<compile_context>
chip_gen: v7x
topology: tpu7x:2x2x1
jax: 0.10.0
libtpu: 0.0.40
codegen_flags: <defaults>
</compile_context>

<pallas_src>
import functools

import jax
import jax.numpy as jnp
from jax.experimental import pallas as pl
from jax.experimental.pallas import tpu as pltpu

GN_GROUPS = 32
GN_EPS = 1e-5
WS_EPS = 1e-5


# ------------------------------------------------------------------ kernel --
def _ws_conv_gn_kernel(x_ref, w_ref, oneh_ref, onehT_ref, g_ref, b_ref, *rest,
                       kh_sz, kw_sz, stride, ho, wo, cin, relu, has_identity,
                       inv_count, eps):
    """Fused conv (tap loop on MXU) + GroupNorm [+ residual add] [+ ReLU] for one sample.

    x_ref  : (P, Hq, Wq, Cin) bf16   stride-parity-decomposed, zero-padded input
    w_ref  : (KH*KW*Cin, Cout) bf16  weight-standardized, tap-major
    oneh_ref / onehT_ref : (Cout, G) / (G, Cout) f32 one-hot group maps
    g_ref, b_ref : (1, Cout) f32 GroupNorm affine
    rest   : ([identity (1, HW, Cout)], out (1, HW, Cout))
    """
    if has_identity:
        id_ref, o_ref = rest
    else:
        (o_ref,) = rest

    hw = ho * wo
    cout = o_ref.shape[-1]

    # ---- convolution: one MXU matmul per (kh, kw) tap on a shifted window ----
    acc = jnp.zeros((hw, cout), jnp.float32)
    for kh in range(kh_sz):
        for kw in range(kw_sz):
            p = (kh % stride) * stride + (kw % stride)       # parity plane
            oh = kh // stride
            ow = kw // stride
            win = x_ref[p, oh:oh + ho, ow:ow + wo, :]         # (ho, wo, cin) bf16
            a = win.reshape(hw, cin)
            t = kh * kw_sz + kw
            wk = w_ref[t * cin:(t + 1) * cin, :]              # (cin, cout) bf16
            acc = acc + jnp.dot(a, wk, preferred_element_type=jnp.float32)

    # ---- GroupNorm(32): two-pass stats via one-hot group reductions (f32) ----
    oneh = oneh_ref[...]                                      # (cout, G)
    onehT = onehT_ref[...]                                    # (G, cout)
    s1 = jnp.dot(jnp.sum(acc, axis=0, keepdims=True), oneh,
                 preferred_element_type=jnp.float32)          # (1, G)
    mean_g = s1 * inv_count
    mean_c = jnp.dot(mean_g, onehT, preferred_element_type=jnp.float32)  # (1, cout)
    xc = acc - mean_c
    s2 = jnp.dot(jnp.sum(xc * xc, axis=0, keepdims=True), oneh,
                 preferred_element_type=jnp.float32)          # (1, G)
    inv_g = jax.lax.rsqrt(s2 * inv_count + eps)
    inv_c = jnp.dot(inv_g, onehT, preferred_element_type=jnp.float32)    # (1, cout)

    y = xc * inv_c * g_ref[...] + b_ref[...]
    if has_identity:
        y = y + id_ref[0].astype(jnp.float32)
    if relu:
        y = jnp.maximum(y, 0.0)
    o_ref[0] = y.astype(o_ref.dtype)


# ----------------------------------------------------------------- wrapper --
def _weight_standardize(w):
    """w: (Cout, Cin, kh, kw) — matches layers_WS.Conv2d (mean-sub, /(std(ddof=1)+1e-5))."""
    mean = jnp.mean(w, axis=(1, 2, 3), keepdims=True)
    w = w - mean
    std = jnp.std(w.reshape(w.shape[0], -1), axis=1, ddof=1).reshape(-1, 1, 1, 1)
    return w / (std + WS_EPS)


def ws_conv_gn(x, w, gamma, beta, *, stride, pad, relu,
               identity=None, out_dtype=jnp.bfloat16):
    """Fused WS-conv + GroupNorm(32) [+ residual add] [+ ReLU].

    x: (N, H, W, Cin), w: (Cout, Cin, KH, KW) in PyTorch OIHW layout.
    Returns (N, Ho, Wo, Cout) in out_dtype.
    """
    N, H, W, Cin = x.shape
    Cout, Cin2, KH, KW = w.shape
    assert Cin == Cin2 and Cout % GN_GROUPS == 0

    Ho = (H + 2 * pad - KH) // stride + 1
    Wo = (W + 2 * pad - KW) // stride + 1
    Hq = Ho + (KH - 1) // stride
    Wq = Wo + (KW - 1) // stride
    P = stride * stride
    HW = Ho * Wo

    # Weight standardization in f32 (tiny), tap-major matrix, bf16 for the MXU.
    ws = _weight_standardize(w.astype(jnp.float32))
    wmat = jnp.transpose(ws, (2, 3, 1, 0)).reshape(KH * KW * Cin, Cout).astype(jnp.bfloat16)

    # Zero-pad spatially (bf16, so the single pad copy is half-width) and decompose
    # into stride-parity planes so the kernel only needs unit-stride static windows.
    xb = x.astype(jnp.bfloat16)
    ph = stride * Hq - H
    pw = stride * Wq - W
    xp = jnp.pad(xb, ((0, 0), (pad, ph - pad), (pad, pw - pad), (0, 0)))
    xq = xp.reshape(N, Hq, stride, Wq, stride, Cin)
    xq = jnp.transpose(xq, (0, 2, 4, 1, 3, 5)).reshape(N * P, Hq, Wq, Cin)

    G = GN_GROUPS
    cg = Cout // G
    oneh = (jnp.arange(Cout)[:, None] // cg == jnp.arange(G)[None, :]).astype(jnp.float32)
    onehT = jnp.transpose(oneh)
    gamma2 = gamma.reshape(1, Cout).astype(jnp.float32)
    beta2 = beta.reshape(1, Cout).astype(jnp.float32)

    inputs = [xq, wmat, oneh, onehT, gamma2, beta2]
    in_specs = [
        pl.BlockSpec((P, Hq, Wq, Cin), lambda n: (n, 0, 0, 0)),
        pl.BlockSpec((KH * KW * Cin, Cout), lambda n: (0, 0)),
        pl.BlockSpec((Cout, G), lambda n: (0, 0)),
        pl.BlockSpec((G, Cout), lambda n: (0, 0)),
        pl.BlockSpec((1, Cout), lambda n: (0, 0)),
        pl.BlockSpec((1, Cout), lambda n: (0, 0)),
    ]
    has_identity = identity is not None
    if has_identity:
        inputs.append(identity.reshape(N, HW, Cout).astype(jnp.bfloat16))
        in_specs.append(pl.BlockSpec((1, HW, Cout), lambda n: (n, 0, 0)))

    kern = functools.partial(
        _ws_conv_gn_kernel, kh_sz=KH, kw_sz=KW, stride=stride, ho=Ho, wo=Wo,
        cin=Cin, relu=relu, has_identity=has_identity,
        inv_count=1.0 / (HW * cg), eps=GN_EPS)

    # NOTE: for very large Cout/spatial this per-sample block would need channel/
    # spatial tiling; for BasicBlock-scale shapes it fits comfortably in VMEM.
    out = pl.pallas_call(
        kern,
        out_shape=jax.ShapeDtypeStruct((N, HW, Cout), out_dtype),
        grid_spec=pltpu.PrefetchScalarGridSpec(
            num_scalar_prefetch=0,
            grid=(N,),
            in_specs=in_specs,
            out_specs=pl.BlockSpec((1, HW, Cout), lambda n: (n, 0, 0))),
        compiler_params=pltpu.CompilerParams(
            dimension_semantics=("parallel",)),
    )(*inputs)
    return out.reshape(N, Ho, Wo, Cout)


# ------------------------------------------------------------- parameters --
def _conv_w(key, cout, cin, kh, kw):
    fan_in = cin * kh * kw
    return jax.random.normal(key, (cout, cin, kh, kw), jnp.float32) * jnp.sqrt(2.0 / fan_in)


def _gn_p(key, c):
    k1, k2 = jax.random.split(key)
    gamma = 1.0 + 0.1 * jax.random.normal(k1, (c,), jnp.float32)
    beta = 0.1 * jax.random.normal(k2, (c,), jnp.float32)
    return gamma, beta


def init_basic_block(key, inplanes, planes, stride=1):
    expansion = 1  # BasicBlock
    ks = jax.random.split(key, 6)
    p = {'stride': stride,
         'conv1_w': _conv_w(ks[0], planes, inplanes, 3, 3),
         'gn1': _gn_p(ks[1], planes),
         'conv2_w': _conv_w(ks[2], planes, planes, 3, 3),
         'gn2': _gn_p(ks[3], planes)}
    if stride != 1 or inplanes != planes * expansion:
        # downsample = Sequential(L.Conv2d(1x1, stride, bias=False), L.BatchNorm2d==GroupNorm(32))
        p['down_w'] = _conv_w(ks[4], planes * expansion, inplanes, 1, 1)
        p['down_gn'] = _gn_p(ks[5], planes * expansion)
    return p


# ---------------------------------------------------------------- forward --
def basic_block_forward(x, blk, out_dtype=jnp.bfloat16):
    """x: (N, H, W, Cin) -> (N, Ho, Wo, planes).  Matches BasicBlock.forward."""
    s = blk['stride']
    out = ws_conv_gn(x, blk['conv1_w'], *blk['gn1'],
                     stride=s, pad=1, relu=True)                       # conv1 + bn1 + relu
    if 'down_w' in blk:
        identity = ws_conv_gn(x, blk['down_w'], *blk['down_gn'],
                              stride=s, pad=0, relu=False)             # downsample(x)
    else:
        identity = x
    # conv2 + bn2 + (out += identity) + relu, all fused in a single kernel.
    out = ws_conv_gn(out, blk['conv2_w'], *blk['gn2'],
                     stride=1, pad=1, relu=True, identity=identity,
                     out_dtype=out_dtype)
    return out


if __name__ == "__main__":
    key = jax.random.PRNGKey(0)
    k1, k2, kx = jax.random.split(key, 3)

    # Block 1: 32 -> 64 channels, stride=2 (exercises the downsample path).
    blk1 = init_basic_block(k1, 32, 64, stride=2)
    # Block 2: 64 -> 64 channels, stride=1 (plain identity shortcut).
    blk2 = init_basic_block(k2, 64, 64, stride=1)

    # PyTorch-style NCHW input; converted to NHWC for the TPU kernels.
    x_nchw = jax.random.normal(kx, (2, 32, 16, 16), jnp.float32)
    x = jnp.transpose(x_nchw, (0, 2, 3, 1))

    fwd = jax.jit(lambda xx: basic_block_forward(
        basic_block_forward(xx, blk1), blk2, out_dtype=jnp.float32))
    y = fwd(x)
    jax.block_until_ready(y)

    assert y.shape == (2, 8, 8, 64), y.shape
    assert bool(jnp.all(jnp.isfinite(y)))
    assert bool(jnp.all(y >= 0.0))  # final ReLU
    print("KERNEL_OK")
</pallas_src>

<mosaic_0001>
module attributes {stable_mosaic.version = 11 : i64} {
  func.func @_ws_conv_gn_kernel(%arg0: i32, %arg1: memref<4x9x9x32xbf16, #tpu.memory_space<vmem>>, %arg2: memref<288x64xbf16, #tpu.memory_space<vmem>>, %arg3: memref<64x32xf32, #tpu.memory_space<vmem>>, %arg4: memref<32x64xf32, #tpu.memory_space<vmem>>, %arg5: memref<1x64xf32, #tpu.memory_space<vmem>>, %arg6: memref<1x64xf32, #tpu.memory_space<vmem>>, %arg7: memref<1x64x64xbf16, #tpu.memory_space<vmem>>) attributes {dimension_semantics = [#tpu.dimension_semantics<parallel>], iteration_bounds = array<i64: 2>, scalar_prefetch = 0 : i64, scratch_operands = 0 : i64, tpu.core_type = #tpu.core_type<tc>, window_params = [{transform_indices = @transform_0, window_bounds = array<i64: 4, 9, 9, 32>}, {pipeline_mode = #tpu.pipeline_mode<synchronous>, transform_indices = @transform_1, window_bounds = array<i64: 288, 64>}, {pipeline_mode = #tpu.pipeline_mode<synchronous>, transform_indices = @transform_2, window_bounds = array<i64: 64, 32>}, {pipeline_mode = #tpu.pipeline_mode<synchronous>, transform_indices = @transform_3, window_bounds = array<i64: 32, 64>}, {pipeline_mode = #tpu.pipeline_mode<synchronous>, transform_indices = @transform_4, window_bounds = array<i64: 1, 64>}, {pipeline_mode = #tpu.pipeline_mode<synchronous>, transform_indices = @transform_5, window_bounds = array<i64: 1, 64>}, {transform_indices = @transform_6, window_bounds = array<i64: 1, 64, 64>}]} {
    %cst = arith.constant 0.000000e+00 : f32
    %0 = vector.broadcast %cst : f32 to vector<64x64xf32>
    %c0 = arith.constant 0 : index
    %c0_0 = arith.constant 0 : index
    %c0_1 = arith.constant 0 : index
    %c0_2 = arith.constant 0 : index
    %1 = vector.load %arg1[%c0, %c0_0, %c0_1, %c0_2] : memref<4x9x9x32xbf16, #tpu.memory_space<vmem>>, vector<1x8x8x32xbf16>
    %2 = vector.shape_cast %1 : vector<1x8x8x32xbf16> to vector<8x8x32xbf16>
    %3 = vector.shape_cast %2 : vector<8x8x32xbf16> to vector<64x32xbf16>
    %c0_3 = arith.constant 0 : index
    %c0_4 = arith.constant 0 : index
    %4 = vector.load %arg2[%c0_3, %c0_4] : memref<288x64xbf16, #tpu.memory_space<vmem>>, vector<32x64xbf16>
    %cst_5 = arith.constant dense<0.000000e+00> : vector<64x64xf32>
    %5 = tpu.matmul %3, %4, %cst_5 {dimension_numbers = #tpu.dot_dimension_numbers<[1], [0], [0], [1], [0, 0, 1, 1], [], []>} : vector<64x32xbf16>, vector<32x64xbf16>, vector<64x64xf32> -> vector<64x64xf32>
    %6 = arith.addf %0, %5 : vector<64x64xf32>
    %c1 = arith.constant 1 : index
    %c0_6 = arith.constant 0 : index
    %c0_7 = arith.constant 0 : index
    %c0_8 = arith.constant 0 : index
    %7 = vector.load %arg1[%c1, %c0_6, %c0_7, %c0_8] : memref<4x9x9x32xbf16, #tpu.memory_space<vmem>>, vector<1x8x8x32xbf16>
    %8 = vector.shape_cast %7 : vector<1x8x8x32xbf16> to vector<8x8x32xbf16>
    %9 = vector.shape_cast %8 : vector<8x8x32xbf16> to vector<64x32xbf16>
    %c32 = arith.constant 32 : index
    %c0_9 = arith.constant 0 : index
    %10 = vector.load %arg2[%c32, %c0_9] : memref<288x64xbf16, #tpu.memory_space<vmem>>, vector<32x64xbf16>
    %cst_10 = arith.constant dense<0.000000e+00> : vector<64x64xf32>
    %11 = tpu.matmul %9, %10, %cst_10 {dimension_numbers = #tpu.dot_dimension_numbers<[1], [0], [0], [1], [0, 0, 1, 1], [], []>} : vector<64x32xbf16>, vector<32x64xbf16>, vector<64x64xf32> -> vector<64x64xf32>
    %12 = arith.addf %6, %11 : vector<64x64xf32>
    %c0_11 = arith.constant 0 : index
    %c0_12 = arith.constant 0 : index
    %c1_13 = arith.constant 1 : index
    %c0_14 = arith.constant 0 : index
    %13 = vector.load %arg1[%c0_11, %c0_12, %c1_13, %c0_14] : memref<4x9x9x32xbf16, #tpu.memory_space<vmem>>, vector<1x8x8x32xbf16>
    %14 = vector.shape_cast %13 : vector<1x8x8x32xbf16> to vector<8x8x32xbf16>
    %15 = vector.shape_cast %14 : vector<8x8x32xbf16> to vector<64x32xbf16>
    %c64 = arith.constant 64 : index
    %c0_15 = arith.constant 0 : index
    %16 = vector.load %arg2[%c64, %c0_15] : memref<288x64xbf16, #tpu.memory_space<vmem>>, vector<32x64xbf16>
    %cst_16 = arith.constant dense<0.000000e+00> : vector<64x64xf32>
    %17 = tpu.matmul %15, %16, %cst_16 {dimension_numbers = #tpu.dot_dimension_numbers<[1], [0], [0], [1], [0, 0, 1, 1], [], []>} : vector<64x32xbf16>, vector<32x64xbf16>, vector<64x64xf32> -> vector<64x64xf32>
    %18 = arith.addf %12, %17 : vector<64x64xf32>
    %c2 = arith.constant 2 : index
    %c0_17 = arith.constant 0 : index
    %c0_18 = arith.constant 0 : index
    %c0_19 = arith.constant 0 : index
    %19 = vector.load %arg1[%c2, %c0_17, %c0_18, %c0_19] : memref<4x9x9x32xbf16, #tpu.memory_space<vmem>>, vector<1x8x8x32xbf16>
    %20 = vector.shape_cast %19 : vector<1x8x8x32xbf16> to vector<8x8x32xbf16>
    %21 = vector.shape_cast %20 : vector<8x8x32xbf16> to vector<64x32xbf16>
    %c96 = arith.constant 96 : index
    %c0_20 = arith.constant 0 : index
    %22 = vector.load %arg2[%c96, %c0_20] : memref<288x64xbf16, #tpu.memory_space<vmem>>, vector<32x64xbf16>
    %cst_21 = arith.constant dense<0.000000e+00> : vector<64x64xf32>
    %23 = tpu.matmul %21, %22, %cst_21 {dimension_numbers = #tpu.dot_dimension_numbers<[1], [0], [0], [1], [0, 0, 1, 1], [], []>} : vector<64x32xbf16>, vector<32x64xbf16>, vector<64x64xf32> -> vector<64x64xf32>
    %24 = arith.addf %18, %23 : vector<64x64xf32>
    %c3 = arith.constant 3 : index
    %c0_22 = arith.constant 0 : index
    %c0_23 = arith.constant 0 : index
    %c0_24 = arith.constant 0 : index
    %25 = vector.load %arg1[%c3, %c0_22, %c0_23, %c0_24] : memref<4x9x9x32xbf16, #tpu.memory_space<vmem>>, vector<1x8x8x32xbf16>
    %26 = vector.shape_cast %25 : vector<1x8x8x32xbf16> to vector<8x8x32xbf16>
    %27 = vector.shape_cast %26 : vector<8x8x32xbf16> to vector<64x32xbf16>
    %c128 = arith.constant 128 : index
    %c0_25 = arith.constant 0 : index
    %28 = vector.load %arg2[%c128, %c0_25] : memref<288x64xbf16, #tpu.memory_space<vmem>>, vector<32x64xbf16>
    %cst_26 = arith.constant dense<0.000000e+00> : vector<64x64xf32>
    %29 = tpu.matmul %27, %28, %cst_26 {dimension_numbers = #tpu.dot_dimension_numbers<[1], [0], [0], [1], [0, 0, 1, 1], [], []>} : vector<64x32xbf16>, vector<32x64xbf16>, vector<64x64xf32> -> vector<64x64xf32>
    %30 = arith.addf %24, %29 : vector<64x64xf32>
    %c2_27 = arith.constant 2 : index
    %c0_28 = arith.constant 0 : index
    %c1_29 = arith.constant 1 : index
    %c0_30 = arith.constant 0 : index
    %31 = vector.load %arg1[%c2_27, %c0_28, %c1_29, %c0_30] : memref<4x9x9x32xbf16, #tpu.memory_space<vmem>>, vector<1x8x8x32xbf16>
    %32 = vector.shape_cast %31 : vector<1x8x8x32xbf16> to vector<8x8x32xbf16>
    %33 = vector.shape_cast %32 : vector<8x8x32xbf16> to vector<64x32xbf16>
    %c160 = arith.constant 160 : index
    %c0_31 = arith.constant 0 : index
    %34 = vector.load %arg2[%c160, %c0_31] : memref<288x64xbf16, #tpu.memory_space<vmem>>, vector<32x64xbf16>
    %cst_32 = arith.constant dense<0.000000e+00> : vector<64x64xf32>
    %35 = tpu.matmul %33, %34, %cst_32 {dimension_numbers = #tpu.dot_dimension_numbers<[1], [0], [0], [1], [0, 0, 1, 1], [], []>} : vector<64x32xbf16>, vector<32x64xbf16>, vector<64x64xf32> -> vector<64x64xf32>
    %36 = arith.addf %30, %35 : vector<64x64xf32>
    %c0_33 = arith.constant 0 : index
    %c1_34 = arith.constant 1 : index
    %c0_35 = arith.constant 0 : index
    %c0_36 = arith.constant 0 : index
    %37 = vector.load %arg1[%c0_33, %c1_34, %c0_35, %c0_36] : memref<4x9x9x32xbf16, #tpu.memory_space<vmem>>, vector<1x8x8x32xbf16>
    %38 = vector.shape_cast %37 : vector<1x8x8x32xbf16> to vector<8x8x32xbf16>
    %39 = vector.shape_cast %38 : vector<8x8x32xbf16> to vector<64x32xbf16>
    %c192 = arith.constant 192 : index
    %c0_37 = arith.constant 0 : index
    %40 = vector.load %arg2[%c192, %c0_37] : memref<288x64xbf16, #tpu.memory_space<vmem>>, vector<32x64xbf16>
    %cst_38 = arith.constant dense<0.000000e+00> : vector<64x64xf32>
    %41 = tpu.matmul %39, %40, %cst_38 {dimension_numbers = #tpu.dot_dimension_numbers<[1], [0], [0], [1], [0, 0, 1, 1], [], []>} : vector<64x32xbf16>, vector<32x64xbf16>, vector<64x64xf32> -> vector<64x64xf32>
    %42 = arith.addf %36, %41 : vector<64x64xf32>
    %c1_39 = arith.constant 1 : index
    %c1_40 = arith.constant 1 : index
    %c0_41 = arith.constant 0 : index
    %c0_42 = arith.constant 0 : index
    %43 = vector.load %arg1[%c1_39, %c1_40, %c0_41, %c0_42] : memref<4x9x9x32xbf16, #tpu.memory_space<vmem>>, vector<1x8x8x32xbf16>
    %44 = vector.shape_cast %43 : vector<1x8x8x32xbf16> to vector<8x8x32xbf16>
    %45 = vector.shape_cast %44 : vector<8x8x32xbf16> to vector<64x32xbf16>
    %c224 = arith.constant 224 : index
    %c0_43 = arith.constant 0 : index
    %46 = vector.load %arg2[%c224, %c0_43] : memref<288x64xbf16, #tpu.memory_space<vmem>>, vector<32x64xbf16>
    %cst_44 = arith.constant dense<0.000000e+00> : vector<64x64xf32>
    %47 = tpu.matmul %45, %46, %cst_44 {dimension_numbers = #tpu.dot_dimension_numbers<[1], [0], [0], [1], [0, 0, 1, 1], [], []>} : vector<64x32xbf16>, vector<32x64xbf16>, vector<64x64xf32> -> vector<64x64xf32>
    %48 = arith.addf %42, %47 : vector<64x64xf32>
    %c0_45 = arith.constant 0 : index
    %c1_46 = arith.constant 1 : index
    %c1_47 = arith.constant 1 : index
    %c0_48 = arith.constant 0 : index
    %49 = vector.load %arg1[%c0_45, %c1_46, %c1_47, %c0_48] : memref<4x9x9x32xbf16, #tpu.memory_space<vmem>>, vector<1x8x8x32xbf16>
    %50 = vector.shape_cast %49 : vector<1x8x8x32xbf16> to vector<8x8x32xbf16>
    %51 = vector.shape_cast %50 : vector<8x8x32xbf16> to vector<64x32xbf16>
    %c256 = arith.constant 256 : index
    %c0_49 = arith.constant 0 : index
    %52 = vector.load %arg2[%c256, %c0_49] : memref<288x64xbf16, #tpu.memory_space<vmem>>, vector<32x64xbf16>
    %cst_50 = arith.constant dense<0.000000e+00> : vector<64x64xf32>
    %53 = tpu.matmul %51, %52, %cst_50 {dimension_numbers = #tpu.dot_dimension_numbers<[1], [0], [0], [1], [0, 0, 1, 1], [], []>} : vector<64x32xbf16>, vector<32x64xbf16>, vector<64x64xf32> -> vector<64x64xf32>
    %54 = arith.addf %48, %53 : vector<64x64xf32>
    %c0_51 = arith.constant 0 : index
    %c0_52 = arith.constant 0 : index
    %55 = vector.load %arg3[%c0_51, %c0_52] : memref<64x32xf32, #tpu.memory_space<vmem>>, vector<64x32xf32>
    %c0_53 = arith.constant 0 : index
    %c0_54 = arith.constant 0 : index
    %56 = vector.load %arg4[%c0_53, %c0_54] : memref<32x64xf32, #tpu.memory_space<vmem>>, vector<32x64xf32>
    %cst_55 = arith.constant dense<0.000000e+00> : vector<64xf32>
    %57 = vector.multi_reduction <add>, %54, %cst_55 [0] : vector<64x64xf32> to vector<64xf32>
    %58 = vector.shape_cast %57 : vector<64xf32> to vector<1x64xf32>
    %cst_56 = arith.constant dense<0.000000e+00> : vector<1x32xf32>
    %59 = tpu.matmul %58, %55, %cst_56 {dimension_numbers = #tpu.dot_dimension_numbers<[1], [0], [0], [1], [0, 0, 1, 1], [], []>} : vector<1x64xf32>, vector<64x32xf32>, vector<1x32xf32> -> vector<1x32xf32>
    %cst_57 = arith.constant 7.812500e-03 : f32
    %60 = vector.broadcast %cst_57 : f32 to vector<1x32xf32>
    %61 = arith.mulf %59, %60 : vector<1x32xf32>
    %cst_58 = arith.constant dense<0.000000e+00> : vector<1x64xf32>
    %62 = tpu.matmul %61, %56, %cst_58 {dimension_numbers = #tpu.dot_dimension_numbers<[1], [0], [0], [1], [0, 0, 1, 1], [], []>} : vector<1x32xf32>, vector<32x64xf32>, vector<1x64xf32> -> vector<1x64xf32>
    %63 = vector.broadcast %62 : vector<1x64xf32> to vector<64x64xf32>
    %64 = arith.subf %54, %63 : vector<64x64xf32>
    %65 = arith.mulf %64, %64 : vector<64x64xf32>
    %cst_59 = arith.constant dense<0.000000e+00> : vector<64xf32>
    %66 = vector.multi_reduction <add>, %65, %cst_59 [0] : vector<64x64xf32> to vector<64xf32>
    %67 = vector.shape_cast %66 : vector<64xf32> to vector<1x64xf32>
    %cst_60 = arith.constant dense<0.000000e+00> : vector<1x32xf32>
    %68 = tpu.matmul %67, %55, %cst_60 {dimension_numbers = #tpu.dot_dimension_numbers<[1], [0], [0], [1], [0, 0, 1, 1], [], []>} : vector<1x64xf32>, vector<64x32xf32>, vector<1x32xf32> -> vector<1x32xf32>
    %cst_61 = arith.constant 7.812500e-03 : f32
    %69 = vector.broadcast %cst_61 : f32 to vector<1x32xf32>
    %70 = arith.mulf %68, %69 : vector<1x32xf32>
    %cst_62 = arith.constant 9.99999974E-6 : f32
    %71 = vector.broadcast %cst_62 : f32 to vector<1x32xf32>
    %72 = arith.addf %70, %71 : vector<1x32xf32>
    %73 = math.rsqrt %72 : vector<1x32xf32>
    %cst_63 = arith.constant dense<0.000000e+00> : vector<1x64xf32>
    %74 = tpu.matmul %73, %56, %cst_63 {dimension_numbers = #tpu.dot_dimension_numbers<[1], [0], [0], [1], [0, 0, 1, 1], [], []>} : vector<1x32xf32>, vector<32x64xf32>, vector<1x64xf32> -> vector<1x64xf32>
    %75 = vector.broadcast %74 : vector<1x64xf32> to vector<64x64xf32>
    %76 = arith.mulf %64, %75 : vector<64x64xf32>
    %c0_64 = arith.constant 0 : index
    %c0_65 = arith.constant 0 : index
    %77 = vector.load %arg5[%c0_64, %c0_65] : memref<1x64xf32, #tpu.memory_space<vmem>>, vector<1x64xf32>
    %78 = vector.broadcast %77 : vector<1x64xf32> to vector<64x64xf32>
    %79 = arith.mulf %76, %78 : vector<64x64xf32>
    %c0_66 = arith.constant 0 : index
    %c0_67 = arith.constant 0 : index
    %80 = vector.load %arg6[%c0_66, %c0_67] : memref<1x64xf32, #tpu.memory_space<vmem>>, vector<1x64xf32>
    %81 = vector.broadcast %80 : vector<1x64xf32> to vector<64x64xf32>
    %82 = arith.addf %79, %81 : vector<64x64xf32>
    %cst_68 = arith.constant 0.000000e+00 : f32
    %83 = vector.broadcast %cst_68 : f32 to vector<64x64xf32>
    %84 = arith.maximumf %82, %83 : vector<64x64xf32>
    %85 = arith.truncf %84 : vector<64x64xf32> to vector<64x64xbf16>
    %c0_69 = arith.constant 0 : index
    %c0_70 = arith.constant 0 : index
    %c0_71 = arith.constant 0 : index
    %86 = vector.load %arg7[%c0_69, %c0_70, %c0_71] : memref<1x64x64xbf16, #tpu.memory_space<vmem>>, vector<1x64x64xbf16>
    %87 = vector.shape_cast %86 : vector<1x64x64xbf16> to vector<64x64xbf16>
    %88 = vector.shape_cast %85 : vector<64x64xbf16> to vector<1x64x64xbf16>
    tpu.vector_store %arg7[%c0_69, %c0_70, %c0_71], %88 {strides = array<i32>} : memref<1x64x64xbf16, #tpu.memory_space<vmem>>, vector<1x64x64xbf16>,
    return
  }
  func.func @transform_0(%arg0: i32) -> (i32, i32, i32, i32) {
    %c0_i32 = arith.constant 0 : i32
    %c0_i32_0 = arith.constant 0 : i32
    %c0_i32_1 = arith.constant 0 : i32
    %c0_i32_2 = arith.constant 0 : i32
    return %arg0, %c0_i32, %c0_i32_0, %c0_i32_1 : i32, i32, i32, i32
  }
  func.func @transform_1(%arg0: i32) -> (i32, i32) {
    %c0_i32 = arith.constant 0 : i32
    %c0_i32_0 = arith.constant 0 : i32
    %c0_i32_1 = arith.constant 0 : i32
    return %c0_i32, %c0_i32_0 : i32, i32
  }
  func.func @transform_2(%arg0: i32) -> (i32, i32) {
    %c0_i32 = arith.constant 0 : i32
    %c0_i32_0 = arith.constant 0 : i32
    %c0_i32_1 = arith.constant 0 : i32
    return %c0_i32, %c0_i32_0 : i32, i32
  }
  func.func @transform_3(%arg0: i32) -> (i32, i32) {
    %c0_i32 = arith.constant 0 : i32
    %c0_i32_0 = arith.constant 0 : i32
    %c0_i32_1 = arith.constant 0 : i32
    return %c0_i32, %c0_i32_0 : i32, i32
  }
  func.func @transform_4(%arg0: i32) -> (i32, i32) {
    %c0_i32 = arith.constant 0 : i32
    %c0_i32_0 = arith.constant 0 : i32
    %c0_i32_1 = arith.constant 0 : i32
    return %c0_i32, %c0_i32_0 : i32, i32
  }
  func.func @transform_5(%arg0: i32) -> (i32, i32) {
    %c0_i32 = arith.constant 0 : i32
    %c0_i32_0 = arith.constant 0 : i32
    %c0_i32_1 = arith.constant 0 : i32
    return %c0_i32, %c0_i32_0 : i32, i32
  }
  func.func @transform_6(%arg0: i32) -> (i32, i32, i32) {
    %c0_i32 = arith.constant 0 : i32
    %c0_i32_0 = arith.constant 0 : i32
    %c0_i32_1 = arith.constant 0 : i32
    return %arg0, %c0_i32, %c0_i32_0 : i32, i32, i32
  }
}

module attributes {stable_mosaic.version = 11 : i64} {
  func.func @_ws_conv_gn_kernel(%arg0: i32, %arg1: memref<1x10x10x64xbf16, #tpu.memory_space<vmem>>, %arg2: memref<576x64xbf16, #tpu.memory_space<vmem>>, %arg3: memref<64x32xf32, #tpu.memory_space<vmem>>, %arg4: memref<32x64xf32, #tpu.memory_space<vmem>>, %arg5: memref<1x64xf32, #tpu.memory_space<vmem>>, %arg6: memref<1x64xf32, #tpu.memory_space<vmem>>, %arg7: memref<1x64x64xbf16, #tpu.memory_space<vmem>>) attributes {dimension_semantics = [#tpu.dimension_semantics<parallel>], iteration_bounds = array<i64: 2>, scalar_prefetch = 0 : i64, scratch_operands = 0 : i64, tpu.core_type = #tpu.core_type<tc>, window_params = [{transform_indices = @transform_0, window_bounds = array<i64: 1, 10, 10, 64>}, {pipeline_mode = #tpu.pipeline_mode<synchronous>, transform_indices = @transform_1, window_bounds = array<i64: 576, 64>}, {pipeline_mode = #tpu.pipeline_mode<synchronous>, transform_indices = @transform_2, window_bounds = array<i64: 64, 32>}, {pipeline_mode = #tpu.pipeline_mode<synchronous>, transform_indices = @transform_3, window_bounds = array<i64: 32, 64>}, {pipeline_mode = #tpu.pipeline_mode<synchronous>, transform_indices = @transform_4, window_bounds = array<i64: 1, 64>}, {pipeline_mode = #tpu.pipeline_mode<synchronous>, transform_indices = @transform_5, window_bounds = array<i64: 1, 64>}, {transform_indices = @transform_6, window_bounds = array<i64: 1, 64, 64>}]} {
    %cst = arith.constant 0.000000e+00 : f32
    %0 = vector.broadcast %cst : f32 to vector<64x64xf32>
    %c0 = arith.constant 0 : index
    %c0_0 = arith.constant 0 : index
    %c0_1 = arith.constant 0 : index
    %c0_2 = arith.constant 0 : index
    %1 = vector.load %arg1[%c0, %c0_0, %c0_1, %c0_2] : memref<1x10x10x64xbf16, #tpu.memory_space<vmem>>, vector<1x8x8x64xbf16>
    %2 = vector.shape_cast %1 : vector<1x8x8x64xbf16> to vector<8x8x64xbf16>
    %3 = vector.shape_cast %2 : vector<8x8x64xbf16> to vector<64x64xbf16>
    %c0_3 = arith.constant 0 : index
    %c0_4 = arith.constant 0 : index
    %4 = vector.load %arg2[%c0_3, %c0_4] : memref<576x64xbf16, #tpu.memory_space<vmem>>, vector<64x64xbf16>
    %cst_5 = arith.constant dense<0.000000e+00> : vector<64x64xf32>
    %5 = tpu.matmul %3, %4, %cst_5 {dimension_numbers = #tpu.dot_dimension_numbers<[1], [0], [0], [1], [0, 0, 1, 1], [], []>} : vector<64x64xbf16>, vector<64x64xbf16>, vector<64x64xf32> -> vector<64x64xf32>
    %6 = arith.addf %0, %5 : vector<64x64xf32>
    %c0_6 = arith.constant 0 : index
    %c0_7 = arith.constant 0 : index
    %c1 = arith.constant 1 : index
    %c0_8 = arith.constant 0 : index
    %7 = vector.load %arg1[%c0_6, %c0_7, %c1, %c0_8] : memref<1x10x10x64xbf16, #tpu.memory_space<vmem>>, vector<1x8x8x64xbf16>
    %8 = vector.shape_cast %7 : vector<1x8x8x64xbf16> to vector<8x8x64xbf16>
    %9 = vector.shape_cast %8 : vector<8x8x64xbf16> to vector<64x64xbf16>
    %c64 = arith.constant 64 : index
    %c0_9 = arith.constant 0 : index
    %10 = vector.load %arg2[%c64, %c0_9] : memref<576x64xbf16, #tpu.memory_space<vmem>>, vector<64x64xbf16>
    %cst_10 = arith.constant dense<0.000000e+00> : vector<64x64xf32>
    %11 = tpu.matmul %9, %10, %cst_10 {dimension_numbers = #tpu.dot_dimension_numbers<[1], [0], [0], [1], [0, 0, 1, 1], [], []>} : vector<64x64xbf16>, vector<64x64xbf16>, vector<64x64xf32> -> vector<64x64xf32>
    %12 = arith.addf %6, %11 : vector<64x64xf32>
    %c0_11 = arith.constant 0 : index
    %c0_12 = arith.constant 0 : index
    %c2 = arith.constant 2 : index
    %c0_13 = arith.constant 0 : index
    %13 = vector.load %arg1[%c0_11, %c0_12, %c2, %c0_13] : memref<1x10x10x64xbf16, #tpu.memory_space<vmem>>, vector<1x8x8x64xbf16>
    %14 = vector.shape_cast %13 : vector<1x8x8x64xbf16> to vector<8x8x64xbf16>
    %15 = vector.shape_cast %14 : vector<8x8x64xbf16> to vector<64x64xbf16>
    %c128 = arith.constant 128 : index
    %c0_14 = arith.constant 0 : index
    %16 = vector.load %arg2[%c128, %c0_14] : memref<576x64xbf16, #tpu.memory_space<vmem>>, vector<64x64xbf16>
    %cst_15 = arith.constant dense<0.000000e+00> : vector<64x64xf32>
    %17 = tpu.matmul %15, %16, %cst_15 {dimension_numbers = #tpu.dot_dimension_numbers<[1], [0], [0], [1], [0, 0, 1, 1], [], []>} : vector<64x64xbf16>, vector<64x64xbf16>, vector<64x64xf32> -> vector<64x64xf32>
    %18 = arith.addf %12, %17 : vector<64x64xf32>
    %c0_16 = arith.constant 0 : index
    %c1_17 = arith.constant 1 : index
    %c0_18 = arith.constant 0 : index
    %c0_19 = arith.constant 0 : index
    %19 = vector.load %arg1[%c0_16, %c1_17, %c0_18, %c0_19] : memref<1x10x10x64xbf16, #tpu.memory_space<vmem>>, vector<1x8x8x64xbf16>
    %20 = vector.shape_cast %19 : vector<1x8x8x64xbf16> to vector<8x8x64xbf16>
    %21 = vector.shape_cast %20 : vector<8x8x64xbf16> to vector<64x64xbf16>
    %c192 = arith.constant 192 : index
    %c0_20 = arith.constant 0 : index
    %22 = vector.load %arg2[%c192, %c0_20] : memref<576x64xbf16, #tpu.memory_space<vmem>>, vector<64x64xbf16>
    %cst_21 = arith.constant dense<0.000000e+00> : vector<64x64xf32>
    %23 = tpu.matmul %21, %22, %cst_21 {dimension_numbers = #tpu.dot_dimension_numbers<[1], [0], [0], [1], [0, 0, 1, 1], [], []>} : vector<64x64xbf16>, vector<64x64xbf16>, vector<64x64xf32> -> vector<64x64xf32>
    %24 = arith.addf %18, %23 : vector<64x64xf32>
    %c0_22 = arith.constant 0 : index
    %c1_23 = arith.constant 1 : index
    %c1_24 = arith.constant 1 : index
    %c0_25 = arith.constant 0 : index
    %25 = vector.load %arg1[%c0_22, %c1_23, %c1_24, %c0_25] : memref<1x10x10x64xbf16, #tpu.memory_space<vmem>>, vector<1x8x8x64xbf16>
    %26 = vector.shape_cast %25 : vector<1x8x8x64xbf16> to vector<8x8x64xbf16>
    %27 = vector.shape_cast %26 : vector<8x8x64xbf16> to vector<64x64xbf16>
    %c256 = arith.constant 256 : index
    %c0_26 = arith.constant 0 : index
    %28 = vector.load %arg2[%c256, %c0_26] : memref<576x64xbf16, #tpu.memory_space<vmem>>, vector<64x64xbf16>
    %cst_27 = arith.constant dense<0.000000e+00> : vector<64x64xf32>
    %29 = tpu.matmul %27, %28, %cst_27 {dimension_numbers = #tpu.dot_dimension_numbers<[1], [0], [0], [1], [0, 0, 1, 1], [], []>} : vector<64x64xbf16>, vector<64x64xbf16>, vector<64x64xf32> -> vector<64x64xf32>
    %30 = arith.addf %24, %29 : vector<64x64xf32>
    %c0_28 = arith.constant 0 : index
    %c1_29 = arith.constant 1 : index
    %c2_30 = arith.constant 2 : index
    %c0_31 = arith.constant 0 : index
    %31 = vector.load %arg1[%c0_28, %c1_29, %c2_30, %c0_31] : memref<1x10x10x64xbf16, #tpu.memory_space<vmem>>, vector<1x8x8x64xbf16>
    %32 = vector.shape_cast %31 : vector<1x8x8x64xbf16> to vector<8x8x64xbf16>
    %33 = vector.shape_cast %32 : vector<8x8x64xbf16> to vector<64x64xbf16>
    %c320 = arith.constant 320 : index
    %c0_32 = arith.constant 0 : index
    %34 = vector.load %arg2[%c320, %c0_32] : memref<576x64xbf16, #tpu.memory_space<vmem>>, vector<64x64xbf16>
    %cst_33 = arith.constant dense<0.000000e+00> : vector<64x64xf32>
    %35 = tpu.matmul %33, %34, %cst_33 {dimension_numbers = #tpu.dot_dimension_numbers<[1], [0], [0], [1], [0, 0, 1, 1], [], []>} : vector<64x64xbf16>, vector<64x64xbf16>, vector<64x64xf32> -> vector<64x64xf32>
    %36 = arith.addf %30, %35 : vector<64x64xf32>
    %c0_34 = arith.constant 0 : index
    %c2_35 = arith.constant 2 : index
    %c0_36 = arith.constant 0 : index
    %c0_37 = arith.constant 0 : index
    %37 = vector.load %arg1[%c0_34, %c2_35, %c0_36, %c0_37] : memref<1x10x10x64xbf16, #tpu.memory_space<vmem>>, vector<1x8x8x64xbf16>
    %38 = vector.shape_cast %37 : vector<1x8x8x64xbf16> to vector<8x8x64xbf16>
    %39 = vector.shape_cast %38 : vector<8x8x64xbf16> to vector<64x64xbf16>
    %c384 = arith.constant 384 : index
    %c0_38 = arith.constant 0 : index
    %40 = vector.load %arg2[%c384, %c0_38] : memref<576x64xbf16, #tpu.memory_space<vmem>>, vector<64x64xbf16>
    %cst_39 = arith.constant dense<0.000000e+00> : vector<64x64xf32>
    %41 = tpu.matmul %39, %40, %cst_39 {dimension_numbers = #tpu.dot_dimension_numbers<[1], [0], [0], [1], [0, 0, 1, 1], [], []>} : vector<64x64xbf16>, vector<64x64xbf16>, vector<64x64xf32> -> vector<64x64xf32>
    %42 = arith.addf %36, %41 : vector<64x64xf32>
    %c0_40 = arith.constant 0 : index
    %c2_41 = arith.constant 2 : index
    %c1_42 = arith.constant 1 : index
    %c0_43 = arith.constant 0 : index
    %43 = vector.load %arg1[%c0_40, %c2_41, %c1_42, %c0_43] : memref<1x10x10x64xbf16, #tpu.memory_space<vmem>>, vector<1x8x8x64xbf16>
    %44 = vector.shape_cast %43 : vector<1x8x8x64xbf16> to vector<8x8x64xbf16>
    %45 = vector.shape_cast %44 : vector<8x8x64xbf16> to vector<64x64xbf16>
    %c448 = arith.constant 448 : index
    %c0_44 = arith.constant 0 : index
    %46 = vector.load %arg2[%c448, %c0_44] : memref<576x64xbf16, #tpu.memory_space<vmem>>, vector<64x64xbf16>
    %cst_45 = arith.constant dense<0.000000e+00> : vector<64x64xf32>
    %47 = tpu.matmul %45, %46, %cst_45 {dimension_numbers = #tpu.dot_dimension_numbers<[1], [0], [0], [1], [0, 0, 1, 1], [], []>} : vector<64x64xbf16>, vector<64x64xbf16>, vector<64x64xf32> -> vector<64x64xf32>
    %48 = arith.addf %42, %47 : vector<64x64xf32>
    %c0_46 = arith.constant 0 : index
    %c2_47 = arith.constant 2 : index
    %c2_48 = arith.constant 2 : index
    %c0_49 = arith.constant 0 : index
    %49 = vector.load %arg1[%c0_46, %c2_47, %c2_48, %c0_49] : memref<1x10x10x64xbf16, #tpu.memory_space<vmem>>, vector<1x8x8x64xbf16>
    %50 = vector.shape_cast %49 : vector<1x8x8x64xbf16> to vector<8x8x64xbf16>
    %51 = vector.shape_cast %50 : vector<8x8x64xbf16> to vector<64x64xbf16>
    %c512 = arith.constant 512 : index
    %c0_50 = arith.constant 0 : index
    %52 = vector.load %arg2[%c512, %c0_50] : memref<576x64xbf16, #tpu.memory_space<vmem>>, vector<64x64xbf16>
    %cst_51 = arith.constant dense<0.000000e+00> : vector<64x64xf32>
    %53 = tpu.matmul %51, %52, %cst_51 {dimension_numbers = #tpu.dot_dimension_numbers<[1], [0], [0], [1], [0, 0, 1, 1], [], []>} : vector<64x64xbf16>, vector<64x64xbf16>, vector<64x64xf32> -> vector<64x64xf32>
    %54 = arith.addf %48, %53 : vector<64x64xf32>
    %c0_52 = arith.constant 0 : index
    %c0_53 = arith.constant 0 : index
    %55 = vector.load %arg3[%c0_52, %c0_53] : memref<64x32xf32, #tpu.memory_space<vmem>>, vector<64x32xf32>
    %c0_54 = arith.constant 0 : index
    %c0_55 = arith.constant 0 : index
    %56 = vector.load %arg4[%c0_54, %c0_55] : memref<32x64xf32, #tpu.memory_space<vmem>>, vector<32x64xf32>
    %cst_56 = arith.constant dense<0.000000e+00> : vector<64xf32>
    %57 = vector.multi_reduction <add>, %54, %cst_56 [0] : vector<64x64xf32> to vector<64xf32>
    %58 = vector.shape_cast %57 : vector<64xf32> to vector<1x64xf32>
    %cst_57 = arith.constant dense<0.000000e+00> : vector<1x32xf32>
    %59 = tpu.matmul %58, %55, %cst_57 {dimension_numbers = #tpu.dot_dimension_numbers<[1], [0], [0], [1], [0, 0, 1, 1], [], []>} : vector<1x64xf32>, vector<64x32xf32>, vector<1x32xf32> -> vector<1x32xf32>
    %cst_58 = arith.constant 7.812500e-03 : f32
    %60 = vector.broadcast %cst_58 : f32 to vector<1x32xf32>
    %61 = arith.mulf %59, %60 : vector<1x32xf32>
    %cst_59 = arith.constant dense<0.000000e+00> : vector<1x64xf32>
    %62 = tpu.matmul %61, %56, %cst_59 {dimension_numbers = #tpu.dot_dimension_numbers<[1], [0], [0], [1], [0, 0, 1, 1], [], []>} : vector<1x32xf32>, vector<32x64xf32>, vector<1x64xf32> -> vector<1x64xf32>
    %63 = vector.broadcast %62 : vector<1x64xf32> to vector<64x64xf32>
    %64 = arith.subf %54, %63 : vector<64x64xf32>
    %65 = arith.mulf %64, %64 : vector<64x64xf32>
    %cst_60 = arith.constant dense<0.000000e+00> : vector<64xf32>
    %66 = vector.multi_reduction <add>, %65, %cst_60 [0] : vector<64x64xf32> to vector<64xf32>
    %67 = vector.shape_cast %66 : vector<64xf32> to vector<1x64xf32>
    %cst_61 = arith.constant dense<0.000000e+00> : vector<1x32xf32>
    %68 = tpu.matmul %67, %55, %cst_61 {dimension_numbers = #tpu.dot_dimension_numbers<[1], [0], [0], [1], [0, 0, 1, 1], [], []>} : vector<1x64xf32>, vector<64x32xf32>, vector<1x32xf32> -> vector<1x32xf32>
    %cst_62 = arith.constant 7.812500e-03 : f32
    %69 = vector.broadcast %cst_62 : f32 to vector<1x32xf32>
    %70 = arith.mulf %68, %69 : vector<1x32xf32>
    %cst_63 = arith.constant 9.99999974E-6 : f32
    %71 = vector.broadcast %cst_63 : f32 to vector<1x32xf32>
    %72 = arith.addf %70, %71 : vector<1x32xf32>
    %73 = math.rsqrt %72 : vector<1x32xf32>
    %cst_64 = arith.constant dense<0.000000e+00> : vector<1x64xf32>
    %74 = tpu.matmul %73, %56, %cst_64 {dimension_numbers = #tpu.dot_dimension_numbers<[1], [0], [0], [1], [0, 0, 1, 1], [], []>} : vector<1x32xf32>, vector<32x64xf32>, vector<1x64xf32> -> vector<1x64xf32>
    %75 = vector.broadcast %74 : vector<1x64xf32> to vector<64x64xf32>
    %76 = arith.mulf %64, %75 : vector<64x64xf32>
    %c0_65 = arith.constant 0 : index
    %c0_66 = arith.constant 0 : index
    %77 = vector.load %arg5[%c0_65, %c0_66] : memref<1x64xf32, #tpu.memory_space<vmem>>, vector<1x64xf32>
    %78 = vector.broadcast %77 : vector<1x64xf32> to vector<64x64xf32>
    %79 = arith.mulf %76, %78 : vector<64x64xf32>
    %c0_67 = arith.constant 0 : index
    %c0_68 = arith.constant 0 : index
    %80 = vector.load %arg6[%c0_67, %c0_68] : memref<1x64xf32, #tpu.memory_space<vmem>>, vector<1x64xf32>
    %81 = vector.broadcast %80 : vector<1x64xf32> to vector<64x64xf32>
    %82 = arith.addf %79, %81 : vector<64x64xf32>
    %cst_69 = arith.constant 0.000000e+00 : f32
    %83 = vector.broadcast %cst_69 : f32 to vector<64x64xf32>
    %84 = arith.maximumf %82, %83 : vector<64x64xf32>
    %85 = arith.truncf %84 : vector<64x64xf32> to vector<64x64xbf16>
    %c0_70 = arith.constant 0 : index
    %c0_71 = arith.constant 0 : index
    %c0_72 = arith.constant 0 : index
    %86 = vector.load %arg7[%c0_70, %c0_71, %c0_72] : memref<1x64x64xbf16, #tpu.memory_space<vmem>>, vector<1x64x64xbf16>
    %87 = vector.shape_cast %86 : vector<1x64x64xbf16> to vector<64x64xbf16>
    %88 = vector.shape_cast %85 : vector<64x64xbf16> to vector<1x64x64xbf16>
    tpu.vector_store %arg7[%c0_70, %c0_71, %c0_72], %88 {strides = array<i32>} : memref<1x64x64xbf16, #tpu.memory_space<vmem>>, vector<1x64x64xbf16>,
    return
  }
  func.func @transform_0(%arg0: i32) -> (i32, i32, i32, i32) {
    %c0_i32 = arith.constant 0 : i32
    %c0_i32_0 = arith.constant 0 : i32
    %c0_i32_1 = arith.constant 0 : i32
    %c0_i32_2 = arith.constant 0 : i32
    return %arg0, %c0_i32, %c0_i32_0, %c0_i32_1 : i32, i32, i32, i32
  }
  func.func @transform_1(%arg0: i32) -> (i32, i32) {
    %c0_i32 = arith.constant 0 : i32
    %c0_i32_0 = arith.constant 0 : i32
    %c0_i32_1 = arith.constant 0 : i32
    return %c0_i32, %c0_i32_0 : i32, i32
  }
  func.func @transform_2(%arg0: i32) -> (i32, i32) {
    %c0_i32 = arith.constant 0 : i32
    %c0_i32_0 = arith.constant 0 : i32
    %c0_i32_1 = arith.constant 0 : i32
    return %c0_i32, %c0_i32_0 : i32, i32
  }
  func.func @transform_3(%arg0: i32) -> (i32, i32) {
    %c0_i32 = arith.constant 0 : i32
    %c0_i32_0 = arith.constant 0 : i32
    %c0_i32_1 = arith.constant 0 : i32
    return %c0_i32, %c0_i32_0 : i32, i32
  }
  func.func @transform_4(%arg0: i32) -> (i32, i32) {
    %c0_i32 = arith.constant 0 : i32
    %c0_i32_0 = arith.constant 0 : i32
    %c0_i32_1 = arith.constant 0 : i32
    return %c0_i32, %c0_i32_0 : i32, i32
  }
  func.func @transform_5(%arg0: i32) -> (i32, i32) {
    %c0_i32 = arith.constant 0 : i32
    %c0_i32_0 = arith.constant 0 : i32
    %c0_i32_1 = arith.constant 0 : i32
    return %c0_i32, %c0_i32_0 : i32, i32
  }
  func.func @transform_6(%arg0: i32) -> (i32, i32, i32) {
    %c0_i32 = arith.constant 0 : i32
    %c0_i32_0 = arith.constant 0 : i32
    %c0_i32_1 = arith.constant 0 : i32
    return %arg0, %c0_i32, %c0_i32_0 : i32, i32, i32
  }
}

module attributes {stable_mosaic.version = 11 : i64} {
  func.func @_ws_conv_gn_kernel(%arg0: i32, %arg1: memref<4x8x8x32xbf16, #tpu.memory_space<vmem>>, %arg2: memref<32x64xbf16, #tpu.memory_space<vmem>>, %arg3: memref<64x32xf32, #tpu.memory_space<vmem>>, %arg4: memref<32x64xf32, #tpu.memory_space<vmem>>, %arg5: memref<1x64xf32, #tpu.memory_space<vmem>>, %arg6: memref<1x64xf32, #tpu.memory_space<vmem>>, %arg7: memref<1x64x64xbf16, #tpu.memory_space<vmem>>) attributes {dimension_semantics = [#tpu.dimension_semantics<parallel>], iteration_bounds = array<i64: 2>, scalar_prefetch = 0 : i64, scratch_operands = 0 : i64, tpu.core_type = #tpu.core_type<tc>, window_params = [{transform_indices = @transform_0, window_bounds = array<i64: 4, 8, 8, 32>}, {pipeline_mode = #tpu.pipeline_mode<synchronous>, transform_indices = @transform_1, window_bounds = array<i64: 32, 64>}, {pipeline_mode = #tpu.pipeline_mode<synchronous>, transform_indices = @transform_2, window_bounds = array<i64: 64, 32>}, {pipeline_mode = #tpu.pipeline_mode<synchronous>, transform_indices = @transform_3, window_bounds = array<i64: 32, 64>}, {pipeline_mode = #tpu.pipeline_mode<synchronous>, transform_indices = @transform_4, window_bounds = array<i64: 1, 64>}, {pipeline_mode = #tpu.pipeline_mode<synchronous>, transform_indices = @transform_5, window_bounds = array<i64: 1, 64>}, {transform_indices = @transform_6, window_bounds = array<i64: 1, 64, 64>}]} {
    %cst = arith.constant 0.000000e+00 : f32
    %0 = vector.broadcast %cst : f32 to vector<64x64xf32>
    %c0 = arith.constant 0 : index
    %c0_0 = arith.constant 0 : index
    %c0_1 = arith.constant 0 : index
    %c0_2 = arith.constant 0 : index
    %1 = vector.load %arg1[%c0, %c0_0, %c0_1, %c0_2] : memref<4x8x8x32xbf16, #tpu.memory_space<vmem>>, vector<1x8x8x32xbf16>
    %2 = vector.shape_cast %1 : vector<1x8x8x32xbf16> to vector<8x8x32xbf16>
    %3 = vector.shape_cast %2 : vector<8x8x32xbf16> to vector<64x32xbf16>
    %c0_3 = arith.constant 0 : index
    %c0_4 = arith.constant 0 : index
    %4 = vector.load %arg2[%c0_3, %c0_4] : memref<32x64xbf16, #tpu.memory_space<vmem>>, vector<32x64xbf16>
    %cst_5 = arith.constant dense<0.000000e+00> : vector<64x64xf32>
    %5 = tpu.matmul %3, %4, %cst_5 {dimension_numbers = #tpu.dot_dimension_numbers<[1], [0], [0], [1], [0, 0, 1, 1], [], []>} : vector<64x32xbf16>, vector<32x64xbf16>, vector<64x64xf32> -> vector<64x64xf32>
    %6 = arith.addf %0, %5 : vector<64x64xf32>
    %c0_6 = arith.constant 0 : index
    %c0_7 = arith.constant 0 : index
    %7 = vector.load %arg3[%c0_6, %c0_7] : memref<64x32xf32, #tpu.memory_space<vmem>>, vector<64x32xf32>
    %c0_8 = arith.constant 0 : index
    %c0_9 = arith.constant 0 : index
    %8 = vector.load %arg4[%c0_8, %c0_9] : memref<32x64xf32, #tpu.memory_space<vmem>>, vector<32x64xf32>
    %cst_10 = arith.constant dense<0.000000e+00> : vector<64xf32>
    %9 = vector.multi_reduction <add>, %6, %cst_10 [0] : vector<64x64xf32> to vector<64xf32>
    %10 = vector.shape_cast %9 : vector<64xf32> to vector<1x64xf32>
    %cst_11 = arith.constant dense<0.000000e+00> : vector<1x32xf32>
    %11 = tpu.matmul %10, %7, %cst_11 {dimension_numbers = #tpu.dot_dimension_numbers<[1], [0], [0], [1], [0, 0, 1, 1], [], []>} : vector<1x64xf32>, vector<64x32xf32>, vector<1x32xf32> -> vector<1x32xf32>
    %cst_12 = arith.constant 7.812500e-03 : f32
    %12 = vector.broadcast %cst_12 : f32 to vector<1x32xf32>
    %13 = arith.mulf %11, %12 : vector<1x32xf32>
    %cst_13 = arith.constant dense<0.000000e+00> : vector<1x64xf32>
    %14 = tpu.matmul %13, %8, %cst_13 {dimension_numbers = #tpu.dot_dimension_numbers<[1], [0], [0], [1], [0, 0, 1, 1], [], []>} : vector<1x32xf32>, vector<32x64xf32>, vector<1x64xf32> -> vector<1x64xf32>
    %15 = vector.broadcast %14 : vector<1x64xf32> to vector<64x64xf32>
    %16 = arith.subf %6, %15 : vector<64x64xf32>
    %17 = arith.mulf %16, %16 : vector<64x64xf32>
    %cst_14 = arith.constant dense<0.000000e+00> : vector<64xf32>
    %18 = vector.multi_reduction <add>, %17, %cst_14 [0] : vector<64x64xf32> to vector<64xf32>
    %19 = vector.shape_cast %18 : vector<64xf32> to vector<1x64xf32>
    %cst_15 = arith.constant dense<0.000000e+00> : vector<1x32xf32>
    %20 = tpu.matmul %19, %7, %cst_15 {dimension_numbers = #tpu.dot_dimension_numbers<[1], [0], [0], [1], [0, 0, 1, 1], [], []>} : vector<1x64xf32>, vector<64x32xf32>, vector<1x32xf32> -> vector<1x32xf32>
    %cst_16 = arith.constant 7.812500e-03 : f32
    %21 = vector.broadcast %cst_16 : f32 to vector<1x32xf32>
    %22 = arith.mulf %20, %21 : vector<1x32xf32>
    %cst_17 = arith.constant 9.99999974E-6 : f32
    %23 = vector.broadcast %cst_17 : f32 to vector<1x32xf32>
    %24 = arith.addf %22, %23 : vector<1x32xf32>
    %25 = math.rsqrt %24 : vector<1x32xf32>
    %cst_18 = arith.constant dense<0.000000e+00> : vector<1x64xf32>
    %26 = tpu.matmul %25, %8, %cst_18 {dimension_numbers = #tpu.dot_dimension_numbers<[1], [0], [0], [1], [0, 0, 1, 1], [], []>} : vector<1x32xf32>, vector<32x64xf32>, vector<1x64xf32> -> vector<1x64xf32>
    %27 = vector.broadcast %26 : vector<1x64xf32> to vector<64x64xf32>
    %28 = arith.mulf %16, %27 : vector<64x64xf32>
    %c0_19 = arith.constant 0 : index
    %c0_20 = arith.constant 0 : index
    %29 = vector.load %arg5[%c0_19, %c0_20] : memref<1x64xf32, #tpu.memory_space<vmem>>, vector<1x64xf32>
    %30 = vector.broadcast %29 : vector<1x64xf32> to vector<64x64xf32>
    %31 = arith.mulf %28, %30 : vector<64x64xf32>
    %c0_21 = arith.constant 0 : index
    %c0_22 = arith.constant 0 : index
    %32 = vector.load %arg6[%c0_21, %c0_22] : memref<1x64xf32, #tpu.memory_space<vmem>>, vector<1x64xf32>
    %33 = vector.broadcast %32 : vector<1x64xf32> to vector<64x64xf32>
    %34 = arith.addf %31, %33 : vector<64x64xf32>
    %35 = arith.truncf %34 : vector<64x64xf32> to vector<64x64xbf16>
    %c0_23 = arith.constant 0 : index
    %c0_24 = arith.constant 0 : index
    %c0_25 = arith.constant 0 : index
    %36 = vector.load %arg7[%c0_23, %c0_24, %c0_25] : memref<1x64x64xbf16, #tpu.memory_space<vmem>>, vector<1x64x64xbf16>
    %37 = vector.shape_cast %36 : vector<1x64x64xbf16> to vector<64x64xbf16>
    %38 = vector.shape_cast %35 : vector<64x64xbf16> to vector<1x64x64xbf16>
    tpu.vector_store %arg7[%c0_23, %c0_24, %c0_25], %38 {strides = array<i32>} : memref<1x64x64xbf16, #tpu.memory_space<vmem>>, vector<1x64x64xbf16>,
    return
  }
  func.func @transform_0(%arg0: i32) -> (i32, i32, i32, i32) {
    %c0_i32 = arith.constant 0 : i32
    %c0_i32_0 = arith.constant 0 : i32
    %c0_i32_1 = arith.constant 0 : i32
    %c0_i32_2 = arith.constant 0 : i32
    return %arg0, %c0_i32, %c0_i32_0, %c0_i32_1 : i32, i32, i32, i32
  }
  func.func @transform_1(%arg0: i32) -> (i32, i32) {
    %c0_i32 = arith.constant 0 : i32
    %c0_i32_0 = arith.constant 0 : i32
    %c0_i32_1 = arith.constant 0 : i32
    return %c0_i32, %c0_i32_0 : i32, i32
  }
  func.func @transform_2(%arg0: i32) -> (i32, i32) {
    %c0_i32 = arith.constant 0 : i32
    %c0_i32_0 = arith.constant 0 : i32
    %c0_i32_1 = arith.constant 0 : i32
    return %c0_i32, %c0_i32_0 : i32, i32
  }
  func.func @transform_3(%arg0: i32) -> (i32, i32) {
    %c0_i32 = arith.constant 0 : i32
    %c0_i32_0 = arith.constant 0 : i32
    %c0_i32_1 = arith.constant 0 : i32
    return %c0_i32, %c0_i32_0 : i32, i32
  }
  func.func @transform_4(%arg0: i32) -> (i32, i32) {
    %c0_i32 = arith.constant 0 : i32
    %c0_i32_0 = arith.constant 0 : i32
    %c0_i32_1 = arith.constant 0 : i32
    return %c0_i32, %c0_i32_0 : i32, i32
  }
  func.func @transform_5(%arg0: i32) -> (i32, i32) {
    %c0_i32 = arith.constant 0 : i32
    %c0_i32_0 = arith.constant 0 : i32
    %c0_i32_1 = arith.constant 0 : i32
    return %c0_i32, %c0_i32_0 : i32, i32
  }
  func.func @transform_6(%arg0: i32) -> (i32, i32, i32) {
    %c0_i32 = arith.constant 0 : i32
    %c0_i32_0 = arith.constant 0 : i32
    %c0_i32_1 = arith.constant 0 : i32
    return %arg0, %c0_i32, %c0_i32_0 : i32, i32, i32
  }
}

module attributes {stable_mosaic.version = 11 : i64} {
  func.func @_ws_conv_gn_kernel(%arg0: i32, %arg1: memref<1x10x10x64xbf16, #tpu.memory_space<vmem>>, %arg2: memref<576x64xbf16, #tpu.memory_space<vmem>>, %arg3: memref<64x32xf32, #tpu.memory_space<vmem>>, %arg4: memref<32x64xf32, #tpu.memory_space<vmem>>, %arg5: memref<1x64xf32, #tpu.memory_space<vmem>>, %arg6: memref<1x64xf32, #tpu.memory_space<vmem>>, %arg7: memref<1x64x64xbf16, #tpu.memory_space<vmem>>, %arg8: memref<1x64x64xbf16, #tpu.memory_space<vmem>>) attributes {dimension_semantics = [#tpu.dimension_semantics<parallel>], iteration_bounds = array<i64: 2>, scalar_prefetch = 0 : i64, scratch_operands = 0 : i64, tpu.core_type = #tpu.core_type<tc>, window_params = [{transform_indices = @transform_0, window_bounds = array<i64: 1, 10, 10, 64>}, {pipeline_mode = #tpu.pipeline_mode<synchronous>, transform_indices = @transform_1, window_bounds = array<i64: 576, 64>}, {pipeline_mode = #tpu.pipeline_mode<synchronous>, transform_indices = @transform_2, window_bounds = array<i64: 64, 32>}, {pipeline_mode = #tpu.pipeline_mode<synchronous>, transform_indices = @transform_3, window_bounds = array<i64: 32, 64>}, {pipeline_mode = #tpu.pipeline_mode<synchronous>, transform_indices = @transform_4, window_bounds = array<i64: 1, 64>}, {pipeline_mode = #tpu.pipeline_mode<synchronous>, transform_indices = @transform_5, window_bounds = array<i64: 1, 64>}, {transform_indices = @transform_6, window_bounds = array<i64: 1, 64, 64>}, {transform_indices = @transform_7, window_bounds = array<i64: 1, 64, 64>}]} {
    %cst = arith.constant 0.000000e+00 : f32
    %0 = vector.broadcast %cst : f32 to vector<64x64xf32>
    %c0 = arith.constant 0 : index
    %c0_0 = arith.constant 0 : index
    %c0_1 = arith.constant 0 : index
    %c0_2 = arith.constant 0 : index
    %1 = vector.load %arg1[%c0, %c0_0, %c0_1, %c0_2] : memref<1x10x10x64xbf16, #tpu.memory_space<vmem>>, vector<1x8x8x64xbf16>
    %2 = vector.shape_cast %1 : vector<1x8x8x64xbf16> to vector<8x8x64xbf16>
    %3 = vector.shape_cast %2 : vector<8x8x64xbf16> to vector<64x64xbf16>
    %c0_3 = arith.constant 0 : index
    %c0_4 = arith.constant 0 : index
    %4 = vector.load %arg2[%c0_3, %c0_4] : memref<576x64xbf16, #tpu.memory_space<vmem>>, vector<64x64xbf16>
    %cst_5 = arith.constant dense<0.000000e+00> : vector<64x64xf32>
    %5 = tpu.matmul %3, %4, %cst_5 {dimension_numbers = #tpu.dot_dimension_numbers<[1], [0], [0], [1], [0, 0, 1, 1], [], []>} : vector<64x64xbf16>, vector<64x64xbf16>, vector<64x64xf32> -> vector<64x64xf32>
    %6 = arith.addf %0, %5 : vector<64x64xf32>
    %c0_6 = arith.constant 0 : index
    %c0_7 = arith.constant 0 : index
    %c1 = arith.constant 1 : index
    %c0_8 = arith.constant 0 : index
    %7 = vector.load %arg1[%c0_6, %c0_7, %c1, %c0_8] : memref<1x10x10x64xbf16, #tpu.memory_space<vmem>>, vector<1x8x8x64xbf16>
    %8 = vector.shape_cast %7 : vector<1x8x8x64xbf16> to vector<8x8x64xbf16>
    %9 = vector.shape_cast %8 : vector<8x8x64xbf16> to vector<64x64xbf16>
    %c64 = arith.constant 64 : index
    %c0_9 = arith.constant 0 : index
    %10 = vector.load %arg2[%c64, %c0_9] : memref<576x64xbf16, #tpu.memory_space<vmem>>, vector<64x64xbf16>
    %cst_10 = arith.constant dense<0.000000e+00> : vector<64x64xf32>
    %11 = tpu.matmul %9, %10, %cst_10 {dimension_numbers = #tpu.dot_dimension_numbers<[1], [0], [0], [1], [0, 0, 1, 1], [], []>} : vector<64x64xbf16>, vector<64x64xbf16>, vector<64x64xf32> -> vector<64x64xf32>
    %12 = arith.addf %6, %11 : vector<64x64xf32>
    %c0_11 = arith.constant 0 : index
    %c0_12 = arith.constant 0 : index
    %c2 = arith.constant 2 : index
    %c0_13 = arith.constant 0 : index
    %13 = vector.load %arg1[%c0_11, %c0_12, %c2, %c0_13] : memref<1x10x10x64xbf16, #tpu.memory_space<vmem>>, vector<1x8x8x64xbf16>
    %14 = vector.shape_cast %13 : vector<1x8x8x64xbf16> to vector<8x8x64xbf16>
    %15 = vector.shape_cast %14 : vector<8x8x64xbf16> to vector<64x64xbf16>
    %c128 = arith.constant 128 : index
    %c0_14 = arith.constant 0 : index
    %16 = vector.load %arg2[%c128, %c0_14] : memref<576x64xbf16, #tpu.memory_space<vmem>>, vector<64x64xbf16>
    %cst_15 = arith.constant dense<0.000000e+00> : vector<64x64xf32>
    %17 = tpu.matmul %15, %16, %cst_15 {dimension_numbers = #tpu.dot_dimension_numbers<[1], [0], [0], [1], [0, 0, 1, 1], [], []>} : vector<64x64xbf16>, vector<64x64xbf16>, vector<64x64xf32> -> vector<64x64xf32>
    %18 = arith.addf %12, %17 : vector<64x64xf32>
    %c0_16 = arith.constant 0 : index
    %c1_17 = arith.constant 1 : index
    %c0_18 = arith.constant 0 : index
    %c0_19 = arith.constant 0 : index
    %19 = vector.load %arg1[%c0_16, %c1_17, %c0_18, %c0_19] : memref<1x10x10x64xbf16, #tpu.memory_space<vmem>>, vector<1x8x8x64xbf16>
    %20 = vector.shape_cast %19 : vector<1x8x8x64xbf16> to vector<8x8x64xbf16>
    %21 = vector.shape_cast %20 : vector<8x8x64xbf16> to vector<64x64xbf16>
    %c192 = arith.constant 192 : index
    %c0_20 = arith.constant 0 : index
    %22 = vector.load %arg2[%c192, %c0_20] : memref<576x64xbf16, #tpu.memory_space<vmem>>, vector<64x64xbf16>
    %cst_21 = arith.constant dense<0.000000e+00> : vector<64x64xf32>
    %23 = tpu.matmul %21, %22, %cst_21 {dimension_numbers = #tpu.dot_dimension_numbers<[1], [0], [0], [1], [0, 0, 1, 1], [], []>} : vector<64x64xbf16>, vector<64x64xbf16>, vector<64x64xf32> -> vector<64x64xf32>
    %24 = arith.addf %18, %23 : vector<64x64xf32>
    %c0_22 = arith.constant 0 : index
    %c1_23 = arith.constant 1 : index
    %c1_24 = arith.constant 1 : index
    %c0_25 = arith.constant 0 : index
    %25 = vector.load %arg1[%c0_22, %c1_23, %c1_24, %c0_25] : memref<1x10x10x64xbf16, #tpu.memory_space<vmem>>, vector<1x8x8x64xbf16>
    %26 = vector.shape_cast %25 : vector<1x8x8x64xbf16> to vector<8x8x64xbf16>
    %27 = vector.shape_cast %26 : vector<8x8x64xbf16> to vector<64x64xbf16>
    %c256 = arith.constant 256 : index
    %c0_26 = arith.constant 0 : index
    %28 = vector.load %arg2[%c256, %c0_26] : memref<576x64xbf16, #tpu.memory_space<vmem>>, vector<64x64xbf16>
    %cst_27 = arith.constant dense<0.000000e+00> : vector<64x64xf32>
    %29 = tpu.matmul %27, %28, %cst_27 {dimension_numbers = #tpu.dot_dimension_numbers<[1], [0], [0], [1], [0, 0, 1, 1], [], []>} : vector<64x64xbf16>, vector<64x64xbf16>, vector<64x64xf32> -> vector<64x64xf32>
    %30 = arith.addf %24, %29 : vector<64x64xf32>
    %c0_28 = arith.constant 0 : index
    %c1_29 = arith.constant 1 : index
    %c2_30 = arith.constant 2 : index
    %c0_31 = arith.constant 0 : index
    %31 = vector.load %arg1[%c0_28, %c1_29, %c2_30, %c0_31] : memref<1x10x10x64xbf16, #tpu.memory_space<vmem>>, vector<1x8x8x64xbf16>
    %32 = vector.shape_cast %31 : vector<1x8x8x64xbf16> to vector<8x8x64xbf16>
    %33 = vector.shape_cast %32 : vector<8x8x64xbf16> to vector<64x64xbf16>
    %c320 = arith.constant 320 : index
    %c0_32 = arith.constant 0 : index
    %34 = vector.load %arg2[%c320, %c0_32] : memref<576x64xbf16, #tpu.memory_space<vmem>>, vector<64x64xbf16>
    %cst_33 = arith.constant dense<0.000000e+00> : vector<64x64xf32>
    %35 = tpu.matmul %33, %34, %cst_33 {dimension_numbers = #tpu.dot_dimension_numbers<[1], [0], [0], [1], [0, 0, 1, 1], [], []>} : vector<64x64xbf16>, vector<64x64xbf16>, vector<64x64xf32> -> vector<64x64xf32>
    %36 = arith.addf %30, %35 : vector<64x64xf32>
    %c0_34 = arith.constant 0 : index
    %c2_35 = arith.constant 2 : index
    %c0_36 = arith.constant 0 : index
    %c0_37 = arith.constant 0 : index
    %37 = vector.load %arg1[%c0_34, %c2_35, %c0_36, %c0_37] : memref<1x10x10x64xbf16, #tpu.memory_space<vmem>>, vector<1x8x8x64xbf16>
    %38 = vector.shape_cast %37 : vector<1x8x8x64xbf16> to vector<8x8x64xbf16>
    %39 = vector.shape_cast %38 : vector<8x8x64xbf16> to vector<64x64xbf16>
    %c384 = arith.constant 384 : index
    %c0_38 = arith.constant 0 : index
    %40 = vector.load %arg2[%c384, %c0_38] : memref<576x64xbf16, #tpu.memory_space<vmem>>, vector<64x64xbf16>
    %cst_39 = arith.constant dense<0.000000e+00> : vector<64x64xf32>
    %41 = tpu.matmul %39, %40, %cst_39 {dimension_numbers = #tpu.dot_dimension_numbers<[1], [0], [0], [1], [0, 0, 1, 1], [], []>} : vector<64x64xbf16>, vector<64x64xbf16>, vector<64x64xf32> -> vector<64x64xf32>
    %42 = arith.addf %36, %41 : vector<64x64xf32>
    %c0_40 = arith.constant 0 : index
    %c2_41 = arith.constant 2 : index
    %c1_42 = arith.constant 1 : index
    %c0_43 = arith.constant 0 : index
    %43 = vector.load %arg1[%c0_40, %c2_41, %c1_42, %c0_43] : memref<1x10x10x64xbf16, #tpu.memory_space<vmem>>, vector<1x8x8x64xbf16>
    %44 = vector.shape_cast %43 : vector<1x8x8x64xbf16> to vector<8x8x64xbf16>
    %45 = vector.shape_cast %44 : vector<8x8x64xbf16> to vector<64x64xbf16>
    %c448 = arith.constant 448 : index
    %c0_44 = arith.constant 0 : index
    %46 = vector.load %arg2[%c448, %c0_44] : memref<576x64xbf16, #tpu.memory_space<vmem>>, vector<64x64xbf16>
    %cst_45 = arith.constant dense<0.000000e+00> : vector<64x64xf32>
    %47 = tpu.matmul %45, %46, %cst_45 {dimension_numbers = #tpu.dot_dimension_numbers<[1], [0], [0], [1], [0, 0, 1, 1], [], []>} : vector<64x64xbf16>, vector<64x64xbf16>, vector<64x64xf32> -> vector<64x64xf32>
    %48 = arith.addf %42, %47 : vector<64x64xf32>
    %c0_46 = arith.constant 0 : index
    %c2_47 = arith.constant 2 : index
    %c2_48 = arith.constant 2 : index
    %c0_49 = arith.constant 0 : index
    %49 = vector.load %arg1[%c0_46, %c2_47, %c2_48, %c0_49] : memref<1x10x10x64xbf16, #tpu.memory_space<vmem>>, vector<1x8x8x64xbf16>
    %50 = vector.shape_cast %49 : vector<1x8x8x64xbf16> to vector<8x8x64xbf16>
    %51 = vector.shape_cast %50 : vector<8x8x64xbf16> to vector<64x64xbf16>
    %c512 = arith.constant 512 : index
    %c0_50 = arith.constant 0 : index
    %52 = vector.load %arg2[%c512, %c0_50] : memref<576x64xbf16, #tpu.memory_space<vmem>>, vector<64x64xbf16>
    %cst_51 = arith.constant dense<0.000000e+00> : vector<64x64xf32>
    %53 = tpu.matmul %51, %52, %cst_51 {dimension_numbers = #tpu.dot_dimension_numbers<[1], [0], [0], [1], [0, 0, 1, 1], [], []>} : vector<64x64xbf16>, vector<64x64xbf16>, vector<64x64xf32> -> vector<64x64xf32>
    %54 = arith.addf %48, %53 : vector<64x64xf32>
    %c0_52 = arith.constant 0 : index
    %c0_53 = arith.constant 0 : index
    %55 = vector.load %arg3[%c0_52, %c0_53] : memref<64x32xf32, #tpu.memory_space<vmem>>, vector<64x32xf32>
    %c0_54 = arith.constant 0 : index
    %c0_55 = arith.constant 0 : index
    %56 = vector.load %arg4[%c0_54, %c0_55] : memref<32x64xf32, #tpu.memory_space<vmem>>, vector<32x64xf32>
    %cst_56 = arith.constant dense<0.000000e+00> : vector<64xf32>
    %57 = vector.multi_reduction <add>, %54, %cst_56 [0] : vector<64x64xf32> to vector<64xf32>
    %58 = vector.shape_cast %57 : vector<64xf32> to vector<1x64xf32>
    %cst_57 = arith.constant dense<0.000000e+00> : vector<1x32xf32>
    %59 = tpu.matmul %58, %55, %cst_57 {dimension_numbers = #tpu.dot_dimension_numbers<[1], [0], [0], [1], [0, 0, 1, 1], [], []>} : vector<1x64xf32>, vector<64x32xf32>, vector<1x32xf32> -> vector<1x32xf32>
    %cst_58 = arith.constant 7.812500e-03 : f32
    %60 = vector.broadcast %cst_58 : f32 to vector<1x32xf32>
    %61 = arith.mulf %59, %60 : vector<1x32xf32>
    %cst_59 = arith.constant dense<0.000000e+00> : vector<1x64xf32>
    %62 = tpu.matmul %61, %56, %cst_59 {dimension_numbers = #tpu.dot_dimension_numbers<[1], [0], [0], [1], [0, 0, 1, 1], [], []>} : vector<1x32xf32>, vector<32x64xf32>, vector<1x64xf32> -> vector<1x64xf32>
    %63 = vector.broadcast %62 : vector<1x64xf32> to vector<64x64xf32>
    %64 = arith.subf %54, %63 : vector<64x64xf32>
    %65 = arith.mulf %64, %64 : vector<64x64xf32>
    %cst_60 = arith.constant dense<0.000000e+00> : vector<64xf32>
    %66 = vector.multi_reduction <add>, %65, %cst_60 [0] : vector<64x64xf32> to vector<64xf32>
    %67 = vector.shape_cast %66 : vector<64xf32> to vector<1x64xf32>
    %cst_61 = arith.constant dense<0.000000e+00> : vector<1x32xf32>
    %68 = tpu.matmul %67, %55, %cst_61 {dimension_numbers = #tpu.dot_dimension_numbers<[1], [0], [0], [1], [0, 0, 1, 1], [], []>} : vector<1x64xf32>, vector<64x32xf32>, vector<1x32xf32> -> vector<1x32xf32>
    %cst_62 = arith.constant 7.812500e-03 : f32
    %69 = vector.broadcast %cst_62 : f32 to vector<1x32xf32>
    %70 = arith.mulf %68, %69 : vector<1x32xf32>
    %cst_63 = arith.constant 9.99999974E-6 : f32
    %71 = vector.broadcast %cst_63 : f32 to vector<1x32xf32>
    %72 = arith.addf %70, %71 : vector<1x32xf32>
    %73 = math.rsqrt %72 : vector<1x32xf32>
    %cst_64 = arith.constant dense<0.000000e+00> : vector<1x64xf32>
    %74 = tpu.matmul %73, %56, %cst_64 {dimension_numbers = #tpu.dot_dimension_numbers<[1], [0], [0], [1], [0, 0, 1, 1], [], []>} : vector<1x32xf32>, vector<32x64xf32>, vector<1x64xf32> -> vector<1x64xf32>
    %75 = vector.broadcast %74 : vector<1x64xf32> to vector<64x64xf32>
    %76 = arith.mulf %64, %75 : vector<64x64xf32>
    %c0_65 = arith.constant 0 : index
    %c0_66 = arith.constant 0 : index
    %77 = vector.load %arg5[%c0_65, %c0_66] : memref<1x64xf32, #tpu.memory_space<vmem>>, vector<1x64xf32>
    %78 = vector.broadcast %77 : vector<1x64xf32> to vector<64x64xf32>
    %79 = arith.mulf %76, %78 : vector<64x64xf32>
    %c0_67 = arith.constant 0 : index
    %c0_68 = arith.constant 0 : index
    %80 = vector.load %arg6[%c0_67, %c0_68] : memref<1x64xf32, #tpu.memory_space<vmem>>, vector<1x64xf32>
    %81 = vector.broadcast %80 : vector<1x64xf32> to vector<64x64xf32>
    %82 = arith.addf %79, %81 : vector<64x64xf32>
    %c0_69 = arith.constant 0 : index
    %c0_70 = arith.constant 0 : index
    %c0_71 = arith.constant 0 : index
    %83 = vector.load %arg7[%c0_69, %c0_70, %c0_71] : memref<1x64x64xbf16, #tpu.memory_space<vmem>>, vector<1x64x64xbf16>
    %84 = vector.shape_cast %83 : vector<1x64x64xbf16> to vector<64x64xbf16>
    %85 = arith.extf %84 : vector<64x64xbf16> to vector<64x64xf32>
    %86 = arith.addf %82, %85 : vector<64x64xf32>
    %cst_72 = arith.constant 0.000000e+00 : f32
    %87 = vector.broadcast %cst_72 : f32 to vector<64x64xf32>
    %88 = arith.maximumf %86, %87 : vector<64x64xf32>
    %89 = arith.truncf %88 : vector<64x64xf32> to vector<64x64xbf16>
    %c0_73 = arith.constant 0 : index
    %c0_74 = arith.constant 0 : index
    %c0_75 = arith.constant 0 : index
    %90 = vector.load %arg8[%c0_73, %c0_74, %c0_75] : memref<1x64x64xbf16, #tpu.memory_space<vmem>>, vector<1x64x64xbf16>
    %91 = vector.shape_cast %90 : vector<1x64x64xbf16> to vector<64x64xbf16>
    %92 = vector.shape_cast %89 : vector<64x64xbf16> to vector<1x64x64xbf16>
    tpu.vector_store %arg8[%c0_73, %c0_74, %c0_75], %92 {strides = array<i32>} : memref<1x64x64xbf16, #tpu.memory_space<vmem>>, vector<1x64x64xbf16>,
    return
  }
  func.func @transform_0(%arg0: i32) -> (i32, i32, i32, i32) {
    %c0_i32 = arith.constant 0 : i32
    %c0_i32_0 = arith.constant 0 : i32
    %c0_i32_1 = arith.constant 0 : i32
    %c0_i32_2 = arith.constant 0 : i32
    return %arg0, %c0_i32, %c0_i32_0, %c0_i32_1 : i32, i32, i32, i32
  }
  func.func @transform_1(%arg0: i32) -> (i32, i32) {
    %c0_i32 = arith.constant 0 : i32
    %c0_i32_0 = arith.constant 0 : i32
    %c0_i32_1 = arith.constant 0 : i32
    return %c0_i32, %c0_i32_0 : i32, i32
  }
  func.func @transform_2(%arg0: i32) -> (i32, i32) {
    %c0_i32 = arith.constant 0 : i32
    %c0_i32_0 = arith.constant 0 : i32
    %c0_i32_1 = arith.constant 0 : i32
    return %c0_i32, %c0_i32_0 : i32, i32
  }
  func.func @transform_3(%arg0: i32) -> (i32, i32) {
    %c0_i32 = arith.constant 0 : i32
    %c0_i32_0 = arith.constant 0 : i32
    %c0_i32_1 = arith.constant 0 : i32
    return %c0_i32, %c0_i32_0 : i32, i32
  }
  func.func @transform_4(%arg0: i32) -> (i32, i32) {
    %c0_i32 = arith.constant 0 : i32
    %c0_i32_0 = arith.constant 0 : i32
    %c0_i32_1 = arith.constant 0 : i32
    return %c0_i32, %c0_i32_0 : i32, i32
  }
  func.func @transform_5(%arg0: i32) -> (i32, i32) {
    %c0_i32 = arith.constant 0 : i32
    %c0_i32_0 = arith.constant 0 : i32
    %c0_i32_1 = arith.constant 0 : i32
    return %c0_i32, %c0_i32_0 : i32, i32
  }
  func.func @transform_6(%arg0: i32) -> (i32, i32, i32) {
    %c0_i32 = arith.constant 0 : i32
    %c0_i32_0 = arith.constant 0 : i32
    %c0_i32_1 = arith.constant 0 : i32
    return %arg0, %c0_i32, %c0_i32_0 : i32, i32, i32
  }
  func.func @transform_7(%arg0: i32) -> (i32, i32, i32) {
    %c0_i32 = arith.constant 0 : i32
    %c0_i32_0 = arith.constant 0 : i32
    %c0_i32_1 = arith.constant 0 : i32
    return %arg0, %c0_i32, %c0_i32_0 : i32, i32, i32
  }
}

module attributes {stable_mosaic.version = 11 : i64} {
  func.func @_ws_conv_gn_kernel(%arg0: i32, %arg1: memref<1x10x10x64xbf16, #tpu.memory_space<vmem>>, %arg2: memref<576x64xbf16, #tpu.memory_space<vmem>>, %arg3: memref<64x32xf32, #tpu.memory_space<vmem>>, %arg4: memref<32x64xf32, #tpu.memory_space<vmem>>, %arg5: memref<1x64xf32, #tpu.memory_space<vmem>>, %arg6: memref<1x64xf32, #tpu.memory_space<vmem>>, %arg7: memref<1x64x64xbf16, #tpu.memory_space<vmem>>, %arg8: memref<1x64x64xf32, #tpu.memory_space<vmem>>) attributes {dimension_semantics = [#tpu.dimension_semantics<parallel>], iteration_bounds = array<i64: 2>, scalar_prefetch = 0 : i64, scratch_operands = 0 : i64, tpu.core_type = #tpu.core_type<tc>, window_params = [{transform_indices = @transform_0, window_bounds = array<i64: 1, 10, 10, 64>}, {pipeline_mode = #tpu.pipeline_mode<synchronous>, transform_indices = @transform_1, window_bounds = array<i64: 576, 64>}, {pipeline_mode = #tpu.pipeline_mode<synchronous>, transform_indices = @transform_2, window_bounds = array<i64: 64, 32>}, {pipeline_mode = #tpu.pipeline_mode<synchronous>, transform_indices = @transform_3, window_bounds = array<i64: 32, 64>}, {pipeline_mode = #tpu.pipeline_mode<synchronous>, transform_indices = @transform_4, window_bounds = array<i64: 1, 64>}, {pipeline_mode = #tpu.pipeline_mode<synchronous>, transform_indices = @transform_5, window_bounds = array<i64: 1, 64>}, {transform_indices = @transform_6, window_bounds = array<i64: 1, 64, 64>}, {transform_indices = @transform_7, window_bounds = array<i64: 1, 64, 64>}]} {
    %cst = arith.constant 0.000000e+00 : f32
    %0 = vector.broadcast %cst : f32 to vector<64x64xf32>
    %c0 = arith.constant 0 : index
    %c0_0 = arith.constant 0 : index
    %c0_1 = arith.constant 0 : index
    %c0_2 = arith.constant 0 : index
    %1 = vector.load %arg1[%c0, %c0_0, %c0_1, %c0_2] : memref<1x10x10x64xbf16, #tpu.memory_space<vmem>>, vector<1x8x8x64xbf16>
    %2 = vector.shape_cast %1 : vector<1x8x8x64xbf16> to vector<8x8x64xbf16>
    %3 = vector.shape_cast %2 : vector<8x8x64xbf16> to vector<64x64xbf16>
    %c0_3 = arith.constant 0 : index
    %c0_4 = arith.constant 0 : index
    %4 = vector.load %arg2[%c0_3, %c0_4] : memref<576x64xbf16, #tpu.memory_space<vmem>>, vector<64x64xbf16>
    %cst_5 = arith.constant dense<0.000000e+00> : vector<64x64xf32>
    %5 = tpu.matmul %3, %4, %cst_5 {dimension_numbers = #tpu.dot_dimension_numbers<[1], [0], [0], [1], [0, 0, 1, 1], [], []>} : vector<64x64xbf16>, vector<64x64xbf16>, vector<64x64xf32> -> vector<64x64xf32>
    %6 = arith.addf %0, %5 : vector<64x64xf32>
    %c0_6 = arith.constant 0 : index
    %c0_7 = arith.constant 0 : index
    %c1 = arith.constant 1 : index
    %c0_8 = arith.constant 0 : index
    %7 = vector.load %arg1[%c0_6, %c0_7, %c1, %c0_8] : memref<1x10x10x64xbf16, #tpu.memory_space<vmem>>, vector<1x8x8x64xbf16>
    %8 = vector.shape_cast %7 : vector<1x8x8x64xbf16> to vector<8x8x64xbf16>
    %9 = vector.shape_cast %8 : vector<8x8x64xbf16> to vector<64x64xbf16>
    %c64 = arith.constant 64 : index
    %c0_9 = arith.constant 0 : index
    %10 = vector.load %arg2[%c64, %c0_9] : memref<576x64xbf16, #tpu.memory_space<vmem>>, vector<64x64xbf16>
    %cst_10 = arith.constant dense<0.000000e+00> : vector<64x64xf32>
    %11 = tpu.matmul %9, %10, %cst_10 {dimension_numbers = #tpu.dot_dimension_numbers<[1], [0], [0], [1], [0, 0, 1, 1], [], []>} : vector<64x64xbf16>, vector<64x64xbf16>, vector<64x64xf32> -> vector<64x64xf32>
    %12 = arith.addf %6, %11 : vector<64x64xf32>
    %c0_11 = arith.constant 0 : index
    %c0_12 = arith.constant 0 : index
    %c2 = arith.constant 2 : index
    %c0_13 = arith.constant 0 : index
    %13 = vector.load %arg1[%c0_11, %c0_12, %c2, %c0_13] : memref<1x10x10x64xbf16, #tpu.memory_space<vmem>>, vector<1x8x8x64xbf16>
    %14 = vector.shape_cast %13 : vector<1x8x8x64xbf16> to vector<8x8x64xbf16>
    %15 = vector.shape_cast %14 : vector<8x8x64xbf16> to vector<64x64xbf16>
    %c128 = arith.constant 128 : index
    %c0_14 = arith.constant 0 : index
    %16 = vector.load %arg2[%c128, %c0_14] : memref<576x64xbf16, #tpu.memory_space<vmem>>, vector<64x64xbf16>
    %cst_15 = arith.constant dense<0.000000e+00> : vector<64x64xf32>
    %17 = tpu.matmul %15, %16, %cst_15 {dimension_numbers = #tpu.dot_dimension_numbers<[1], [0], [0], [1], [0, 0, 1, 1], [], []>} : vector<64x64xbf16>, vector<64x64xbf16>, vector<64x64xf32> -> vector<64x64xf32>
    %18 = arith.addf %12, %17 : vector<64x64xf32>
    %c0_16 = arith.constant 0 : index
    %c1_17 = arith.constant 1 : index
    %c0_18 = arith.constant 0 : index
    %c0_19 = arith.constant 0 : index
    %19 = vector.load %arg1[%c0_16, %c1_17, %c0_18, %c0_19] : memref<1x10x10x64xbf16, #tpu.memory_space<vmem>>, vector<1x8x8x64xbf16>
    %20 = vector.shape_cast %19 : vector<1x8x8x64xbf16> to vector<8x8x64xbf16>
    %21 = vector.shape_cast %20 : vector<8x8x64xbf16> to vector<64x64xbf16>
    %c192 = arith.constant 192 : index
    %c0_20 = arith.constant 0 : index
    %22 = vector.load %arg2[%c192, %c0_20] : memref<576x64xbf16, #tpu.memory_space<vmem>>, vector<64x64xbf16>
    %cst_21 = arith.constant dense<0.000000e+00> : vector<64x64xf32>
    %23 = tpu.matmul %21, %22, %cst_21 {dimension_numbers = #tpu.dot_dimension_numbers<[1], [0], [0], [1], [0, 0, 1, 1], [], []>} : vector<64x64xbf16>, vector<64x64xbf16>, vector<64x64xf32> -> vector<64x64xf32>
    %24 = arith.addf %18, %23 : vector<64x64xf32>
    %c0_22 = arith.constant 0 : index
    %c1_23 = arith.constant 1 : index
    %c1_24 = arith.constant 1 : index
    %c0_25 = arith.constant 0 : index
    %25 = vector.load %arg1[%c0_22, %c1_23, %c1_24, %c0_25] : memref<1x10x10x64xbf16, #tpu.memory_space<vmem>>, vector<1x8x8x64xbf16>
    %26 = vector.shape_cast %25 : vector<1x8x8x64xbf16> to vector<8x8x64xbf16>
    %27 = vector.shape_cast %26 : vector<8x8x64xbf16> to vector<64x64xbf16>
    %c256 = arith.constant 256 : index
    %c0_26 = arith.constant 0 : index
    %28 = vector.load %arg2[%c256, %c0_26] : memref<576x64xbf16, #tpu.memory_space<vmem>>, vector<64x64xbf16>
    %cst_27 = arith.constant dense<0.000000e+00> : vector<64x64xf32>
    %29 = tpu.matmul %27, %28, %cst_27 {dimension_numbers = #tpu.dot_dimension_numbers<[1], [0], [0], [1], [0, 0, 1, 1], [], []>} : vector<64x64xbf16>, vector<64x64xbf16>, vector<64x64xf32> -> vector<64x64xf32>
    %30 = arith.addf %24, %29 : vector<64x64xf32>
    %c0_28 = arith.constant 0 : index
    %c1_29 = arith.constant 1 : index
    %c2_30 = arith.constant 2 : index
    %c0_31 = arith.constant 0 : index
    %31 = vector.load %arg1[%c0_28, %c1_29, %c2_30, %c0_31] : memref<1x10x10x64xbf16, #tpu.memory_space<vmem>>, vector<1x8x8x64xbf16>
    %32 = vector.shape_cast %31 : vector<1x8x8x64xbf16> to vector<8x8x64xbf16>
    %33 = vector.shape_cast %32 : vector<8x8x64xbf16> to vector<64x64xbf16>
    %c320 = arith.constant 320 : index
    %c0_32 = arith.constant 0 : index
    %34 = vector.load %arg2[%c320, %c0_32] : memref<576x64xbf16, #tpu.memory_space<vmem>>, vector<64x64xbf16>
    %cst_33 = arith.constant dense<0.000000e+00> : vector<64x64xf32>
    %35 = tpu.matmul %33, %34, %cst_33 {dimension_numbers = #tpu.dot_dimension_numbers<[1], [0], [0], [1], [0, 0, 1, 1], [], []>} : vector<64x64xbf16>, vector<64x64xbf16>, vector<64x64xf32> -> vector<64x64xf32>
    %36 = arith.addf %30, %35 : vector<64x64xf32>
    %c0_34 = arith.constant 0 : index
    %c2_35 = arith.constant 2 : index
    %c0_36 = arith.constant 0 : index
    %c0_37 = arith.constant 0 : index
    %37 = vector.load %arg1[%c0_34, %c2_35, %c0_36, %c0_37] : memref<1x10x10x64xbf16, #tpu.memory_space<vmem>>, vector<1x8x8x64xbf16>
    %38 = vector.shape_cast %37 : vector<1x8x8x64xbf16> to vector<8x8x64xbf16>
    %39 = vector.shape_cast %38 : vector<8x8x64xbf16> to vector<64x64xbf16>
    %c384 = arith.constant 384 : index
    %c0_38 = arith.constant 0 : index
    %40 = vector.load %arg2[%c384, %c0_38] : memref<576x64xbf16, #tpu.memory_space<vmem>>, vector<64x64xbf16>
    %cst_39 = arith.constant dense<0.000000e+00> : vector<64x64xf32>
    %41 = tpu.matmul %39, %40, %cst_39 {dimension_numbers = #tpu.dot_dimension_numbers<[1], [0], [0], [1], [0, 0, 1, 1], [], []>} : vector<64x64xbf16>, vector<64x64xbf16>, vector<64x64xf32> -> vector<64x64xf32>
    %42 = arith.addf %36, %41 : vector<64x64xf32>
    %c0_40 = arith.constant 0 : index
    %c2_41 = arith.constant 2 : index
    %c1_42 = arith.constant 1 : index
    %c0_43 = arith.constant 0 : index
    %43 = vector.load %arg1[%c0_40, %c2_41, %c1_42, %c0_43] : memref<1x10x10x64xbf16, #tpu.memory_space<vmem>>, vector<1x8x8x64xbf16>
    %44 = vector.shape_cast %43 : vector<1x8x8x64xbf16> to vector<8x8x64xbf16>
    %45 = vector.shape_cast %44 : vector<8x8x64xbf16> to vector<64x64xbf16>
    %c448 = arith.constant 448 : index
    %c0_44 = arith.constant 0 : index
    %46 = vector.load %arg2[%c448, %c0_44] : memref<576x64xbf16, #tpu.memory_space<vmem>>, vector<64x64xbf16>
    %cst_45 = arith.constant dense<0.000000e+00> : vector<64x64xf32>
    %47 = tpu.matmul %45, %46, %cst_45 {dimension_numbers = #tpu.dot_dimension_numbers<[1], [0], [0], [1], [0, 0, 1, 1], [], []>} : vector<64x64xbf16>, vector<64x64xbf16>, vector<64x64xf32> -> vector<64x64xf32>
    %48 = arith.addf %42, %47 : vector<64x64xf32>
    %c0_46 = arith.constant 0 : index
    %c2_47 = arith.constant 2 : index
    %c2_48 = arith.constant 2 : index
    %c0_49 = arith.constant 0 : index
    %49 = vector.load %arg1[%c0_46, %c2_47, %c2_48, %c0_49] : memref<1x10x10x64xbf16, #tpu.memory_space<vmem>>, vector<1x8x8x64xbf16>
    %50 = vector.shape_cast %49 : vector<1x8x8x64xbf16> to vector<8x8x64xbf16>
    %51 = vector.shape_cast %50 : vector<8x8x64xbf16> to vector<64x64xbf16>
    %c512 = arith.constant 512 : index
    %c0_50 = arith.constant 0 : index
    %52 = vector.load %arg2[%c512, %c0_50] : memref<576x64xbf16, #tpu.memory_space<vmem>>, vector<64x64xbf16>
    %cst_51 = arith.constant dense<0.000000e+00> : vector<64x64xf32>
    %53 = tpu.matmul %51, %52, %cst_51 {dimension_numbers = #tpu.dot_dimension_numbers<[1], [0], [0], [1], [0, 0, 1, 1], [], []>} : vector<64x64xbf16>, vector<64x64xbf16>, vector<64x64xf32> -> vector<64x64xf32>
    %54 = arith.addf %48, %53 : vector<64x64xf32>
    %c0_52 = arith.constant 0 : index
    %c0_53 = arith.constant 0 : index
    %55 = vector.load %arg3[%c0_52, %c0_53] : memref<64x32xf32, #tpu.memory_space<vmem>>, vector<64x32xf32>
    %c0_54 = arith.constant 0 : index
    %c0_55 = arith.constant 0 : index
    %56 = vector.load %arg4[%c0_54, %c0_55] : memref<32x64xf32, #tpu.memory_space<vmem>>, vector<32x64xf32>
    %cst_56 = arith.constant dense<0.000000e+00> : vector<64xf32>
    %57 = vector.multi_reduction <add>, %54, %cst_56 [0] : vector<64x64xf32> to vector<64xf32>
    %58 = vector.shape_cast %57 : vector<64xf32> to vector<1x64xf32>
    %cst_57 = arith.constant dense<0.000000e+00> : vector<1x32xf32>
    %59 = tpu.matmul %58, %55, %cst_57 {dimension_numbers = #tpu.dot_dimension_numbers<[1], [0], [0], [1], [0, 0, 1, 1], [], []>} : vector<1x64xf32>, vector<64x32xf32>, vector<1x32xf32> -> vector<1x32xf32>
    %cst_58 = arith.constant 7.812500e-03 : f32
    %60 = vector.broadcast %cst_58 : f32 to vector<1x32xf32>
    %61 = arith.mulf %59, %60 : vector<1x32xf32>
    %cst_59 = arith.constant dense<0.000000e+00> : vector<1x64xf32>
    %62 = tpu.matmul %61, %56, %cst_59 {dimension_numbers = #tpu.dot_dimension_numbers<[1], [0], [0], [1], [0, 0, 1, 1], [], []>} : vector<1x32xf32>, vector<32x64xf32>, vector<1x64xf32> -> vector<1x64xf32>
    %63 = vector.broadcast %62 : vector<1x64xf32> to vector<64x64xf32>
    %64 = arith.subf %54, %63 : vector<64x64xf32>
    %65 = arith.mulf %64, %64 : vector<64x64xf32>
    %cst_60 = arith.constant dense<0.000000e+00> : vector<64xf32>
    %66 = vector.multi_reduction <add>, %65, %cst_60 [0] : vector<64x64xf32> to vector<64xf32>
    %67 = vector.shape_cast %66 : vector<64xf32> to vector<1x64xf32>
    %cst_61 = arith.constant dense<0.000000e+00> : vector<1x32xf32>
    %68 = tpu.matmul %67, %55, %cst_61 {dimension_numbers = #tpu.dot_dimension_numbers<[1], [0], [0], [1], [0, 0, 1, 1], [], []>} : vector<1x64xf32>, vector<64x32xf32>, vector<1x32xf32> -> vector<1x32xf32>
    %cst_62 = arith.constant 7.812500e-03 : f32
    %69 = vector.broadcast %cst_62 : f32 to vector<1x32xf32>
    %70 = arith.mulf %68, %69 : vector<1x32xf32>
    %cst_63 = arith.constant 9.99999974E-6 : f32
    %71 = vector.broadcast %cst_63 : f32 to vector<1x32xf32>
    %72 = arith.addf %70, %71 : vector<1x32xf32>
    %73 = math.rsqrt %72 : vector<1x32xf32>
    %cst_64 = arith.constant dense<0.000000e+00> : vector<1x64xf32>
    %74 = tpu.matmul %73, %56, %cst_64 {dimension_numbers = #tpu.dot_dimension_numbers<[1], [0], [0], [1], [0, 0, 1, 1], [], []>} : vector<1x32xf32>, vector<32x64xf32>, vector<1x64xf32> -> vector<1x64xf32>
    %75 = vector.broadcast %74 : vector<1x64xf32> to vector<64x64xf32>
    %76 = arith.mulf %64, %75 : vector<64x64xf32>
    %c0_65 = arith.constant 0 : index
    %c0_66 = arith.constant 0 : index
    %77 = vector.load %arg5[%c0_65, %c0_66] : memref<1x64xf32, #tpu.memory_space<vmem>>, vector<1x64xf32>
    %78 = vector.broadcast %77 : vector<1x64xf32> to vector<64x64xf32>
    %79 = arith.mulf %76, %78 : vector<64x64xf32>
    %c0_67 = arith.constant 0 : index
    %c0_68 = arith.constant 0 : index
    %80 = vector.load %arg6[%c0_67, %c0_68] : memref<1x64xf32, #tpu.memory_space<vmem>>, vector<1x64xf32>
    %81 = vector.broadcast %80 : vector<1x64xf32> to vector<64x64xf32>
    %82 = arith.addf %79, %81 : vector<64x64xf32>
    %c0_69 = arith.constant 0 : index
    %c0_70 = arith.constant 0 : index
    %c0_71 = arith.constant 0 : index
    %83 = vector.load %arg7[%c0_69, %c0_70, %c0_71] : memref<1x64x64xbf16, #tpu.memory_space<vmem>>, vector<1x64x64xbf16>
    %84 = vector.shape_cast %83 : vector<1x64x64xbf16> to vector<64x64xbf16>
    %85 = arith.extf %84 : vector<64x64xbf16> to vector<64x64xf32>
    %86 = arith.addf %82, %85 : vector<64x64xf32>
    %cst_72 = arith.constant 0.000000e+00 : f32
    %87 = vector.broadcast %cst_72 : f32 to vector<64x64xf32>
    %88 = arith.maximumf %86, %87 : vector<64x64xf32>
    %c0_73 = arith.constant 0 : index
    %c0_74 = arith.constant 0 : index
    %c0_75 = arith.constant 0 : index
    %89 = vector.load %arg8[%c0_73, %c0_74, %c0_75] : memref<1x64x64xf32, #tpu.memory_space<vmem>>, vector<1x64x64xf32>
    %90 = vector.shape_cast %89 : vector<1x64x64xf32> to vector<64x64xf32>
    %91 = vector.shape_cast %88 : vector<64x64xf32> to vector<1x64x64xf32>
    tpu.vector_store %arg8[%c0_73, %c0_74, %c0_75], %91 {strides = array<i32>} : memref<1x64x64xf32, #tpu.memory_space<vmem>>, vector<1x64x64xf32>,
    return
  }
  func.func @transform_0(%arg0: i32) -> (i32, i32, i32, i32) {
    %c0_i32 = arith.constant 0 : i32
    %c0_i32_0 = arith.constant 0 : i32
    %c0_i32_1 = arith.constant 0 : i32
    %c0_i32_2 = arith.constant 0 : i32
    return %arg0, %c0_i32, %c0_i32_0, %c0_i32_1 : i32, i32, i32, i32
  }
  func.func @transform_1(%arg0: i32) -> (i32, i32) {
    %c0_i32 = arith.constant 0 : i32
    %c0_i32_0 = arith.constant 0 : i32
    %c0_i32_1 = arith.constant 0 : i32
    return %c0_i32, %c0_i32_0 : i32, i32
  }
  func.func @transform_2(%arg0: i32) -> (i32, i32) {
    %c0_i32 = arith.constant 0 : i32
    %c0_i32_0 = arith.constant 0 : i32
    %c0_i32_1 = arith.constant 0 : i32
    return %c0_i32, %c0_i32_0 : i32, i32
  }
  func.func @transform_3(%arg0: i32) -> (i32, i32) {
    %c0_i32 = arith.constant 0 : i32
    %c0_i32_0 = arith.constant 0 : i32
    %c0_i32_1 = arith.constant 0 : i32
    return %c0_i32, %c0_i32_0 : i32, i32
  }
  func.func @transform_4(%arg0: i32) -> (i32, i32) {
    %c0_i32 = arith.constant 0 : i32
    %c0_i32_0 = arith.constant 0 : i32
    %c0_i32_1 = arith.constant 0 : i32
    return %c0_i32, %c0_i32_0 : i32, i32
  }
  func.func @transform_5(%arg0: i32) -> (i32, i32) {
    %c0_i32 = arith.constant 0 : i32
    %c0_i32_0 = arith.constant 0 : i32
    %c0_i32_1 = arith.constant 0 : i32
    return %c0_i32, %c0_i32_0 : i32, i32
  }
  func.func @transform_6(%arg0: i32) -> (i32, i32, i32) {
    %c0_i32 = arith.constant 0 : i32
    %c0_i32_0 = arith.constant 0 : i32
    %c0_i32_1 = arith.constant 0 : i32
    return %arg0, %c0_i32, %c0_i32_0 : i32, i32, i32
  }
  func.func @transform_7(%arg0: i32) -> (i32, i32, i32) {
    %c0_i32 = arith.constant 0 : i32
    %c0_i32_0 = arith.constant 0 : i32
    %c0_i32_1 = arith.constant 0 : i32
    return %arg0, %c0_i32, %c0_i32_0 : i32, i32, i32
  }
}

</mosaic_0001>

<llo_original>
// kernel: _lambda_.6
$region0: #{_lambda_.6}
  #allocation0 [shape = 'u32[]', space=smem, size = 0x4, offset = 0x4, fixed_abs, tag = 'smem constant byte address 0x4 - core index']
  #allocation1 [shape = 'u32[144,128]{1,0:T(1,128)}', space=vmem, size = 0x12000, scoped, tag = 'internal scratch']
  %s0 = inlined_call_operand.vmem [shape: bf16[8,8,8,32], index: 0, kind: input, shape index: {}]
  %s1 = inlined_call_operand.vmem [shape: bf16[32,64], index: 1, kind: input, shape index: {}]
  %s2 = inlined_call_operand.vmem [shape: f32[64,32], index: 2, kind: input, shape index: {}]
  %s3 = inlined_call_operand.vmem [shape: f32[32,64], index: 3, kind: input, shape index: {}]
  %s4 = inlined_call_operand.vmem [shape: f32[1,64], index: 4, kind: input, shape index: {}]
  %s5 = inlined_call_operand.vmem [shape: f32[1,64], index: 5, kind: input, shape index: {}]
  %s6 = inlined_call_operand.vmem [shape: bf16[2,64,64], index: 6, kind: output, shape index: {}]
  %s7 = sld [smem:[#allocation0]]
  $region57: #{_lambda_.6} parent=0
    _
  %s9 = ssub.s32 1, %s7
  %s10 = scalar_select 0, %s9, %s7
  loop: start=0, step=1, limit=4
  $region2: #{_lambda_.6} parent=0 // loop_pre_header
    _
  $region3: #{_lambda_.6} parent=0 // loop_header
    %s12 = sphi 0, %s16
    %p13 = scmp.ge.s32.totalorder %s12, 4
    %s22 = sphi 0, %s24
    %s25 = sphi 0, %s22
    %s26 = sphi 0, %s25
    %s42 = sphi 0, %s26
    %s46 = sphi 0, %s46
    %s48 = sphi 0, %s46
    %s49 = sphi 0, %s48
    %s63 = sphi 0, %s49
    %s67 = sphi 0, %s67
    %s69 = sphi 0, %s67
    %s70 = sphi 0, %s69
    %s84 = sphi 0, %s70
    %s88 = sphi 0, %s88
    %s90 = sphi 0, %s88
    %s91 = sphi 0, %s90
    %s105 = sphi 0, %s91
    %s109 = sphi 0, %s109
    %s111 = sphi 0, %s109
    %s112 = sphi 0, %s111
    %s126 = sphi 0, %s112
    %s130 = sphi 0, %s130
    %s132 = sphi 0, %s130
    %s133 = sphi 0, %s132
    %s147 = sphi 0, %s133
    %s153 = sphi 0, %s155
    %s156 = sphi 0, %s153
    %s157 = sphi 0, %s156
    %s173 = sphi 0, %s157
  $region4: #{_lambda_.6} parent=0 // loop_header_branch
    %15 = sbr.rel (%p13) target = $region8
  $region5: #{_lambda_.6} parent=0 // loop_body
    %s17 = ssub.s32 %s12, 1
    %s18 = ssub.s32 %s12, 2
    %s19 = sadd.s32 %s12, 1
    %s20 = ssub.s32 %s12, %s19
    %p21 = scmp.eq.s32.totalorder %s20, 0
    %s23 = sadd.s32 %s22, 1
    %s24 = scalar_select %p21, %s22, %s23
    %p27 = pneg %p21
    %p28 = scmp.eq.s32.totalorder %s12, 1
    %p29 = por %p27, %p28
    %p30 = scmp.ne.s32.totalorder %s22, %s25
    %p31 = scmp.eq.s32.totalorder %s12, 0
    %p32 = por %p30, %p31
    %p33 = scmp.ne.s32.totalorder %s22, %s25
    %p34 = scmp.eq.s32.totalorder %s17, 1
    %p35 = por %p33, %p34
    %p36 = scmp.ne.s32.totalorder %s25, %s26
    %p37 = scmp.eq.s32.totalorder %s17, 0
    %p38 = por %p36, %p37
    %p39 = scmp.ne.s32.totalorder %s25, %s26
    %p40 = scmp.eq.s32.totalorder %s18, 1
    %p41 = por %p39, %p40
    %p43 = scmp.ne.s32.totalorder %s26, %s42
    %p44 = scmp.eq.s32.totalorder %s18, 0
    %p45 = por %p43, %p44
    %s47 = sadd.s32 %s46, 1
    %p50 = scmp.eq.s32.totalorder %s12, 1
    %p51 = scmp.ne.s32.totalorder %s46, %s48
    %p52 = scmp.eq.s32.totalorder %s12, 0
    %p53 = por %p51, %p52
    %p54 = scmp.ne.s32.totalorder %s46, %s48
    %p55 = scmp.eq.s32.totalorder %s17, 1
    %p56 = por %p54, %p55
    %p57 = scmp.ne.s32.totalorder %s48, %s49
    %p58 = scmp.eq.s32.totalorder %s17, 0
    %p59 = por %p57, %p58
    %p60 = scmp.ne.s32.totalorder %s48, %s49
    %p61 = scmp.eq.s32.totalorder %s18, 1
    %p62 = por %p60, %p61
    %p64 = scmp.ne.s32.totalorder %s49, %s63
    %p65 = scmp.eq.s32.totalorder %s18, 0
    %p66 = por %p64, %p65
    %s68 = sadd.s32 %s67, 1
    %p71 = scmp.eq.s32.totalorder %s12, 1
    %p72 = scmp.ne.s32.totalorder %s67, %s69
    %p73 = scmp.eq.s32.totalorder %s12, 0
    %p74 = por %p72, %p73
    %p75 = scmp.ne.s32.totalorder %s67, %s69
    %p76 = scmp.eq.s32.totalorder %s17, 1
    %p77 = por %p75, %p76
    %p78 = scmp.ne.s32.totalorder %s69, %s70
    %p79 = scmp.eq.s32.totalorder %s17, 0
    %p80 = por %p78, %p79
    %p81 = scmp.ne.s32.totalorder %s69, %s70
    %p82 = scmp.eq.s32.totalorder %s18, 1
    %p83 = por %p81, %p82
    %p85 = scmp.ne.s32.totalorder %s70, %s84
    %p86 = scmp.eq.s32.totalorder %s18, 0
    %p87 = por %p85, %p86
    %s89 = sadd.s32 %s88, 1
    %p92 = scmp.eq.s32.totalorder %s12, 1
    %p93 = scmp.ne.s32.totalorder %s88, %s90
    %p94 = scmp.eq.s32.totalorder %s12, 0
    %p95 = por %p93, %p94
    %p96 = scmp.ne.s32.totalorder %s88, %s90
    %p97 = scmp.eq.s32.totalorder %s17, 1
    %p98 = por %p96, %p97
    %p99 = scmp.ne.s32.totalorder %s90, %s91
    %p100 = scmp.eq.s32.totalorder %s17, 0
    %p101 = por %p99, %p100
    %p102 = scmp.ne.s32.totalorder %s90, %s91
    %p103 = scmp.eq.s32.totalorder %s18, 1
    %p104 = por %p102, %p103
    %p106 = scmp.ne.s32.totalorder %s91, %s105
    %p107 = scmp.eq.s32.totalorder %s18, 0
    %p108 = por %p106, %p107
    %s110 = sadd.s32 %s109, 1
    %p113 = scmp.eq.s32.totalorder %s12, 1
    %p114 = scmp.ne.s32.totalorder %s109, %s111
    %p115 = scmp.eq.s32.totalorder %s12, 0
    %p116 = por %p114, %p115
    %p117 = scmp.ne.s32.totalorder %s109, %s111
    %p118 = scmp.eq.s32.totalorder %s17, 1
    %p119 = por %p117, %p118
    %p120 = scmp.ne.s32.totalorder %s111, %s112
    %p121 = scmp.eq.s32.totalorder %s17, 0
    %p122 = por %p120, %p121
    %p123 = scmp.ne.s32.totalorder %s111, %s112
    %p124 = scmp.eq.s32.totalorder %s18, 1
    %p125 = por %p123, %p124
    %p127 = scmp.ne.s32.totalorder %s112, %s126
    %p128 = scmp.eq.s32.totalorder %s18, 0
    %p129 = por %p127, %p128
    %s131 = sadd.s32 %s130, 1
    %p134 = scmp.eq.s32.totalorder %s12, 1
    %p135 = scmp.ne.s32.totalorder %s130, %s132
    %p136 = scmp.eq.s32.totalorder %s12, 0
    %p137 = por %p135, %p136
    %p138 = scmp.ne.s32.totalorder %s130, %s132
    %p139 = scmp.eq.s32.totalorder %s17, 1
    %p140 = por %p138, %p139
    %p141 = scmp.ne.s32.totalorder %s132, %s133
    %p142 = scmp.eq.s32.totalorder %s17, 0
    %p143 = por %p141, %p142
    %p144 = scmp.ne.s32.totalorder %s132, %s133
    %p145 = scmp.eq.s32.totalorder %s18, 1
    %p146 = por %p144, %p145
    %p148 = scmp.ne.s32.totalorder %s133, %s147
    %p149 = scmp.eq.s32.totalorder %s18, 0
    %p150 = por %p148, %p149
    %s151 = ssub.s32 %s12, %s19
    %p152 = scmp.eq.s32.totalorder %s151, 0
    %s154 = sadd.s32 %s153, 1
    %s155 = scalar_select %p152, %s153, %s154
    %p158 = pneg %p152
    %p159 = scmp.eq.s32.totalorder %s12, 1
    %p160 = por %p158, %p159
    %p161 = scmp.ne.s32.totalorder %s153, %s156
    %p162 = scmp.eq.s32.totalorder %s12, 0
    %p163 = por %p161, %p162
    %p164 = scmp.ne.s32.totalorder %s153, %s156
    %p165 = scmp.eq.s32.totalorder %s17, 1
    %p166 = por %p164, %p165
    %p167 = scmp.ne.s32.totalorder %s156, %s157
    %p168 = scmp.eq.s32.totalorder %s17, 0
    %p169 = por %p167, %p168
    %p170 = scmp.ne.s32.totalorder %s156, %s157
    %p171 = scmp.eq.s32.totalorder %s18, 1
    %p172 = por %p170, %p171
    %p174 = scmp.ne.s32.totalorder %s157, %s173
    %p175 = scmp.eq.s32.totalorder %s18, 0
    %p176 = por %p174, %p175
    %p177 = scmp.le.s32.totalorder 1, %s12
    %p178 = scmp.lt.s32.totalorder %s12, 3
    %p179 = pnand %p177, %p178
    %p180 = pneg %p179
    // Predicated region
    $region9: #{_lambda_.6} parent=5 // pred_check
      _
    $region10: #{_lambda_.6} parent=5 // pred_check_branch
      %182 = sbr.rel (%p179) target = $region12
    $region11: #{_lambda_.6} parent=5 // pred_region
      %s183 = ssub.s32 %s12, 1
      // Predicated region
      $region13: #{_lambda_.6} parent=11 // pred_check
        %p184 = pneg %p59
      $region14: #{_lambda_.6} parent=11 // pred_check_branch
        %186 = sbr.rel (%p184) target = $region16
      $region15: #{_lambda_.6} parent=11 // pred_region
        _
      $region16: #{_lambda_.6} parent=11 // pred_fallthru
        _
      // Predicated region
      $region17: #{_lambda_.6} parent=11 // pred_check
        %p187 = pneg %p80
      $region18: #{_lambda_.6} parent=11 // pred_check_branch
        %189 = sbr.rel (%p187) target = $region20
      $region19: #{_lambda_.6} parent=11 // pred_region
        _
      $region20: #{_lambda_.6} parent=11 // pred_fallthru
        _
      // Predicated region
      $region21: #{_lambda_.6} parent=11 // pred_check
        %p190 = pneg %p101
      $region22: #{_lambda_.6} parent=11 // pred_check_branch
        %192 = sbr.rel (%p190) target = $region24
      $region23: #{_lambda_.6} parent=11 // pred_region
        _
      $region24: #{_lambda_.6} parent=11 // pred_fallthru
        _
      // Predicated region
      $region25: #{_lambda_.6} parent=11 // pred_check
        %p193 = pneg %p122
      $region26: #{_lambda_.6} parent=11 // pred_check_branch
        %195 = sbr.rel (%p193) target = $region28
      $region27: #{_lambda_.6} parent=11 // pred_region
        _
      $region28: #{_lambda_.6} parent=11 // pred_fallthru
        _
      // Predicated region
      $region29: #{_lambda_.6} parent=11 // pred_check
        %p196 = pneg %p143
      $region30: #{_lambda_.6} parent=11 // pred_check_branch
        %198 = sbr.rel (%p196) target = $region32
      $region31: #{_lambda_.6} parent=11 // pred_region
        _
      $region32: #{_lambda_.6} parent=11 // pred_fallthru
        _
    $region12: #{_lambda_.6} parent=5 // pred_fallthru
      _
    %p199 = scmp.lt.s32.totalorder %s12, 2
    // Predicated region
    $region33: #{_lambda_.6} parent=5 // pred_check
      %p200 = pneg %p199
    $region34: #{_lambda_.6} parent=5 // pred_check_branch
      %202 = sbr.rel (%p200) target = $region36
    $region35: #{_lambda_.6} parent=5 // pred_region
      // Predicated region
      $region37: #{_lambda_.6} parent=35 // pred_check
        %p203 = pneg %p32
      $region38: #{_lambda_.6} parent=35 // pred_check_branch
        %205 = sbr.rel (%p203) target = $region40
      $region39: #{_lambda_.6} parent=35 // pred_region
        %s206 = smul.u32 4, %s12
        %p207 = scmp.lt.s32.totalorder %s206, 7
        %s208 = scalar_select %p207, %s206, 7
        %s209 = smul.addr %s208, 8
        %s210 = smul.addr %s209, 4
        %s211 = scalar_lea.vmem %s0, %s210
        %s212 = smul.u32 4, %s12
      $region40: #{_lambda_.6} parent=35 // pred_fallthru
        _
    $region36: #{_lambda_.6} parent=5 // pred_fallthru
      _
    %p213 = scmp.le.s32.totalorder 1, %s12
    %p214 = scmp.lt.s32.totalorder %s12, 3
    %p215 = pnand %p213, %p214
    %p216 = pneg %p215
    // Predicated region
    $region41: #{_lambda_.6} parent=5 // pred_check
      _
    $region42: #{_lambda_.6} parent=5 // pred_check_branch
      %218 = sbr.rel (%p215) target = $region44
    $region43: #{_lambda_.6} parent=5 // pred_region
      %s219 = ssub.s32 %s12, 1
      %s220 = smul.u32 4, %s17
      %p221 = scmp.lt.s32.totalorder %s220, 7
      %s222 = scalar_select %p221, %s220, 7
      %s223 = smul.addr %s222, 8
      %s224 = smul.addr %s223, 4
      %s225 = scalar_lea.vmem %s0, %s224
      %p226 = pneg %p38
      %p227 = pneg %p35
      %p228 = pneg %p59
      %p229 = pneg %p56
      %p230 = pneg %p80
      %p231 = pneg %p77
      %p232 = pneg %p101
      %p233 = pneg %p98
      %p234 = pneg %p122
      %p235 = pneg %p119
      %p236 = pneg %p143
      %p237 = pneg %p140
      %p238 = pneg %p169
      %p239 = pneg %p166
      %p240 = scmp.lt.s32.totalorder %s17, 1
      %s241 = scalar_select %p240, %s17, 1
      %s242 = smul.addr %s241, 8
      %s243 = smul.addr %s242, 4
      %s244 = scalar_lea.vmem %s6, %s243
      %s245 = smul.u32 4, %s17
      %p246 = scmp.lt.s32.totalorder %s245, 7
      %s247 = scalar_select %p246, %s245, 7
      %s248 = smul.addr %s247, 8
      %s249 = smul.addr %s248, 4
      %s250 = scalar_lea.vmem %s0, %s249
      %s251 = smul.u32 4, %s17
      %p252 = scmp.lt.s32.totalorder %s17, 1
      %s253 = scalar_select %p252, %s17, 1
      %s254 = smul.addr %s253, 8
      %s255 = smul.addr %s254, 4
      %s256 = scalar_lea.vmem %s6, %s255
      %v258 = vld [vmem:[%s250] sm:$0xf]
      %v259 = vld [vmem:[%s250 + $0x4] sm:$0xf]
      %v260 = vld [vmem:[%s250 + $0x8] sm:$0xf]
      %v261 = vld [vmem:[%s250 + $0xc] sm:$0xf]
      %v262 = vld [vmem:[%s250 + $0x10] sm:$0xf]
      %v263 = vld [vmem:[%s250 + $0x14] sm:$0xf]
      %v264 = vld [vmem:[%s250 + $0x18] sm:$0xf]
      %v265 = vld [vmem:[%s250 + $0x1c] sm:$0xf]
      %v266 = vld [vmem:[%s1] sm:$0xf]
      %v267 = vld [vmem:[%s1 + $0x4] sm:$0xf]
      %v268 = vld [vmem:[%s1 + $0x8] sm:$0xf]
      %v269 = vld [vmem:[%s1 + $0xc] sm:$0xf]
      %v278 = vunpack.c.l.b16 %v258
      %v279 = vunpack.c.l.b16 %v259
      %v280 = vunpack.c.l.b16 %v260
      %v281 = vunpack.c.l.b16 %v261
      %v282 = vunpack.c.l.b16 %v262
      %v283 = vunpack.c.l.b16 %v263
      %v284 = vunpack.c.l.b16 %v264
      %v285 = vunpack.c.l.b16 %v265
      %v286 = vpack.c.b16 %v279, %v278
      %v287 = vpack.c.b16 %v281, %v280
      %v288 = vpack.c.b16 %v283, %v282
      %v289 = vpack.c.b16 %v285, %v284
      %v294 = vunpack.c.l.b16 %v266
      %v295 = vunpack.c.l.b16 %v267
      %v296 = vunpack.c.l.b16 %v268
      %v297 = vunpack.c.l.b16 %v269
      %v298 = vpack.c.b16 %v295, %v294
      %v299 = vpack.c.b16 %v297, %v296
      %vm302 = vcmask 261120
      %v304 = vsel %vm302, %v286, 0
      %v307 = vsel %vm302, %v287, 0
      %v310 = vsel %vm302, %v288, 0
      %v313 = vsel %vm302, %v289, 0
      %315 = vmatprep.subr.bf16.mxu0 0
      %316 = vmatpush1.bf16.msra.mxu0 %v298
      %317 = vmatprep.subr.bf16.mxu0 0
      %318 = vmatpush1.bf16.msra.mxu0 %v299
      %319 = vmatprep.subr.bf16.mxu0 0
      %320 = vmatpush1.bf16.msra.mxu0 0
      %321 = vmatprep.subr.bf16.mxu0 0
      %322 = vmatpush1.bf16.msra.mxu0 0
      %323 = vmatprep.subr.bf16.mxu0 0
      %324 = vmatpush1.bf16.msra.mxu0 0
      %325 = vmatprep.subr.bf16.mxu0 0
      %326 = vmatpush1.bf16.msra.mxu0 0
      %327 = vmatprep.subr.bf16.mxu0 0
      %328 = vmatpush1.bf16.msra.mxu0 0
      %329 = vmatprep.subr.bf16.mxu0 0
      %330 = vmatpush1.bf16.msra.mxu0 0
      %331 = vmatprep.subr.bf16.mxu0 0
      %332 = vmatpush1.bf16.msra.mxu0 0
      %333 = vmatprep.subr.bf16.mxu0 0
      %334 = vmatpush1.bf16.msra.mxu0 0
      %335 = vmatprep.subr.bf16.mxu0 0
      %336 = vmatpush1.bf16.msra.mxu0 0
      %337 = vmatprep.subr.bf16.mxu0 0
      %338 = vmatpush1.bf16.msra.mxu0 0
      %339 = vmatprep.subr.bf16.mxu0 0
      %340 = vmatpush1.bf16.msra.mxu0 0
      %341 = vmatprep.subr.bf16.mxu0 0
      %342 = vmatpush1.bf16.msra.mxu0 0
      %343 = vmatprep.subr.bf16.mxu0 0
      %344 = vmatpush1.bf16.msra.mxu0 0
      %345 = vmatprep.subr.bf16.mxu0 0
      %346 = vmatpush1.bf16.msra.mxu0 0
      %347 = vmatprep.mubr.bf16.mxu0 0
      %348 = vmatmul.mubr.bf16.gmra.mrb[0].mxu0 %v304
      %v349 = vpop.f32.mrb[0].mxu0
      %v350 = vadd.f32 0.0, %v349
      %v351 = vpop.f32.mrb[0].mxu0
      %v352 = vpop.f32.mrb[0].mxu0
      %v353 = vadd.f32 0.0, %v352
      %v354 = vpop.f32.mrb[0].mxu0
      %355 = vmatprep.mubr.bf16.mxu0 0
      %356 = vmatmul.mubr.bf16.gmra.mrb[0].mxu0 %v307
      %v357 = vpop.f32.mrb[0].mxu0
      %v358 = vadd.f32 0.0, %v357
      %v359 = vpop.f32.mrb[0].mxu0
      %v360 = vpop.f32.mrb[0].mxu0
      %v361 = vadd.f32 0.0, %v360
      %v362 = vpop.f32.mrb[0].mxu0
      %363 = vmatprep.mubr.bf16.mxu0 0
      %364 = vmatmul.mubr.bf16.gmra.mrb[0].mxu0 %v310
      %v365 = vpop.f32.mrb[0].mxu0
      %v366 = vadd.f32 0.0, %v365
      %v367 = vpop.f32.mrb[0].mxu0
      %v368 = vpop.f32.mrb[0].mxu0
      %v369 = vadd.f32 0.0, %v368
      %v370 = vpop.f32.mrb[0].mxu0
      %371 = vmatprep.mubr.bf16.mxu0 0
      %372 = vmatmul.mubr.bf16.gmra.mrb[0].mxu0 %v313
      %v373 = vpop.f32.mrb[0].mxu0
      %v374 = vadd.f32 0.0, %v373
      %v375 = vpop.f32.mrb[0].mxu0
      %v376 = vpop.f32.mrb[0].mxu0
      %v377 = vadd.f32 0.0, %v376
      %v378 = vpop.f32.mrb[0].mxu0
      %379 = vdwg.mxu0
      %v380 = vld [vmem:[%s2] sm:$0xff]
      %v381 = vld [vmem:[%s2 + $0x8] sm:$0xff]
      %v382 = vld [vmem:[%s2 + $0x10] sm:$0xff]
      %v383 = vld [vmem:[%s2 + $0x18] sm:$0xff]
      %v384 = vld [vmem:[%s2 + $0x20] sm:$0xff]
      %v385 = vld [vmem:[%s2 + $0x28] sm:$0xff]
      %v386 = vld [vmem:[%s2 + $0x30] sm:$0xff]
      %v387 = vld [vmem:[%s2 + $0x38] sm:$0xff]
      %v388 = vld [vmem:[%s3] sm:$0xff]
      %v389 = vld [vmem:[%s3 + $0x8] sm:$0xff]
      %v390 = vld [vmem:[%s3 + $0x10] sm:$0xff]
      %v391 = vld [vmem:[%s3 + $0x18] sm:$0xff]
      %vm392 = vcmask 523264
      %v393 = vsel %vm392, %v350, 0.0
      %v394 = vsel %vm392, %v353, 0.0
      %v395 = vadd.f32 %v393, %v394
      %v396 = vsel %vm392, %v358, 0.0
      %v397 = vadd.f32 %v395, %v396
      %v398 = vsel %vm392, %v361, 0.0
      %v399 = vadd.f32 %v397, %v398
      %v400 = vsel %vm392, %v366, 0.0
      %v401 = vadd.f32 %v399, %v400
      %v402 = vsel %vm392, %v369, 0.0
      %v403 = vadd.f32 %v401, %v402
      %v404 = vsel %vm392, %v374, 0.0
      %v405 = vadd.f32 %v403, %v404
      %v406 = vsel %vm392, %v377, 0.0
      %v407 = vadd.f32 %v405, %v406
      %v408 = vrot.slane %v407, 4
      %v409 = vadd.f32 %v407, %v408
      %v410 = vrot.slane %v409, 2
      %v411 = vadd.f32 %v409, %v410
      %v412 = vrot.slane %v411, 1
      %v413 = vadd.f32 %v411, %v412
      %v415 = vsel %vm392, %v413, 0
      %417 = vmatprep.subr.mxu0 0.0
      %418 = vmatpush1.msra.mxu0 %v380
      %419 = vmatprep.subr.mxu0 0.0
      %420 = vmatpush1.msra.mxu0 %v381
      %421 = vmatprep.subr.mxu0 0.0
      %422 = vmatpush1.msra.mxu0 %v382
      %423 = vmatprep.subr.mxu0 0.0
      %424 = vmatpush1.msra.mxu0 %v383
      %425 = vmatprep.subr.mxu0 0.0
      %426 = vmatpush1.msra.mxu0 %v384
      %427 = vmatprep.subr.mxu0 0.0
      %428 = vmatpush1.msra.mxu0 %v385
      %429 = vmatprep.subr.mxu0 0.0
      %430 = vmatpush1.msra.mxu0 %v386
      %431 = vmatprep.subr.mxu0 0.0
      %432 = vmatpush1.msra.mxu0 %v387
      %433 = vmatprep.subr.mxu0 0.0
      %434 = vmatpush1.msra.mxu0 0.0
      %435 = vmatprep.subr.mxu0 0.0
      %436 = vmatpush1.msra.mxu0 0.0
      %437 = vmatprep.subr.mxu0 0.0
      %438 = vmatpush1.msra.mxu0 0.0
      %439 = vmatprep.subr.mxu0 0.0
      %440 = vmatpush1.msra.mxu0 0.0
      %441 = vmatprep.subr.mxu0 0.0
      %442 = vmatpush1.msra.mxu0 0.0
      %443 = vmatprep.subr.mxu0 0.0
      %444 = vmatpush1.msra.mxu0 0.0
      %445 = vmatprep.subr.mxu0 0.0
      %446 = vmatpush1.msra.mxu0 0.0
      %447 = vmatprep.subr.mxu0 0.0
      %448 = vmatpush1.msra.mxu0 0.0
      %449 = vmatprep.subr.mxu0 0.0
      %450 = vmatpush1.msra.mxu0 0.0
      %451 = vmatprep.subr.mxu0 0.0
      %452 = vmatpush1.msra.mxu0 0.0
      %453 = vmatprep.subr.mxu0 0.0
      %454 = vmatpush1.msra.mxu0 0.0
      %455 = vmatprep.subr.mxu0 0.0
      %456 = vmatpush1.msra.mxu0 0.0
      %457 = vmatprep.subr.mxu0 0.0
      %458 = vmatpush1.msra.mxu0 0.0
      %459 = vmatprep.subr.mxu0 0.0
      %460 = vmatpush1.msra.mxu0 0.0
      %461 = vmatprep.subr.mxu0 0.0
      %462 = vmatpush1.msra.mxu0 0.0
      %463 = vmatprep.subr.mxu0 0.0
      %464 = vmatpush1.msra.mxu0 0.0
      %465 = vmatprep.subr.mxu0 0.0
      %466 = vmatpush1.msra.mxu0 0.0
      %467 = vmatprep.subr.mxu0 0.0
      %468 = vmatpush1.msra.mxu0 0.0
      %469 = vmatprep.subr.mxu0 0.0
      %470 = vmatpush1.msra.mxu0 0.0
      %471 = vmatprep.subr.mxu0 0.0
      %472 = vmatpush1.msra.mxu0 0.0
      %473 = vmatprep.subr.mxu0 0.0
      %474 = vmatpush1.msra.mxu0 0.0
      %475 = vmatprep.subr.mxu0 0.0
      %476 = vmatpush1.msra.mxu0 0.0
      %477 = vmatprep.subr.mxu0 0.0
      %478 = vmatpush1.msra.mxu0 0.0
      %479 = vmatprep.subr.mxu0 0.0
      %480 = vmatpush1.msra.mxu0 0.0
      %481 = vmatprep.mubr.f32.mxu0 0.0
      %482 = vmatmul.mubr.f32.gmra.mrb[0].mxu0 %v415
      %v483 = vpop.f32.mrb[0].mxu0
      %v484 = vadd.f32 0.0, %v483
      %v485 = vpop.f32.mrb[0].mxu0
      %486 = vdwg.mxu0
      %v487 = vmul.f32 %v484, 0.0078125
      %v489 = vsel %vm302, %v487, 0
      %491 = vmatprep.subr.mxu0 0.0
      %492 = vmatpush1.msra.mxu0 %v388
      %493 = vmatprep.subr.mxu0 0.0
      %494 = vmatpush1.msra.mxu0 %v389
      %495 = vmatprep.subr.mxu0 0.0
      %496 = vmatpush1.msra.mxu0 %v390
      %497 = vmatprep.subr.mxu0 0.0
      %498 = vmatpush1.msra.mxu0 %v391
      %499 = vmatprep.subr.mxu0 0.0
      %500 = vmatpush1.msra.mxu0 0.0
      %501 = vmatprep.subr.mxu0 0.0
      %502 = vmatpush1.msra.mxu0 0.0
      %503 = vmatprep.subr.mxu0 0.0
      %504 = vmatpush1.msra.mxu0 0.0
      %505 = vmatprep.subr.mxu0 0.0
      %506 = vmatpush1.msra.mxu0 0.0
      %507 = vmatprep.subr.mxu0 0.0
      %508 = vmatpush1.msra.mxu0 0.0
      %509 = vmatprep.subr.mxu0 0.0
      %510 = vmatpush1.msra.mxu0 0.0
      %511 = vmatprep.subr.mxu0 0.0
      %512 = vmatpush1.msra.mxu0 0.0
      %513 = vmatprep.subr.mxu0 0.0
      %514 = vmatpush1.msra.mxu0 0.0
      %515 = vmatprep.subr.mxu0 0.0
      %516 = vmatpush1.msra.mxu0 0.0
      %517 = vmatprep.subr.mxu0 0.0
      %518 = vmatpush1.msra.mxu0 0.0
      %519 = vmatprep.subr.mxu0 0.0
      %520 = vmatpush1.msra.mxu0 0.0
      %521 = vmatprep.subr.mxu0 0.0
      %522 = vmatpush1.msra.mxu0 0.0
      %523 = vmatprep.subr.mxu0 0.0
      %524 = vmatpush1.msra.mxu0 0.0
      %525 = vmatprep.subr.mxu0 0.0
      %526 = vmatpush1.msra.mxu0 0.0
      %527 = vmatprep.subr.mxu0 0.0
      %528 = vmatpush1.msra.mxu0 0.0
      %529 = vmatprep.subr.mxu0 0.0
      %530 = vmatpush1.msra.mxu0 0.0
      %531 = vmatprep.subr.mxu0 0.0
      %532 = vmatpush1.msra.mxu0 0.0
      %533 = vmatprep.subr.mxu0 0.0
      %534 = vmatpush1.msra.mxu0 0.0
      %535 = vmatprep.subr.mxu0 0.0
      %536 = vmatpush1.msra.mxu0 0.0
      %537 = vmatprep.subr.mxu0 0.0
      %538 = vmatpush1.msra.mxu0 0.0
      %539 = vmatprep.subr.mxu0 0.0
      %540 = vmatpush1.msra.mxu0 0.0
      %541 = vmatprep.subr.mxu0 0.0
      %542 = vmatpush1.msra.mxu0 0.0
      %543 = vmatprep.subr.mxu0 0.0
      %544 = vmatpush1.msra.mxu0 0.0
      %545 = vmatprep.subr.mxu0 0.0
      %546 = vmatpush1.msra.mxu0 0.0
      %547 = vmatprep.subr.mxu0 0.0
      %548 = vmatpush1.msra.mxu0 0.0
      %549 = vmatprep.subr.mxu0 0.0
      %550 = vmatpush1.msra.mxu0 0.0
      %551 = vmatprep.subr.mxu0 0.0
      %552 = vmatpush1.msra.mxu0 0.0
      %553 = vmatprep.subr.mxu0 0.0
      %554 = vmatpush1.msra.mxu0 0.0
      %555 = vmatprep.mubr.f32.mxu0 0.0
      %556 = vmatmul.mubr.f32.gmra.mrb[0].mxu0 %v489
      %v557 = vpop.f32.mrb[0].mxu0
      %v558 = vadd.f32 0.0, %v557
      %v559 = vpop.f32.mrb[0].mxu0
      %560 = vdwg.mxu0
      %v561 = vlaneseq
      %v562 = vshrl.u32 %v561, 7
      %v563 = vsub.s32 0, %v562
      %v564 = vrot.slane %v558, %v563
      %v565 = vsub.f32 %v350, %v564
      %v566 = vsub.f32 %v353, %v564
      %v567 = vsub.f32 %v358, %v564
      %v568 = vsub.f32 %v361, %v564
      %v569 = vsub.f32 %v366, %v564
      %v570 = vsub.f32 %v369, %v564
      %v571 = vsub.f32 %v374, %v564
      %v572 = vsub.f32 %v377, %v564
      %v573 = vmul.f32 %v565, %v565
      %v574 = vmul.f32 %v566, %v566
      %v575 = vmul.f32 %v567, %v567
      %v576 = vmul.f32 %v568, %v568
      %v577 = vmul.f32 %v569, %v569
      %v578 = vmul.f32 %v570, %v570
      %v579 = vmul.f32 %v571, %v571
      %v580 = vmul.f32 %v572, %v572
      %v581 = vsel %vm392, %v573, 0.0
      %v582 = vsel %vm392, %v574, 0.0
      %v583 = vadd.f32 %v581, %v582
      %v584 = vsel %vm392, %v575, 0.0
      %v585 = vadd.f32 %v583, %v584
      %v586 = vsel %vm392, %v576, 0.0
      %v587 = vadd.f32 %v585, %v586
      %v588 = vsel %vm392, %v577, 0.0
      %v589 = vadd.f32 %v587, %v588
      %v590 = vsel %vm392, %v578, 0.0
      %v591 = vadd.f32 %v589, %v590
      %v592 = vsel %vm392, %v579, 0.0
      %v593 = vadd.f32 %v591, %v592
      %v594 = vsel %vm392, %v580, 0.0
      %v595 = vadd.f32 %v593, %v594
      %v596 = vrot.slane %v595, 4
      %v597 = vadd.f32 %v595, %v596
      %v598 = vrot.slane %v597, 2
      %v599 = vadd.f32 %v597, %v598
      %v600 = vrot.slane %v599, 1
      %v601 = vadd.f32 %v599, %v600
      %v603 = vsel %vm392, %v601, 0
      %605 = vmatprep.subr.mxu0 0.0
      %606 = vmatpush1.msra.mxu0 %v380
      %607 = vmatprep.subr.mxu0 0.0
      %608 = vmatpush1.msra.mxu0 %v381
      %609 = vmatprep.subr.mxu0 0.0
      %610 = vmatpush1.msra.mxu0 %v382
      %611 = vmatprep.subr.mxu0 0.0
      %612 = vmatpush1.msra.mxu0 %v383
      %613 = vmatprep.subr.mxu0 0.0
      %614 = vmatpush1.msra.mxu0 %v384
      %615 = vmatprep.subr.mxu0 0.0
      %616 = vmatpush1.msra.mxu0 %v385
      %617 = vmatprep.subr.mxu0 0.0
      %618 = vmatpush1.msra.mxu0 %v386
      %619 = vmatprep.subr.mxu0 0.0
      %620 = vmatpush1.msra.mxu0 %v387
      %621 = vmatprep.subr.mxu0 0.0
      %622 = vmatpush1.msra.mxu0 0.0
      %623 = vmatprep.subr.mxu0 0.0
      %624 = vmatpush1.msra.mxu0 0.0
      %625 = vmatprep.subr.mxu0 0.0
      %626 = vmatpush1.msra.mxu0 0.0
      %627 = vmatprep.subr.mxu0 0.0
      %628 = vmatpush1.msra.mxu0 0.0
      %629 = vmatprep.subr.mxu0 0.0
      %630 = vmatpush1.msra.mxu0 0.0
      %631 = vmatprep.subr.mxu0 0.0
      %632 = vmatpush1.msra.mxu0 0.0
      %633 = vmatprep.subr.mxu0 0.0
      %634 = vmatpush1.msra.mxu0 0.0
      %635 = vmatprep.subr.mxu0 0.0
      %636 = vmatpush1.msra.mxu0 0.0
      %637 = vmatprep.subr.mxu0 0.0
      %638 = vmatpush1.msra.mxu0 0.0
      %639 = vmatprep.subr.mxu0 0.0
      %640 = vmatpush1.msra.mxu0 0.0
      %641 = vmatprep.subr.mxu0 0.0
      %642 = vmatpush1.msra.mxu0 0.0
      %643 = vmatprep.subr.mxu0 0.0
      %644 = vmatpush1.msra.mxu0 0.0
      %645 = vmatprep.subr.mxu0 0.0
      %646 = vmatpush1.msra.mxu0 0.0
      %647 = vmatprep.subr.mxu0 0.0
      %648 = vmatpush1.msra.mxu0 0.0
      %649 = vmatprep.subr.mxu0 0.0
      %650 = vmatpush1.msra.mxu0 0.0
      %651 = vmatprep.subr.mxu0 0.0
      %652 = vmatpush1.msra.mxu0 0.0
      %653 = vmatprep.subr.mxu0 0.0
      %654 = vmatpush1.msra.mxu0 0.0
      %655 = vmatprep.subr.mxu0 0.0
      %656 = vmatpush1.msra.mxu0 0.0
      %657 = vmatprep.subr.mxu0 0.0
      %658 = vmatpush1.msra.mxu0 0.0
      %659 = vmatprep.subr.mxu0 0.0
      %660 = vmatpush1.msra.mxu0 0.0
      %661 = vmatprep.subr.mxu0 0.0
      %662 = vmatpush1.msra.mxu0 0.0
      %663 = vmatprep.subr.mxu0 0.0
      %664 = vmatpush1.msra.mxu0 0.0
      %665 = vmatprep.subr.mxu0 0.0
      %666 = vmatpush1.msra.mxu0 0.0
      %667 = vmatprep.subr.mxu0 0.0
      %668 = vmatpush1.msra.mxu0 0.0
      %669 = vmatprep.mubr.f32.mxu0 0.0
      %670 = vmatmul.mubr.f32.gmra.mrb[0].mxu0 %v603
      %v671 = vpop.f32.mrb[0].mxu0
      %v672 = vadd.f32 0.0, %v671
      %v673 = vpop.f32.mrb[0].mxu0
      %674 = vdwg.mxu0
      %v675 = vmul.f32 %v672, 0.0078125
      %v676 = vadd.f32 %v675, 1e-05
      %v677 = vrsqrt.pop %v676
      %v679 = vsel %vm302, %v677, 0
      %681 = vmatprep.subr.mxu0 0.0
      %682 = vmatpush1.msra.mxu0 %v388
      %683 = vmatprep.subr.mxu0 0.0
      %684 = vmatpush1.msra.mxu0 %v389
      %685 = vmatprep.subr.mxu0 0.0
      %686 = vmatpush1.msra.mxu0 %v390
      %687 = vmatprep.subr.mxu0 0.0
      %688 = vmatpush1.msra.mxu0 %v391
      %689 = vmatprep.subr.mxu0 0.0
      %690 = vmatpush1.msra.mxu0 0.0
      %691 = vmatprep.subr.mxu0 0.0
      %692 = vmatpush1.msra.mxu0 0.0
      %693 = vmatprep.subr.mxu0 0.0
      %694 = vmatpush1.msra.mxu0 0.0
      %695 = vmatprep.subr.mxu0 0.0
      %696 = vmatpush1.msra.mxu0 0.0
      %697 = vmatprep.subr.mxu0 0.0
      %698 = vmatpush1.msra.mxu0 0.0
      %699 = vmatprep.subr.mxu0 0.0
      %700 = vmatpush1.msra.mxu0 0.0
      %701 = vmatprep.subr.mxu0 0.0
      %702 = vmatpush1.msra.mxu0 0.0
      %703 = vmatprep.subr.mxu0 0.0
      %704 = vmatpush1.msra.mxu0 0.0
      %705 = vmatprep.subr.mxu0 0.0
      %706 = vmatpush1.msra.mxu0 0.0
      %707 = vmatprep.subr.mxu0 0.0
      %708 = vmatpush1.msra.mxu0 0.0
      %709 = vmatprep.subr.mxu0 0.0
      %710 = vmatpush1.msra.mxu0 0.0
      %711 = vmatprep.subr.mxu0 0.0
      %712 = vmatpush1.msra.mxu0 0.0
      %713 = vmatprep.subr.mxu0 0.0
      %714 = vmatpush1.msra.mxu0 0.0
      %715 = vmatprep.subr.mxu0 0.0
      %716 = vmatpush1.msra.mxu0 0.0
      %717 = vmatprep.subr.mxu0 0.0
      %718 = vmatpush1.msra.mxu0 0.0
      %719 = vmatprep.subr.mxu0 0.0
      %720 = vmatpush1.msra.mxu0 0.0
      %721 = vmatprep.subr.mxu0 0.0
      %722 = vmatpush1.msra.mxu0 0.0
      %723 = vmatprep.subr.mxu0 0.0
      %724 = vmatpush1.msra.mxu0 0.0
      %725 = vmatprep.subr.mxu0 0.0
      %726 = vmatpush1.msra.mxu0 0.0
      %727 = vmatprep.subr.mxu0 0.0
      %728 = vmatpush1.msra.mxu0 0.0
      %729 = vmatprep.subr.mxu0 0.0
      %730 = vmatpush1.msra.mxu0 0.0
      %731 = vmatprep.subr.mxu0 0.0
      %732 = vmatpush1.msra.mxu0 0.0
      %733 = vmatprep.subr.mxu0 0.0
      %734 = vmatpush1.msra.mxu0 0.0
      %735 = vmatprep.subr.mxu0 0.0
      %736 = vmatpush1.msra.mxu0 0.0
      %737 = vmatprep.subr.mxu0 0.0
      %738 = vmatpush1.msra.mxu0 0.0
      %739 = vmatprep.subr.mxu0 0.0
      %740 = vmatpush1.msra.mxu0 0.0
      %741 = vmatprep.subr.mxu0 0.0
      %742 = vmatpush1.msra.mxu0 0.0
      %743 = vmatprep.subr.mxu0 0.0
      %744 = vmatpush1.msra.mxu0 0.0
      %745 = vmatprep.mubr.f32.mxu0 0.0
      %746 = vmatmul.mubr.f32.gmra.mrb[0].mxu0 %v679
      %v747 = vpop.f32.mrb[0].mxu0
      %v748 = vadd.f32 0.0, %v747
      %v749 = vpop.f32.mrb[0].mxu0
      %750 = vdwg.mxu0
      %v751 = vlaneseq
      %v752 = vshrl.u32 %v751, 7
      %v753 = vsub.s32 0, %v752
      %v754 = vrot.slane %v748, %v753
      %v755 = vmul.f32 %v565, %v754
      %v756 = vmul.f32 %v566, %v754
      %v757 = vmul.f32 %v567, %v754
      %v758 = vmul.f32 %v568, %v754
      %v759 = vmul.f32 %v569, %v754
      %v760 = vmul.f32 %v570, %v754
      %v761 = vmul.f32 %v571, %v754
      %v762 = vmul.f32 %v572, %v754
      %v763 = vld [vmem:[%s4] sm:$0x1]
      %v765 = vlaneseq
      %v766 = vshrl.u32 %v765, 7
      %v767 = vsub.s32 0, %v766
      %v768 = vrot.slane %v763, %v767
      %v770 = vmul.f32 %v755, %v768
      %v771 = vmul.f32 %v756, %v768
      %v772 = vmul.f32 %v757, %v768
      %v773 = vmul.f32 %v758, %v768
      %v774 = vmul.f32 %v759, %v768
      %v775 = vmul.f32 %v760, %v768
      %v776 = vmul.f32 %v761, %v768
      %v777 = vmul.f32 %v762, %v768
      %v778 = vld [vmem:[%s5] sm:$0x1]
      %v780 = vlaneseq
      %v781 = vshrl.u32 %v780, 7
      %v782 = vsub.s32 0, %v781
      %v783 = vrot.slane %v778, %v782
      %v785 = vadd.f32 %v770, %v783
      %v786 = vadd.f32 %v771, %v783
      %v787 = vadd.f32 %v772, %v783
      %v788 = vadd.f32 %v773, %v783
      %v789 = vadd.f32 %v774, %v783
      %v790 = vadd.f32 %v775, %v783
      %v791 = vadd.f32 %v776, %v783
      %v792 = vadd.f32 %v777, %v783
      %v793 = vpack.c.bf16 %v786, %v785
      %v794 = vpack.c.bf16 %v788, %v787
      %v795 = vpack.c.bf16 %v790, %v789
      %v796 = vpack.c.bf16 %v792, %v791
      %v801 = vunpack.c.l.b16 %v793
      %v802 = vunpack.c.h.b16 %v793
      %v803 = vunpack.c.l.b16 %v794
      %v804 = vunpack.c.h.b16 %v794
      %v805 = vunpack.c.l.b16 %v795
      %v806 = vunpack.c.h.b16 %v795
      %v807 = vunpack.c.l.b16 %v796
      %v808 = vunpack.c.h.b16 %v796
      %v809 = vpack.c.b16 %v801, %v801
      %v810 = vpack.c.b16 %v802, %v802
      %v811 = vpack.c.b16 %v803, %v803
      %v812 = vpack.c.b16 %v804, %v804
      %v813 = vpack.c.b16 %v805, %v805
      %v814 = vpack.c.b16 %v806, %v806
      %v815 = vpack.c.b16 %v807, %v807
      %v816 = vpack.c.b16 %v808, %v808
      %vm825 = vcmask 519168
      %826 = vst.msk [vmem:[%s256] sm:$0xf] %vm825, %v809
      %827 = vst.msk [vmem:[%s256 + $0x4] sm:$0xf] %vm825, %v810
      %828 = vst.msk [vmem:[%s256 + $0x8] sm:$0xf] %vm825, %v811
      %829 = vst.msk [vmem:[%s256 + $0xc] sm:$0xf] %vm825, %v812
      %830 = vst.msk [vmem:[%s256 + $0x10] sm:$0xf] %vm825, %v813
      %831 = vst.msk [vmem:[%s256 + $0x14] sm:$0xf] %vm825, %v814
      %832 = vst.msk [vmem:[%s256 + $0x18] sm:$0xf] %vm825, %v815
      %833 = vst.msk [vmem:[%s256 + $0x1c] sm:$0xf] %vm825, %v816
      %p834 = scmp.lt.s32.totalorder %s17, 1
      %s835 = scalar_select %p834, %s17, 1
      %s836 = smul.addr %s835, 8
      %s837 = smul.addr %s836, 4
      %s838 = scalar_lea.vmem %s6, %s837
      // Predicated region
      $region45: #{_lambda_.6} parent=43 // pred_check
        %p839 = pneg %p166
      $region46: #{_lambda_.6} parent=43 // pred_check_branch
        %841 = sbr.rel (%p839) target = $region48
      $region47: #{_lambda_.6} parent=43 // pred_region
        _
      $region48: #{_lambda_.6} parent=43 // pred_fallthru
        _
    $region44: #{_lambda_.6} parent=5 // pred_fallthru
      _
    %p842 = scmp.le.s32.totalorder 2, %s12
    // Predicated region
    $region49: #{_lambda_.6} parent=5 // pred_check
      %p843 = pneg %p842
    $region50: #{_lambda_.6} parent=5 // pred_check_branch
      %845 = sbr.rel (%p843) target = $region52
    $region51: #{_lambda_.6} parent=5 // pred_region
      %s846 = ssub.s32 %s12, 2
      // Predicated region
      $region53: #{_lambda_.6} parent=51 // pred_check
        %p847 = pneg %p172
      $region54: #{_lambda_.6} parent=51 // pred_check_branch
        %849 = sbr.rel (%p847) target = $region56
      $region55: #{_lambda_.6} parent=51 // pred_region
        %p850 = scmp.lt.s32.totalorder %s18, 1
        %s851 = scalar_select %p850, %s18, 1
        %s852 = smul.addr %s851, 8
        %s853 = smul.addr %s852, 4
        %s854 = scalar_lea.vmem %s6, %s853
      $region56: #{_lambda_.6} parent=51 // pred_fallthru
        _
    $region52: #{_lambda_.6} parent=5 // pred_fallthru
      _
  $region6: #{_lambda_.6} parent=0 // loop_footer
    %s16 = sadd.s32 1, %s12
  $region7: #{_lambda_.6} parent=0 // loop_footer_branch
    %11 = sbr.rel target = $region3
  $region8: #{_lambda_.6} parent=0 // loop_exit
    _

// kernel: _lambda_.5
$region0: #{_lambda_.5}
  #allocation0 [shape = 'u32[]', space=smem, size = 0x4, offset = 0x4, fixed_abs, tag = 'smem constant byte address 0x4 - core index']
  #allocation1 [shape = 'u32[144,128]{1,0:T(1,128)}', space=vmem, size = 0x12000, scoped, tag = 'internal scratch']
  %s0 = inlined_call_operand.vmem [shape: bf16[8,9,9,32], index: 0, kind: input, shape index: {}]
  %s1 = inlined_call_operand.vmem [shape: bf16[288,64], index: 1, kind: input, shape index: {}]
  %s2 = inlined_call_operand.vmem [shape: f32[64,32], index: 2, kind: input, shape index: {}]
  %s3 = inlined_call_operand.vmem [shape: f32[32,64], index: 3, kind: input, shape index: {}]
  %s4 = inlined_call_operand.vmem [shape: f32[1,64], index: 4, kind: input, shape index: {}]
  %s5 = inlined_call_operand.vmem [shape: f32[1,64], index: 5, kind: input, shape index: {}]
  %s6 = inlined_call_operand.vmem [shape: bf16[2,64,64], index: 6, kind: output, shape index: {}]
  %s7 = sld [smem:[#allocation0]]
  $region57: #{_lambda_.5} parent=0
    _
  %s9 = ssub.s32 1, %s7
  %s10 = scalar_select 0, %s9, %s7
  loop: start=0, step=1, limit=4
  $region2: #{_lambda_.5} parent=0 // loop_pre_header
    _
  $region3: #{_lambda_.5} parent=0 // loop_header
    %s12 = sphi 0, %s16
    %p13 = scmp.ge.s32.totalorder %s12, 4
    %s22 = sphi 0, %s24
    %s25 = sphi 0, %s22
    %s26 = sphi 0, %s25
    %s42 = sphi 0, %s26
    %s46 = sphi 0, %s46
    %s48 = sphi 0, %s46
    %s49 = sphi 0, %s48
    %s63 = sphi 0, %s49
    %s67 = sphi 0, %s67
    %s69 = sphi 0, %s67
    %s70 = sphi 0, %s69
    %s84 = sphi 0, %s70
    %s88 = sphi 0, %s88
    %s90 = sphi 0, %s88
    %s91 = sphi 0, %s90
    %s105 = sphi 0, %s91
    %s109 = sphi 0, %s109
    %s111 = sphi 0, %s109
    %s112 = sphi 0, %s111
    %s126 = sphi 0, %s112
    %s130 = sphi 0, %s130
    %s132 = sphi 0, %s130
    %s133 = sphi 0, %s132
    %s147 = sphi 0, %s133
    %s153 = sphi 0, %s155
    %s156 = sphi 0, %s153
    %s157 = sphi 0, %s156
    %s173 = sphi 0, %s157
  $region4: #{_lambda_.5} parent=0 // loop_header_branch
    %15 = sbr.rel (%p13) target = $region8
  $region5: #{_lambda_.5} parent=0 // loop_body
    %s17 = ssub.s32 %s12, 1
    %s18 = ssub.s32 %s12, 2
    %s19 = sadd.s32 %s12, 1
    %s20 = ssub.s32 %s12, %s19
    %p21 = scmp.eq.s32.totalorder %s20, 0
    %s23 = sadd.s32 %s22, 1
    %s24 = scalar_select %p21, %s22, %s23
    %p27 = pneg %p21
    %p28 = scmp.eq.s32.totalorder %s12, 1
    %p29 = por %p27, %p28
    %p30 = scmp.ne.s32.totalorder %s22, %s25
    %p31 = scmp.eq.s32.totalorder %s12, 0
    %p32 = por %p30, %p31
    %p33 = scmp.ne.s32.totalorder %s22, %s25
    %p34 = scmp.eq.s32.totalorder %s17, 1
    %p35 = por %p33, %p34
    %p36 = scmp.ne.s32.totalorder %s25, %s26
    %p37 = scmp.eq.s32.totalorder %s17, 0
    %p38 = por %p36, %p37
    %p39 = scmp.ne.s32.totalorder %s25, %s26
    %p40 = scmp.eq.s32.totalorder %s18, 1
    %p41 = por %p39, %p40
    %p43 = scmp.ne.s32.totalorder %s26, %s42
    %p44 = scmp.eq.s32.totalorder %s18, 0
    %p45 = por %p43, %p44
    %s47 = sadd.s32 %s46, 1
    %p50 = scmp.eq.s32.totalorder %s12, 1
    %p51 = scmp.ne.s32.totalorder %s46, %s48
    %p52 = scmp.eq.s32.totalorder %s12, 0
    %p53 = por %p51, %p52
    %p54 = scmp.ne.s32.totalorder %s46, %s48
    %p55 = scmp.eq.s32.totalorder %s17, 1
    %p56 = por %p54, %p55
    %p57 = scmp.ne.s32.totalorder %s48, %s49
    %p58 = scmp.eq.s32.totalorder %s17, 0
    %p59 = por %p57, %p58
    %p60 = scmp.ne.s32.totalorder %s48, %s49
    %p61 = scmp.eq.s32.totalorder %s18, 1
    %p62 = por %p60, %p61
    %p64 = scmp.ne.s32.totalorder %s49, %s63
    %p65 = scmp.eq.s32.totalorder %s18, 0
    %p66 = por %p64, %p65
    %s68 = sadd.s32 %s67, 1
    %p71 = scmp.eq.s32.totalorder %s12, 1
    %p72 = scmp.ne.s32.totalorder %s67, %s69
    %p73 = scmp.eq.s32.totalorder %s12, 0
    %p74 = por %p72, %p73
    %p75 = scmp.ne.s32.totalorder %s67, %s69
    %p76 = scmp.eq.s32.totalorder %s17, 1
    %p77 = por %p75, %p76
    %p78 = scmp.ne.s32.totalorder %s69, %s70
    %p79 = scmp.eq.s32.totalorder %s17, 0
    %p80 = por %p78, %p79
    %p81 = scmp.ne.s32.totalorder %s69, %s70
    %p82 = scmp.eq.s32.totalorder %s18, 1
    %p83 = por %p81, %p82
    %p85 = scmp.ne.s32.totalorder %s70, %s84
    %p86 = scmp.eq.s32.totalorder %s18, 0
    %p87 = por %p85, %p86
    %s89 = sadd.s32 %s88, 1
    %p92 = scmp.eq.s32.totalorder %s12, 1
    %p93 = scmp.ne.s32.totalorder %s88, %s90
    %p94 = scmp.eq.s32.totalorder %s12, 0
    %p95 = por %p93, %p94
    %p96 = scmp.ne.s32.totalorder %s88, %s90
    %p97 = scmp.eq.s32.totalorder %s17, 1
    %p98 = por %p96, %p97
    %p99 = scmp.ne.s32.totalorder %s90, %s91
    %p100 = scmp.eq.s32.totalorder %s17, 0
    %p101 = por %p99, %p100
    %p102 = scmp.ne.s32.totalorder %s90, %s91
    %p103 = scmp.eq.s32.totalorder %s18, 1
    %p104 = por %p102, %p103
    %p106 = scmp.ne.s32.totalorder %s91, %s105
    %p107 = scmp.eq.s32.totalorder %s18, 0
    %p108 = por %p106, %p107
    %s110 = sadd.s32 %s109, 1
    %p113 = scmp.eq.s32.totalorder %s12, 1
    %p114 = scmp.ne.s32.totalorder %s109, %s111
    %p115 = scmp.eq.s32.totalorder %s12, 0
    %p116 = por %p114, %p115
    %p117 = scmp.ne.s32.totalorder %s109, %s111
    %p118 = scmp.eq.s32.totalorder %s17, 1
    %p119 = por %p117, %p118
    %p120 = scmp.ne.s32.totalorder %s111, %s112
    %p121 = scmp.eq.s32.totalorder %s17, 0
    %p122 = por %p120, %p121
    %p123 = scmp.ne.s32.totalorder %s111, %s112
    %p124 = scmp.eq.s32.totalorder %s18, 1
    %p125 = por %p123, %p124
    %p127 = scmp.ne.s32.totalorder %s112, %s126
    %p128 = scmp.eq.s32.totalorder %s18, 0
    %p129 = por %p127, %p128
    %s131 = sadd.s32 %s130, 1
    %p134 = scmp.eq.s32.totalorder %s12, 1
    %p135 = scmp.ne.s32.totalorder %s130, %s132
    %p136 = scmp.eq.s32.totalorder %s12, 0
    %p137 = por %p135, %p136
    %p138 = scmp.ne.s32.totalorder %s130, %s132
    %p139 = scmp.eq.s32.totalorder %s17, 1
    %p140 = por %p138, %p139
    %p141 = scmp.ne.s32.totalorder %s132, %s133
    %p142 = scmp.eq.s32.totalorder %s17, 0
    %p143 = por %p141, %p142
    %p144 = scmp.ne.s32.totalorder %s132, %s133
    %p145 = scmp.eq.s32.totalorder %s18, 1
    %p146 = por %p144, %p145
    %p148 = scmp.ne.s32.totalorder %s133, %s147
    %p149 = scmp.eq.s32.totalorder %s18, 0
    %p150 = por %p148, %p149
    %s151 = ssub.s32 %s12, %s19
    %p152 = scmp.eq.s32.totalorder %s151, 0
    %s154 = sadd.s32 %s153, 1
    %s155 = scalar_select %p152, %s153, %s154
    %p158 = pneg %p152
    %p159 = scmp.eq.s32.totalorder %s12, 1
    %p160 = por %p158, %p159
    %p161 = scmp.ne.s32.totalorder %s153, %s156
    %p162 = scmp.eq.s32.totalorder %s12, 0
    %p163 = por %p161, %p162
    %p164 = scmp.ne.s32.totalorder %s153, %s156
    %p165 = scmp.eq.s32.totalorder %s17, 1
    %p166 = por %p164, %p165
    %p167 = scmp.ne.s32.totalorder %s156, %s157
    %p168 = scmp.eq.s32.totalorder %s17, 0
    %p169 = por %p167, %p168
    %p170 = scmp.ne.s32.totalorder %s156, %s157
    %p171 = scmp.eq.s32.totalorder %s18, 1
    %p172 = por %p170, %p171
    %p174 = scmp.ne.s32.totalorder %s157, %s173
    %p175 = scmp.eq.s32.totalorder %s18, 0
    %p176 = por %p174, %p175
    %p177 = scmp.le.s32.totalorder 1, %s12
    %p178 = scmp.lt.s32.totalorder %s12, 3
    %p179 = pnand %p177, %p178
    %p180 = pneg %p179
    // Predicated region
    $region9: #{_lambda_.5} parent=5 // pred_check
      _
    $region10: #{_lambda_.5} parent=5 // pred_check_branch
      %182 = sbr.rel (%p179) target = $region12
    $region11: #{_lambda_.5} parent=5 // pred_region
      %s183 = ssub.s32 %s12, 1
      // Predicated region
      $region13: #{_lambda_.5} parent=11 // pred_check
        %p184 = pneg %p59
      $region14: #{_lambda_.5} parent=11 // pred_check_branch
        %186 = sbr.rel (%p184) target = $region16
      $region15: #{_lambda_.5} parent=11 // pred_region
        _
      $region16: #{_lambda_.5} parent=11 // pred_fallthru
        _
      // Predicated region
      $region17: #{_lambda_.5} parent=11 // pred_check
        %p187 = pneg %p80
      $region18: #{_lambda_.5} parent=11 // pred_check_branch
        %189 = sbr.rel (%p187) target = $region20
      $region19: #{_lambda_.5} parent=11 // pred_region
        _
      $region20: #{_lambda_.5} parent=11 // pred_fallthru
        _
      // Predicated region
      $region21: #{_lambda_.5} parent=11 // pred_check
        %p190 = pneg %p101
      $region22: #{_lambda_.5} parent=11 // pred_check_branch
        %192 = sbr.rel (%p190) target = $region24
      $region23: #{_lambda_.5} parent=11 // pred_region
        _
      $region24: #{_lambda_.5} parent=11 // pred_fallthru
        _
      // Predicated region
      $region25: #{_lambda_.5} parent=11 // pred_check
        %p193 = pneg %p122
      $region26: #{_lambda_.5} parent=11 // pred_check_branch
        %195 = sbr.rel (%p193) target = $region28
      $region27: #{_lambda_.5} parent=11 // pred_region
        _
      $region28: #{_lambda_.5} parent=11 // pred_fallthru
        _
      // Predicated region
      $region29: #{_lambda_.5} parent=11 // pred_check
        %p196 = pneg %p143
      $region30: #{_lambda_.5} parent=11 // pred_check_branch
        %198 = sbr.rel (%p196) target = $region32
      $region31: #{_lambda_.5} parent=11 // pred_region
        _
      $region32: #{_lambda_.5} parent=11 // pred_fallthru
        _
    $region12: #{_lambda_.5} parent=5 // pred_fallthru
      _
    %p199 = scmp.lt.s32.totalorder %s12, 2
    // Predicated region
    $region33: #{_lambda_.5} parent=5 // pred_check
      %p200 = pneg %p199
    $region34: #{_lambda_.5} parent=5 // pred_check_branch
      %202 = sbr.rel (%p200) target = $region36
    $region35: #{_lambda_.5} parent=5 // pred_region
      // Predicated region
      $region37: #{_lambda_.5} parent=35 // pred_check
        %p203 = pneg %p32
      $region38: #{_lambda_.5} parent=35 // pred_check_branch
        %205 = sbr.rel (%p203) target = $region40
      $region39: #{_lambda_.5} parent=35 // pred_region
        %s206 = smul.u32 4, %s12
        %p207 = scmp.lt.s32.totalorder %s206, 7
        %s208 = scalar_select %p207, %s206, 7
        %s209 = smul.addr %s208, 18
        %s210 = smul.addr %s209, 4
        %s211 = scalar_lea.vmem %s0, %s210
        %s212 = smul.u32 4, %s12
      $region40: #{_lambda_.5} parent=35 // pred_fallthru
        _
    $region36: #{_lambda_.5} parent=5 // pred_fallthru
      _
    %p213 = scmp.le.s32.totalorder 1, %s12
    %p214 = scmp.lt.s32.totalorder %s12, 3
    %p215 = pnand %p213, %p214
    %p216 = pneg %p215
    // Predicated region
    $region41: #{_lambda_.5} parent=5 // pred_check
      _
    $region42: #{_lambda_.5} parent=5 // pred_check_branch
      %218 = sbr.rel (%p215) target = $region44
    $region43: #{_lambda_.5} parent=5 // pred_region
      %s219 = ssub.s32 %s12, 1
      %s220 = smul.u32 4, %s17
      %p221 = scmp.lt.s32.totalorder %s220, 7
      %s222 = scalar_select %p221, %s220, 7
      %s223 = smul.addr %s222, 18
      %s224 = smul.addr %s223, 4
      %s225 = scalar_lea.vmem %s0, %s224
      %p226 = pneg %p38
      %p227 = pneg %p35
      %p228 = pneg %p59
      %p229 = pneg %p56
      %p230 = pneg %p80
      %p231 = pneg %p77
      %p232 = pneg %p101
      %p233 = pneg %p98
      %p234 = pneg %p122
      %p235 = pneg %p119
      %p236 = pneg %p143
      %p237 = pneg %p140
      %p238 = pneg %p169
      %p239 = pneg %p166
      %p240 = scmp.lt.s32.totalorder %s17, 1
      %s241 = scalar_select %p240, %s17, 1
      %s242 = smul.addr %s241, 8
      %s243 = smul.addr %s242, 4
      %s244 = scalar_lea.vmem %s6, %s243
      %s245 = smul.u32 4, %s17
      %p246 = scmp.lt.s32.totalorder %s245, 7
      %s247 = scalar_select %p246, %s245, 7
      %s248 = smul.addr %s247, 18
      %s249 = smul.addr %s248, 4
      %s250 = scalar_lea.vmem %s0, %s249
      %s251 = smul.u32 4, %s17
      %p252 = scmp.lt.s32.totalorder %s17, 1
      %s253 = scalar_select %p252, %s17, 1
      %s254 = smul.addr %s253, 8
      %s255 = smul.addr %s254, 4
      %s256 = scalar_lea.vmem %s6, %s255
      %v258 = vld [vmem:[%s250] sm:$0xf]
      %v259 = vld [vmem:[%s250 + $0x8] sm:$0xf]
      %v260 = vld [vmem:[%s250 + $0x10] sm:$0xf]
      %v261 = vld [vmem:[%s250 + $0x18] sm:$0xf]
      %v262 = vld [vmem:[%s250 + $0x20] sm:$0xf]
      %v263 = vld [vmem:[%s250 + $0x28] sm:$0xf]
      %v264 = vld [vmem:[%s250 + $0x30] sm:$0xf]
      %v265 = vld [vmem:[%s250 + $0x38] sm:$0xf]
      %v266 = vld [vmem:[%s1] sm:$0xf]
      %v267 = vld [vmem:[%s1 + $0x4] sm:$0xf]
      %v268 = vld [vmem:[%s1 + $0x8] sm:$0xf]
      %v269 = vld [vmem:[%s1 + $0xc] sm:$0xf]
      %s270 = scalar_lea.vmem %s250, 72
      %v271 = vld [vmem:[%s270] sm:$0xf]
      %v272 = vld [vmem:[%s270 + $0x8] sm:$0xf]
      %v273 = vld [vmem:[%s270 + $0x10] sm:$0xf]
      %v274 = vld [vmem:[%s270 + $0x18] sm:$0xf]
      %v275 = vld [vmem:[%s270 + $0x20] sm:$0xf]
      %v276 = vld [vmem:[%s270 + $0x28] sm:$0xf]
      %v277 = vld [vmem:[%s270 + $0x30] sm:$0xf]
      %v278 = vld [vmem:[%s270 + $0x38] sm:$0xf]
      %v279 = vld [vmem:[%s1 + $0x10] sm:$0xf]
      %v280 = vld [vmem:[%s1 + $0x14] sm:$0xf]
      %v281 = vld [vmem:[%s1 + $0x18] sm:$0xf]
      %v282 = vld [vmem:[%s1 + $0x1c] sm:$0xf]
      %v291 = vunpack.c.l.b16 %v271
      %v292 = vunpack.c.l.b16 %v272
      %v293 = vunpack.c.l.b16 %v273
      %v294 = vunpack.c.l.b16 %v274
      %v295 = vunpack.c.l.b16 %v275
      %v296 = vunpack.c.l.b16 %v276
      %v297 = vunpack.c.l.b16 %v277
      %v298 = vunpack.c.l.b16 %v278
      %v299 = vpack.c.b16 %v292, %v291
      %v300 = vpack.c.b16 %v294, %v293
      %v301 = vpack.c.b16 %v296, %v295
      %v302 = vpack.c.b16 %v298, %v297
      %v307 = vunpack.c.l.b16 %v279
      %v308 = vunpack.c.l.b16 %v280
      %v309 = vunpack.c.l.b16 %v281
      %v310 = vunpack.c.l.b16 %v282
      %v311 = vpack.c.b16 %v308, %v307
      %v312 = vpack.c.b16 %v310, %v309
      %vm315 = vcmask 261120
      %v317 = vsel %vm315, %v299, 0
      %v320 = vsel %vm315, %v300, 0
      %v323 = vsel %vm315, %v301, 0
      %v326 = vsel %vm315, %v302, 0
      %328 = vmatprep.subr.bf16.mxu0 0
      %329 = vmatpush1.bf16.msra.mxu0 %v311
      %330 = vmatprep.subr.bf16.mxu0 0
      %331 = vmatpush1.bf16.msra.mxu0 %v312
      %332 = vmatprep.subr.bf16.mxu0 0
      %333 = vmatpush1.bf16.msra.mxu0 0
      %334 = vmatprep.subr.bf16.mxu0 0
      %335 = vmatpush1.bf16.msra.mxu0 0
      %336 = vmatprep.subr.bf16.mxu0 0
      %337 = vmatpush1.bf16.msra.mxu0 0
      %338 = vmatprep.subr.bf16.mxu0 0
      %339 = vmatpush1.bf16.msra.mxu0 0
      %340 = vmatprep.subr.bf16.mxu0 0
      %341 = vmatpush1.bf16.msra.mxu0 0
      %342 = vmatprep.subr.bf16.mxu0 0
      %343 = vmatpush1.bf16.msra.mxu0 0
      %344 = vmatprep.subr.bf16.mxu0 0
      %345 = vmatpush1.bf16.msra.mxu0 0
      %346 = vmatprep.subr.bf16.mxu0 0
      %347 = vmatpush1.bf16.msra.mxu0 0
      %348 = vmatprep.subr.bf16.mxu0 0
      %349 = vmatpush1.bf16.msra.mxu0 0
      %350 = vmatprep.subr.bf16.mxu0 0
      %351 = vmatpush1.bf16.msra.mxu0 0
      %352 = vmatprep.subr.bf16.mxu0 0
      %353 = vmatpush1.bf16.msra.mxu0 0
      %354 = vmatprep.subr.bf16.mxu0 0
      %355 = vmatpush1.bf16.msra.mxu0 0
      %356 = vmatprep.subr.bf16.mxu0 0
      %357 = vmatpush1.bf16.msra.mxu0 0
      %358 = vmatprep.subr.bf16.mxu0 0
      %359 = vmatpush1.bf16.msra.mxu0 0
      %360 = vmatprep.mubr.bf16.mxu0 0
      %361 = vmatmul.mubr.bf16.gmra.mrb[0].mxu0 %v317
      %v362 = vpop.f32.mrb[0].mxu0
      %v363 = vadd.f32 0.0, %v362
      %v364 = vpop.f32.mrb[0].mxu0
      %v365 = vpop.f32.mrb[0].mxu0
      %v366 = vadd.f32 0.0, %v365
      %v367 = vpop.f32.mrb[0].mxu0
      %368 = vmatprep.mubr.bf16.mxu0 0
      %369 = vmatmul.mubr.bf16.gmra.mrb[0].mxu0 %v320
      %v370 = vpop.f32.mrb[0].mxu0
      %v371 = vadd.f32 0.0, %v370
      %v372 = vpop.f32.mrb[0].mxu0
      %v373 = vpop.f32.mrb[0].mxu0
      %v374 = vadd.f32 0.0, %v373
      %v375 = vpop.f32.mrb[0].mxu0
      %376 = vmatprep.mubr.bf16.mxu0 0
      %377 = vmatmul.mubr.bf16.gmra.mrb[0].mxu0 %v323
      %v378 = vpop.f32.mrb[0].mxu0
      %v379 = vadd.f32 0.0, %v378
      %v380 = vpop.f32.mrb[0].mxu0
      %v381 = vpop.f32.mrb[0].mxu0
      %v382 = vadd.f32 0.0, %v381
      %v383 = vpop.f32.mrb[0].mxu0
      %384 = vmatprep.mubr.bf16.mxu0 0
      %385 = vmatmul.mubr.bf16.gmra.mrb[0].mxu0 %v326
      %v386 = vpop.f32.mrb[0].mxu0
      %v387 = vadd.f32 0.0, %v386
      %v388 = vpop.f32.mrb[0].mxu0
      %v389 = vpop.f32.mrb[0].mxu0
      %v390 = vadd.f32 0.0, %v389
      %v391 = vpop.f32.mrb[0].mxu0
      %392 = vdwg.mxu0
      %v401 = vunpack.c.l.b16 %v258
      %v402 = vunpack.c.l.b16 %v259
      %v403 = vunpack.c.l.b16 %v260
      %v404 = vunpack.c.l.b16 %v261
      %v405 = vunpack.c.l.b16 %v262
      %v406 = vunpack.c.l.b16 %v263
      %v407 = vunpack.c.l.b16 %v264
      %v408 = vunpack.c.l.b16 %v265
      %v409 = vpack.c.b16 %v402, %v401
      %v410 = vpack.c.b16 %v404, %v403
      %v411 = vpack.c.b16 %v406, %v405
      %v412 = vpack.c.b16 %v408, %v407
      %v417 = vunpack.c.l.b16 %v266
      %v418 = vunpack.c.l.b16 %v267
      %v419 = vunpack.c.l.b16 %v268
      %v420 = vunpack.c.l.b16 %v269
      %v421 = vpack.c.b16 %v418, %v417
      %v422 = vpack.c.b16 %v420, %v419
      %v426 = vsel %vm315, %v409, 0
      %v429 = vsel %vm315, %v410, 0
      %v432 = vsel %vm315, %v411, 0
      %v435 = vsel %vm315, %v412, 0
      %437 = vmatprep.subr.bf16.mxu0 0
      %438 = vmatpush1.bf16.msra.mxu0 %v421
      %439 = vmatprep.subr.bf16.mxu0 0
      %440 = vmatpush1.bf16.msra.mxu0 %v422
      %441 = vmatprep.subr.bf16.mxu0 0
      %442 = vmatpush1.bf16.msra.mxu0 0
      %443 = vmatprep.subr.bf16.mxu0 0
      %444 = vmatpush1.bf16.msra.mxu0 0
      %445 = vmatprep.subr.bf16.mxu0 0
      %446 = vmatpush1.bf16.msra.mxu0 0
      %447 = vmatprep.subr.bf16.mxu0 0
      %448 = vmatpush1.bf16.msra.mxu0 0
      %449 = vmatprep.subr.bf16.mxu0 0
      %450 = vmatpush1.bf16.msra.mxu0 0
      %451 = vmatprep.subr.bf16.mxu0 0
      %452 = vmatpush1.bf16.msra.mxu0 0
      %453 = vmatprep.subr.bf16.mxu0 0
      %454 = vmatpush1.bf16.msra.mxu0 0
      %455 = vmatprep.subr.bf16.mxu0 0
      %456 = vmatpush1.bf16.msra.mxu0 0
      %457 = vmatprep.subr.bf16.mxu0 0
      %458 = vmatpush1.bf16.msra.mxu0 0
      %459 = vmatprep.subr.bf16.mxu0 0
      %460 = vmatpush1.bf16.msra.mxu0 0
      %461 = vmatprep.subr.bf16.mxu0 0
      %462 = vmatpush1.bf16.msra.mxu0 0
      %463 = vmatprep.subr.bf16.mxu0 0
      %464 = vmatpush1.bf16.msra.mxu0 0
      %465 = vmatprep.subr.bf16.mxu0 0
      %466 = vmatpush1.bf16.msra.mxu0 0
      %467 = vmatprep.subr.bf16.mxu0 0
      %468 = vmatpush1.bf16.msra.mxu0 0
      %469 = vmatprep.mubr.bf16.mxu0 0
      %470 = vmatmul.mubr.bf16.gmra.mrb[0].mxu0 %v426
      %v471 = vpop.f32.mrb[0].mxu0
      %v472 = vadd.f32 %v363, %v471
      %v473 = vpop.f32.mrb[0].mxu0
      %v474 = vpop.f32.mrb[0].mxu0
      %v475 = vadd.f32 %v366, %v474
      %v476 = vpop.f32.mrb[0].mxu0
      %477 = vmatprep.mubr.bf16.mxu0 0
      %478 = vmatmul.mubr.bf16.gmra.mrb[0].mxu0 %v429
      %v479 = vpop.f32.mrb[0].mxu0
      %v480 = vadd.f32 %v371, %v479
      %v481 = vpop.f32.mrb[0].mxu0
      %v482 = vpop.f32.mrb[0].mxu0
      %v483 = vadd.f32 %v374, %v482
      %v484 = vpop.f32.mrb[0].mxu0
      %485 = vmatprep.mubr.bf16.mxu0 0
      %486 = vmatmul.mubr.bf16.gmra.mrb[0].mxu0 %v432
      %v487 = vpop.f32.mrb[0].mxu0
      %v488 = vadd.f32 %v379, %v487
      %v489 = vpop.f32.mrb[0].mxu0
      %v490 = vpop.f32.mrb[0].mxu0
      %v491 = vadd.f32 %v382, %v490
      %v492 = vpop.f32.mrb[0].mxu0
      %493 = vmatprep.mubr.bf16.mxu0 0
      %494 = vmatmul.mubr.bf16.gmra.mrb[0].mxu0 %v435
      %v495 = vpop.f32.mrb[0].mxu0
      %v496 = vadd.f32 %v387, %v495
      %v497 = vpop.f32.mrb[0].mxu0
      %v498 = vpop.f32.mrb[0].mxu0
      %v499 = vadd.f32 %v390, %v498
      %v500 = vpop.f32.mrb[0].mxu0
      %501 = vdwg.mxu0
      %v502 = vld [vmem:[%s250] sm:$0xf]
      %v503 = vld [vmem:[%s250 + $0x4] sm:$0x1]
      %v504 = vld [vmem:[%s250 + $0x8] sm:$0xf]
      %v505 = vld [vmem:[%s250 + $0xc] sm:$0x1]
      %v506 = vld [vmem:[%s250 + $0x10] sm:$0xf]
      %v507 = vld [vmem:[%s250 + $0x14] sm:$0x1]
      %v508 = vld [vmem:[%s250 + $0x18] sm:$0xf]
      %v509 = vld [vmem:[%s250 + $0x1c] sm:$0x1]
      %v510 = vld [vmem:[%s250 + $0x20] sm:$0xf]
      %v511 = vld [vmem:[%s250 + $0x24] sm:$0x1]
      %v512 = vld [vmem:[%s250 + $0x28] sm:$0xf]
      %v513 = vld [vmem:[%s250 + $0x2c] sm:$0x1]
      %v514 = vld [vmem:[%s250 + $0x30] sm:$0xf]
      %v515 = vld [vmem:[%s250 + $0x34] sm:$0x1]
      %v516 = vld [vmem:[%s250 + $0x38] sm:$0xf]
      %v517 = vld [vmem:[%s250 + $0x3c] sm:$0x1]
      %vm518 = vsmask.f32 3328
      %vm519 = vsmask.f32 7440
      %vm520 = vmor %vm518, %vm519
      %v522 = vshrl.u32 %v502, 16
      %v524 = vrot.slane %v522, 4
      %v525 = vshll.u32 %v502, 16
      %v527 = vrot.slane %v525, 5
      %v528 = vor.u32 %v524, %v527
      %v529 = vrot.slane %v528, 4
      %v531 = vshll.u32 %v503, 16
      %v533 = vrot.slane %v531, 5
      %v534 = vsel %vm520, %v529, %v533
      %v536 = vshrl.u32 %v504, 16
      %v538 = vrot.slane %v536, 4
      %v539 = vshll.u32 %v504, 16
      %v541 = vrot.slane %v539, 5
      %v542 = vor.u32 %v538, %v541
      %v543 = vrot.slane %v542, 4
      %v545 = vshll.u32 %v505, 16
      %v547 = vrot.slane %v545, 5
      %v548 = vsel %vm520, %v543, %v547
      %v550 = vshrl.u32 %v506, 16
      %v552 = vrot.slane %v550, 4
      %v553 = vshll.u32 %v506, 16
      %v555 = vrot.slane %v553, 5
      %v556 = vor.u32 %v552, %v555
      %v557 = vrot.slane %v556, 4
      %v559 = vshll.u32 %v507, 16
      %v561 = vrot.slane %v559, 5
      %v562 = vsel %vm520, %v557, %v561
      %v564 = vshrl.u32 %v508, 16
      %v566 = vrot.slane %v564, 4
      %v567 = vshll.u32 %v508, 16
      %v569 = vrot.slane %v567, 5
      %v570 = vor.u32 %v566, %v569
      %v571 = vrot.slane %v570, 4
      %v573 = vshll.u32 %v509, 16
      %v575 = vrot.slane %v573, 5
      %v576 = vsel %vm520, %v571, %v575
      %v578 = vshrl.u32 %v510, 16
      %v580 = vrot.slane %v578, 4
      %v581 = vshll.u32 %v510, 16
      %v583 = vrot.slane %v581, 5
      %v584 = vor.u32 %v580, %v583
      %v585 = vrot.slane %v584, 4
      %v587 = vshll.u32 %v511, 16
      %v589 = vrot.slane %v587, 5
      %v590 = vsel %vm520, %v585, %v589
      %v592 = vshrl.u32 %v512, 16
      %v594 = vrot.slane %v592, 4
      %v595 = vshll.u32 %v512, 16
      %v597 = vrot.slane %v595, 5
      %v598 = vor.u32 %v594, %v597
      %v599 = vrot.slane %v598, 4
      %v601 = vshll.u32 %v513, 16
      %v603 = vrot.slane %v601, 5
      %v604 = vsel %vm520, %v599, %v603
      %v606 = vshrl.u32 %v514, 16
      %v608 = vrot.slane %v606, 4
      %v609 = vshll.u32 %v514, 16
      %v611 = vrot.slane %v609, 5
      %v612 = vor.u32 %v608, %v611
      %v613 = vrot.slane %v612, 4
      %v615 = vshll.u32 %v515, 16
      %v617 = vrot.slane %v615, 5
      %v618 = vsel %vm520, %v613, %v617
      %v620 = vshrl.u32 %v516, 16
      %v622 = vrot.slane %v620, 4
      %v623 = vshll.u32 %v516, 16
      %v625 = vrot.slane %v623, 5
      %v626 = vor.u32 %v622, %v625
      %v627 = vrot.slane %v626, 4
      %v629 = vshll.u32 %v517, 16
      %v631 = vrot.slane %v629, 5
      %v632 = vsel %vm520, %v627, %v631
      %v633 = vld [vmem:[%s1 + $0x20] sm:$0xf]
      %v634 = vld [vmem:[%s1 + $0x24] sm:$0xf]
      %v635 = vld [vmem:[%s1 + $0x28] sm:$0xf]
      %v636 = vld [vmem:[%s1 + $0x2c] sm:$0xf]
      %v637 = vunpack.c.l.b16 %v534
      %v638 = vunpack.c.l.b16 %v548
      %v639 = vunpack.c.l.b16 %v562
      %v640 = vunpack.c.l.b16 %v576
      %v641 = vunpack.c.l.b16 %v590
      %v642 = vunpack.c.l.b16 %v604
      %v643 = vunpack.c.l.b16 %v618
      %v644 = vunpack.c.l.b16 %v632
      %v645 = vpack.c.b16 %v638, %v637
      %v646 = vpack.c.b16 %v640, %v639
      %v647 = vpack.c.b16 %v642, %v641
      %v648 = vpack.c.b16 %v644, %v643
      %v653 = vunpack.c.l.b16 %v633
      %v654 = vunpack.c.l.b16 %v634
      %v655 = vunpack.c.l.b16 %v635
      %v656 = vunpack.c.l.b16 %v636
      %v657 = vpack.c.b16 %v654, %v653
      %v658 = vpack.c.b16 %v656, %v655
      %v662 = vsel %vm315, %v645, 0
      %v665 = vsel %vm315, %v646, 0
      %v668 = vsel %vm315, %v647, 0
      %v671 = vsel %vm315, %v648, 0
      %673 = vmatprep.subr.bf16.mxu0 0
      %674 = vmatpush1.bf16.msra.mxu0 %v657
      %675 = vmatprep.subr.bf16.mxu0 0
      %676 = vmatpush1.bf16.msra.mxu0 %v658
      %677 = vmatprep.subr.bf16.mxu0 0
      %678 = vmatpush1.bf16.msra.mxu0 0
      %679 = vmatprep.subr.bf16.mxu0 0
      %680 = vmatpush1.bf16.msra.mxu0 0
      %681 = vmatprep.subr.bf16.mxu0 0
      %682 = vmatpush1.bf16.msra.mxu0 0
      %683 = vmatprep.subr.bf16.mxu0 0
      %684 = vmatpush1.bf16.msra.mxu0 0
      %685 = vmatprep.subr.bf16.mxu0 0
      %686 = vmatpush1.bf16.msra.mxu0 0
      %687 = vmatprep.subr.bf16.mxu0 0
      %688 = vmatpush1.bf16.msra.mxu0 0
      %689 = vmatprep.subr.bf16.mxu0 0
      %690 = vmatpush1.bf16.msra.mxu0 0
      %691 = vmatprep.subr.bf16.mxu0 0
      %692 = vmatpush1.bf16.msra.mxu0 0
      %693 = vmatprep.subr.bf16.mxu0 0
      %694 = vmatpush1.bf16.msra.mxu0 0
      %695 = vmatprep.subr.bf16.mxu0 0
      %696 = vmatpush1.bf16.msra.mxu0 0
      %697 = vmatprep.subr.bf16.mxu0 0
      %698 = vmatpush1.bf16.msra.mxu0 0
      %699 = vmatprep.subr.bf16.mxu0 0
      %700 = vmatpush1.bf16.msra.mxu0 0
      %701 = vmatprep.subr.bf16.mxu0 0
      %702 = vmatpush1.bf16.msra.mxu0 0
      %703 = vmatprep.subr.bf16.mxu0 0
      %704 = vmatpush1.bf16.msra.mxu0 0
      %705 = vmatprep.mubr.bf16.mxu0 0
      %706 = vmatmul.mubr.bf16.gmra.mrb[0].mxu0 %v662
      %v707 = vpop.f32.mrb[0].mxu0
      %v708 = vadd.f32 0.0, %v707
      %v709 = vpop.f32.mrb[0].mxu0
      %v710 = vpop.f32.mrb[0].mxu0
      %v711 = vadd.f32 0.0, %v710
      %v712 = vpop.f32.mrb[0].mxu0
      %713 = vmatprep.mubr.bf16.mxu0 0
      %714 = vmatmul.mubr.bf16.gmra.mrb[0].mxu0 %v665
      %v715 = vpop.f32.mrb[0].mxu0
      %v716 = vadd.f32 0.0, %v715
      %v717 = vpop.f32.mrb[0].mxu0
      %v718 = vpop.f32.mrb[0].mxu0
      %v719 = vadd.f32 0.0, %v718
      %v720 = vpop.f32.mrb[0].mxu0
      %721 = vmatprep.mubr.bf16.mxu0 0
      %722 = vmatmul.mubr.bf16.gmra.mrb[0].mxu0 %v668
      %v723 = vpop.f32.mrb[0].mxu0
      %v724 = vadd.f32 0.0, %v723
      %v725 = vpop.f32.mrb[0].mxu0
      %v726 = vpop.f32.mrb[0].mxu0
      %v727 = vadd.f32 0.0, %v726
      %v728 = vpop.f32.mrb[0].mxu0
      %729 = vmatprep.mubr.bf16.mxu0 0
      %730 = vmatmul.mubr.bf16.gmra.mrb[0].mxu0 %v671
      %v731 = vpop.f32.mrb[0].mxu0
      %v732 = vadd.f32 0.0, %v731
      %v733 = vpop.f32.mrb[0].mxu0
      %v734 = vpop.f32.mrb[0].mxu0
      %v735 = vadd.f32 0.0, %v734
      %v736 = vpop.f32.mrb[0].mxu0
      %737 = vdwg.mxu0
      %v738 = vadd.f32 %v472, %v708
      %v739 = vadd.f32 %v475, %v711
      %v740 = vadd.f32 %v480, %v716
      %v741 = vadd.f32 %v483, %v719
      %v742 = vadd.f32 %v488, %v724
      %v743 = vadd.f32 %v491, %v727
      %v744 = vadd.f32 %v496, %v732
      %v745 = vadd.f32 %v499, %v735
      %s746 = scalar_lea.vmem %s250, 144
      %v747 = vld [vmem:[%s746] sm:$0xf]
      %v748 = vld [vmem:[%s746 + $0x8] sm:$0xf]
      %v749 = vld [vmem:[%s746 + $0x10] sm:$0xf]
      %v750 = vld [vmem:[%s746 + $0x18] sm:$0xf]
      %v751 = vld [vmem:[%s746 + $0x20] sm:$0xf]
      %v752 = vld [vmem:[%s746 + $0x28] sm:$0xf]
      %v753 = vld [vmem:[%s746 + $0x30] sm:$0xf]
      %v754 = vld [vmem:[%s746 + $0x38] sm:$0xf]
      %v755 = vld [vmem:[%s1 + $0x30] sm:$0xf]
      %v756 = vld [vmem:[%s1 + $0x34] sm:$0xf]
      %v757 = vld [vmem:[%s1 + $0x38] sm:$0xf]
      %v758 = vld [vmem:[%s1 + $0x3c] sm:$0xf]
      %v767 = vunpack.c.l.b16 %v747
      %v768 = vunpack.c.l.b16 %v748
      %v769 = vunpack.c.l.b16 %v749
      %v770 = vunpack.c.l.b16 %v750
      %v771 = vunpack.c.l.b16 %v751
      %v772 = vunpack.c.l.b16 %v752
      %v773 = vunpack.c.l.b16 %v753
      %v774 = vunpack.c.l.b16 %v754
      %v775 = vpack.c.b16 %v768, %v767
      %v776 = vpack.c.b16 %v770, %v769
      %v777 = vpack.c.b16 %v772, %v771
      %v778 = vpack.c.b16 %v774, %v773
      %v783 = vunpack.c.l.b16 %v755
      %v784 = vunpack.c.l.b16 %v756
      %v785 = vunpack.c.l.b16 %v757
      %v786 = vunpack.c.l.b16 %v758
      %v787 = vpack.c.b16 %v784, %v783
      %v788 = vpack.c.b16 %v786, %v785
      %v792 = vsel %vm315, %v775, 0
      %v795 = vsel %vm315, %v776, 0
      %v798 = vsel %vm315, %v777, 0
      %v801 = vsel %vm315, %v778, 0
      %803 = vmatprep.subr.bf16.mxu0 0
      %804 = vmatpush1.bf16.msra.mxu0 %v787
      %805 = vmatprep.subr.bf16.mxu0 0
      %806 = vmatpush1.bf16.msra.mxu0 %v788
      %807 = vmatprep.subr.bf16.mxu0 0
      %808 = vmatpush1.bf16.msra.mxu0 0
      %809 = vmatprep.subr.bf16.mxu0 0
      %810 = vmatpush1.bf16.msra.mxu0 0
      %811 = vmatprep.subr.bf16.mxu0 0
      %812 = vmatpush1.bf16.msra.mxu0 0
      %813 = vmatprep.subr.bf16.mxu0 0
      %814 = vmatpush1.bf16.msra.mxu0 0
      %815 = vmatprep.subr.bf16.mxu0 0
      %816 = vmatpush1.bf16.msra.mxu0 0
      %817 = vmatprep.subr.bf16.mxu0 0
      %818 = vmatpush1.bf16.msra.mxu0 0
      %819 = vmatprep.subr.bf16.mxu0 0
      %820 = vmatpush1.bf16.msra.mxu0 0
      %821 = vmatprep.subr.bf16.mxu0 0
      %822 = vmatpush1.bf16.msra.mxu0 0
      %823 = vmatprep.subr.bf16.mxu0 0
      %824 = vmatpush1.bf16.msra.mxu0 0
      %825 = vmatprep.subr.bf16.mxu0 0
      %826 = vmatpush1.bf16.msra.mxu0 0
      %827 = vmatprep.subr.bf16.mxu0 0
      %828 = vmatpush1.bf16.msra.mxu0 0
      %829 = vmatprep.subr.bf16.mxu0 0
      %830 = vmatpush1.bf16.msra.mxu0 0
      %831 = vmatprep.subr.bf16.mxu0 0
      %832 = vmatpush1.bf16.msra.mxu0 0
      %833 = vmatprep.subr.bf16.mxu0 0
      %834 = vmatpush1.bf16.msra.mxu0 0
      %835 = vmatprep.mubr.bf16.mxu0 0
      %836 = vmatmul.mubr.bf16.gmra.mrb[0].mxu0 %v792
      %v837 = vpop.f32.mrb[0].mxu0
      %v838 = vadd.f32 0.0, %v837
      %v839 = vpop.f32.mrb[0].mxu0
      %v840 = vpop.f32.mrb[0].mxu0
      %v841 = vadd.f32 0.0, %v840
      %v842 = vpop.f32.mrb[0].mxu0
      %843 = vmatprep.mubr.bf16.mxu0 0
      %844 = vmatmul.mubr.bf16.gmra.mrb[0].mxu0 %v795
      %v845 = vpop.f32.mrb[0].mxu0
      %v846 = vadd.f32 0.0, %v845
      %v847 = vpop.f32.mrb[0].mxu0
      %v848 = vpop.f32.mrb[0].mxu0
      %v849 = vadd.f32 0.0, %v848
      %v850 = vpop.f32.mrb[0].mxu0
      %851 = vmatprep.mubr.bf16.mxu0 0
      %852 = vmatmul.mubr.bf16.gmra.mrb[0].mxu0 %v798
      %v853 = vpop.f32.mrb[0].mxu0
      %v854 = vadd.f32 0.0, %v853
      %v855 = vpop.f32.mrb[0].mxu0
      %v856 = vpop.f32.mrb[0].mxu0
      %v857 = vadd.f32 0.0, %v856
      %v858 = vpop.f32.mrb[0].mxu0
      %859 = vmatprep.mubr.bf16.mxu0 0
      %860 = vmatmul.mubr.bf16.gmra.mrb[0].mxu0 %v801
      %v861 = vpop.f32.mrb[0].mxu0
      %v862 = vadd.f32 0.0, %v861
      %v863 = vpop.f32.mrb[0].mxu0
      %v864 = vpop.f32.mrb[0].mxu0
      %v865 = vadd.f32 0.0, %v864
      %v866 = vpop.f32.mrb[0].mxu0
      %867 = vdwg.mxu0
      %v868 = vadd.f32 %v738, %v838
      %v869 = vadd.f32 %v739, %v841
      %v870 = vadd.f32 %v740, %v846
      %v871 = vadd.f32 %v741, %v849
      %v872 = vadd.f32 %v742, %v854
      %v873 = vadd.f32 %v743, %v857
      %v874 = vadd.f32 %v744, %v862
      %v875 = vadd.f32 %v745, %v865
      %s876 = scalar_lea.vmem %s250, 216
      %v877 = vld [vmem:[%s876] sm:$0xf]
      %v878 = vld [vmem:[%s876 + $0x8] sm:$0xf]
      %v879 = vld [vmem:[%s876 + $0x10] sm:$0xf]
      %v880 = vld [vmem:[%s876 + $0x18] sm:$0xf]
      %v881 = vld [vmem:[%s876 + $0x20] sm:$0xf]
      %v882 = vld [vmem:[%s876 + $0x28] sm:$0xf]
      %v883 = vld [vmem:[%s876 + $0x30] sm:$0xf]
      %v884 = vld [vmem:[%s876 + $0x38] sm:$0xf]
      %v885 = vld [vmem:[%s1 + $0x40] sm:$0xf]
      %v886 = vld [vmem:[%s1 + $0x44] sm:$0xf]
      %v887 = vld [vmem:[%s1 + $0x48] sm:$0xf]
      %v888 = vld [vmem:[%s1 + $0x4c] sm:$0xf]
      %v897 = vunpack.c.l.b16 %v877
      %v898 = vunpack.c.l.b16 %v878
      %v899 = vunpack.c.l.b16 %v879
      %v900 = vunpack.c.l.b16 %v880
      %v901 = vunpack.c.l.b16 %v881
      %v902 = vunpack.c.l.b16 %v882
      %v903 = vunpack.c.l.b16 %v883
      %v904 = vunpack.c.l.b16 %v884
      %v905 = vpack.c.b16 %v898, %v897
      %v906 = vpack.c.b16 %v900, %v899
      %v907 = vpack.c.b16 %v902, %v901
      %v908 = vpack.c.b16 %v904, %v903
      %v913 = vunpack.c.l.b16 %v885
      %v914 = vunpack.c.l.b16 %v886
      %v915 = vunpack.c.l.b16 %v887
      %v916 = vunpack.c.l.b16 %v888
      %v917 = vpack.c.b16 %v914, %v913
      %v918 = vpack.c.b16 %v916, %v915
      %v922 = vsel %vm315, %v905, 0
      %v925 = vsel %vm315, %v906, 0
      %v928 = vsel %vm315, %v907, 0
      %v931 = vsel %vm315, %v908, 0
      %933 = vmatprep.subr.bf16.mxu0 0
      %934 = vmatpush1.bf16.msra.mxu0 %v917
      %935 = vmatprep.subr.bf16.mxu0 0
      %936 = vmatpush1.bf16.msra.mxu0 %v918
      %937 = vmatprep.subr.bf16.mxu0 0
      %938 = vmatpush1.bf16.msra.mxu0 0
      %939 = vmatprep.subr.bf16.mxu0 0
      %940 = vmatpush1.bf16.msra.mxu0 0
      %941 = vmatprep.subr.bf16.mxu0 0
      %942 = vmatpush1.bf16.msra.mxu0 0
      %943 = vmatprep.subr.bf16.mxu0 0
      %944 = vmatpush1.bf16.msra.mxu0 0
      %945 = vmatprep.subr.bf16.mxu0 0
      %946 = vmatpush1.bf16.msra.mxu0 0
      %947 = vmatprep.subr.bf16.mxu0 0
      %948 = vmatpush1.bf16.msra.mxu0 0
      %949 = vmatprep.subr.bf16.mxu0 0
      %950 = vmatpush1.bf16.msra.mxu0 0
      %951 = vmatprep.subr.bf16.mxu0 0
      %952 = vmatpush1.bf16.msra.mxu0 0
      %953 = vmatprep.subr.bf16.mxu0 0
      %954 = vmatpush1.bf16.msra.mxu0 0
      %955 = vmatprep.subr.bf16.mxu0 0
      %956 = vmatpush1.bf16.msra.mxu0 0
      %957 = vmatprep.subr.bf16.mxu0 0
      %958 = vmatpush1.bf16.msra.mxu0 0
      %959 = vmatprep.subr.bf16.mxu0 0
      %960 = vmatpush1.bf16.msra.mxu0 0
      %961 = vmatprep.subr.bf16.mxu0 0
      %962 = vmatpush1.bf16.msra.mxu0 0
      %963 = vmatprep.subr.bf16.mxu0 0
      %964 = vmatpush1.bf16.msra.mxu0 0
      %965 = vmatprep.mubr.bf16.mxu0 0
      %966 = vmatmul.mubr.bf16.gmra.mrb[0].mxu0 %v922
      %v967 = vpop.f32.mrb[0].mxu0
      %v968 = vadd.f32 0.0, %v967
      %v969 = vpop.f32.mrb[0].mxu0
      %v970 = vpop.f32.mrb[0].mxu0
      %v971 = vadd.f32 0.0, %v970
      %v972 = vpop.f32.mrb[0].mxu0
      %973 = vmatprep.mubr.bf16.mxu0 0
      %974 = vmatmul.mubr.bf16.gmra.mrb[0].mxu0 %v925
      %v975 = vpop.f32.mrb[0].mxu0
      %v976 = vadd.f32 0.0, %v975
      %v977 = vpop.f32.mrb[0].mxu0
      %v978 = vpop.f32.mrb[0].mxu0
      %v979 = vadd.f32 0.0, %v978
      %v980 = vpop.f32.mrb[0].mxu0
      %981 = vmatprep.mubr.bf16.mxu0 0
      %982 = vmatmul.mubr.bf16.gmra.mrb[0].mxu0 %v928
      %v983 = vpop.f32.mrb[0].mxu0
      %v984 = vadd.f32 0.0, %v983
      %v985 = vpop.f32.mrb[0].mxu0
      %v986 = vpop.f32.mrb[0].mxu0
      %v987 = vadd.f32 0.0, %v986
      %v988 = vpop.f32.mrb[0].mxu0
      %989 = vmatprep.mubr.bf16.mxu0 0
      %990 = vmatmul.mubr.bf16.gmra.mrb[0].mxu0 %v931
      %v991 = vpop.f32.mrb[0].mxu0
      %v992 = vadd.f32 0.0, %v991
      %v993 = vpop.f32.mrb[0].mxu0
      %v994 = vpop.f32.mrb[0].mxu0
      %v995 = vadd.f32 0.0, %v994
      %v996 = vpop.f32.mrb[0].mxu0
      %997 = vdwg.mxu0
      %v998 = vadd.f32 %v868, %v968
      %v999 = vadd.f32 %v869, %v971
      %v1000 = vadd.f32 %v870, %v976
      %v1001 = vadd.f32 %v871, %v979
      %v1002 = vadd.f32 %v872, %v984
      %v1003 = vadd.f32 %v873, %v987
      %v1004 = vadd.f32 %v874, %v992
      %v1005 = vadd.f32 %v875, %v995
      %v1006 = vld [vmem:[%s746] sm:$0xf]
      %v1007 = vld [vmem:[%s746 + $0x4] sm:$0x1]
      %v1008 = vld [vmem:[%s746 + $0x8] sm:$0xf]
      %v1009 = vld [vmem:[%s746 + $0xc] sm:$0x1]
      %v1010 = vld [vmem:[%s746 + $0x10] sm:$0xf]
      %v1011 = vld [vmem:[%s746 + $0x14] sm:$0x1]
      %v1012 = vld [vmem:[%s746 + $0x18] sm:$0xf]
      %v1013 = vld [vmem:[%s746 + $0x1c] sm:$0x1]
      %v1014 = vld [vmem:[%s746 + $0x20] sm:$0xf]
      %v1015 = vld [vmem:[%s746 + $0x24] sm:$0x1]
      %v1016 = vld [vmem:[%s746 + $0x28] sm:$0xf]
      %v1017 = vld [vmem:[%s746 + $0x2c] sm:$0x1]
      %v1018 = vld [vmem:[%s746 + $0x30] sm:$0xf]
      %v1019 = vld [vmem:[%s746 + $0x34] sm:$0x1]
      %v1020 = vld [vmem:[%s746 + $0x38] sm:$0xf]
      %v1021 = vld [vmem:[%s746 + $0x3c] sm:$0x1]
      %v1023 = vshrl.u32 %v1006, 16
      %v1025 = vrot.slane %v1023, 4
      %v1026 = vshll.u32 %v1006, 16
      %v1028 = vrot.slane %v1026, 5
      %v1029 = vor.u32 %v1025, %v1028
      %v1030 = vrot.slane %v1029, 4
      %v1032 = vshll.u32 %v1007, 16
      %v1034 = vrot.slane %v1032, 5
      %v1035 = vsel %vm520, %v1030, %v1034
      %v1037 = vshrl.u32 %v1008, 16
      %v1039 = vrot.slane %v1037, 4
      %v1040 = vshll.u32 %v1008, 16
      %v1042 = vrot.slane %v1040, 5
      %v1043 = vor.u32 %v1039, %v1042
      %v1044 = vrot.slane %v1043, 4
      %v1046 = vshll.u32 %v1009, 16
      %v1048 = vrot.slane %v1046, 5
      %v1049 = vsel %vm520, %v1044, %v1048
      %v1051 = vshrl.u32 %v1010, 16
      %v1053 = vrot.slane %v1051, 4
      %v1054 = vshll.u32 %v1010, 16
      %v1056 = vrot.slane %v1054, 5
      %v1057 = vor.u32 %v1053, %v1056
      %v1058 = vrot.slane %v1057, 4
      %v1060 = vshll.u32 %v1011, 16
      %v1062 = vrot.slane %v1060, 5
      %v1063 = vsel %vm520, %v1058, %v1062
      %v1065 = vshrl.u32 %v1012, 16
      %v1067 = vrot.slane %v1065, 4
      %v1068 = vshll.u32 %v1012, 16
      %v1070 = vrot.slane %v1068, 5
      %v1071 = vor.u32 %v1067, %v1070
      %v1072 = vrot.slane %v1071, 4
      %v1074 = vshll.u32 %v1013, 16
      %v1076 = vrot.slane %v1074, 5
      %v1077 = vsel %vm520, %v1072, %v1076
      %v1079 = vshrl.u32 %v1014, 16
      %v1081 = vrot.slane %v1079, 4
      %v1082 = vshll.u32 %v1014, 16
      %v1084 = vrot.slane %v1082, 5
      %v1085 = vor.u32 %v1081, %v1084
      %v1086 = vrot.slane %v1085, 4
      %v1088 = vshll.u32 %v1015, 16
      %v1090 = vrot.slane %v1088, 5
      %v1091 = vsel %vm520, %v1086, %v1090
      %v1093 = vshrl.u32 %v1016, 16
      %v1095 = vrot.slane %v1093, 4
      %v1096 = vshll.u32 %v1016, 16
      %v1098 = vrot.slane %v1096, 5
      %v1099 = vor.u32 %v1095, %v1098
      %v1100 = vrot.slane %v1099, 4
      %v1102 = vshll.u32 %v1017, 16
      %v1104 = vrot.slane %v1102, 5
      %v1105 = vsel %vm520, %v1100, %v1104
      %v1107 = vshrl.u32 %v1018, 16
      %v1109 = vrot.slane %v1107, 4
      %v1110 = vshll.u32 %v1018, 16
      %v1112 = vrot.slane %v1110, 5
      %v1113 = vor.u32 %v1109, %v1112
      %v1114 = vrot.slane %v1113, 4
      %v1116 = vshll.u32 %v1019, 16
      %v1118 = vrot.slane %v1116, 5
      %v1119 = vsel %vm520, %v1114, %v1118
      %v1121 = vshrl.u32 %v1020, 16
      %v1123 = vrot.slane %v1121, 4
      %v1124 = vshll.u32 %v1020, 16
      %v1126 = vrot.slane %v1124, 5
      %v1127 = vor.u32 %v1123, %v1126
      %v1128 = vrot.slane %v1127, 4
      %v1130 = vshll.u32 %v1021, 16
      %v1132 = vrot.slane %v1130, 5
      %v1133 = vsel %vm520, %v1128, %v1132
      %v1134 = vld [vmem:[%s1 + $0x50] sm:$0xf]
      %v1135 = vld [vmem:[%s1 + $0x54] sm:$0xf]
      %v1136 = vld [vmem:[%s1 + $0x58] sm:$0xf]
      %v1137 = vld [vmem:[%s1 + $0x5c] sm:$0xf]
      %v1138 = vunpack.c.l.b16 %v1035
      %v1139 = vunpack.c.l.b16 %v1049
      %v1140 = vunpack.c.l.b16 %v1063
      %v1141 = vunpack.c.l.b16 %v1077
      %v1142 = vunpack.c.l.b16 %v1091
      %v1143 = vunpack.c.l.b16 %v1105
      %v1144 = vunpack.c.l.b16 %v1119
      %v1145 = vunpack.c.l.b16 %v1133
      %v1146 = vpack.c.b16 %v1139, %v1138
      %v1147 = vpack.c.b16 %v1141, %v1140
      %v1148 = vpack.c.b16 %v1143, %v1142
      %v1149 = vpack.c.b16 %v1145, %v1144
      %v1154 = vunpack.c.l.b16 %v1134
      %v1155 = vunpack.c.l.b16 %v1135
      %v1156 = vunpack.c.l.b16 %v1136
      %v1157 = vunpack.c.l.b16 %v1137
      %v1158 = vpack.c.b16 %v1155, %v1154
      %v1159 = vpack.c.b16 %v1157, %v1156
      %v1163 = vsel %vm315, %v1146, 0
      %v1166 = vsel %vm315, %v1147, 0
      %v1169 = vsel %vm315, %v1148, 0
      %v1172 = vsel %vm315, %v1149, 0
      %1174 = vmatprep.subr.bf16.mxu0 0
      %1175 = vmatpush1.bf16.msra.mxu0 %v1158
      %1176 = vmatprep.subr.bf16.mxu0 0
      %1177 = vmatpush1.bf16.msra.mxu0 %v1159
      %1178 = vmatprep.subr.bf16.mxu0 0
      %1179 = vmatpush1.bf16.msra.mxu0 0
      %1180 = vmatprep.subr.bf16.mxu0 0
      %1181 = vmatpush1.bf16.msra.mxu0 0
      %1182 = vmatprep.subr.bf16.mxu0 0
      %1183 = vmatpush1.bf16.msra.mxu0 0
      %1184 = vmatprep.subr.bf16.mxu0 0
      %1185 = vmatpush1.bf16.msra.mxu0 0
      %1186 = vmatprep.subr.bf16.mxu0 0
      %1187 = vmatpush1.bf16.msra.mxu0 0
      %1188 = vmatprep.subr.bf16.mxu0 0
      %1189 = vmatpush1.bf16.msra.mxu0 0
      %1190 = vmatprep.subr.bf16.mxu0 0
      %1191 = vmatpush1.bf16.msra.mxu0 0
      %1192 = vmatprep.subr.bf16.mxu0 0
      %1193 = vmatpush1.bf16.msra.mxu0 0
      %1194 = vmatprep.subr.bf16.mxu0 0
      %1195 = vmatpush1.bf16.msra.mxu0 0
      %1196 = vmatprep.subr.bf16.mxu0 0
      %1197 = vmatpush1.bf16.msra.mxu0 0
      %1198 = vmatprep.subr.bf16.mxu0 0
      %1199 = vmatpush1.bf16.msra.mxu0 0
      %1200 = vmatprep.subr.bf16.mxu0 0
      %1201 = vmatpush1.bf16.msra.mxu0 0
      %1202 = vmatprep.subr.bf16.mxu0 0
      %1203 = vmatpush1.bf16.msra.mxu0 0
      %1204 = vmatprep.subr.bf16.mxu0 0
      %1205 = vmatpush1.bf16.msra.mxu0 0
      %1206 = vmatprep.mubr.bf16.mxu0 0
      %1207 = vmatmul.mubr.bf16.gmra.mrb[0].mxu0 %v1163
      %v1208 = vpop.f32.mrb[0].mxu0
      %v1209 = vadd.f32 0.0, %v1208
      %v1210 = vpop.f32.mrb[0].mxu0
      %v1211 = vpop.f32.mrb[0].mxu0
      %v1212 = vadd.f32 0.0, %v1211
      %v1213 = vpop.f32.mrb[0].mxu0
      %1214 = vmatprep.mubr.bf16.mxu0 0
      %1215 = vmatmul.mubr.bf16.gmra.mrb[0].mxu0 %v1166
      %v1216 = vpop.f32.mrb[0].mxu0
      %v1217 = vadd.f32 0.0, %v1216
      %v1218 = vpop.f32.mrb[0].mxu0
      %v1219 = vpop.f32.mrb[0].mxu0
      %v1220 = vadd.f32 0.0, %v1219
      %v1221 = vpop.f32.mrb[0].mxu0
      %1222 = vmatprep.mubr.bf16.mxu0 0
      %1223 = vmatmul.mubr.bf16.gmra.mrb[0].mxu0 %v1169
      %v1224 = vpop.f32.mrb[0].mxu0
      %v1225 = vadd.f32 0.0, %v1224
      %v1226 = vpop.f32.mrb[0].mxu0
      %v1227 = vpop.f32.mrb[0].mxu0
      %v1228 = vadd.f32 0.0, %v1227
      %v1229 = vpop.f32.mrb[0].mxu0
      %1230 = vmatprep.mubr.bf16.mxu0 0
      %1231 = vmatmul.mubr.bf16.gmra.mrb[0].mxu0 %v1172
      %v1232 = vpop.f32.mrb[0].mxu0
      %v1233 = vadd.f32 0.0, %v1232
      %v1234 = vpop.f32.mrb[0].mxu0
      %v1235 = vpop.f32.mrb[0].mxu0
      %v1236 = vadd.f32 0.0, %v1235
      %v1237 = vpop.f32.mrb[0].mxu0
      %1238 = vdwg.mxu0
      %v1239 = vadd.f32 %v998, %v1209
      %v1240 = vadd.f32 %v999, %v1212
      %v1241 = vadd.f32 %v1000, %v1217
      %v1242 = vadd.f32 %v1001, %v1220
      %v1243 = vadd.f32 %v1002, %v1225
      %v1244 = vadd.f32 %v1003, %v1228
      %v1245 = vadd.f32 %v1004, %v1233
      %v1246 = vadd.f32 %v1005, %v1236
      %s1247 = scalar_lea.vmem %s250, 8
      %v1248 = vld [vmem:[%s1247] sm:$0xf]
      %v1249 = vld [vmem:[%s1247 + $0x8] sm:$0xf]
      %v1250 = vld [vmem:[%s1247 + $0x10] sm:$0xf]
      %v1251 = vld [vmem:[%s1247 + $0x18] sm:$0xf]
      %v1252 = vld [vmem:[%s1247 + $0x20] sm:$0xf]
      %v1253 = vld [vmem:[%s1247 + $0x28] sm:$0xf]
      %v1254 = vld [vmem:[%s1247 + $0x30] sm:$0xf]
      %v1255 = vld [vmem:[%s1247 + $0x38] sm:$0xf]
      %v1256 = vld [vmem:[%s1 + $0x60] sm:$0xf]
      %v1257 = vld [vmem:[%s1 + $0x64] sm:$0xf]
      %v1258 = vld [vmem:[%s1 + $0x68] sm:$0xf]
      %v1259 = vld [vmem:[%s1 + $0x6c] sm:$0xf]
      %v1268 = vunpack.c.l.b16 %v1248
      %v1269 = vunpack.c.l.b16 %v1249
      %v1270 = vunpack.c.l.b16 %v1250
      %v1271 = vunpack.c.l.b16 %v1251
      %v1272 = vunpack.c.l.b16 %v1252
      %v1273 = vunpack.c.l.b16 %v1253
      %v1274 = vunpack.c.l.b16 %v1254
      %v1275 = vunpack.c.l.b16 %v1255
      %v1276 = vpack.c.b16 %v1269, %v1268
      %v1277 = vpack.c.b16 %v1271, %v1270
      %v1278 = vpack.c.b16 %v1273, %v1272
      %v1279 = vpack.c.b16 %v1275, %v1274
      %v1284 = vunpack.c.l.b16 %v1256
      %v1285 = vunpack.c.l.b16 %v1257
      %v1286 = vunpack.c.l.b16 %v1258
      %v1287 = vunpack.c.l.b16 %v1259
      %v1288 = vpack.c.b16 %v1285, %v1284
      %v1289 = vpack.c.b16 %v1287, %v1286
      %v1293 = vsel %vm315, %v1276, 0
      %v1296 = vsel %vm315, %v1277, 0
      %v1299 = vsel %vm315, %v1278, 0
      %v1302 = vsel %vm315, %v1279, 0
      %1304 = vmatprep.subr.bf16.mxu0 0
      %1305 = vmatpush1.bf16.msra.mxu0 %v1288
      %1306 = vmatprep.subr.bf16.mxu0 0
      %1307 = vmatpush1.bf16.msra.mxu0 %v1289
      %1308 = vmatprep.subr.bf16.mxu0 0
      %1309 = vmatpush1.bf16.msra.mxu0 0
      %1310 = vmatprep.subr.bf16.mxu0 0
      %1311 = vmatpush1.bf16.msra.mxu0 0
      %1312 = vmatprep.subr.bf16.mxu0 0
      %1313 = vmatpush1.bf16.msra.mxu0 0
      %1314 = vmatprep.subr.bf16.mxu0 0
      %1315 = vmatpush1.bf16.msra.mxu0 0
      %1316 = vmatprep.subr.bf16.mxu0 0
      %1317 = vmatpush1.bf16.msra.mxu0 0
      %1318 = vmatprep.subr.bf16.mxu0 0
      %1319 = vmatpush1.bf16.msra.mxu0 0
      %1320 = vmatprep.subr.bf16.mxu0 0
      %1321 = vmatpush1.bf16.msra.mxu0 0
      %1322 = vmatprep.subr.bf16.mxu0 0
      %1323 = vmatpush1.bf16.msra.mxu0 0
      %1324 = vmatprep.subr.bf16.mxu0 0
      %1325 = vmatpush1.bf16.msra.mxu0 0
      %1326 = vmatprep.subr.bf16.mxu0 0
      %1327 = vmatpush1.bf16.msra.mxu0 0
      %1328 = vmatprep.subr.bf16.mxu0 0
      %1329 = vmatpush1.bf16.msra.mxu0 0
      %1330 = vmatprep.subr.bf16.mxu0 0
      %1331 = vmatpush1.bf16.msra.mxu0 0
      %1332 = vmatprep.subr.bf16.mxu0 0
      %1333 = vmatpush1.bf16.msra.mxu0 0
      %1334 = vmatprep.subr.bf16.mxu0 0
      %1335 = vmatpush1.bf16.msra.mxu0 0
      %1336 = vmatprep.mubr.bf16.mxu0 0
      %1337 = vmatmul.mubr.bf16.gmra.mrb[0].mxu0 %v1293
      %v1338 = vpop.f32.mrb[0].mxu0
      %v1339 = vadd.f32 0.0, %v1338
      %v1340 = vpop.f32.mrb[0].mxu0
      %v1341 = vpop.f32.mrb[0].mxu0
      %v1342 = vadd.f32 0.0, %v1341
      %v1343 = vpop.f32.mrb[0].mxu0
      %1344 = vmatprep.mubr.bf16.mxu0 0
      %1345 = vmatmul.mubr.bf16.gmra.mrb[0].mxu0 %v1296
      %v1346 = vpop.f32.mrb[0].mxu0
      %v1347 = vadd.f32 0.0, %v1346
      %v1348 = vpop.f32.mrb[0].mxu0
      %v1349 = vpop.f32.mrb[0].mxu0
      %v1350 = vadd.f32 0.0, %v1349
      %v1351 = vpop.f32.mrb[0].mxu0
      %1352 = vmatprep.mubr.bf16.mxu0 0
      %1353 = vmatmul.mubr.bf16.gmra.mrb[0].mxu0 %v1299
      %v1354 = vpop.f32.mrb[0].mxu0
      %v1355 = vadd.f32 0.0, %v1354
      %v1356 = vpop.f32.mrb[0].mxu0
      %v1357 = vpop.f32.mrb[0].mxu0
      %v1358 = vadd.f32 0.0, %v1357
      %v1359 = vpop.f32.mrb[0].mxu0
      %1360 = vmatprep.mubr.bf16.mxu0 0
      %1361 = vmatmul.mubr.bf16.gmra.mrb[0].mxu0 %v1302
      %v1362 = vpop.f32.mrb[0].mxu0
      %v1363 = vadd.f32 0.0, %v1362
      %v1364 = vpop.f32.mrb[0].mxu0
      %v1365 = vpop.f32.mrb[0].mxu0
      %v1366 = vadd.f32 0.0, %v1365
      %v1367 = vpop.f32.mrb[0].mxu0
      %1368 = vdwg.mxu0
      %v1369 = vadd.f32 %v1239, %v1339
      %v1370 = vadd.f32 %v1240, %v1342
      %v1371 = vadd.f32 %v1241, %v1347
      %v1372 = vadd.f32 %v1242, %v1350
      %v1373 = vadd.f32 %v1243, %v1355
      %v1374 = vadd.f32 %v1244, %v1358
      %v1375 = vadd.f32 %v1245, %v1363
      %v1376 = vadd.f32 %v1246, %v1366
      %s1377 = scalar_lea.vmem %s250, 80
      %v1378 = vld [vmem:[%s1377] sm:$0xf]
      %v1379 = vld [vmem:[%s1377 + $0x8] sm:$0xf]
      %v1380 = vld [vmem:[%s1377 + $0x10] sm:$0xf]
      %v1381 = vld [vmem:[%s1377 + $0x18] sm:$0xf]
      %v1382 = vld [vmem:[%s1377 + $0x20] sm:$0xf]
      %v1383 = vld [vmem:[%s1377 + $0x28] sm:$0xf]
      %v1384 = vld [vmem:[%s1377 + $0x30] sm:$0xf]
      %v1385 = vld [vmem:[%s1377 + $0x38] sm:$0xf]
      %v1386 = vld [vmem:[%s1 + $0x70] sm:$0xf]
      %v1387 = vld [vmem:[%s1 + $0x74] sm:$0xf]
      %v1388 = vld [vmem:[%s1 + $0x78] sm:$0xf]
      %v1389 = vld [vmem:[%s1 + $0x7c] sm:$0xf]
      %v1398 = vunpack.c.l.b16 %v1378
      %v1399 = vunpack.c.l.b16 %v1379
      %v1400 = vunpack.c.l.b16 %v1380
      %v1401 = vunpack.c.l.b16 %v1381
      %v1402 = vunpack.c.l.b16 %v1382
      %v1403 = vunpack.c.l.b16 %v1383
      %v1404 = vunpack.c.l.b16 %v1384
      %v1405 = vunpack.c.l.b16 %v1385
      %v1406 = vpack.c.b16 %v1399, %v1398
      %v1407 = vpack.c.b16 %v1401, %v1400
      %v1408 = vpack.c.b16 %v1403, %v1402
      %v1409 = vpack.c.b16 %v1405, %v1404
      %v1414 = vunpack.c.l.b16 %v1386
      %v1415 = vunpack.c.l.b16 %v1387
      %v1416 = vunpack.c.l.b16 %v1388
      %v1417 = vunpack.c.l.b16 %v1389
      %v1418 = vpack.c.b16 %v1415, %v1414
      %v1419 = vpack.c.b16 %v1417, %v1416
      %v1423 = vsel %vm315, %v1406, 0
      %v1426 = vsel %vm315, %v1407, 0
      %v1429 = vsel %vm315, %v1408, 0
      %v1432 = vsel %vm315, %v1409, 0
      %1434 = vmatprep.subr.bf16.mxu0 0
      %1435 = vmatpush1.bf16.msra.mxu0 %v1418
      %1436 = vmatprep.subr.bf16.mxu0 0
      %1437 = vmatpush1.bf16.msra.mxu0 %v1419
      %1438 = vmatprep.subr.bf16.mxu0 0
      %1439 = vmatpush1.bf16.msra.mxu0 0
      %1440 = vmatprep.subr.bf16.mxu0 0
      %1441 = vmatpush1.bf16.msra.mxu0 0
      %1442 = vmatprep.subr.bf16.mxu0 0
      %1443 = vmatpush1.bf16.msra.mxu0 0
      %1444 = vmatprep.subr.bf16.mxu0 0
      %1445 = vmatpush1.bf16.msra.mxu0 0
      %1446 = vmatprep.subr.bf16.mxu0 0
      %1447 = vmatpush1.bf16.msra.mxu0 0
      %1448 = vmatprep.subr.bf16.mxu0 0
      %1449 = vmatpush1.bf16.msra.mxu0 0
      %1450 = vmatprep.subr.bf16.mxu0 0
      %1451 = vmatpush1.bf16.msra.mxu0 0
      %1452 = vmatprep.subr.bf16.mxu0 0
      %1453 = vmatpush1.bf16.msra.mxu0 0
      %1454 = vmatprep.subr.bf16.mxu0 0
      %1455 = vmatpush1.bf16.msra.mxu0 0
      %1456 = vmatprep.subr.bf16.mxu0 0
      %1457 = vmatpush1.bf16.msra.mxu0 0
      %1458 = vmatprep.subr.bf16.mxu0 0
      %1459 = vmatpush1.bf16.msra.mxu0 0
      %1460 = vmatprep.subr.bf16.mxu0 0
      %1461 = vmatpush1.bf16.msra.mxu0 0
      %1462 = vmatprep.subr.bf16.mxu0 0
      %1463 = vmatpush1.bf16.msra.mxu0 0
      %1464 = vmatprep.subr.bf16.mxu0 0
      %1465 = vmatpush1.bf16.msra.mxu0 0
      %1466 = vmatprep.mubr.bf16.mxu0 0
      %1467 = vmatmul.mubr.bf16.gmra.mrb[0].mxu0 %v1423
      %v1468 = vpop.f32.mrb[0].mxu0
      %v1469 = vadd.f32 0.0, %v1468
      %v1470 = vpop.f32.mrb[0].mxu0
      %v1471 = vpop.f32.mrb[0].mxu0
      %v1472 = vadd.f32 0.0, %v1471
      %v1473 = vpop.f32.mrb[0].mxu0
      %1474 = vmatprep.mubr.bf16.mxu0 0
      %1475 = vmatmul.mubr.bf16.gmra.mrb[0].mxu0 %v1426
      %v1476 = vpop.f32.mrb[0].mxu0
      %v1477 = vadd.f32 0.0, %v1476
      %v1478 = vpop.f32.mrb[0].mxu0
      %v1479 = vpop.f32.mrb[0].mxu0
      %v1480 = vadd.f32 0.0, %v1479
      %v1481 = vpop.f32.mrb[0].mxu0
      %1482 = vmatprep.mubr.bf16.mxu0 0
      %1483 = vmatmul.mubr.bf16.gmra.mrb[0].mxu0 %v1429
      %v1484 = vpop.f32.mrb[0].mxu0
      %v1485 = vadd.f32 0.0, %v1484
      %v1486 = vpop.f32.mrb[0].mxu0
      %v1487 = vpop.f32.mrb[0].mxu0
      %v1488 = vadd.f32 0.0, %v1487
      %v1489 = vpop.f32.mrb[0].mxu0
      %1490 = vmatprep.mubr.bf16.mxu0 0
      %1491 = vmatmul.mubr.bf16.gmra.mrb[0].mxu0 %v1432
      %v1492 = vpop.f32.mrb[0].mxu0
      %v1493 = vadd.f32 0.0, %v1492
      %v1494 = vpop.f32.mrb[0].mxu0
      %v1495 = vpop.f32.mrb[0].mxu0
      %v1496 = vadd.f32 0.0, %v1495
      %v1497 = vpop.f32.mrb[0].mxu0
      %1498 = vdwg.mxu0
      %v1499 = vadd.f32 %v1369, %v1469
      %v1500 = vadd.f32 %v1370, %v1472
      %v1501 = vadd.f32 %v1371, %v1477
      %v1502 = vadd.f32 %v1372, %v1480
      %v1503 = vadd.f32 %v1373, %v1485
      %v1504 = vadd.f32 %v1374, %v1488
      %v1505 = vadd.f32 %v1375, %v1493
      %v1506 = vadd.f32 %v1376, %v1496
      %v1507 = vld [vmem:[%s1247] sm:$0xf]
      %v1508 = vld [vmem:[%s1247 + $0x4] sm:$0x1]
      %v1509 = vld [vmem:[%s1247 + $0x8] sm:$0xf]
      %v1510 = vld [vmem:[%s1247 + $0xc] sm:$0x1]
      %v1511 = vld [vmem:[%s1247 + $0x10] sm:$0xf]
      %v1512 = vld [vmem:[%s1247 + $0x14] sm:$0x1]
      %v1513 = vld [vmem:[%s1247 + $0x18] sm:$0xf]
      %v1514 = vld [vmem:[%s1247 + $0x1c] sm:$0x1]
      %v1515 = vld [vmem:[%s1247 + $0x20] sm:$0xf]
      %v1516 = vld [vmem:[%s1247 + $0x24] sm:$0x1]
      %v1517 = vld [vmem:[%s1247 + $0x28] sm:$0xf]
      %v1518 = vld [vmem:[%s1247 + $0x2c] sm:$0x1]
      %v1519 = vld [vmem:[%s1247 + $0x30] sm:$0xf]
      %v1520 = vld [vmem:[%s1247 + $0x34] sm:$0x1]
      %v1521 = vld [vmem:[%s1247 + $0x38] sm:$0xf]
      %v1522 = vld [vmem:[%s1247 + $0x3c] sm:$0x1]
      %v1524 = vshrl.u32 %v1507, 16
      %v1526 = vrot.slane %v1524, 4
      %v1527 = vshll.u32 %v1507, 16
      %v1529 = vrot.slane %v1527, 5
      %v1530 = vor.u32 %v1526, %v1529
      %v1531 = vrot.slane %v1530, 4
      %v1533 = vshll.u32 %v1508, 16
      %v1535 = vrot.slane %v1533, 5
      %v1536 = vsel %vm520, %v1531, %v1535
      %v1538 = vshrl.u32 %v1509, 16
      %v1540 = vrot.slane %v1538, 4
      %v1541 = vshll.u32 %v1509, 16
      %v1543 = vrot.slane %v1541, 5
      %v1544 = vor.u32 %v1540, %v1543
      %v1545 = vrot.slane %v1544, 4
      %v1547 = vshll.u32 %v1510, 16
      %v1549 = vrot.slane %v1547, 5
      %v1550 = vsel %vm520, %v1545, %v1549
      %v1552 = vshrl.u32 %v1511, 16
      %v1554 = vrot.slane %v1552, 4
      %v1555 = vshll.u32 %v1511, 16
      %v1557 = vrot.slane %v1555, 5
      %v1558 = vor.u32 %v1554, %v1557
      %v1559 = vrot.slane %v1558, 4
      %v1561 = vshll.u32 %v1512, 16
      %v1563 = vrot.slane %v1561, 5
      %v1564 = vsel %vm520, %v1559, %v1563
      %v1566 = vshrl.u32 %v1513, 16
      %v1568 = vrot.slane %v1566, 4
      %v1569 = vshll.u32 %v1513, 16
      %v1571 = vrot.slane %v1569, 5
      %v1572 = vor.u32 %v1568, %v1571
      %v1573 = vrot.slane %v1572, 4
      %v1575 = vshll.u32 %v1514, 16
      %v1577 = vrot.slane %v1575, 5
      %v1578 = vsel %vm520, %v1573, %v1577
      %v1580 = vshrl.u32 %v1515, 16
      %v1582 = vrot.slane %v1580, 4
      %v1583 = vshll.u32 %v1515, 16
      %v1585 = vrot.slane %v1583, 5
      %v1586 = vor.u32 %v1582, %v1585
      %v1587 = vrot.slane %v1586, 4
      %v1589 = vshll.u32 %v1516, 16
      %v1591 = vrot.slane %v1589, 5
      %v1592 = vsel %vm520, %v1587, %v1591
      %v1594 = vshrl.u32 %v1517, 16
      %v1596 = vrot.slane %v1594, 4
      %v1597 = vshll.u32 %v1517, 16
      %v1599 = vrot.slane %v1597, 5
      %v1600 = vor.u32 %v1596, %v1599
      %v1601 = vrot.slane %v1600, 4
      %v1603 = vshll.u32 %v1518, 16
      %v1605 = vrot.slane %v1603, 5
      %v1606 = vsel %vm520, %v1601, %v1605
      %v1608 = vshrl.u32 %v1519, 16
      %v1610 = vrot.slane %v1608, 4
      %v1611 = vshll.u32 %v1519, 16
      %v1613 = vrot.slane %v1611, 5
      %v1614 = vor.u32 %v1610, %v1613
      %v1615 = vrot.slane %v1614, 4
      %v1617 = vshll.u32 %v1520, 16
      %v1619 = vrot.slane %v1617, 5
      %v1620 = vsel %vm520, %v1615, %v1619
      %v1622 = vshrl.u32 %v1521, 16
      %v1624 = vrot.slane %v1622, 4
      %v1625 = vshll.u32 %v1521, 16
      %v1627 = vrot.slane %v1625, 5
      %v1628 = vor.u32 %v1624, %v1627
      %v1629 = vrot.slane %v1628, 4
      %v1631 = vshll.u32 %v1522, 16
      %v1633 = vrot.slane %v1631, 5
      %v1634 = vsel %vm520, %v1629, %v1633
      %v1635 = vld [vmem:[%s1 + $0x80] sm:$0xf]
      %v1636 = vld [vmem:[%s1 + $0x84] sm:$0xf]
      %v1637 = vld [vmem:[%s1 + $0x88] sm:$0xf]
      %v1638 = vld [vmem:[%s1 + $0x8c] sm:$0xf]
      %v1639 = vunpack.c.l.b16 %v1536
      %v1640 = vunpack.c.l.b16 %v1550
      %v1641 = vunpack.c.l.b16 %v1564
      %v1642 = vunpack.c.l.b16 %v1578
      %v1643 = vunpack.c.l.b16 %v1592
      %v1644 = vunpack.c.l.b16 %v1606
      %v1645 = vunpack.c.l.b16 %v1620
      %v1646 = vunpack.c.l.b16 %v1634
      %v1647 = vpack.c.b16 %v1640, %v1639
      %v1648 = vpack.c.b16 %v1642, %v1641
      %v1649 = vpack.c.b16 %v1644, %v1643
      %v1650 = vpack.c.b16 %v1646, %v1645
      %v1655 = vunpack.c.l.b16 %v1635
      %v1656 = vunpack.c.l.b16 %v1636
      %v1657 = vunpack.c.l.b16 %v1637
      %v1658 = vunpack.c.l.b16 %v1638
      %v1659 = vpack.c.b16 %v1656, %v1655
      %v1660 = vpack.c.b16 %v1658, %v1657
      %v1664 = vsel %vm315, %v1647, 0
      %v1667 = vsel %vm315, %v1648, 0
      %v1670 = vsel %vm315, %v1649, 0
      %v1673 = vsel %vm315, %v1650, 0
      %1675 = vmatprep.subr.bf16.mxu0 0
      %1676 = vmatpush1.bf16.msra.mxu0 %v1659
      %1677 = vmatprep.subr.bf16.mxu0 0
      %1678 = vmatpush1.bf16.msra.mxu0 %v1660
      %1679 = vmatprep.subr.bf16.mxu0 0
      %1680 = vmatpush1.bf16.msra.mxu0 0
      %1681 = vmatprep.subr.bf16.mxu0 0
      %1682 = vmatpush1.bf16.msra.mxu0 0
      %1683 = vmatprep.subr.bf16.mxu0 0
      %1684 = vmatpush1.bf16.msra.mxu0 0
      %1685 = vmatprep.subr.bf16.mxu0 0
      %1686 = vmatpush1.bf16.msra.mxu0 0
      %1687 = vmatprep.subr.bf16.mxu0 0
      %1688 = vmatpush1.bf16.msra.mxu0 0
      %1689 = vmatprep.subr.bf16.mxu0 0
      %1690 = vmatpush1.bf16.msra.mxu0 0
      %1691 = vmatprep.subr.bf16.mxu0 0
      %1692 = vmatpush1.bf16.msra.mxu0 0
      %1693 = vmatprep.subr.bf16.mxu0 0
      %1694 = vmatpush1.bf16.msra.mxu0 0
      %1695 = vmatprep.subr.bf16.mxu0 0
      %1696 = vmatpush1.bf16.msra.mxu0 0
      %1697 = vmatprep.subr.bf16.mxu0 0
      %1698 = vmatpush1.bf16.msra.mxu0 0
      %1699 = vmatprep.subr.bf16.mxu0 0
      %1700 = vmatpush1.bf16.msra.mxu0 0
      %1701 = vmatprep.subr.bf16.mxu0 0
      %1702 = vmatpush1.bf16.msra.mxu0 0
      %1703 = vmatprep.subr.bf16.mxu0 0
      %1704 = vmatpush1.bf16.msra.mxu0 0
      %1705 = vmatprep.subr.bf16.mxu0 0
      %1706 = vmatpush1.bf16.msra.mxu0 0
      %1707 = vmatprep.mubr.bf16.mxu0 0
      %1708 = vmatmul.mubr.bf16.gmra.mrb[0].mxu0 %v1664
      %v1709 = vpop.f32.mrb[0].mxu0
      %v1710 = vadd.f32 0.0, %v1709
      %v1711 = vpop.f32.mrb[0].mxu0
      %v1712 = vpop.f32.mrb[0].mxu0
      %v1713 = vadd.f32 0.0, %v1712
      %v1714 = vpop.f32.mrb[0].mxu0
      %1715 = vmatprep.mubr.bf16.mxu0 0
      %1716 = vmatmul.mubr.bf16.gmra.mrb[0].mxu0 %v1667
      %v1717 = vpop.f32.mrb[0].mxu0
      %v1718 = vadd.f32 0.0, %v1717
      %v1719 = vpop.f32.mrb[0].mxu0
      %v1720 = vpop.f32.mrb[0].mxu0
      %v1721 = vadd.f32 0.0, %v1720
      %v1722 = vpop.f32.mrb[0].mxu0
      %1723 = vmatprep.mubr.bf16.mxu0 0
      %1724 = vmatmul.mubr.bf16.gmra.mrb[0].mxu0 %v1670
      %v1725 = vpop.f32.mrb[0].mxu0
      %v1726 = vadd.f32 0.0, %v1725
      %v1727 = vpop.f32.mrb[0].mxu0
      %v1728 = vpop.f32.mrb[0].mxu0
      %v1729 = vadd.f32 0.0, %v1728
      %v1730 = vpop.f32.mrb[0].mxu0
      %1731 = vmatprep.mubr.bf16.mxu0 0
      %1732 = vmatmul.mubr.bf16.gmra.mrb[0].mxu0 %v1673
      %v1733 = vpop.f32.mrb[0].mxu0
      %v1734 = vadd.f32 0.0, %v1733
      %v1735 = vpop.f32.mrb[0].mxu0
      %v1736 = vpop.f32.mrb[0].mxu0
      %v1737 = vadd.f32 0.0, %v1736
      %v1738 = vpop.f32.mrb[0].mxu0
      %1739 = vdwg.mxu0
      %v1740 = vadd.f32 %v1499, %v1710
      %v1741 = vadd.f32 %v1500, %v1713
      %v1742 = vadd.f32 %v1501, %v1718
      %v1743 = vadd.f32 %v1502, %v1721
      %v1744 = vadd.f32 %v1503, %v1726
      %v1745 = vadd.f32 %v1504, %v1729
      %v1746 = vadd.f32 %v1505, %v1734
      %v1747 = vadd.f32 %v1506, %v1737
      %v1748 = vld [vmem:[%s2] sm:$0xff]
      %v1749 = vld [vmem:[%s2 + $0x8] sm:$0xff]
      %v1750 = vld [vmem:[%s2 + $0x10] sm:$0xff]
      %v1751 = vld [vmem:[%s2 + $0x18] sm:$0xff]
      %v1752 = vld [vmem:[%s2 + $0x20] sm:$0xff]
      %v1753 = vld [vmem:[%s2 + $0x28] sm:$0xff]
      %v1754 = vld [vmem:[%s2 + $0x30] sm:$0xff]
      %v1755 = vld [vmem:[%s2 + $0x38] sm:$0xff]
      %v1756 = vld [vmem:[%s3] sm:$0xff]
      %v1757 = vld [vmem:[%s3 + $0x8] sm:$0xff]
      %v1758 = vld [vmem:[%s3 + $0x10] sm:$0xff]
      %v1759 = vld [vmem:[%s3 + $0x18] sm:$0xff]
      %vm1760 = vcmask 523264
      %v1761 = vsel %vm1760, %v1740, 0.0
      %v1762 = vsel %vm1760, %v1741, 0.0
      %v1763 = vadd.f32 %v1761, %v1762
      %v1764 = vsel %vm1760, %v1742, 0.0
      %v1765 = vadd.f32 %v1763, %v1764
      %v1766 = vsel %vm1760, %v1743, 0.0
      %v1767 = vadd.f32 %v1765, %v1766
      %v1768 = vsel %vm1760, %v1744, 0.0
      %v1769 = vadd.f32 %v1767, %v1768
      %v1770 = vsel %vm1760, %v1745, 0.0
      %v1771 = vadd.f32 %v1769, %v1770
      %v1772 = vsel %vm1760, %v1746, 0.0
      %v1773 = vadd.f32 %v1771, %v1772
      %v1774 = vsel %vm1760, %v1747, 0.0
      %v1775 = vadd.f32 %v1773, %v1774
      %v1776 = vrot.slane %v1775, 4
      %v1777 = vadd.f32 %v1775, %v1776
      %v1778 = vrot.slane %v1777, 2
      %v1779 = vadd.f32 %v1777, %v1778
      %v1780 = vrot.slane %v1779, 1
      %v1781 = vadd.f32 %v1779, %v1780
      %v1783 = vsel %vm1760, %v1781, 0
      %1785 = vmatprep.subr.mxu0 0.0
      %1786 = vmatpush1.msra.mxu0 %v1748
      %1787 = vmatprep.subr.mxu0 0.0
      %1788 = vmatpush1.msra.mxu0 %v1749
      %1789 = vmatprep.subr.mxu0 0.0
      %1790 = vmatpush1.msra.mxu0 %v1750
      %1791 = vmatprep.subr.mxu0 0.0
      %1792 = vmatpush1.msra.mxu0 %v1751
      %1793 = vmatprep.subr.mxu0 0.0
      %1794 = vmatpush1.msra.mxu0 %v1752
      %1795 = vmatprep.subr.mxu0 0.0
      %1796 = vmatpush1.msra.mxu0 %v1753
      %1797 = vmatprep.subr.mxu0 0.0
      %1798 = vmatpush1.msra.mxu0 %v1754
      %1799 = vmatprep.subr.mxu0 0.0
      %1800 = vmatpush1.msra.mxu0 %v1755
      %1801 = vmatprep.subr.mxu0 0.0
      %1802 = vmatpush1.msra.mxu0 0.0
      %1803 = vmatprep.subr.mxu0 0.0
      %1804 = vmatpush1.msra.mxu0 0.0
      %1805 = vmatprep.subr.mxu0 0.0
      %1806 = vmatpush1.msra.mxu0 0.0
      %1807 = vmatprep.subr.mxu0 0.0
      %1808 = vmatpush1.msra.mxu0 0.0
      %1809 = vmatprep.subr.mxu0 0.0
      %1810 = vmatpush1.msra.mxu0 0.0
      %1811 = vmatprep.subr.mxu0 0.0
      %1812 = vmatpush1.msra.mxu0 0.0
      %1813 = vmatprep.subr.mxu0 0.0
      %1814 = vmatpush1.msra.mxu0 0.0
      %1815 = vmatprep.subr.mxu0 0.0
      %1816 = vmatpush1.msra.mxu0 0.0
      %1817 = vmatprep.subr.mxu0 0.0
      %1818 = vmatpush1.msra.mxu0 0.0
      %1819 = vmatprep.subr.mxu0 0.0
      %1820 = vmatpush1.msra.mxu0 0.0
      %1821 = vmatprep.subr.mxu0 0.0
      %1822 = vmatpush1.msra.mxu0 0.0
      %1823 = vmatprep.subr.mxu0 0.0
      %1824 = vmatpush1.msra.mxu0 0.0
      %1825 = vmatprep.subr.mxu0 0.0
      %1826 = vmatpush1.msra.mxu0 0.0
      %1827 = vmatprep.subr.mxu0 0.0
      %1828 = vmatpush1.msra.mxu0 0.0
      %1829 = vmatprep.subr.mxu0 0.0
      %1830 = vmatpush1.msra.mxu0 0.0
      %1831 = vmatprep.subr.mxu0 0.0
      %1832 = vmatpush1.msra.mxu0 0.0
      %1833 = vmatprep.subr.mxu0 0.0
      %1834 = vmatpush1.msra.mxu0 0.0
      %1835 = vmatprep.subr.mxu0 0.0
      %1836 = vmatpush1.msra.mxu0 0.0
      %1837 = vmatprep.subr.mxu0 0.0
      %1838 = vmatpush1.msra.mxu0 0.0
      %1839 = vmatprep.subr.mxu0 0.0
      %1840 = vmatpush1.msra.mxu0 0.0
      %1841 = vmatprep.subr.mxu0 0.0
      %1842 = vmatpush1.msra.mxu0 0.0
      %1843 = vmatprep.subr.mxu0 0.0
      %1844 = vmatpush1.msra.mxu0 0.0
      %1845 = vmatprep.subr.mxu0 0.0
      %1846 = vmatpush1.msra.mxu0 0.0
      %1847 = vmatprep.subr.mxu0 0.0
      %1848 = vmatpush1.msra.mxu0 0.0
      %1849 = vmatprep.mubr.f32.mxu0 0.0
      %1850 = vmatmul.mubr.f32.gmra.mrb[0].mxu0 %v1783
      %v1851 = vpop.f32.mrb[0].mxu0
      %v1852 = vadd.f32 0.0, %v1851
      %v1853 = vpop.f32.mrb[0].mxu0
      %1854 = vdwg.mxu0
      %v1855 = vmul.f32 %v1852, 0.0078125
      %v1857 = vsel %vm315, %v1855, 0
      %1859 = vmatprep.subr.mxu0 0.0
      %1860 = vmatpush1.msra.mxu0 %v1756
      %1861 = vmatprep.subr.mxu0 0.0
      %1862 = vmatpush1.msra.mxu0 %v1757
      %1863 = vmatprep.subr.mxu0 0.0
      %1864 = vmatpush1.msra.mxu0 %v1758
      %1865 = vmatprep.subr.mxu0 0.0
      %1866 = vmatpush1.msra.mxu0 %v1759
      %1867 = vmatprep.subr.mxu0 0.0
      %1868 = vmatpush1.msra.mxu0 0.0
      %1869 = vmatprep.subr.mxu0 0.0
      %1870 = vmatpush1.msra.mxu0 0.0
      %1871 = vmatprep.subr.mxu0 0.0
      %1872 = vmatpush1.msra.mxu0 0.0
      %1873 = vmatprep.subr.mxu0 0.0
      %1874 = vmatpush1.msra.mxu0 0.0
      %1875 = vmatprep.subr.mxu0 0.0
      %1876 = vmatpush1.msra.mxu0 0.0
      %1877 = vmatprep.subr.mxu0 0.0
      %1878 = vmatpush1.msra.mxu0 0.0
      %1879 = vmatprep.subr.mxu0 0.0
      %1880 = vmatpush1.msra.mxu0 0.0
      %1881 = vmatprep.subr.mxu0 0.0
      %1882 = vmatpush1.msra.mxu0 0.0
      %1883 = vmatprep.subr.mxu0 0.0
      %1884 = vmatpush1.msra.mxu0 0.0
      %1885 = vmatprep.subr.mxu0 0.0
      %1886 = vmatpush1.msra.mxu0 0.0
      %1887 = vmatprep.subr.mxu0 0.0
      %1888 = vmatpush1.msra.mxu0 0.0
      %1889 = vmatprep.subr.mxu0 0.0
      %1890 = vmatpush1.msra.mxu0 0.0
      %1891 = vmatprep.subr.mxu0 0.0
      %1892 = vmatpush1.msra.mxu0 0.0
      %1893 = vmatprep.subr.mxu0 0.0
      %1894 = vmatpush1.msra.mxu0 0.0
      %1895 = vmatprep.subr.mxu0 0.0
      %1896 = vmatpush1.msra.mxu0 0.0
      %1897 = vmatprep.subr.mxu0 0.0
      %1898 = vmatpush1.msra.mxu0 0.0
      %1899 = vmatprep.subr.mxu0 0.0
      %1900 = vmatpush1.msra.mxu0 0.0
      %1901 = vmatprep.subr.mxu0 0.0
      %1902 = vmatpush1.msra.mxu0 0.0
      %1903 = vmatprep.subr.mxu0 0.0
      %1904 = vmatpush1.msra.mxu0 0.0
      %1905 = vmatprep.subr.mxu0 0.0
      %1906 = vmatpush1.msra.mxu0 0.0
      %1907 = vmatprep.subr.mxu0 0.0
      %1908 = vmatpush1.msra.mxu0 0.0
      %1909 = vmatprep.subr.mxu0 0.0
      %1910 = vmatpush1.msra.mxu0 0.0
      %1911 = vmatprep.subr.mxu0 0.0
      %1912 = vmatpush1.msra.mxu0 0.0
      %1913 = vmatprep.subr.mxu0 0.0
      %1914 = vmatpush1.msra.mxu0 0.0
      %1915 = vmatprep.subr.mxu0 0.0
      %1916 = vmatpush1.msra.mxu0 0.0
      %1917 = vmatprep.subr.mxu0 0.0
      %1918 = vmatpush1.msra.mxu0 0.0
      %1919 = vmatprep.subr.mxu0 0.0
      %1920 = vmatpush1.msra.mxu0 0.0
      %1921 = vmatprep.subr.mxu0 0.0
      %1922 = vmatpush1.msra.mxu0 0.0
      %1923 = vmatprep.mubr.f32.mxu0 0.0
      %1924 = vmatmul.mubr.f32.gmra.mrb[0].mxu0 %v1857
      %v1925 = vpop.f32.mrb[0].mxu0
      %v1926 = vadd.f32 0.0, %v1925
      %v1927 = vpop.f32.mrb[0].mxu0
      %1928 = vdwg.mxu0
      %v1929 = vlaneseq
      %v1930 = vshrl.u32 %v1929, 7
      %v1931 = vsub.s32 0, %v1930
      %v1932 = vrot.slane %v1926, %v1931
      %v1933 = vsub.f32 %v1740, %v1932
      %v1934 = vsub.f32 %v1741, %v1932
      %v1935 = vsub.f32 %v1742, %v1932
      %v1936 = vsub.f32 %v1743, %v1932
      %v1937 = vsub.f32 %v1744, %v1932
      %v1938 = vsub.f32 %v1745, %v1932
      %v1939 = vsub.f32 %v1746, %v1932
      %v1940 = vsub.f32 %v1747, %v1932
      %v1941 = vmul.f32 %v1933, %v1933
      %v1942 = vmul.f32 %v1934, %v1934
      %v1943 = vmul.f32 %v1935, %v1935
      %v1944 = vmul.f32 %v1936, %v1936
      %v1945 = vmul.f32 %v1937, %v1937
      %v1946 = vmul.f32 %v1938, %v1938
      %v1947 = vmul.f32 %v1939, %v1939
      %v1948 = vmul.f32 %v1940, %v1940
      %v1949 = vsel %vm1760, %v1941, 0.0
      %v1950 = vsel %vm1760, %v1942, 0.0
      %v1951 = vadd.f32 %v1949, %v1950
      %v1952 = vsel %vm1760, %v1943, 0.0
      %v1953 = vadd.f32 %v1951, %v1952
      %v1954 = vsel %vm1760, %v1944, 0.0
      %v1955 = vadd.f32 %v1953, %v1954
      %v1956 = vsel %vm1760, %v1945, 0.0
      %v1957 = vadd.f32 %v1955, %v1956
      %v1958 = vsel %vm1760, %v1946, 0.0
      %v1959 = vadd.f32 %v1957, %v1958
      %v1960 = vsel %vm1760, %v1947, 0.0
      %v1961 = vadd.f32 %v1959, %v1960
      %v1962 = vsel %vm1760, %v1948, 0.0
      %v1963 = vadd.f32 %v1961, %v1962
      %v1964 = vrot.slane %v1963, 4
      %v1965 = vadd.f32 %v1963, %v1964
      %v1966 = vrot.slane %v1965, 2
      %v1967 = vadd.f32 %v1965, %v1966
      %v1968 = vrot.slane %v1967, 1
      %v1969 = vadd.f32 %v1967, %v1968
      %v1971 = vsel %vm1760, %v1969, 0
      %1973 = vmatprep.subr.mxu0 0.0
      %1974 = vmatpush1.msra.mxu0 %v1748
      %1975 = vmatprep.subr.mxu0 0.0
      %1976 = vmatpush1.msra.mxu0 %v1749
      %1977 = vmatprep.subr.mxu0 0.0
      %1978 = vmatpush1.msra.mxu0 %v1750
      %1979 = vmatprep.subr.mxu0 0.0
      %1980 = vmatpush1.msra.mxu0 %v1751
      %1981 = vmatprep.subr.mxu0 0.0
      %1982 = vmatpush1.msra.mxu0 %v1752
      %1983 = vmatprep.subr.mxu0 0.0
      %1984 = vmatpush1.msra.mxu0 %v1753
      %1985 = vmatprep.subr.mxu0 0.0
      %1986 = vmatpush1.msra.mxu0 %v1754
      %1987 = vmatprep.subr.mxu0 0.0
      %1988 = vmatpush1.msra.mxu0 %v1755
      %1989 = vmatprep.subr.mxu0 0.0
      %1990 = vmatpush1.msra.mxu0 0.0
      %1991 = vmatprep.subr.mxu0 0.0
      %1992 = vmatpush1.msra.mxu0 0.0
      %1993 = vmatprep.subr.mxu0 0.0
      %1994 = vmatpush1.msra.mxu0 0.0
      %1995 = vmatprep.subr.mxu0 0.0
      %1996 = vmatpush1.msra.mxu0 0.0
      %1997 = vmatprep.subr.mxu0 0.0
      %1998 = vmatpush1.msra.mxu0 0.0
      %1999 = vmatprep.subr.mxu0 0.0
      %2000 = vmatpush1.msra.mxu0 0.0
      %2001 = vmatprep.subr.mxu0 0.0
      %2002 = vmatpush1.msra.mxu0 0.0
      %2003 = vmatprep.subr.mxu0 0.0
      %2004 = vmatpush1.msra.mxu0 0.0
      %2005 = vmatprep.subr.mxu0 0.0
      %2006 = vmatpush1.msra.mxu0 0.0
      %2007 = vmatprep.subr.mxu0 0.0
      %2008 = vmatpush1.msra.mxu0 0.0
      %2009 = vmatprep.subr.mxu0 0.0
      %2010 = vmatpush1.msra.mxu0 0.0
      %2011 = vmatprep.subr.mxu0 0.0
      %2012 = vmatpush1.msra.mxu0 0.0
      %2013 = vmatprep.subr.mxu0 0.0
      %2014 = vmatpush1.msra.mxu0 0.0
      %2015 = vmatprep.subr.mxu0 0.0
      %2016 = vmatpush1.msra.mxu0 0.0
      %2017 = vmatprep.subr.mxu0 0.0
      %2018 = vmatpush1.msra.mxu0 0.0
      %2019 = vmatprep.subr.mxu0 0.0
      %2020 = vmatpush1.msra.mxu0 0.0
      %2021 = vmatprep.subr.mxu0 0.0
      %2022 = vmatpush1.msra.mxu0 0.0
      %2023 = vmatprep.subr.mxu0 0.0
      %2024 = vmatpush1.msra.mxu0 0.0
      %2025 = vmatprep.subr.mxu0 0.0
      %2026 = vmatpush1.msra.mxu0 0.0
      %2027 = vmatprep.subr.mxu0 0.0
      %2028 = vmatpush1.msra.mxu0 0.0
      %2029 = vmatprep.subr.mxu0 0.0
      %2030 = vmatpush1.msra.mxu0 0.0
      %2031 = vmatprep.subr.mxu0 0.0
      %2032 = vmatpush1.msra.mxu0 0.0
      %2033 = vmatprep.subr.mxu0 0.0
      %2034 = vmatpush1.msra.mxu0 0.0
      %2035 = vmatprep.subr.mxu0 0.0
      %2036 = vmatpush1.msra.mxu0 0.0
      %2037 = vmatprep.mubr.f32.mxu0 0.0
      %2038 = vmatmul.mubr.f32.gmra.mrb[0].mxu0 %v1971
      %v2039 = vpop.f32.mrb[0].mxu0
      %v2040 = vadd.f32 0.0, %v2039
      %v2041 = vpop.f32.mrb[0].mxu0
      %2042 = vdwg.mxu0
      %v2043 = vmul.f32 %v2040, 0.0078125
      %v2044 = vadd.f32 %v2043, 1e-05
      %v2045 = vrsqrt.pop %v2044
      %v2047 = vsel %vm315, %v2045, 0
      %2049 = vmatprep.subr.mxu0 0.0
      %2050 = vmatpush1.msra.mxu0 %v1756
      %2051 = vmatprep.subr.mxu0 0.0
      %2052 = vmatpush1.msra.mxu0 %v1757
      %2053 = vmatprep.subr.mxu0 0.0
      %2054 = vmatpush1.msra.mxu0 %v1758
      %2055 = vmatprep.subr.mxu0 0.0
      %2056 = vmatpush1.msra.mxu0 %v1759
      %2057 = vmatprep.subr.mxu0 0.0
      %2058 = vmatpush1.msra.mxu0 0.0
      %2059 = vmatprep.subr.mxu0 0.0
      %2060 = vmatpush1.msra.mxu0 0.0
      %2061 = vmatprep.subr.mxu0 0.0
      %2062 = vmatpush1.msra.mxu0 0.0
      %2063 = vmatprep.subr.mxu0 0.0
      %2064 = vmatpush1.msra.mxu0 0.0
      %2065 = vmatprep.subr.mxu0 0.0
      %2066 = vmatpush1.msra.mxu0 0.0
      %2067 = vmatprep.subr.mxu0 0.0
      %2068 = vmatpush1.msra.mxu0 0.0
      %2069 = vmatprep.subr.mxu0 0.0
      %2070 = vmatpush1.msra.mxu0 0.0
      %2071 = vmatprep.subr.mxu0 0.0
      %2072 = vmatpush1.msra.mxu0 0.0
      %2073 = vmatprep.subr.mxu0 0.0
      %2074 = vmatpush1.msra.mxu0 0.0
      %2075 = vmatprep.subr.mxu0 0.0
      %2076 = vmatpush1.msra.mxu0 0.0
      %2077 = vmatprep.subr.mxu0 0.0
      %2078 = vmatpush1.msra.mxu0 0.0
      %2079 = vmatprep.subr.mxu0 0.0
      %2080 = vmatpush1.msra.mxu0 0.0
      %2081 = vmatprep.subr.mxu0 0.0
      %2082 = vmatpush1.msra.mxu0 0.0
      %2083 = vmatprep.subr.mxu0 0.0
      %2084 = vmatpush1.msra.mxu0 0.0
      %2085 = vmatprep.subr.mxu0 0.0
      %2086 = vmatpush1.msra.mxu0 0.0
      %2087 = vmatprep.subr.mxu0 0.0
      %2088 = vmatpush1.msra.mxu0 0.0
      %2089 = vmatprep.subr.mxu0 0.0
      %2090 = vmatpush1.msra.mxu0 0.0
      %2091 = vmatprep.subr.mxu0 0.0
      %2092 = vmatpush1.msra.mxu0 0.0
      %2093 = vmatprep.subr.mxu0 0.0
      %2094 = vmatpush1.msra.mxu0 0.0
      %2095 = vmatprep.subr.mxu0 0.0
      %2096 = vmatpush1.msra.mxu0 0.0
      %2097 = vmatprep.subr.mxu0 0.0
      %2098 = vmatpush1.msra.mxu0 0.0
      %2099 = vmatprep.subr.mxu0 0.0
      %2100 = vmatpush1.msra.mxu0 0.0
      %2101 = vmatprep.subr.mxu0 0.0
      %2102 = vmatpush1.msra.mxu0 0.0
      %2103 = vmatprep.subr.mxu0 0.0
      %2104 = vmatpush1.msra.mxu0 0.0
      %2105 = vmatprep.subr.mxu0 0.0
      %2106 = vmatpush1.msra.mxu0 0.0
      %2107 = vmatprep.subr.mxu0 0.0
      %2108 = vmatpush1.msra.mxu0 0.0
      %2109 = vmatprep.subr.mxu0 0.0
      %2110 = vmatpush1.msra.mxu0 0.0
      %2111 = vmatprep.subr.mxu0 0.0
      %2112 = vmatpush1.msra.mxu0 0.0
      %2113 = vmatprep.mubr.f32.mxu0 0.0
      %2114 = vmatmul.mubr.f32.gmra.mrb[0].mxu0 %v2047
      %v2115 = vpop.f32.mrb[0].mxu0
      %v2116 = vadd.f32 0.0, %v2115
      %v2117 = vpop.f32.mrb[0].mxu0
      %2118 = vdwg.mxu0
      %v2119 = vlaneseq
      %v2120 = vshrl.u32 %v2119, 7
      %v2121 = vsub.s32 0, %v2120
      %v2122 = vrot.slane %v2116, %v2121
      %v2123 = vmul.f32 %v1933, %v2122
      %v2124 = vmul.f32 %v1934, %v2122
      %v2125 = vmul.f32 %v1935, %v2122
      %v2126 = vmul.f32 %v1936, %v2122
      %v2127 = vmul.f32 %v1937, %v2122
      %v2128 = vmul.f32 %v1938, %v2122
      %v2129 = vmul.f32 %v1939, %v2122
      %v2130 = vmul.f32 %v1940, %v2122
      %v2131 = vld [vmem:[%s4] sm:$0x1]
      %v2133 = vlaneseq
      %v2134 = vshrl.u32 %v2133, 7
      %v2135 = vsub.s32 0, %v2134
      %v2136 = vrot.slane %v2131, %v2135
      %v2138 = vmul.f32 %v2123, %v2136
      %v2139 = vmul.f32 %v2124, %v2136
      %v2140 = vmul.f32 %v2125, %v2136
      %v2141 = vmul.f32 %v2126, %v2136
      %v2142 = vmul.f32 %v2127, %v2136
      %v2143 = vmul.f32 %v2128, %v2136
      %v2144 = vmul.f32 %v2129, %v2136
      %v2145 = vmul.f32 %v2130, %v2136
      %v2146 = vld [vmem:[%s5] sm:$0x1]
      %v2148 = vlaneseq
      %v2149 = vshrl.u32 %v2148, 7
      %v2150 = vsub.s32 0, %v2149
      %v2151 = vrot.slane %v2146, %v2150
      %v2153 = vadd.f32 %v2138, %v2151
      %v2154 = vadd.f32 %v2139, %v2151
      %v2155 = vadd.f32 %v2140, %v2151
      %v2156 = vadd.f32 %v2141, %v2151
      %v2157 = vadd.f32 %v2142, %v2151
      %v2158 = vadd.f32 %v2143, %v2151
      %v2159 = vadd.f32 %v2144, %v2151
      %v2160 = vadd.f32 %v2145, %v2151
      %v2161 = vmax.f32 %v2153, 0.0
      %v2162 = vmax.f32 %v2154, 0.0
      %v2163 = vmax.f32 %v2155, 0.0
      %v2164 = vmax.f32 %v2156, 0.0
      %v2165 = vmax.f32 %v2157, 0.0
      %v2166 = vmax.f32 %v2158, 0.0
      %v2167 = vmax.f32 %v2159, 0.0
      %v2168 = vmax.f32 %v2160, 0.0
      %v2169 = vpack.c.bf16 %v2162, %v2161
      %v2170 = vpack.c.bf16 %v2164, %v2163
      %v2171 = vpack.c.bf16 %v2166, %v2165
      %v2172 = vpack.c.bf16 %v2168, %v2167
      %v2177 = vunpack.c.l.b16 %v2169
      %v2178 = vunpack.c.h.b16 %v2169
      %v2179 = vunpack.c.l.b16 %v2170
      %v2180 = vunpack.c.h.b16 %v2170
      %v2181 = vunpack.c.l.b16 %v2171
      %v2182 = vunpack.c.h.b16 %v2171
      %v2183 = vunpack.c.l.b16 %v2172
      %v2184 = vunpack.c.h.b16 %v2172
      %v2185 = vpack.c.b16 %v2177, %v2177
      %v2186 = vpack.c.b16 %v2178, %v2178
      %v2187 = vpack.c.b16 %v2179, %v2179
      %v2188 = vpack.c.b16 %v2180, %v2180
      %v2189 = vpack.c.b16 %v2181, %v2181
      %v2190 = vpack.c.b16 %v2182, %v2182
      %v2191 = vpack.c.b16 %v2183, %v2183
      %v2192 = vpack.c.b16 %v2184, %v2184
      %vm2201 = vcmask 519168
      %2202 = vst.msk [vmem:[%s256] sm:$0xf] %vm2201, %v2185
      %2203 = vst.msk [vmem:[%s256 + $0x4] sm:$0xf] %vm2201, %v2186
      %2204 = vst.msk [vmem:[%s256 + $0x8] sm:$0xf] %vm2201, %v2187
      %2205 = vst.msk [vmem:[%s256 + $0xc] sm:$0xf] %vm2201, %v2188
      %2206 = vst.msk [vmem:[%s256 + $0x10] sm:$0xf] %vm2201, %v2189
      %2207 = vst.msk [vmem:[%s256 + $0x14] sm:$0xf] %vm2201, %v2190
      %2208 = vst.msk [vmem:[%s256 + $0x18] sm:$0xf] %vm2201, %v2191
      %2209 = vst.msk [vmem:[%s256 + $0x1c] sm:$0xf] %vm2201, %v2192
      %p2210 = scmp.lt.s32.totalorder %s17, 1
      %s2211 = scalar_select %p2210, %s17, 1
      %s2212 = smul.addr %s2211, 8
      %s2213 = smul.addr %s2212, 4
      %s2214 = scalar_lea.vmem %s6, %s2213
      // Predicated region
      $region45: #{_lambda_.5} parent=43 // pred_check
        %p2215 = pneg %p166
      $region46: #{_lambda_.5} parent=43 // pred_check_branch
        %2217 = sbr.rel (%p2215) target = $region48
      $region47: #{_lambda_.5} parent=43 // pred_region
        _
      $region48: #{_lambda_.5} parent=43 // pred_fallthru
        _
    $region44: #{_lambda_.5} parent=5 // pred_fallthru
      _
    %p2218 = scmp.le.s32.totalorder 2, %s12
    // Predicated region
    $region49: #{_lambda_.5} parent=5 // pred_check
      %p2219 = pneg %p2218
    $region50: #{_lambda_.5} parent=5 // pred_check_branch
      %2221 = sbr.rel (%p2219) target = $region52
    $region51: #{_lambda_.5} parent=5 // pred_region
      %s2222 = ssub.s32 %s12, 2
      // Predicated region
      $region53: #{_lambda_.5} parent=51 // pred_check
        %p2223 = pneg %p172
      $region54: #{_lambda_.5} parent=51 // pred_check_branch
        %2225 = sbr.rel (%p2223) target = $region56
      $region55: #{_lambda_.5} parent=51 // pred_region
        %p2226 = scmp.lt.s32.totalorder %s18, 1
        %s2227 = scalar_select %p2226, %s18, 1
        %s2228 = smul.addr %s2227, 8
        %s2229 = smul.addr %s2228, 4
        %s2230 = scalar_lea.vmem %s6, %s2229
      $region56: #{_lambda_.5} parent=51 // pred_fallthru
        _
    $region52: #{_lambda_.5} parent=5 // pred_fallthru
      _
  $region6: #{_lambda_.5} parent=0 // loop_footer
    %s16 = sadd.s32 1, %s12
  $region7: #{_lambda_.5} parent=0 // loop_footer_branch
    %11 = sbr.rel target = $region3
  $region8: #{_lambda_.5} parent=0 // loop_exit
    _

// kernel: _lambda_.8
$region0: #{_lambda_.8}
  #allocation0 [shape = 'u32[]', space=smem, size = 0x4, offset = 0x4, fixed_abs, tag = 'smem constant byte address 0x4 - core index']
  #allocation1 [shape = 'u32[144,128]{1,0:T(1,128)}', space=vmem, size = 0x12000, scoped, tag = 'internal scratch']
  %s0 = inlined_call_operand.vmem [shape: bf16[2,10,10,64], index: 0, kind: input, shape index: {}]
  %s1 = inlined_call_operand.vmem [shape: bf16[576,64], index: 1, kind: input, shape index: {}]
  %s2 = inlined_call_operand.vmem [shape: f32[64,32], index: 2, kind: input, shape index: {}]
  %s3 = inlined_call_operand.vmem [shape: f32[32,64], index: 3, kind: input, shape index: {}]
  %s4 = inlined_call_operand.vmem [shape: f32[1,64], index: 4, kind: input, shape index: {}]
  %s5 = inlined_call_operand.vmem [shape: f32[1,64], index: 5, kind: input, shape index: {}]
  %s6 = inlined_call_operand.vmem [shape: bf16[2,64,64], index: 6, kind: output, shape index: {}]
  %s7 = sld [smem:[#allocation0]]
  $region57: #{_lambda_.8} parent=0
    _
  %s9 = ssub.s32 1, %s7
  %s10 = scalar_select 0, %s9, %s7
  loop: start=0, step=1, limit=4
  $region2: #{_lambda_.8} parent=0 // loop_pre_header
    _
  $region3: #{_lambda_.8} parent=0 // loop_header
    %s12 = sphi 0, %s16
    %p13 = scmp.ge.s32.totalorder %s12, 4
    %s22 = sphi 0, %s24
    %s25 = sphi 0, %s22
    %s26 = sphi 0, %s25
    %s42 = sphi 0, %s26
    %s46 = sphi 0, %s46
    %s48 = sphi 0, %s46
    %s49 = sphi 0, %s48
    %s63 = sphi 0, %s49
    %s67 = sphi 0, %s67
    %s69 = sphi 0, %s67
    %s70 = sphi 0, %s69
    %s84 = sphi 0, %s70
    %s88 = sphi 0, %s88
    %s90 = sphi 0, %s88
    %s91 = sphi 0, %s90
    %s105 = sphi 0, %s91
    %s109 = sphi 0, %s109
    %s111 = sphi 0, %s109
    %s112 = sphi 0, %s111
    %s126 = sphi 0, %s112
    %s130 = sphi 0, %s130
    %s132 = sphi 0, %s130
    %s133 = sphi 0, %s132
    %s147 = sphi 0, %s133
    %s153 = sphi 0, %s155
    %s156 = sphi 0, %s153
    %s157 = sphi 0, %s156
    %s173 = sphi 0, %s157
  $region4: #{_lambda_.8} parent=0 // loop_header_branch
    %15 = sbr.rel (%p13) target = $region8
  $region5: #{_lambda_.8} parent=0 // loop_body
    %s17 = ssub.s32 %s12, 1
    %s18 = ssub.s32 %s12, 2
    %s19 = sadd.s32 %s12, 1
    %s20 = ssub.s32 %s12, %s19
    %p21 = scmp.eq.s32.totalorder %s20, 0
    %s23 = sadd.s32 %s22, 1
    %s24 = scalar_select %p21, %s22, %s23
    %p27 = pneg %p21
    %p28 = scmp.eq.s32.totalorder %s12, 1
    %p29 = por %p27, %p28
    %p30 = scmp.ne.s32.totalorder %s22, %s25
    %p31 = scmp.eq.s32.totalorder %s12, 0
    %p32 = por %p30, %p31
    %p33 = scmp.ne.s32.totalorder %s22, %s25
    %p34 = scmp.eq.s32.totalorder %s17, 1
    %p35 = por %p33, %p34
    %p36 = scmp.ne.s32.totalorder %s25, %s26
    %p37 = scmp.eq.s32.totalorder %s17, 0
    %p38 = por %p36, %p37
    %p39 = scmp.ne.s32.totalorder %s25, %s26
    %p40 = scmp.eq.s32.totalorder %s18, 1
    %p41 = por %p39, %p40
    %p43 = scmp.ne.s32.totalorder %s26, %s42
    %p44 = scmp.eq.s32.totalorder %s18, 0
    %p45 = por %p43, %p44
    %s47 = sadd.s32 %s46, 1
    %p50 = scmp.eq.s32.totalorder %s12, 1
    %p51 = scmp.ne.s32.totalorder %s46, %s48
    %p52 = scmp.eq.s32.totalorder %s12, 0
    %p53 = por %p51, %p52
    %p54 = scmp.ne.s32.totalorder %s46, %s48
    %p55 = scmp.eq.s32.totalorder %s17, 1
    %p56 = por %p54, %p55
    %p57 = scmp.ne.s32.totalorder %s48, %s49
    %p58 = scmp.eq.s32.totalorder %s17, 0
    %p59 = por %p57, %p58
    %p60 = scmp.ne.s32.totalorder %s48, %s49
    %p61 = scmp.eq.s32.totalorder %s18, 1
    %p62 = por %p60, %p61
    %p64 = scmp.ne.s32.totalorder %s49, %s63
    %p65 = scmp.eq.s32.totalorder %s18, 0
    %p66 = por %p64, %p65
    %s68 = sadd.s32 %s67, 1
    %p71 = scmp.eq.s32.totalorder %s12, 1
    %p72 = scmp.ne.s32.totalorder %s67, %s69
    %p73 = scmp.eq.s32.totalorder %s12, 0
    %p74 = por %p72, %p73
    %p75 = scmp.ne.s32.totalorder %s67, %s69
    %p76 = scmp.eq.s32.totalorder %s17, 1
    %p77 = por %p75, %p76
    %p78 = scmp.ne.s32.totalorder %s69, %s70
    %p79 = scmp.eq.s32.totalorder %s17, 0
    %p80 = por %p78, %p79
    %p81 = scmp.ne.s32.totalorder %s69, %s70
    %p82 = scmp.eq.s32.totalorder %s18, 1
    %p83 = por %p81, %p82
    %p85 = scmp.ne.s32.totalorder %s70, %s84
    %p86 = scmp.eq.s32.totalorder %s18, 0
    %p87 = por %p85, %p86
    %s89 = sadd.s32 %s88, 1
    %p92 = scmp.eq.s32.totalorder %s12, 1
    %p93 = scmp.ne.s32.totalorder %s88, %s90
    %p94 = scmp.eq.s32.totalorder %s12, 0
    %p95 = por %p93, %p94
    %p96 = scmp.ne.s32.totalorder %s88, %s90
    %p97 = scmp.eq.s32.totalorder %s17, 1
    %p98 = por %p96, %p97
    %p99 = scmp.ne.s32.totalorder %s90, %s91
    %p100 = scmp.eq.s32.totalorder %s17, 0
    %p101 = por %p99, %p100
    %p102 = scmp.ne.s32.totalorder %s90, %s91
    %p103 = scmp.eq.s32.totalorder %s18, 1
    %p104 = por %p102, %p103
    %p106 = scmp.ne.s32.totalorder %s91, %s105
    %p107 = scmp.eq.s32.totalorder %s18, 0
    %p108 = por %p106, %p107
    %s110 = sadd.s32 %s109, 1
    %p113 = scmp.eq.s32.totalorder %s12, 1
    %p114 = scmp.ne.s32.totalorder %s109, %s111
    %p115 = scmp.eq.s32.totalorder %s12, 0
    %p116 = por %p114, %p115
    %p117 = scmp.ne.s32.totalorder %s109, %s111
    %p118 = scmp.eq.s32.totalorder %s17, 1
    %p119 = por %p117, %p118
    %p120 = scmp.ne.s32.totalorder %s111, %s112
    %p121 = scmp.eq.s32.totalorder %s17, 0
    %p122 = por %p120, %p121
    %p123 = scmp.ne.s32.totalorder %s111, %s112
    %p124 = scmp.eq.s32.totalorder %s18, 1
    %p125 = por %p123, %p124
    %p127 = scmp.ne.s32.totalorder %s112, %s126
    %p128 = scmp.eq.s32.totalorder %s18, 0
    %p129 = por %p127, %p128
    %s131 = sadd.s32 %s130, 1
    %p134 = scmp.eq.s32.totalorder %s12, 1
    %p135 = scmp.ne.s32.totalorder %s130, %s132
    %p136 = scmp.eq.s32.totalorder %s12, 0
    %p137 = por %p135, %p136
    %p138 = scmp.ne.s32.totalorder %s130, %s132
    %p139 = scmp.eq.s32.totalorder %s17, 1
    %p140 = por %p138, %p139
    %p141 = scmp.ne.s32.totalorder %s132, %s133
    %p142 = scmp.eq.s32.totalorder %s17, 0
    %p143 = por %p141, %p142
    %p144 = scmp.ne.s32.totalorder %s132, %s133
    %p145 = scmp.eq.s32.totalorder %s18, 1
    %p146 = por %p144, %p145
    %p148 = scmp.ne.s32.totalorder %s133, %s147
    %p149 = scmp.eq.s32.totalorder %s18, 0
    %p150 = por %p148, %p149
    %s151 = ssub.s32 %s12, %s19
    %p152 = scmp.eq.s32.totalorder %s151, 0
    %s154 = sadd.s32 %s153, 1
    %s155 = scalar_select %p152, %s153, %s154
    %p158 = pneg %p152
    %p159 = scmp.eq.s32.totalorder %s12, 1
    %p160 = por %p158, %p159
    %p161 = scmp.ne.s32.totalorder %s153, %s156
    %p162 = scmp.eq.s32.totalorder %s12, 0
    %p163 = por %p161, %p162
    %p164 = scmp.ne.s32.totalorder %s153, %s156
    %p165 = scmp.eq.s32.totalorder %s17, 1
    %p166 = por %p164, %p165
    %p167 = scmp.ne.s32.totalorder %s156, %s157
    %p168 = scmp.eq.s32.totalorder %s17, 0
    %p169 = por %p167, %p168
    %p170 = scmp.ne.s32.totalorder %s156, %s157
    %p171 = scmp.eq.s32.totalorder %s18, 1
    %p172 = por %p170, %p171
    %p174 = scmp.ne.s32.totalorder %s157, %s173
    %p175 = scmp.eq.s32.totalorder %s18, 0
    %p176 = por %p174, %p175
    %p177 = scmp.le.s32.totalorder 1, %s12
    %p178 = scmp.lt.s32.totalorder %s12, 3
    %p179 = pnand %p177, %p178
    %p180 = pneg %p179
    // Predicated region
    $region9: #{_lambda_.8} parent=5 // pred_check
      _
    $region10: #{_lambda_.8} parent=5 // pred_check_branch
      %182 = sbr.rel (%p179) target = $region12
    $region11: #{_lambda_.8} parent=5 // pred_region
      %s183 = ssub.s32 %s12, 1
      // Predicated region
      $region13: #{_lambda_.8} parent=11 // pred_check
        %p184 = pneg %p59
      $region14: #{_lambda_.8} parent=11 // pred_check_branch
        %186 = sbr.rel (%p184) target = $region16
      $region15: #{_lambda_.8} parent=11 // pred_region
        _
      $region16: #{_lambda_.8} parent=11 // pred_fallthru
        _
      // Predicated region
      $region17: #{_lambda_.8} parent=11 // pred_check
        %p187 = pneg %p80
      $region18: #{_lambda_.8} parent=11 // pred_check_branch
        %189 = sbr.rel (%p187) target = $region20
      $region19: #{_lambda_.8} parent=11 // pred_region
        _
      $region20: #{_lambda_.8} parent=11 // pred_fallthru
        _
      // Predicated region
      $region21: #{_lambda_.8} parent=11 // pred_check
        %p190 = pneg %p101
      $region22: #{_lambda_.8} parent=11 // pred_check_branch
        %192 = sbr.rel (%p190) target = $region24
      $region23: #{_lambda_.8} parent=11 // pred_region
        _
      $region24: #{_lambda_.8} parent=11 // pred_fallthru
        _
      // Predicated region
      $region25: #{_lambda_.8} parent=11 // pred_check
        %p193 = pneg %p122
      $region26: #{_lambda_.8} parent=11 // pred_check_branch
        %195 = sbr.rel (%p193) target = $region28
      $region27: #{_lambda_.8} parent=11 // pred_region
        _
      $region28: #{_lambda_.8} parent=11 // pred_fallthru
        _
      // Predicated region
      $region29: #{_lambda_.8} parent=11 // pred_check
        %p196 = pneg %p143
      $region30: #{_lambda_.8} parent=11 // pred_check_branch
        %198 = sbr.rel (%p196) target = $region32
      $region31: #{_lambda_.8} parent=11 // pred_region
        _
      $region32: #{_lambda_.8} parent=11 // pred_fallthru
        _
    $region12: #{_lambda_.8} parent=5 // pred_fallthru
      _
    %p199 = scmp.lt.s32.totalorder %s12, 2
    // Predicated region
    $region33: #{_lambda_.8} parent=5 // pred_check
      %p200 = pneg %p199
    $region34: #{_lambda_.8} parent=5 // pred_check_branch
      %202 = sbr.rel (%p200) target = $region36
    $region35: #{_lambda_.8} parent=5 // pred_region
      // Predicated region
      $region37: #{_lambda_.8} parent=35 // pred_check
        %p203 = pneg %p32
      $region38: #{_lambda_.8} parent=35 // pred_check_branch
        %205 = sbr.rel (%p203) target = $region40
      $region39: #{_lambda_.8} parent=35 // pred_region
        %p206 = scmp.lt.s32.totalorder %s12, 1
        %s207 = scalar_select %p206, %s12, 1
        %s208 = smul.addr %s207, 20
        %s209 = smul.addr %s208, 4
        %s210 = scalar_lea.vmem %s0, %s209
      $region40: #{_lambda_.8} parent=35 // pred_fallthru
        _
    $region36: #{_lambda_.8} parent=5 // pred_fallthru
      _
    %p211 = scmp.le.s32.totalorder 1, %s12
    %p212 = scmp.lt.s32.totalorder %s12, 3
    %p213 = pnand %p211, %p212
    %p214 = pneg %p213
    // Predicated region
    $region41: #{_lambda_.8} parent=5 // pred_check
      _
    $region42: #{_lambda_.8} parent=5 // pred_check_branch
      %216 = sbr.rel (%p213) target = $region44
    $region43: #{_lambda_.8} parent=5 // pred_region
      %s217 = ssub.s32 %s12, 1
      %p218 = scmp.lt.s32.totalorder %s17, 1
      %s219 = scalar_select %p218, %s17, 1
      %s220 = smul.addr %s219, 20
      %s221 = smul.addr %s220, 4
      %s222 = scalar_lea.vmem %s0, %s221
      %p223 = pneg %p38
      %p224 = pneg %p35
      %p225 = pneg %p59
      %p226 = pneg %p56
      %p227 = pneg %p80
      %p228 = pneg %p77
      %p229 = pneg %p101
      %p230 = pneg %p98
      %p231 = pneg %p122
      %p232 = pneg %p119
      %p233 = pneg %p143
      %p234 = pneg %p140
      %p235 = pneg %p169
      %p236 = pneg %p166
      %p237 = scmp.lt.s32.totalorder %s17, 1
      %s238 = scalar_select %p237, %s17, 1
      %s239 = smul.addr %s238, 8
      %s240 = smul.addr %s239, 4
      %s241 = scalar_lea.vmem %s6, %s240
      %p242 = scmp.lt.s32.totalorder %s17, 1
      %s243 = scalar_select %p242, %s17, 1
      %s244 = smul.addr %s243, 20
      %s245 = smul.addr %s244, 4
      %s246 = scalar_lea.vmem %s0, %s245
      %p247 = scmp.lt.s32.totalorder %s17, 1
      %s248 = scalar_select %p247, %s17, 1
      %s249 = smul.addr %s248, 8
      %s250 = smul.addr %s249, 4
      %s251 = scalar_lea.vmem %s6, %s250
      %v253 = vld [vmem:[%s246] sm:$0xf]
      %v254 = vld [vmem:[%s246 + $0x8] sm:$0xf]
      %v255 = vld [vmem:[%s246 + $0x10] sm:$0xf]
      %v256 = vld [vmem:[%s246 + $0x18] sm:$0xf]
      %v257 = vld [vmem:[%s246 + $0x20] sm:$0xf]
      %v258 = vld [vmem:[%s246 + $0x28] sm:$0xf]
      %v259 = vld [vmem:[%s246 + $0x30] sm:$0xf]
      %v260 = vld [vmem:[%s246 + $0x38] sm:$0xf]
      %v261 = vld [vmem:[%s1] sm:$0xf]
      %v262 = vld [vmem:[%s1 + $0x4] sm:$0xf]
      %v263 = vld [vmem:[%s1 + $0x8] sm:$0xf]
      %v264 = vld [vmem:[%s1 + $0xc] sm:$0xf]
      %v265 = vld [vmem:[%s1 + $0x10] sm:$0xf]
      %v266 = vld [vmem:[%s1 + $0x14] sm:$0xf]
      %v267 = vld [vmem:[%s1 + $0x18] sm:$0xf]
      %v268 = vld [vmem:[%s1 + $0x1c] sm:$0xf]
      %v269 = vld [vmem:[%s246 + $0x4] sm:$0x1]
      %v270 = vld [vmem:[%s246 + $0xc] sm:$0x1]
      %v271 = vld [vmem:[%s246 + $0x14] sm:$0x1]
      %v272 = vld [vmem:[%s246 + $0x1c] sm:$0x1]
      %v273 = vld [vmem:[%s246 + $0x24] sm:$0x1]
      %v274 = vld [vmem:[%s246 + $0x2c] sm:$0x1]
      %v275 = vld [vmem:[%s246 + $0x34] sm:$0x1]
      %v276 = vld [vmem:[%s246 + $0x3c] sm:$0x1]
      %vm277 = vsmask.f32 3328
      %vm278 = vsmask.f32 7440
      %vm279 = vmor %vm277, %vm278
      %v281 = vshrl.u32 %v253, 16
      %v283 = vrot.slane %v281, 4
      %v284 = vshll.u32 %v253, 16
      %v286 = vrot.slane %v284, 5
      %v287 = vor.u32 %v283, %v286
      %v288 = vrot.slane %v287, 4
      %v290 = vshll.u32 %v269, 16
      %v292 = vrot.slane %v290, 5
      %v293 = vsel %vm279, %v288, %v292
      %v295 = vshrl.u32 %v254, 16
      %v297 = vrot.slane %v295, 4
      %v298 = vshll.u32 %v254, 16
      %v300 = vrot.slane %v298, 5
      %v301 = vor.u32 %v297, %v300
      %v302 = vrot.slane %v301, 4
      %v304 = vshll.u32 %v270, 16
      %v306 = vrot.slane %v304, 5
      %v307 = vsel %vm279, %v302, %v306
      %v309 = vshrl.u32 %v255, 16
      %v311 = vrot.slane %v309, 4
      %v312 = vshll.u32 %v255, 16
      %v314 = vrot.slane %v312, 5
      %v315 = vor.u32 %v311, %v314
      %v316 = vrot.slane %v315, 4
      %v318 = vshll.u32 %v271, 16
      %v320 = vrot.slane %v318, 5
      %v321 = vsel %vm279, %v316, %v320
      %v323 = vshrl.u32 %v256, 16
      %v325 = vrot.slane %v323, 4
      %v326 = vshll.u32 %v256, 16
      %v328 = vrot.slane %v326, 5
      %v329 = vor.u32 %v325, %v328
      %v330 = vrot.slane %v329, 4
      %v332 = vshll.u32 %v272, 16
      %v334 = vrot.slane %v332, 5
      %v335 = vsel %vm279, %v330, %v334
      %v337 = vshrl.u32 %v257, 16
      %v339 = vrot.slane %v337, 4
      %v340 = vshll.u32 %v257, 16
      %v342 = vrot.slane %v340, 5
      %v343 = vor.u32 %v339, %v342
      %v344 = vrot.slane %v343, 4
      %v346 = vshll.u32 %v273, 16
      %v348 = vrot.slane %v346, 5
      %v349 = vsel %vm279, %v344, %v348
      %v351 = vshrl.u32 %v258, 16
      %v353 = vrot.slane %v351, 4
      %v354 = vshll.u32 %v258, 16
      %v356 = vrot.slane %v354, 5
      %v357 = vor.u32 %v353, %v356
      %v358 = vrot.slane %v357, 4
      %v360 = vshll.u32 %v274, 16
      %v362 = vrot.slane %v360, 5
      %v363 = vsel %vm279, %v358, %v362
      %v365 = vshrl.u32 %v259, 16
      %v367 = vrot.slane %v365, 4
      %v368 = vshll.u32 %v259, 16
      %v370 = vrot.slane %v368, 5
      %v371 = vor.u32 %v367, %v370
      %v372 = vrot.slane %v371, 4
      %v374 = vshll.u32 %v275, 16
      %v376 = vrot.slane %v374, 5
      %v377 = vsel %vm279, %v372, %v376
      %v379 = vshrl.u32 %v260, 16
      %v381 = vrot.slane %v379, 4
      %v382 = vshll.u32 %v260, 16
      %v384 = vrot.slane %v382, 5
      %v385 = vor.u32 %v381, %v384
      %v386 = vrot.slane %v385, 4
      %v388 = vshll.u32 %v276, 16
      %v390 = vrot.slane %v388, 5
      %v391 = vsel %vm279, %v386, %v390
      %v392 = vld [vmem:[%s1 + $0x20] sm:$0xf]
      %v393 = vld [vmem:[%s1 + $0x24] sm:$0xf]
      %v394 = vld [vmem:[%s1 + $0x28] sm:$0xf]
      %v395 = vld [vmem:[%s1 + $0x2c] sm:$0xf]
      %v396 = vld [vmem:[%s1 + $0x30] sm:$0xf]
      %v397 = vld [vmem:[%s1 + $0x34] sm:$0xf]
      %v398 = vld [vmem:[%s1 + $0x38] sm:$0xf]
      %v399 = vld [vmem:[%s1 + $0x3c] sm:$0xf]
      %v400 = vunpack.c.l.b16 %v293
      %v401 = vunpack.c.l.b16 %v307
      %v402 = vunpack.c.l.b16 %v321
      %v403 = vunpack.c.l.b16 %v335
      %v404 = vunpack.c.l.b16 %v349
      %v405 = vunpack.c.l.b16 %v363
      %v406 = vunpack.c.l.b16 %v377
      %v407 = vunpack.c.l.b16 %v391
      %v408 = vpack.c.b16 %v401, %v400
      %v409 = vpack.c.b16 %v403, %v402
      %v410 = vpack.c.b16 %v405, %v404
      %v411 = vpack.c.b16 %v407, %v406
      %v420 = vunpack.c.l.b16 %v392
      %v421 = vunpack.c.l.b16 %v393
      %v422 = vunpack.c.l.b16 %v394
      %v423 = vunpack.c.l.b16 %v395
      %v424 = vunpack.c.l.b16 %v396
      %v425 = vunpack.c.l.b16 %v397
      %v426 = vunpack.c.l.b16 %v398
      %v427 = vunpack.c.l.b16 %v399
      %v428 = vpack.c.b16 %v421, %v420
      %v429 = vpack.c.b16 %v423, %v422
      %v430 = vpack.c.b16 %v425, %v424
      %v431 = vpack.c.b16 %v427, %v426
      %vm436 = vcmask 523264
      %v438 = vsel %vm436, %v408, 0
      %v441 = vsel %vm436, %v409, 0
      %v444 = vsel %vm436, %v410, 0
      %v447 = vsel %vm436, %v411, 0
      %449 = vmatprep.subr.bf16.mxu0 0
      %450 = vmatpush1.bf16.msra.mxu0 %v428
      %451 = vmatprep.subr.bf16.mxu0 0
      %452 = vmatpush1.bf16.msra.mxu0 %v429
      %453 = vmatprep.subr.bf16.mxu0 0
      %454 = vmatpush1.bf16.msra.mxu0 %v430
      %455 = vmatprep.subr.bf16.mxu0 0
      %456 = vmatpush1.bf16.msra.mxu0 %v431
      %457 = vmatprep.subr.bf16.mxu0 0
      %458 = vmatpush1.bf16.msra.mxu0 0
      %459 = vmatprep.subr.bf16.mxu0 0
      %460 = vmatpush1.bf16.msra.mxu0 0
      %461 = vmatprep.subr.bf16.mxu0 0
      %462 = vmatpush1.bf16.msra.mxu0 0
      %463 = vmatprep.subr.bf16.mxu0 0
      %464 = vmatpush1.bf16.msra.mxu0 0
      %465 = vmatprep.subr.bf16.mxu0 0
      %466 = vmatpush1.bf16.msra.mxu0 0
      %467 = vmatprep.subr.bf16.mxu0 0
      %468 = vmatpush1.bf16.msra.mxu0 0
      %469 = vmatprep.subr.bf16.mxu0 0
      %470 = vmatpush1.bf16.msra.mxu0 0
      %471 = vmatprep.subr.bf16.mxu0 0
      %472 = vmatpush1.bf16.msra.mxu0 0
      %473 = vmatprep.subr.bf16.mxu0 0
      %474 = vmatpush1.bf16.msra.mxu0 0
      %475 = vmatprep.subr.bf16.mxu0 0
      %476 = vmatpush1.bf16.msra.mxu0 0
      %477 = vmatprep.subr.bf16.mxu0 0
      %478 = vmatpush1.bf16.msra.mxu0 0
      %479 = vmatprep.subr.bf16.mxu0 0
      %480 = vmatpush1.bf16.msra.mxu0 0
      %481 = vmatprep.mubr.bf16.mxu0 0
      %482 = vmatmul.mubr.bf16.gmra.mrb[0].mxu0 %v438
      %v483 = vpop.f32.mrb[0].mxu0
      %v484 = vadd.f32 0.0, %v483
      %v485 = vpop.f32.mrb[0].mxu0
      %v486 = vpop.f32.mrb[0].mxu0
      %v487 = vadd.f32 0.0, %v486
      %v488 = vpop.f32.mrb[0].mxu0
      %489 = vmatprep.mubr.bf16.mxu0 0
      %490 = vmatmul.mubr.bf16.gmra.mrb[0].mxu0 %v441
      %v491 = vpop.f32.mrb[0].mxu0
      %v492 = vadd.f32 0.0, %v491
      %v493 = vpop.f32.mrb[0].mxu0
      %v494 = vpop.f32.mrb[0].mxu0
      %v495 = vadd.f32 0.0, %v494
      %v496 = vpop.f32.mrb[0].mxu0
      %497 = vmatprep.mubr.bf16.mxu0 0
      %498 = vmatmul.mubr.bf16.gmra.mrb[0].mxu0 %v444
      %v499 = vpop.f32.mrb[0].mxu0
      %v500 = vadd.f32 0.0, %v499
      %v501 = vpop.f32.mrb[0].mxu0
      %v502 = vpop.f32.mrb[0].mxu0
      %v503 = vadd.f32 0.0, %v502
      %v504 = vpop.f32.mrb[0].mxu0
      %505 = vmatprep.mubr.bf16.mxu0 0
      %506 = vmatmul.mubr.bf16.gmra.mrb[0].mxu0 %v447
      %v507 = vpop.f32.mrb[0].mxu0
      %v508 = vadd.f32 0.0, %v507
      %v509 = vpop.f32.mrb[0].mxu0
      %v510 = vpop.f32.mrb[0].mxu0
      %v511 = vadd.f32 0.0, %v510
      %v512 = vpop.f32.mrb[0].mxu0
      %513 = vdwg.mxu0
      %v522 = vunpack.c.l.b16 %v253
      %v523 = vunpack.c.l.b16 %v254
      %v524 = vunpack.c.l.b16 %v255
      %v525 = vunpack.c.l.b16 %v256
      %v526 = vunpack.c.l.b16 %v257
      %v527 = vunpack.c.l.b16 %v258
      %v528 = vunpack.c.l.b16 %v259
      %v529 = vunpack.c.l.b16 %v260
      %v530 = vpack.c.b16 %v523, %v522
      %v531 = vpack.c.b16 %v525, %v524
      %v532 = vpack.c.b16 %v527, %v526
      %v533 = vpack.c.b16 %v529, %v528
      %v542 = vunpack.c.l.b16 %v261
      %v543 = vunpack.c.l.b16 %v262
      %v544 = vunpack.c.l.b16 %v263
      %v545 = vunpack.c.l.b16 %v264
      %v546 = vunpack.c.l.b16 %v265
      %v547 = vunpack.c.l.b16 %v266
      %v548 = vunpack.c.l.b16 %v267
      %v549 = vunpack.c.l.b16 %v268
      %v550 = vpack.c.b16 %v543, %v542
      %v551 = vpack.c.b16 %v545, %v544
      %v552 = vpack.c.b16 %v547, %v546
      %v553 = vpack.c.b16 %v549, %v548
      %v559 = vsel %vm436, %v530, 0
      %v562 = vsel %vm436, %v531, 0
      %v565 = vsel %vm436, %v532, 0
      %v568 = vsel %vm436, %v533, 0
      %570 = vmatprep.subr.bf16.mxu0 0
      %571 = vmatpush1.bf16.msra.mxu0 %v550
      %572 = vmatprep.subr.bf16.mxu0 0
      %573 = vmatpush1.bf16.msra.mxu0 %v551
      %574 = vmatprep.subr.bf16.mxu0 0
      %575 = vmatpush1.bf16.msra.mxu0 %v552
      %576 = vmatprep.subr.bf16.mxu0 0
      %577 = vmatpush1.bf16.msra.mxu0 %v553
      %578 = vmatprep.subr.bf16.mxu0 0
      %579 = vmatpush1.bf16.msra.mxu0 0
      %580 = vmatprep.subr.bf16.mxu0 0
      %581 = vmatpush1.bf16.msra.mxu0 0
      %582 = vmatprep.subr.bf16.mxu0 0
      %583 = vmatpush1.bf16.msra.mxu0 0
      %584 = vmatprep.subr.bf16.mxu0 0
      %585 = vmatpush1.bf16.msra.mxu0 0
      %586 = vmatprep.subr.bf16.mxu0 0
      %587 = vmatpush1.bf16.msra.mxu0 0
      %588 = vmatprep.subr.bf16.mxu0 0
      %589 = vmatpush1.bf16.msra.mxu0 0
      %590 = vmatprep.subr.bf16.mxu0 0
      %591 = vmatpush1.bf16.msra.mxu0 0
      %592 = vmatprep.subr.bf16.mxu0 0
      %593 = vmatpush1.bf16.msra.mxu0 0
      %594 = vmatprep.subr.bf16.mxu0 0
      %595 = vmatpush1.bf16.msra.mxu0 0
      %596 = vmatprep.subr.bf16.mxu0 0
      %597 = vmatpush1.bf16.msra.mxu0 0
      %598 = vmatprep.subr.bf16.mxu0 0
      %599 = vmatpush1.bf16.msra.mxu0 0
      %600 = vmatprep.subr.bf16.mxu0 0
      %601 = vmatpush1.bf16.msra.mxu0 0
      %602 = vmatprep.mubr.bf16.mxu0 0
      %603 = vmatmul.mubr.bf16.gmra.mrb[0].mxu0 %v559
      %v604 = vpop.f32.mrb[0].mxu0
      %v605 = vadd.f32 %v484, %v604
      %v606 = vpop.f32.mrb[0].mxu0
      %v607 = vpop.f32.mrb[0].mxu0
      %v608 = vadd.f32 %v487, %v607
      %v609 = vpop.f32.mrb[0].mxu0
      %610 = vmatprep.mubr.bf16.mxu0 0
      %611 = vmatmul.mubr.bf16.gmra.mrb[0].mxu0 %v562
      %v612 = vpop.f32.mrb[0].mxu0
      %v613 = vadd.f32 %v492, %v612
      %v614 = vpop.f32.mrb[0].mxu0
      %v615 = vpop.f32.mrb[0].mxu0
      %v616 = vadd.f32 %v495, %v615
      %v617 = vpop.f32.mrb[0].mxu0
      %618 = vmatprep.mubr.bf16.mxu0 0
      %619 = vmatmul.mubr.bf16.gmra.mrb[0].mxu0 %v565
      %v620 = vpop.f32.mrb[0].mxu0
      %v621 = vadd.f32 %v500, %v620
      %v622 = vpop.f32.mrb[0].mxu0
      %v623 = vpop.f32.mrb[0].mxu0
      %v624 = vadd.f32 %v503, %v623
      %v625 = vpop.f32.mrb[0].mxu0
      %626 = vmatprep.mubr.bf16.mxu0 0
      %627 = vmatmul.mubr.bf16.gmra.mrb[0].mxu0 %v568
      %v628 = vpop.f32.mrb[0].mxu0
      %v629 = vadd.f32 %v508, %v628
      %v630 = vpop.f32.mrb[0].mxu0
      %v631 = vpop.f32.mrb[0].mxu0
      %v632 = vadd.f32 %v511, %v631
      %v633 = vpop.f32.mrb[0].mxu0
      %634 = vdwg.mxu0
      %v635 = vld [vmem:[%s246] sm:$0xe]
      %v636 = vld [vmem:[%s246 + $0x8] sm:$0xe]
      %v637 = vld [vmem:[%s246 + $0x10] sm:$0xe]
      %v638 = vld [vmem:[%s246 + $0x18] sm:$0xe]
      %v639 = vld [vmem:[%s246 + $0x20] sm:$0xe]
      %v640 = vld [vmem:[%s246 + $0x28] sm:$0xe]
      %v641 = vld [vmem:[%s246 + $0x30] sm:$0xe]
      %v642 = vld [vmem:[%s246 + $0x38] sm:$0xe]
      %vm659 = vcmask 1042432
      %vm660 = vcmask 1046532
      %vm661 = vmor %vm659, %vm660
      %v662 = vrot.slane %v635, 5
      %v663 = vrot.slane %v662, 4
      %v664 = vrot.slane %v269, 5
      %v665 = vsel %vm661, %v663, %v664
      %v666 = vrot.slane %v636, 5
      %v667 = vrot.slane %v666, 4
      %v668 = vrot.slane %v270, 5
      %v669 = vsel %vm661, %v667, %v668
      %v670 = vrot.slane %v637, 5
      %v671 = vrot.slane %v670, 4
      %v672 = vrot.slane %v271, 5
      %v673 = vsel %vm661, %v671, %v672
      %v674 = vrot.slane %v638, 5
      %v675 = vrot.slane %v674, 4
      %v676 = vrot.slane %v272, 5
      %v677 = vsel %vm661, %v675, %v676
      %v678 = vrot.slane %v639, 5
      %v679 = vrot.slane %v678, 4
      %v680 = vrot.slane %v273, 5
      %v681 = vsel %vm661, %v679, %v680
      %v682 = vrot.slane %v640, 5
      %v683 = vrot.slane %v682, 4
      %v684 = vrot.slane %v274, 5
      %v685 = vsel %vm661, %v683, %v684
      %v686 = vrot.slane %v641, 5
      %v687 = vrot.slane %v686, 4
      %v688 = vrot.slane %v275, 5
      %v689 = vsel %vm661, %v687, %v688
      %v690 = vrot.slane %v642, 5
      %v691 = vrot.slane %v690, 4
      %v692 = vrot.slane %v276, 5
      %v693 = vsel %vm661, %v691, %v692
      %v694 = vld [vmem:[%s1 + $0x40] sm:$0xf]
      %v695 = vld [vmem:[%s1 + $0x44] sm:$0xf]
      %v696 = vld [vmem:[%s1 + $0x48] sm:$0xf]
      %v697 = vld [vmem:[%s1 + $0x4c] sm:$0xf]
      %v698 = vld [vmem:[%s1 + $0x50] sm:$0xf]
      %v699 = vld [vmem:[%s1 + $0x54] sm:$0xf]
      %v700 = vld [vmem:[%s1 + $0x58] sm:$0xf]
      %v701 = vld [vmem:[%s1 + $0x5c] sm:$0xf]
      %v702 = vunpack.c.l.b16 %v665
      %v703 = vunpack.c.l.b16 %v669
      %v704 = vunpack.c.l.b16 %v673
      %v705 = vunpack.c.l.b16 %v677
      %v706 = vunpack.c.l.b16 %v681
      %v707 = vunpack.c.l.b16 %v685
      %v708 = vunpack.c.l.b16 %v689
      %v709 = vunpack.c.l.b16 %v693
      %v710 = vpack.c.b16 %v703, %v702
      %v711 = vpack.c.b16 %v705, %v704
      %v712 = vpack.c.b16 %v707, %v706
      %v713 = vpack.c.b16 %v709, %v708
      %v722 = vunpack.c.l.b16 %v694
      %v723 = vunpack.c.l.b16 %v695
      %v724 = vunpack.c.l.b16 %v696
      %v725 = vunpack.c.l.b16 %v697
      %v726 = vunpack.c.l.b16 %v698
      %v727 = vunpack.c.l.b16 %v699
      %v728 = vunpack.c.l.b16 %v700
      %v729 = vunpack.c.l.b16 %v701
      %v730 = vpack.c.b16 %v723, %v722
      %v731 = vpack.c.b16 %v725, %v724
      %v732 = vpack.c.b16 %v727, %v726
      %v733 = vpack.c.b16 %v729, %v728
      %v739 = vsel %vm436, %v710, 0
      %v742 = vsel %vm436, %v711, 0
      %v745 = vsel %vm436, %v712, 0
      %v748 = vsel %vm436, %v713, 0
      %750 = vmatprep.subr.bf16.mxu0 0
      %751 = vmatpush1.bf16.msra.mxu0 %v730
      %752 = vmatprep.subr.bf16.mxu0 0
      %753 = vmatpush1.bf16.msra.mxu0 %v731
      %754 = vmatprep.subr.bf16.mxu0 0
      %755 = vmatpush1.bf16.msra.mxu0 %v732
      %756 = vmatprep.subr.bf16.mxu0 0
      %757 = vmatpush1.bf16.msra.mxu0 %v733
      %758 = vmatprep.subr.bf16.mxu0 0
      %759 = vmatpush1.bf16.msra.mxu0 0
      %760 = vmatprep.subr.bf16.mxu0 0
      %761 = vmatpush1.bf16.msra.mxu0 0
      %762 = vmatprep.subr.bf16.mxu0 0
      %763 = vmatpush1.bf16.msra.mxu0 0
      %764 = vmatprep.subr.bf16.mxu0 0
      %765 = vmatpush1.bf16.msra.mxu0 0
      %766 = vmatprep.subr.bf16.mxu0 0
      %767 = vmatpush1.bf16.msra.mxu0 0
      %768 = vmatprep.subr.bf16.mxu0 0
      %769 = vmatpush1.bf16.msra.mxu0 0
      %770 = vmatprep.subr.bf16.mxu0 0
      %771 = vmatpush1.bf16.msra.mxu0 0
      %772 = vmatprep.subr.bf16.mxu0 0
      %773 = vmatpush1.bf16.msra.mxu0 0
      %774 = vmatprep.subr.bf16.mxu0 0
      %775 = vmatpush1.bf16.msra.mxu0 0
      %776 = vmatprep.subr.bf16.mxu0 0
      %777 = vmatpush1.bf16.msra.mxu0 0
      %778 = vmatprep.subr.bf16.mxu0 0
      %779 = vmatpush1.bf16.msra.mxu0 0
      %780 = vmatprep.subr.bf16.mxu0 0
      %781 = vmatpush1.bf16.msra.mxu0 0
      %782 = vmatprep.mubr.bf16.mxu0 0
      %783 = vmatmul.mubr.bf16.gmra.mrb[0].mxu0 %v739
      %v784 = vpop.f32.mrb[0].mxu0
      %v785 = vadd.f32 0.0, %v784
      %v786 = vpop.f32.mrb[0].mxu0
      %v787 = vpop.f32.mrb[0].mxu0
      %v788 = vadd.f32 0.0, %v787
      %v789 = vpop.f32.mrb[0].mxu0
      %790 = vmatprep.mubr.bf16.mxu0 0
      %791 = vmatmul.mubr.bf16.gmra.mrb[0].mxu0 %v742
      %v792 = vpop.f32.mrb[0].mxu0
      %v793 = vadd.f32 0.0, %v792
      %v794 = vpop.f32.mrb[0].mxu0
      %v795 = vpop.f32.mrb[0].mxu0
      %v796 = vadd.f32 0.0, %v795
      %v797 = vpop.f32.mrb[0].mxu0
      %798 = vmatprep.mubr.bf16.mxu0 0
      %799 = vmatmul.mubr.bf16.gmra.mrb[0].mxu0 %v745
      %v800 = vpop.f32.mrb[0].mxu0
      %v801 = vadd.f32 0.0, %v800
      %v802 = vpop.f32.mrb[0].mxu0
      %v803 = vpop.f32.mrb[0].mxu0
      %v804 = vadd.f32 0.0, %v803
      %v805 = vpop.f32.mrb[0].mxu0
      %806 = vmatprep.mubr.bf16.mxu0 0
      %807 = vmatmul.mubr.bf16.gmra.mrb[0].mxu0 %v748
      %v808 = vpop.f32.mrb[0].mxu0
      %v809 = vadd.f32 0.0, %v808
      %v810 = vpop.f32.mrb[0].mxu0
      %v811 = vpop.f32.mrb[0].mxu0
      %v812 = vadd.f32 0.0, %v811
      %v813 = vpop.f32.mrb[0].mxu0
      %814 = vdwg.mxu0
      %v815 = vadd.f32 %v605, %v785
      %v816 = vadd.f32 %v608, %v788
      %v817 = vadd.f32 %v613, %v793
      %v818 = vadd.f32 %v616, %v796
      %v819 = vadd.f32 %v621, %v801
      %v820 = vadd.f32 %v624, %v804
      %v821 = vadd.f32 %v629, %v809
      %v822 = vadd.f32 %v632, %v812
      %s823 = scalar_lea.vmem %s246, 8
      %v824 = vld [vmem:[%s823] sm:$0xf]
      %v825 = vld [vmem:[%s823 + $0x8] sm:$0xf]
      %v826 = vld [vmem:[%s823 + $0x10] sm:$0xf]
      %v827 = vld [vmem:[%s823 + $0x18] sm:$0xf]
      %v828 = vld [vmem:[%s823 + $0x20] sm:$0xf]
      %v829 = vld [vmem:[%s823 + $0x28] sm:$0xf]
      %v830 = vld [vmem:[%s823 + $0x30] sm:$0xf]
      %v831 = vld [vmem:[%s823 + $0x38] sm:$0xf]
      %v832 = vld [vmem:[%s1 + $0x60] sm:$0xf]
      %v833 = vld [vmem:[%s1 + $0x64] sm:$0xf]
      %v834 = vld [vmem:[%s1 + $0x68] sm:$0xf]
      %v835 = vld [vmem:[%s1 + $0x6c] sm:$0xf]
      %v836 = vld [vmem:[%s1 + $0x70] sm:$0xf]
      %v837 = vld [vmem:[%s1 + $0x74] sm:$0xf]
      %v838 = vld [vmem:[%s1 + $0x78] sm:$0xf]
      %v839 = vld [vmem:[%s1 + $0x7c] sm:$0xf]
      %v848 = vunpack.c.l.b16 %v824
      %v849 = vunpack.c.l.b16 %v825
      %v850 = vunpack.c.l.b16 %v826
      %v851 = vunpack.c.l.b16 %v827
      %v852 = vunpack.c.l.b16 %v828
      %v853 = vunpack.c.l.b16 %v829
      %v854 = vunpack.c.l.b16 %v830
      %v855 = vunpack.c.l.b16 %v831
      %v856 = vpack.c.b16 %v849, %v848
      %v857 = vpack.c.b16 %v851, %v850
      %v858 = vpack.c.b16 %v853, %v852
      %v859 = vpack.c.b16 %v855, %v854
      %v868 = vunpack.c.l.b16 %v832
      %v869 = vunpack.c.l.b16 %v833
      %v870 = vunpack.c.l.b16 %v834
      %v871 = vunpack.c.l.b16 %v835
      %v872 = vunpack.c.l.b16 %v836
      %v873 = vunpack.c.l.b16 %v837
      %v874 = vunpack.c.l.b16 %v838
      %v875 = vunpack.c.l.b16 %v839
      %v876 = vpack.c.b16 %v869, %v868
      %v877 = vpack.c.b16 %v871, %v870
      %v878 = vpack.c.b16 %v873, %v872
      %v879 = vpack.c.b16 %v875, %v874
      %v885 = vsel %vm436, %v856, 0
      %v888 = vsel %vm436, %v857, 0
      %v891 = vsel %vm436, %v858, 0
      %v894 = vsel %vm436, %v859, 0
      %896 = vmatprep.subr.bf16.mxu0 0
      %897 = vmatpush1.bf16.msra.mxu0 %v876
      %898 = vmatprep.subr.bf16.mxu0 0
      %899 = vmatpush1.bf16.msra.mxu0 %v877
      %900 = vmatprep.subr.bf16.mxu0 0
      %901 = vmatpush1.bf16.msra.mxu0 %v878
      %902 = vmatprep.subr.bf16.mxu0 0
      %903 = vmatpush1.bf16.msra.mxu0 %v879
      %904 = vmatprep.subr.bf16.mxu0 0
      %905 = vmatpush1.bf16.msra.mxu0 0
      %906 = vmatprep.subr.bf16.mxu0 0
      %907 = vmatpush1.bf16.msra.mxu0 0
      %908 = vmatprep.subr.bf16.mxu0 0
      %909 = vmatpush1.bf16.msra.mxu0 0
      %910 = vmatprep.subr.bf16.mxu0 0
      %911 = vmatpush1.bf16.msra.mxu0 0
      %912 = vmatprep.subr.bf16.mxu0 0
      %913 = vmatpush1.bf16.msra.mxu0 0
      %914 = vmatprep.subr.bf16.mxu0 0
      %915 = vmatpush1.bf16.msra.mxu0 0
      %916 = vmatprep.subr.bf16.mxu0 0
      %917 = vmatpush1.bf16.msra.mxu0 0
      %918 = vmatprep.subr.bf16.mxu0 0
      %919 = vmatpush1.bf16.msra.mxu0 0
      %920 = vmatprep.subr.bf16.mxu0 0
      %921 = vmatpush1.bf16.msra.mxu0 0
      %922 = vmatprep.subr.bf16.mxu0 0
      %923 = vmatpush1.bf16.msra.mxu0 0
      %924 = vmatprep.subr.bf16.mxu0 0
      %925 = vmatpush1.bf16.msra.mxu0 0
      %926 = vmatprep.subr.bf16.mxu0 0
      %927 = vmatpush1.bf16.msra.mxu0 0
      %928 = vmatprep.mubr.bf16.mxu0 0
      %929 = vmatmul.mubr.bf16.gmra.mrb[0].mxu0 %v885
      %v930 = vpop.f32.mrb[0].mxu0
      %v931 = vadd.f32 0.0, %v930
      %v932 = vpop.f32.mrb[0].mxu0
      %v933 = vpop.f32.mrb[0].mxu0
      %v934 = vadd.f32 0.0, %v933
      %v935 = vpop.f32.mrb[0].mxu0
      %936 = vmatprep.mubr.bf16.mxu0 0
      %937 = vmatmul.mubr.bf16.gmra.mrb[0].mxu0 %v888
      %v938 = vpop.f32.mrb[0].mxu0
      %v939 = vadd.f32 0.0, %v938
      %v940 = vpop.f32.mrb[0].mxu0
      %v941 = vpop.f32.mrb[0].mxu0
      %v942 = vadd.f32 0.0, %v941
      %v943 = vpop.f32.mrb[0].mxu0
      %944 = vmatprep.mubr.bf16.mxu0 0
      %945 = vmatmul.mubr.bf16.gmra.mrb[0].mxu0 %v891
      %v946 = vpop.f32.mrb[0].mxu0
      %v947 = vadd.f32 0.0, %v946
      %v948 = vpop.f32.mrb[0].mxu0
      %v949 = vpop.f32.mrb[0].mxu0
      %v950 = vadd.f32 0.0, %v949
      %v951 = vpop.f32.mrb[0].mxu0
      %952 = vmatprep.mubr.bf16.mxu0 0
      %953 = vmatmul.mubr.bf16.gmra.mrb[0].mxu0 %v894
      %v954 = vpop.f32.mrb[0].mxu0
      %v955 = vadd.f32 0.0, %v954
      %v956 = vpop.f32.mrb[0].mxu0
      %v957 = vpop.f32.mrb[0].mxu0
      %v958 = vadd.f32 0.0, %v957
      %v959 = vpop.f32.mrb[0].mxu0
      %960 = vdwg.mxu0
      %v961 = vadd.f32 %v815, %v931
      %v962 = vadd.f32 %v816, %v934
      %v963 = vadd.f32 %v817, %v939
      %v964 = vadd.f32 %v818, %v942
      %v965 = vadd.f32 %v819, %v947
      %v966 = vadd.f32 %v820, %v950
      %v967 = vadd.f32 %v821, %v955
      %v968 = vadd.f32 %v822, %v958
      %v969 = vld [vmem:[%s823] sm:$0xf]
      %v970 = vld [vmem:[%s823 + $0x4] sm:$0x1]
      %v971 = vld [vmem:[%s823 + $0x8] sm:$0xf]
      %v972 = vld [vmem:[%s823 + $0xc] sm:$0x1]
      %v973 = vld [vmem:[%s823 + $0x10] sm:$0xf]
      %v974 = vld [vmem:[%s823 + $0x14] sm:$0x1]
      %v975 = vld [vmem:[%s823 + $0x18] sm:$0xf]
      %v976 = vld [vmem:[%s823 + $0x1c] sm:$0x1]
      %v977 = vld [vmem:[%s823 + $0x20] sm:$0xf]
      %v978 = vld [vmem:[%s823 + $0x24] sm:$0x1]
      %v979 = vld [vmem:[%s823 + $0x28] sm:$0xf]
      %v980 = vld [vmem:[%s823 + $0x2c] sm:$0x1]
      %v981 = vld [vmem:[%s823 + $0x30] sm:$0xf]
      %v982 = vld [vmem:[%s823 + $0x34] sm:$0x1]
      %v983 = vld [vmem:[%s823 + $0x38] sm:$0xf]
      %v984 = vld [vmem:[%s823 + $0x3c] sm:$0x1]
      %v986 = vshrl.u32 %v969, 16
      %v988 = vrot.slane %v986, 4
      %v989 = vshll.u32 %v969, 16
      %v991 = vrot.slane %v989, 5
      %v992 = vor.u32 %v988, %v991
      %v993 = vrot.slane %v992, 4
      %v995 = vshll.u32 %v970, 16
      %v997 = vrot.slane %v995, 5
      %v998 = vsel %vm279, %v993, %v997
      %v1000 = vshrl.u32 %v971, 16
      %v1002 = vrot.slane %v1000, 4
      %v1003 = vshll.u32 %v971, 16
      %v1005 = vrot.slane %v1003, 5
      %v1006 = vor.u32 %v1002, %v1005
      %v1007 = vrot.slane %v1006, 4
      %v1009 = vshll.u32 %v972, 16
      %v1011 = vrot.slane %v1009, 5
      %v1012 = vsel %vm279, %v1007, %v1011
      %v1014 = vshrl.u32 %v973, 16
      %v1016 = vrot.slane %v1014, 4
      %v1017 = vshll.u32 %v973, 16
      %v1019 = vrot.slane %v1017, 5
      %v1020 = vor.u32 %v1016, %v1019
      %v1021 = vrot.slane %v1020, 4
      %v1023 = vshll.u32 %v974, 16
      %v1025 = vrot.slane %v1023, 5
      %v1026 = vsel %vm279, %v1021, %v1025
      %v1028 = vshrl.u32 %v975, 16
      %v1030 = vrot.slane %v1028, 4
      %v1031 = vshll.u32 %v975, 16
      %v1033 = vrot.slane %v1031, 5
      %v1034 = vor.u32 %v1030, %v1033
      %v1035 = vrot.slane %v1034, 4
      %v1037 = vshll.u32 %v976, 16
      %v1039 = vrot.slane %v1037, 5
      %v1040 = vsel %vm279, %v1035, %v1039
      %v1042 = vshrl.u32 %v977, 16
      %v1044 = vrot.slane %v1042, 4
      %v1045 = vshll.u32 %v977, 16
      %v1047 = vrot.slane %v1045, 5
      %v1048 = vor.u32 %v1044, %v1047
      %v1049 = vrot.slane %v1048, 4
      %v1051 = vshll.u32 %v978, 16
      %v1053 = vrot.slane %v1051, 5
      %v1054 = vsel %vm279, %v1049, %v1053
      %v1056 = vshrl.u32 %v979, 16
      %v1058 = vrot.slane %v1056, 4
      %v1059 = vshll.u32 %v979, 16
      %v1061 = vrot.slane %v1059, 5
      %v1062 = vor.u32 %v1058, %v1061
      %v1063 = vrot.slane %v1062, 4
      %v1065 = vshll.u32 %v980, 16
      %v1067 = vrot.slane %v1065, 5
      %v1068 = vsel %vm279, %v1063, %v1067
      %v1070 = vshrl.u32 %v981, 16
      %v1072 = vrot.slane %v1070, 4
      %v1073 = vshll.u32 %v981, 16
      %v1075 = vrot.slane %v1073, 5
      %v1076 = vor.u32 %v1072, %v1075
      %v1077 = vrot.slane %v1076, 4
      %v1079 = vshll.u32 %v982, 16
      %v1081 = vrot.slane %v1079, 5
      %v1082 = vsel %vm279, %v1077, %v1081
      %v1084 = vshrl.u32 %v983, 16
      %v1086 = vrot.slane %v1084, 4
      %v1087 = vshll.u32 %v983, 16
      %v1089 = vrot.slane %v1087, 5
      %v1090 = vor.u32 %v1086, %v1089
      %v1091 = vrot.slane %v1090, 4
      %v1093 = vshll.u32 %v984, 16
      %v1095 = vrot.slane %v1093, 5
      %v1096 = vsel %vm279, %v1091, %v1095
      %v1097 = vld [vmem:[%s1 + $0x80] sm:$0xf]
      %v1098 = vld [vmem:[%s1 + $0x84] sm:$0xf]
      %v1099 = vld [vmem:[%s1 + $0x88] sm:$0xf]
      %v1100 = vld [vmem:[%s1 + $0x8c] sm:$0xf]
      %v1101 = vld [vmem:[%s1 + $0x90] sm:$0xf]
      %v1102 = vld [vmem:[%s1 + $0x94] sm:$0xf]
      %v1103 = vld [vmem:[%s1 + $0x98] sm:$0xf]
      %v1104 = vld [vmem:[%s1 + $0x9c] sm:$0xf]
      %v1105 = vunpack.c.l.b16 %v998
      %v1106 = vunpack.c.l.b16 %v1012
      %v1107 = vunpack.c.l.b16 %v1026
      %v1108 = vunpack.c.l.b16 %v1040
      %v1109 = vunpack.c.l.b16 %v1054
      %v1110 = vunpack.c.l.b16 %v1068
      %v1111 = vunpack.c.l.b16 %v1082
      %v1112 = vunpack.c.l.b16 %v1096
      %v1113 = vpack.c.b16 %v1106, %v1105
      %v1114 = vpack.c.b16 %v1108, %v1107
      %v1115 = vpack.c.b16 %v1110, %v1109
      %v1116 = vpack.c.b16 %v1112, %v1111
      %v1125 = vunpack.c.l.b16 %v1097
      %v1126 = vunpack.c.l.b16 %v1098
      %v1127 = vunpack.c.l.b16 %v1099
      %v1128 = vunpack.c.l.b16 %v1100
      %v1129 = vunpack.c.l.b16 %v1101
      %v1130 = vunpack.c.l.b16 %v1102
      %v1131 = vunpack.c.l.b16 %v1103
      %v1132 = vunpack.c.l.b16 %v1104
      %v1133 = vpack.c.b16 %v1126, %v1125
      %v1134 = vpack.c.b16 %v1128, %v1127
      %v1135 = vpack.c.b16 %v1130, %v1129
      %v1136 = vpack.c.b16 %v1132, %v1131
      %v1142 = vsel %vm436, %v1113, 0
      %v1145 = vsel %vm436, %v1114, 0
      %v1148 = vsel %vm436, %v1115, 0
      %v1151 = vsel %vm436, %v1116, 0
      %1153 = vmatprep.subr.bf16.mxu0 0
      %1154 = vmatpush1.bf16.msra.mxu0 %v1133
      %1155 = vmatprep.subr.bf16.mxu0 0
      %1156 = vmatpush1.bf16.msra.mxu0 %v1134
      %1157 = vmatprep.subr.bf16.mxu0 0
      %1158 = vmatpush1.bf16.msra.mxu0 %v1135
      %1159 = vmatprep.subr.bf16.mxu0 0
      %1160 = vmatpush1.bf16.msra.mxu0 %v1136
      %1161 = vmatprep.subr.bf16.mxu0 0
      %1162 = vmatpush1.bf16.msra.mxu0 0
      %1163 = vmatprep.subr.bf16.mxu0 0
      %1164 = vmatpush1.bf16.msra.mxu0 0
      %1165 = vmatprep.subr.bf16.mxu0 0
      %1166 = vmatpush1.bf16.msra.mxu0 0
      %1167 = vmatprep.subr.bf16.mxu0 0
      %1168 = vmatpush1.bf16.msra.mxu0 0
      %1169 = vmatprep.subr.bf16.mxu0 0
      %1170 = vmatpush1.bf16.msra.mxu0 0
      %1171 = vmatprep.subr.bf16.mxu0 0
      %1172 = vmatpush1.bf16.msra.mxu0 0
      %1173 = vmatprep.subr.bf16.mxu0 0
      %1174 = vmatpush1.bf16.msra.mxu0 0
      %1175 = vmatprep.subr.bf16.mxu0 0
      %1176 = vmatpush1.bf16.msra.mxu0 0
      %1177 = vmatprep.subr.bf16.mxu0 0
      %1178 = vmatpush1.bf16.msra.mxu0 0
      %1179 = vmatprep.subr.bf16.mxu0 0
      %1180 = vmatpush1.bf16.msra.mxu0 0
      %1181 = vmatprep.subr.bf16.mxu0 0
      %1182 = vmatpush1.bf16.msra.mxu0 0
      %1183 = vmatprep.subr.bf16.mxu0 0
      %1184 = vmatpush1.bf16.msra.mxu0 0
      %1185 = vmatprep.mubr.bf16.mxu0 0
      %1186 = vmatmul.mubr.bf16.gmra.mrb[0].mxu0 %v1142
      %v1187 = vpop.f32.mrb[0].mxu0
      %v1188 = vadd.f32 0.0, %v1187
      %v1189 = vpop.f32.mrb[0].mxu0
      %v1190 = vpop.f32.mrb[0].mxu0
      %v1191 = vadd.f32 0.0, %v1190
      %v1192 = vpop.f32.mrb[0].mxu0
      %1193 = vmatprep.mubr.bf16.mxu0 0
      %1194 = vmatmul.mubr.bf16.gmra.mrb[0].mxu0 %v1145
      %v1195 = vpop.f32.mrb[0].mxu0
      %v1196 = vadd.f32 0.0, %v1195
      %v1197 = vpop.f32.mrb[0].mxu0
      %v1198 = vpop.f32.mrb[0].mxu0
      %v1199 = vadd.f32 0.0, %v1198
      %v1200 = vpop.f32.mrb[0].mxu0
      %1201 = vmatprep.mubr.bf16.mxu0 0
      %1202 = vmatmul.mubr.bf16.gmra.mrb[0].mxu0 %v1148
      %v1203 = vpop.f32.mrb[0].mxu0
      %v1204 = vadd.f32 0.0, %v1203
      %v1205 = vpop.f32.mrb[0].mxu0
      %v1206 = vpop.f32.mrb[0].mxu0
      %v1207 = vadd.f32 0.0, %v1206
      %v1208 = vpop.f32.mrb[0].mxu0
      %1209 = vmatprep.mubr.bf16.mxu0 0
      %1210 = vmatmul.mubr.bf16.gmra.mrb[0].mxu0 %v1151
      %v1211 = vpop.f32.mrb[0].mxu0
      %v1212 = vadd.f32 0.0, %v1211
      %v1213 = vpop.f32.mrb[0].mxu0
      %v1214 = vpop.f32.mrb[0].mxu0
      %v1215 = vadd.f32 0.0, %v1214
      %v1216 = vpop.f32.mrb[0].mxu0
      %1217 = vdwg.mxu0
      %v1218 = vadd.f32 %v961, %v1188
      %v1219 = vadd.f32 %v962, %v1191
      %v1220 = vadd.f32 %v963, %v1196
      %v1221 = vadd.f32 %v964, %v1199
      %v1222 = vadd.f32 %v965, %v1204
      %v1223 = vadd.f32 %v966, %v1207
      %v1224 = vadd.f32 %v967, %v1212
      %v1225 = vadd.f32 %v968, %v1215
      %v1226 = vld [vmem:[%s823] sm:$0xe]
      %v1227 = vld [vmem:[%s823 + $0x8] sm:$0xe]
      %v1228 = vld [vmem:[%s823 + $0x10] sm:$0xe]
      %v1229 = vld [vmem:[%s823 + $0x18] sm:$0xe]
      %v1230 = vld [vmem:[%s823 + $0x20] sm:$0xe]
      %v1231 = vld [vmem:[%s823 + $0x28] sm:$0xe]
      %v1232 = vld [vmem:[%s823 + $0x30] sm:$0xe]
      %v1233 = vld [vmem:[%s823 + $0x38] sm:$0xe]
      %v1250 = vrot.slane %v1226, 5
      %v1251 = vrot.slane %v1250, 4
      %v1252 = vrot.slane %v970, 5
      %v1253 = vsel %vm661, %v1251, %v1252
      %v1254 = vrot.slane %v1227, 5
      %v1255 = vrot.slane %v1254, 4
      %v1256 = vrot.slane %v972, 5
      %v1257 = vsel %vm661, %v1255, %v1256
      %v1258 = vrot.slane %v1228, 5
      %v1259 = vrot.slane %v1258, 4
      %v1260 = vrot.slane %v974, 5
      %v1261 = vsel %vm661, %v1259, %v1260
      %v1262 = vrot.slane %v1229, 5
      %v1263 = vrot.slane %v1262, 4
      %v1264 = vrot.slane %v976, 5
      %v1265 = vsel %vm661, %v1263, %v1264
      %v1266 = vrot.slane %v1230, 5
      %v1267 = vrot.slane %v1266, 4
      %v1268 = vrot.slane %v978, 5
      %v1269 = vsel %vm661, %v1267, %v1268
      %v1270 = vrot.slane %v1231, 5
      %v1271 = vrot.slane %v1270, 4
      %v1272 = vrot.slane %v980, 5
      %v1273 = vsel %vm661, %v1271, %v1272
      %v1274 = vrot.slane %v1232, 5
      %v1275 = vrot.slane %v1274, 4
      %v1276 = vrot.slane %v982, 5
      %v1277 = vsel %vm661, %v1275, %v1276
      %v1278 = vrot.slane %v1233, 5
      %v1279 = vrot.slane %v1278, 4
      %v1280 = vrot.slane %v984, 5
      %v1281 = vsel %vm661, %v1279, %v1280
      %v1282 = vld [vmem:[%s1 + $0xa0] sm:$0xf]
      %v1283 = vld [vmem:[%s1 + $0xa4] sm:$0xf]
      %v1284 = vld [vmem:[%s1 + $0xa8] sm:$0xf]
      %v1285 = vld [vmem:[%s1 + $0xac] sm:$0xf]
      %v1286 = vld [vmem:[%s1 + $0xb0] sm:$0xf]
      %v1287 = vld [vmem:[%s1 + $0xb4] sm:$0xf]
      %v1288 = vld [vmem:[%s1 + $0xb8] sm:$0xf]
      %v1289 = vld [vmem:[%s1 + $0xbc] sm:$0xf]
      %v1290 = vunpack.c.l.b16 %v1253
      %v1291 = vunpack.c.l.b16 %v1257
      %v1292 = vunpack.c.l.b16 %v1261
      %v1293 = vunpack.c.l.b16 %v1265
      %v1294 = vunpack.c.l.b16 %v1269
      %v1295 = vunpack.c.l.b16 %v1273
      %v1296 = vunpack.c.l.b16 %v1277
      %v1297 = vunpack.c.l.b16 %v1281
      %v1298 = vpack.c.b16 %v1291, %v1290
      %v1299 = vpack.c.b16 %v1293, %v1292
      %v1300 = vpack.c.b16 %v1295, %v1294
      %v1301 = vpack.c.b16 %v1297, %v1296
      %v1310 = vunpack.c.l.b16 %v1282
      %v1311 = vunpack.c.l.b16 %v1283
      %v1312 = vunpack.c.l.b16 %v1284
      %v1313 = vunpack.c.l.b16 %v1285
      %v1314 = vunpack.c.l.b16 %v1286
      %v1315 = vunpack.c.l.b16 %v1287
      %v1316 = vunpack.c.l.b16 %v1288
      %v1317 = vunpack.c.l.b16 %v1289
      %v1318 = vpack.c.b16 %v1311, %v1310
      %v1319 = vpack.c.b16 %v1313, %v1312
      %v1320 = vpack.c.b16 %v1315, %v1314
      %v1321 = vpack.c.b16 %v1317, %v1316
      %v1327 = vsel %vm436, %v1298, 0
      %v1330 = vsel %vm436, %v1299, 0
      %v1333 = vsel %vm436, %v1300, 0
      %v1336 = vsel %vm436, %v1301, 0
      %1338 = vmatprep.subr.bf16.mxu0 0
      %1339 = vmatpush1.bf16.msra.mxu0 %v1318
      %1340 = vmatprep.subr.bf16.mxu0 0
      %1341 = vmatpush1.bf16.msra.mxu0 %v1319
      %1342 = vmatprep.subr.bf16.mxu0 0
      %1343 = vmatpush1.bf16.msra.mxu0 %v1320
      %1344 = vmatprep.subr.bf16.mxu0 0
      %1345 = vmatpush1.bf16.msra.mxu0 %v1321
      %1346 = vmatprep.subr.bf16.mxu0 0
      %1347 = vmatpush1.bf16.msra.mxu0 0
      %1348 = vmatprep.subr.bf16.mxu0 0
      %1349 = vmatpush1.bf16.msra.mxu0 0
      %1350 = vmatprep.subr.bf16.mxu0 0
      %1351 = vmatpush1.bf16.msra.mxu0 0
      %1352 = vmatprep.subr.bf16.mxu0 0
      %1353 = vmatpush1.bf16.msra.mxu0 0
      %1354 = vmatprep.subr.bf16.mxu0 0
      %1355 = vmatpush1.bf16.msra.mxu0 0
      %1356 = vmatprep.subr.bf16.mxu0 0
      %1357 = vmatpush1.bf16.msra.mxu0 0
      %1358 = vmatprep.subr.bf16.mxu0 0
      %1359 = vmatpush1.bf16.msra.mxu0 0
      %1360 = vmatprep.subr.bf16.mxu0 0
      %1361 = vmatpush1.bf16.msra.mxu0 0
      %1362 = vmatprep.subr.bf16.mxu0 0
      %1363 = vmatpush1.bf16.msra.mxu0 0
      %1364 = vmatprep.subr.bf16.mxu0 0
      %1365 = vmatpush1.bf16.msra.mxu0 0
      %1366 = vmatprep.subr.bf16.mxu0 0
      %1367 = vmatpush1.bf16.msra.mxu0 0
      %1368 = vmatprep.subr.bf16.mxu0 0
      %1369 = vmatpush1.bf16.msra.mxu0 0
      %1370 = vmatprep.mubr.bf16.mxu0 0
      %1371 = vmatmul.mubr.bf16.gmra.mrb[0].mxu0 %v1327
      %v1372 = vpop.f32.mrb[0].mxu0
      %v1373 = vadd.f32 0.0, %v1372
      %v1374 = vpop.f32.mrb[0].mxu0
      %v1375 = vpop.f32.mrb[0].mxu0
      %v1376 = vadd.f32 0.0, %v1375
      %v1377 = vpop.f32.mrb[0].mxu0
      %1378 = vmatprep.mubr.bf16.mxu0 0
      %1379 = vmatmul.mubr.bf16.gmra.mrb[0].mxu0 %v1330
      %v1380 = vpop.f32.mrb[0].mxu0
      %v1381 = vadd.f32 0.0, %v1380
      %v1382 = vpop.f32.mrb[0].mxu0
      %v1383 = vpop.f32.mrb[0].mxu0
      %v1384 = vadd.f32 0.0, %v1383
      %v1385 = vpop.f32.mrb[0].mxu0
      %1386 = vmatprep.mubr.bf16.mxu0 0
      %1387 = vmatmul.mubr.bf16.gmra.mrb[0].mxu0 %v1333
      %v1388 = vpop.f32.mrb[0].mxu0
      %v1389 = vadd.f32 0.0, %v1388
      %v1390 = vpop.f32.mrb[0].mxu0
      %v1391 = vpop.f32.mrb[0].mxu0
      %v1392 = vadd.f32 0.0, %v1391
      %v1393 = vpop.f32.mrb[0].mxu0
      %1394 = vmatprep.mubr.bf16.mxu0 0
      %1395 = vmatmul.mubr.bf16.gmra.mrb[0].mxu0 %v1336
      %v1396 = vpop.f32.mrb[0].mxu0
      %v1397 = vadd.f32 0.0, %v1396
      %v1398 = vpop.f32.mrb[0].mxu0
      %v1399 = vpop.f32.mrb[0].mxu0
      %v1400 = vadd.f32 0.0, %v1399
      %v1401 = vpop.f32.mrb[0].mxu0
      %1402 = vdwg.mxu0
      %v1403 = vadd.f32 %v1218, %v1373
      %v1404 = vadd.f32 %v1219, %v1376
      %v1405 = vadd.f32 %v1220, %v1381
      %v1406 = vadd.f32 %v1221, %v1384
      %v1407 = vadd.f32 %v1222, %v1389
      %v1408 = vadd.f32 %v1223, %v1392
      %v1409 = vadd.f32 %v1224, %v1397
      %v1410 = vadd.f32 %v1225, %v1400
      %s1411 = scalar_lea.vmem %s246, 16
      %v1412 = vld [vmem:[%s1411] sm:$0xf]
      %v1413 = vld [vmem:[%s1411 + $0x8] sm:$0xf]
      %v1414 = vld [vmem:[%s1411 + $0x10] sm:$0xf]
      %v1415 = vld [vmem:[%s1411 + $0x18] sm:$0xf]
      %v1416 = vld [vmem:[%s1411 + $0x20] sm:$0xf]
      %v1417 = vld [vmem:[%s1411 + $0x28] sm:$0xf]
      %v1418 = vld [vmem:[%s1411 + $0x30] sm:$0xf]
      %v1419 = vld [vmem:[%s1411 + $0x38] sm:$0xf]
      %v1420 = vld [vmem:[%s1 + $0xc0] sm:$0xf]
      %v1421 = vld [vmem:[%s1 + $0xc4] sm:$0xf]
      %v1422 = vld [vmem:[%s1 + $0xc8] sm:$0xf]
      %v1423 = vld [vmem:[%s1 + $0xcc] sm:$0xf]
      %v1424 = vld [vmem:[%s1 + $0xd0] sm:$0xf]
      %v1425 = vld [vmem:[%s1 + $0xd4] sm:$0xf]
      %v1426 = vld [vmem:[%s1 + $0xd8] sm:$0xf]
      %v1427 = vld [vmem:[%s1 + $0xdc] sm:$0xf]
      %v1436 = vunpack.c.l.b16 %v1412
      %v1437 = vunpack.c.l.b16 %v1413
      %v1438 = vunpack.c.l.b16 %v1414
      %v1439 = vunpack.c.l.b16 %v1415
      %v1440 = vunpack.c.l.b16 %v1416
      %v1441 = vunpack.c.l.b16 %v1417
      %v1442 = vunpack.c.l.b16 %v1418
      %v1443 = vunpack.c.l.b16 %v1419
      %v1444 = vpack.c.b16 %v1437, %v1436
      %v1445 = vpack.c.b16 %v1439, %v1438
      %v1446 = vpack.c.b16 %v1441, %v1440
      %v1447 = vpack.c.b16 %v1443, %v1442
      %v1456 = vunpack.c.l.b16 %v1420
      %v1457 = vunpack.c.l.b16 %v1421
      %v1458 = vunpack.c.l.b16 %v1422
      %v1459 = vunpack.c.l.b16 %v1423
      %v1460 = vunpack.c.l.b16 %v1424
      %v1461 = vunpack.c.l.b16 %v1425
      %v1462 = vunpack.c.l.b16 %v1426
      %v1463 = vunpack.c.l.b16 %v1427
      %v1464 = vpack.c.b16 %v1457, %v1456
      %v1465 = vpack.c.b16 %v1459, %v1458
      %v1466 = vpack.c.b16 %v1461, %v1460
      %v1467 = vpack.c.b16 %v1463, %v1462
      %v1473 = vsel %vm436, %v1444, 0
      %v1476 = vsel %vm436, %v1445, 0
      %v1479 = vsel %vm436, %v1446, 0
      %v1482 = vsel %vm436, %v1447, 0
      %1484 = vmatprep.subr.bf16.mxu0 0
      %1485 = vmatpush1.bf16.msra.mxu0 %v1464
      %1486 = vmatprep.subr.bf16.mxu0 0
      %1487 = vmatpush1.bf16.msra.mxu0 %v1465
      %1488 = vmatprep.subr.bf16.mxu0 0
      %1489 = vmatpush1.bf16.msra.mxu0 %v1466
      %1490 = vmatprep.subr.bf16.mxu0 0
      %1491 = vmatpush1.bf16.msra.mxu0 %v1467
      %1492 = vmatprep.subr.bf16.mxu0 0
      %1493 = vmatpush1.bf16.msra.mxu0 0
      %1494 = vmatprep.subr.bf16.mxu0 0
      %1495 = vmatpush1.bf16.msra.mxu0 0
      %1496 = vmatprep.subr.bf16.mxu0 0
      %1497 = vmatpush1.bf16.msra.mxu0 0
      %1498 = vmatprep.subr.bf16.mxu0 0
      %1499 = vmatpush1.bf16.msra.mxu0 0
      %1500 = vmatprep.subr.bf16.mxu0 0
      %1501 = vmatpush1.bf16.msra.mxu0 0
      %1502 = vmatprep.subr.bf16.mxu0 0
      %1503 = vmatpush1.bf16.msra.mxu0 0
      %1504 = vmatprep.subr.bf16.mxu0 0
      %1505 = vmatpush1.bf16.msra.mxu0 0
      %1506 = vmatprep.subr.bf16.mxu0 0
      %1507 = vmatpush1.bf16.msra.mxu0 0
      %1508 = vmatprep.subr.bf16.mxu0 0
      %1509 = vmatpush1.bf16.msra.mxu0 0
      %1510 = vmatprep.subr.bf16.mxu0 0
      %1511 = vmatpush1.bf16.msra.mxu0 0
      %1512 = vmatprep.subr.bf16.mxu0 0
      %1513 = vmatpush1.bf16.msra.mxu0 0
      %1514 = vmatprep.subr.bf16.mxu0 0
      %1515 = vmatpush1.bf16.msra.mxu0 0
      %1516 = vmatprep.mubr.bf16.mxu0 0
      %1517 = vmatmul.mubr.bf16.gmra.mrb[0].mxu0 %v1473
      %v1518 = vpop.f32.mrb[0].mxu0
      %v1519 = vadd.f32 0.0, %v1518
      %v1520 = vpop.f32.mrb[0].mxu0
      %v1521 = vpop.f32.mrb[0].mxu0
      %v1522 = vadd.f32 0.0, %v1521
      %v1523 = vpop.f32.mrb[0].mxu0
      %1524 = vmatprep.mubr.bf16.mxu0 0
      %1525 = vmatmul.mubr.bf16.gmra.mrb[0].mxu0 %v1476
      %v1526 = vpop.f32.mrb[0].mxu0
      %v1527 = vadd.f32 0.0, %v1526
      %v1528 = vpop.f32.mrb[0].mxu0
      %v1529 = vpop.f32.mrb[0].mxu0
      %v1530 = vadd.f32 0.0, %v1529
      %v1531 = vpop.f32.mrb[0].mxu0
      %1532 = vmatprep.mubr.bf16.mxu0 0
      %1533 = vmatmul.mubr.bf16.gmra.mrb[0].mxu0 %v1479
      %v1534 = vpop.f32.mrb[0].mxu0
      %v1535 = vadd.f32 0.0, %v1534
      %v1536 = vpop.f32.mrb[0].mxu0
      %v1537 = vpop.f32.mrb[0].mxu0
      %v1538 = vadd.f32 0.0, %v1537
      %v1539 = vpop.f32.mrb[0].mxu0
      %1540 = vmatprep.mubr.bf16.mxu0 0
      %1541 = vmatmul.mubr.bf16.gmra.mrb[0].mxu0 %v1482
      %v1542 = vpop.f32.mrb[0].mxu0
      %v1543 = vadd.f32 0.0, %v1542
      %v1544 = vpop.f32.mrb[0].mxu0
      %v1545 = vpop.f32.mrb[0].mxu0
      %v1546 = vadd.f32 0.0, %v1545
      %v1547 = vpop.f32.mrb[0].mxu0
      %1548 = vdwg.mxu0
      %v1549 = vadd.f32 %v1403, %v1519
      %v1550 = vadd.f32 %v1404, %v1522
      %v1551 = vadd.f32 %v1405, %v1527
      %v1552 = vadd.f32 %v1406, %v1530
      %v1553 = vadd.f32 %v1407, %v1535
      %v1554 = vadd.f32 %v1408, %v1538
      %v1555 = vadd.f32 %v1409, %v1543
      %v1556 = vadd.f32 %v1410, %v1546
      %v1557 = vld [vmem:[%s1411] sm:$0xf]
      %v1558 = vld [vmem:[%s1411 + $0x4] sm:$0x1]
      %v1559 = vld [vmem:[%s1411 + $0x8] sm:$0xf]
      %v1560 = vld [vmem:[%s1411 + $0xc] sm:$0x1]
      %v1561 = vld [vmem:[%s1411 + $0x10] sm:$0xf]
      %v1562 = vld [vmem:[%s1411 + $0x14] sm:$0x1]
      %v1563 = vld [vmem:[%s1411 + $0x18] sm:$0xf]
      %v1564 = vld [vmem:[%s1411 + $0x1c] sm:$0x1]
      %v1565 = vld [vmem:[%s1411 + $0x20] sm:$0xf]
      %v1566 = vld [vmem:[%s1411 + $0x24] sm:$0x1]
      %v1567 = vld [vmem:[%s1411 + $0x28] sm:$0xf]
      %v1568 = vld [vmem:[%s1411 + $0x2c] sm:$0x1]
      %v1569 = vld [vmem:[%s1411 + $0x30] sm:$0xf]
      %v1570 = vld [vmem:[%s1411 + $0x34] sm:$0x1]
      %v1571 = vld [vmem:[%s1411 + $0x38] sm:$0xf]
      %v1572 = vld [vmem:[%s1411 + $0x3c] sm:$0x1]
      %v1574 = vshrl.u32 %v1557, 16
      %v1576 = vrot.slane %v1574, 4
      %v1577 = vshll.u32 %v1557, 16
      %v1579 = vrot.slane %v1577, 5
      %v1580 = vor.u32 %v1576, %v1579
      %v1581 = vrot.slane %v1580, 4
      %v1583 = vshll.u32 %v1558, 16
      %v1585 = vrot.slane %v1583, 5
      %v1586 = vsel %vm279, %v1581, %v1585
      %v1588 = vshrl.u32 %v1559, 16
      %v1590 = vrot.slane %v1588, 4
      %v1591 = vshll.u32 %v1559, 16
      %v1593 = vrot.slane %v1591, 5
      %v1594 = vor.u32 %v1590, %v1593
      %v1595 = vrot.slane %v1594, 4
      %v1597 = vshll.u32 %v1560, 16
      %v1599 = vrot.slane %v1597, 5
      %v1600 = vsel %vm279, %v1595, %v1599
      %v1602 = vshrl.u32 %v1561, 16
      %v1604 = vrot.slane %v1602, 4
      %v1605 = vshll.u32 %v1561, 16
      %v1607 = vrot.slane %v1605, 5
      %v1608 = vor.u32 %v1604, %v1607
      %v1609 = vrot.slane %v1608, 4
      %v1611 = vshll.u32 %v1562, 16
      %v1613 = vrot.slane %v1611, 5
      %v1614 = vsel %vm279, %v1609, %v1613
      %v1616 = vshrl.u32 %v1563, 16
      %v1618 = vrot.slane %v1616, 4
      %v1619 = vshll.u32 %v1563, 16
      %v1621 = vrot.slane %v1619, 5
      %v1622 = vor.u32 %v1618, %v1621
      %v1623 = vrot.slane %v1622, 4
      %v1625 = vshll.u32 %v1564, 16
      %v1627 = vrot.slane %v1625, 5
      %v1628 = vsel %vm279, %v1623, %v1627
      %v1630 = vshrl.u32 %v1565, 16
      %v1632 = vrot.slane %v1630, 4
      %v1633 = vshll.u32 %v1565, 16
      %v1635 = vrot.slane %v1633, 5
      %v1636 = vor.u32 %v1632, %v1635
      %v1637 = vrot.slane %v1636, 4
      %v1639 = vshll.u32 %v1566, 16
      %v1641 = vrot.slane %v1639, 5
      %v1642 = vsel %vm279, %v1637, %v1641
      %v1644 = vshrl.u32 %v1567, 16
      %v1646 = vrot.slane %v1644, 4
      %v1647 = vshll.u32 %v1567, 16
      %v1649 = vrot.slane %v1647, 5
      %v1650 = vor.u32 %v1646, %v1649
      %v1651 = vrot.slane %v1650, 4
      %v1653 = vshll.u32 %v1568, 16
      %v1655 = vrot.slane %v1653, 5
      %v1656 = vsel %vm279, %v1651, %v1655
      %v1658 = vshrl.u32 %v1569, 16
      %v1660 = vrot.slane %v1658, 4
      %v1661 = vshll.u32 %v1569, 16
      %v1663 = vrot.slane %v1661, 5
      %v1664 = vor.u32 %v1660, %v1663
      %v1665 = vrot.slane %v1664, 4
      %v1667 = vshll.u32 %v1570, 16
      %v1669 = vrot.slane %v1667, 5
      %v1670 = vsel %vm279, %v1665, %v1669
      %v1672 = vshrl.u32 %v1571, 16
      %v1674 = vrot.slane %v1672, 4
      %v1675 = vshll.u32 %v1571, 16
      %v1677 = vrot.slane %v1675, 5
      %v1678 = vor.u32 %v1674, %v1677
      %v1679 = vrot.slane %v1678, 4
      %v1681 = vshll.u32 %v1572, 16
      %v1683 = vrot.slane %v1681, 5
      %v1684 = vsel %vm279, %v1679, %v1683
      %v1685 = vld [vmem:[%s1 + $0xe0] sm:$0xf]
      %v1686 = vld [vmem:[%s1 + $0xe4] sm:$0xf]
      %v1687 = vld [vmem:[%s1 + $0xe8] sm:$0xf]
      %v1688 = vld [vmem:[%s1 + $0xec] sm:$0xf]
      %v1689 = vld [vmem:[%s1 + $0xf0] sm:$0xf]
      %v1690 = vld [vmem:[%s1 + $0xf4] sm:$0xf]
      %v1691 = vld [vmem:[%s1 + $0xf8] sm:$0xf]
      %v1692 = vld [vmem:[%s1 + $0xfc] sm:$0xf]
      %v1693 = vunpack.c.l.b16 %v1586
      %v1694 = vunpack.c.l.b16 %v1600
      %v1695 = vunpack.c.l.b16 %v1614
      %v1696 = vunpack.c.l.b16 %v1628
      %v1697 = vunpack.c.l.b16 %v1642
      %v1698 = vunpack.c.l.b16 %v1656
      %v1699 = vunpack.c.l.b16 %v1670
      %v1700 = vunpack.c.l.b16 %v1684
      %v1701 = vpack.c.b16 %v1694, %v1693
      %v1702 = vpack.c.b16 %v1696, %v1695
      %v1703 = vpack.c.b16 %v1698, %v1697
      %v1704 = vpack.c.b16 %v1700, %v1699
      %v1713 = vunpack.c.l.b16 %v1685
      %v1714 = vunpack.c.l.b16 %v1686
      %v1715 = vunpack.c.l.b16 %v1687
      %v1716 = vunpack.c.l.b16 %v1688
      %v1717 = vunpack.c.l.b16 %v1689
      %v1718 = vunpack.c.l.b16 %v1690
      %v1719 = vunpack.c.l.b16 %v1691
      %v1720 = vunpack.c.l.b16 %v1692
      %v1721 = vpack.c.b16 %v1714, %v1713
      %v1722 = vpack.c.b16 %v1716, %v1715
      %v1723 = vpack.c.b16 %v1718, %v1717
      %v1724 = vpack.c.b16 %v1720, %v1719
      %v1730 = vsel %vm436, %v1701, 0
      %v1733 = vsel %vm436, %v1702, 0
      %v1736 = vsel %vm436, %v1703, 0
      %v1739 = vsel %vm436, %v1704, 0
      %1741 = vmatprep.subr.bf16.mxu0 0
      %1742 = vmatpush1.bf16.msra.mxu0 %v1721
      %1743 = vmatprep.subr.bf16.mxu0 0
      %1744 = vmatpush1.bf16.msra.mxu0 %v1722
      %1745 = vmatprep.subr.bf16.mxu0 0
      %1746 = vmatpush1.bf16.msra.mxu0 %v1723
      %1747 = vmatprep.subr.bf16.mxu0 0
      %1748 = vmatpush1.bf16.msra.mxu0 %v1724
      %1749 = vmatprep.subr.bf16.mxu0 0
      %1750 = vmatpush1.bf16.msra.mxu0 0
      %1751 = vmatprep.subr.bf16.mxu0 0
      %1752 = vmatpush1.bf16.msra.mxu0 0
      %1753 = vmatprep.subr.bf16.mxu0 0
      %1754 = vmatpush1.bf16.msra.mxu0 0
      %1755 = vmatprep.subr.bf16.mxu0 0
      %1756 = vmatpush1.bf16.msra.mxu0 0
      %1757 = vmatprep.subr.bf16.mxu0 0
      %1758 = vmatpush1.bf16.msra.mxu0 0
      %1759 = vmatprep.subr.bf16.mxu0 0
      %1760 = vmatpush1.bf16.msra.mxu0 0
      %1761 = vmatprep.subr.bf16.mxu0 0
      %1762 = vmatpush1.bf16.msra.mxu0 0
      %1763 = vmatprep.subr.bf16.mxu0 0
      %1764 = vmatpush1.bf16.msra.mxu0 0
      %1765 = vmatprep.subr.bf16.mxu0 0
      %1766 = vmatpush1.bf16.msra.mxu0 0
      %1767 = vmatprep.subr.bf16.mxu0 0
      %1768 = vmatpush1.bf16.msra.mxu0 0
      %1769 = vmatprep.subr.bf16.mxu0 0
      %1770 = vmatpush1.bf16.msra.mxu0 0
      %1771 = vmatprep.subr.bf16.mxu0 0
      %1772 = vmatpush1.bf16.msra.mxu0 0
      %1773 = vmatprep.mubr.bf16.mxu0 0
      %1774 = vmatmul.mubr.bf16.gmra.mrb[0].mxu0 %v1730
      %v1775 = vpop.f32.mrb[0].mxu0
      %v1776 = vadd.f32 0.0, %v1775
      %v1777 = vpop.f32.mrb[0].mxu0
      %v1778 = vpop.f32.mrb[0].mxu0
      %v1779 = vadd.f32 0.0, %v1778
      %v1780 = vpop.f32.mrb[0].mxu0
      %1781 = vmatprep.mubr.bf16.mxu0 0
      %1782 = vmatmul.mubr.bf16.gmra.mrb[0].mxu0 %v1733
      %v1783 = vpop.f32.mrb[0].mxu0
      %v1784 = vadd.f32 0.0, %v1783
      %v1785 = vpop.f32.mrb[0].mxu0
      %v1786 = vpop.f32.mrb[0].mxu0
      %v1787 = vadd.f32 0.0, %v1786
      %v1788 = vpop.f32.mrb[0].mxu0
      %1789 = vmatprep.mubr.bf16.mxu0 0
      %1790 = vmatmul.mubr.bf16.gmra.mrb[0].mxu0 %v1736
      %v1791 = vpop.f32.mrb[0].mxu0
      %v1792 = vadd.f32 0.0, %v1791
      %v1793 = vpop.f32.mrb[0].mxu0
      %v1794 = vpop.f32.mrb[0].mxu0
      %v1795 = vadd.f32 0.0, %v1794
      %v1796 = vpop.f32.mrb[0].mxu0
      %1797 = vmatprep.mubr.bf16.mxu0 0
      %1798 = vmatmul.mubr.bf16.gmra.mrb[0].mxu0 %v1739
      %v1799 = vpop.f32.mrb[0].mxu0
      %v1800 = vadd.f32 0.0, %v1799
      %v1801 = vpop.f32.mrb[0].mxu0
      %v1802 = vpop.f32.mrb[0].mxu0
      %v1803 = vadd.f32 0.0, %v1802
      %v1804 = vpop.f32.mrb[0].mxu0
      %1805 = vdwg.mxu0
      %v1806 = vadd.f32 %v1549, %v1776
      %v1807 = vadd.f32 %v1550, %v1779
      %v1808 = vadd.f32 %v1551, %v1784
      %v1809 = vadd.f32 %v1552, %v1787
      %v1810 = vadd.f32 %v1553, %v1792
      %v1811 = vadd.f32 %v1554, %v1795
      %v1812 = vadd.f32 %v1555, %v1800
      %v1813 = vadd.f32 %v1556, %v1803
      %v1814 = vld [vmem:[%s1411] sm:$0xe]
      %v1815 = vld [vmem:[%s1411 + $0x8] sm:$0xe]
      %v1816 = vld [vmem:[%s1411 + $0x10] sm:$0xe]
      %v1817 = vld [vmem:[%s1411 + $0x18] sm:$0xe]
      %v1818 = vld [vmem:[%s1411 + $0x20] sm:$0xe]
      %v1819 = vld [vmem:[%s1411 + $0x28] sm:$0xe]
      %v1820 = vld [vmem:[%s1411 + $0x30] sm:$0xe]
      %v1821 = vld [vmem:[%s1411 + $0x38] sm:$0xe]
      %v1838 = vrot.slane %v1814, 5
      %v1839 = vrot.slane %v1838, 4
      %v1840 = vrot.slane %v1558, 5
      %v1841 = vsel %vm661, %v1839, %v1840
      %v1842 = vrot.slane %v1815, 5
      %v1843 = vrot.slane %v1842, 4
      %v1844 = vrot.slane %v1560, 5
      %v1845 = vsel %vm661, %v1843, %v1844
      %v1846 = vrot.slane %v1816, 5
      %v1847 = vrot.slane %v1846, 4
      %v1848 = vrot.slane %v1562, 5
      %v1849 = vsel %vm661, %v1847, %v1848
      %v1850 = vrot.slane %v1817, 5
      %v1851 = vrot.slane %v1850, 4
      %v1852 = vrot.slane %v1564, 5
      %v1853 = vsel %vm661, %v1851, %v1852
      %v1854 = vrot.slane %v1818, 5
      %v1855 = vrot.slane %v1854, 4
      %v1856 = vrot.slane %v1566, 5
      %v1857 = vsel %vm661, %v1855, %v1856
      %v1858 = vrot.slane %v1819, 5
      %v1859 = vrot.slane %v1858, 4
      %v1860 = vrot.slane %v1568, 5
      %v1861 = vsel %vm661, %v1859, %v1860
      %v1862 = vrot.slane %v1820, 5
      %v1863 = vrot.slane %v1862, 4
      %v1864 = vrot.slane %v1570, 5
      %v1865 = vsel %vm661, %v1863, %v1864
      %v1866 = vrot.slane %v1821, 5
      %v1867 = vrot.slane %v1866, 4
      %v1868 = vrot.slane %v1572, 5
      %v1869 = vsel %vm661, %v1867, %v1868
      %v1870 = vld [vmem:[%s1 + $0x100] sm:$0xf]
      %v1871 = vld [vmem:[%s1 + $0x104] sm:$0xf]
      %v1872 = vld [vmem:[%s1 + $0x108] sm:$0xf]
      %v1873 = vld [vmem:[%s1 + $0x10c] sm:$0xf]
      %v1874 = vld [vmem:[%s1 + $0x110] sm:$0xf]
      %v1875 = vld [vmem:[%s1 + $0x114] sm:$0xf]
      %v1876 = vld [vmem:[%s1 + $0x118] sm:$0xf]
      %v1877 = vld [vmem:[%s1 + $0x11c] sm:$0xf]
      %v1878 = vunpack.c.l.b16 %v1841
      %v1879 = vunpack.c.l.b16 %v1845
      %v1880 = vunpack.c.l.b16 %v1849
      %v1881 = vunpack.c.l.b16 %v1853
      %v1882 = vunpack.c.l.b16 %v1857
      %v1883 = vunpack.c.l.b16 %v1861
      %v1884 = vunpack.c.l.b16 %v1865
      %v1885 = vunpack.c.l.b16 %v1869
      %v1886 = vpack.c.b16 %v1879, %v1878
      %v1887 = vpack.c.b16 %v1881, %v1880
      %v1888 = vpack.c.b16 %v1883, %v1882
      %v1889 = vpack.c.b16 %v1885, %v1884
      %v1898 = vunpack.c.l.b16 %v1870
      %v1899 = vunpack.c.l.b16 %v1871
      %v1900 = vunpack.c.l.b16 %v1872
      %v1901 = vunpack.c.l.b16 %v1873
      %v1902 = vunpack.c.l.b16 %v1874
      %v1903 = vunpack.c.l.b16 %v1875
      %v1904 = vunpack.c.l.b16 %v1876
      %v1905 = vunpack.c.l.b16 %v1877
      %v1906 = vpack.c.b16 %v1899, %v1898
      %v1907 = vpack.c.b16 %v1901, %v1900
      %v1908 = vpack.c.b16 %v1903, %v1902
      %v1909 = vpack.c.b16 %v1905, %v1904
      %v1915 = vsel %vm436, %v1886, 0
      %v1918 = vsel %vm436, %v1887, 0
      %v1921 = vsel %vm436, %v1888, 0
      %v1924 = vsel %vm436, %v1889, 0
      %1926 = vmatprep.subr.bf16.mxu0 0
      %1927 = vmatpush1.bf16.msra.mxu0 %v1906
      %1928 = vmatprep.subr.bf16.mxu0 0
      %1929 = vmatpush1.bf16.msra.mxu0 %v1907
      %1930 = vmatprep.subr.bf16.mxu0 0
      %1931 = vmatpush1.bf16.msra.mxu0 %v1908
      %1932 = vmatprep.subr.bf16.mxu0 0
      %1933 = vmatpush1.bf16.msra.mxu0 %v1909
      %1934 = vmatprep.subr.bf16.mxu0 0
      %1935 = vmatpush1.bf16.msra.mxu0 0
      %1936 = vmatprep.subr.bf16.mxu0 0
      %1937 = vmatpush1.bf16.msra.mxu0 0
      %1938 = vmatprep.subr.bf16.mxu0 0
      %1939 = vmatpush1.bf16.msra.mxu0 0
      %1940 = vmatprep.subr.bf16.mxu0 0
      %1941 = vmatpush1.bf16.msra.mxu0 0
      %1942 = vmatprep.subr.bf16.mxu0 0
      %1943 = vmatpush1.bf16.msra.mxu0 0
      %1944 = vmatprep.subr.bf16.mxu0 0
      %1945 = vmatpush1.bf16.msra.mxu0 0
      %1946 = vmatprep.subr.bf16.mxu0 0
      %1947 = vmatpush1.bf16.msra.mxu0 0
      %1948 = vmatprep.subr.bf16.mxu0 0
      %1949 = vmatpush1.bf16.msra.mxu0 0
      %1950 = vmatprep.subr.bf16.mxu0 0
      %1951 = vmatpush1.bf16.msra.mxu0 0
      %1952 = vmatprep.subr.bf16.mxu0 0
      %1953 = vmatpush1.bf16.msra.mxu0 0
      %1954 = vmatprep.subr.bf16.mxu0 0
      %1955 = vmatpush1.bf16.msra.mxu0 0
      %1956 = vmatprep.subr.bf16.mxu0 0
      %1957 = vmatpush1.bf16.msra.mxu0 0
      %1958 = vmatprep.mubr.bf16.mxu0 0
      %1959 = vmatmul.mubr.bf16.gmra.mrb[0].mxu0 %v1915
      %v1960 = vpop.f32.mrb[0].mxu0
      %v1961 = vadd.f32 0.0, %v1960
      %v1962 = vpop.f32.mrb[0].mxu0
      %v1963 = vpop.f32.mrb[0].mxu0
      %v1964 = vadd.f32 0.0, %v1963
      %v1965 = vpop.f32.mrb[0].mxu0
      %1966 = vmatprep.mubr.bf16.mxu0 0
      %1967 = vmatmul.mubr.bf16.gmra.mrb[0].mxu0 %v1918
      %v1968 = vpop.f32.mrb[0].mxu0
      %v1969 = vadd.f32 0.0, %v1968
      %v1970 = vpop.f32.mrb[0].mxu0
      %v1971 = vpop.f32.mrb[0].mxu0
      %v1972 = vadd.f32 0.0, %v1971
      %v1973 = vpop.f32.mrb[0].mxu0
      %1974 = vmatprep.mubr.bf16.mxu0 0
      %1975 = vmatmul.mubr.bf16.gmra.mrb[0].mxu0 %v1921
      %v1976 = vpop.f32.mrb[0].mxu0
      %v1977 = vadd.f32 0.0, %v1976
      %v1978 = vpop.f32.mrb[0].mxu0
      %v1979 = vpop.f32.mrb[0].mxu0
      %v1980 = vadd.f32 0.0, %v1979
      %v1981 = vpop.f32.mrb[0].mxu0
      %1982 = vmatprep.mubr.bf16.mxu0 0
      %1983 = vmatmul.mubr.bf16.gmra.mrb[0].mxu0 %v1924
      %v1984 = vpop.f32.mrb[0].mxu0
      %v1985 = vadd.f32 0.0, %v1984
      %v1986 = vpop.f32.mrb[0].mxu0
      %v1987 = vpop.f32.mrb[0].mxu0
      %v1988 = vadd.f32 0.0, %v1987
      %v1989 = vpop.f32.mrb[0].mxu0
      %1990 = vdwg.mxu0
      %v1991 = vadd.f32 %v1806, %v1961
      %v1992 = vadd.f32 %v1807, %v1964
      %v1993 = vadd.f32 %v1808, %v1969
      %v1994 = vadd.f32 %v1809, %v1972
      %v1995 = vadd.f32 %v1810, %v1977
      %v1996 = vadd.f32 %v1811, %v1980
      %v1997 = vadd.f32 %v1812, %v1985
      %v1998 = vadd.f32 %v1813, %v1988
      %v1999 = vld [vmem:[%s2] sm:$0xff]
      %v2000 = vld [vmem:[%s2 + $0x8] sm:$0xff]
      %v2001 = vld [vmem:[%s2 + $0x10] sm:$0xff]
      %v2002 = vld [vmem:[%s2 + $0x18] sm:$0xff]
      %v2003 = vld [vmem:[%s2 + $0x20] sm:$0xff]
      %v2004 = vld [vmem:[%s2 + $0x28] sm:$0xff]
      %v2005 = vld [vmem:[%s2 + $0x30] sm:$0xff]
      %v2006 = vld [vmem:[%s2 + $0x38] sm:$0xff]
      %v2007 = vld [vmem:[%s3] sm:$0xff]
      %v2008 = vld [vmem:[%s3 + $0x8] sm:$0xff]
      %v2009 = vld [vmem:[%s3 + $0x10] sm:$0xff]
      %v2010 = vld [vmem:[%s3 + $0x18] sm:$0xff]
      %v2011 = vsel %vm436, %v1991, 0.0
      %v2012 = vsel %vm436, %v1992, 0.0
      %v2013 = vadd.f32 %v2011, %v2012
      %v2014 = vsel %vm436, %v1993, 0.0
      %v2015 = vadd.f32 %v2013, %v2014
      %v2016 = vsel %vm436, %v1994, 0.0
      %v2017 = vadd.f32 %v2015, %v2016
      %v2018 = vsel %vm436, %v1995, 0.0
      %v2019 = vadd.f32 %v2017, %v2018
      %v2020 = vsel %vm436, %v1996, 0.0
      %v2021 = vadd.f32 %v2019, %v2020
      %v2022 = vsel %vm436, %v1997, 0.0
      %v2023 = vadd.f32 %v2021, %v2022
      %v2024 = vsel %vm436, %v1998, 0.0
      %v2025 = vadd.f32 %v2023, %v2024
      %v2026 = vrot.slane %v2025, 4
      %v2027 = vadd.f32 %v2025, %v2026
      %v2028 = vrot.slane %v2027, 2
      %v2029 = vadd.f32 %v2027, %v2028
      %v2030 = vrot.slane %v2029, 1
      %v2031 = vadd.f32 %v2029, %v2030
      %v2033 = vsel %vm436, %v2031, 0
      %2035 = vmatprep.subr.mxu0 0.0
      %2036 = vmatpush1.msra.mxu0 %v1999
      %2037 = vmatprep.subr.mxu0 0.0
      %2038 = vmatpush1.msra.mxu0 %v2000
      %2039 = vmatprep.subr.mxu0 0.0
      %2040 = vmatpush1.msra.mxu0 %v2001
      %2041 = vmatprep.subr.mxu0 0.0
      %2042 = vmatpush1.msra.mxu0 %v2002
      %2043 = vmatprep.subr.mxu0 0.0
      %2044 = vmatpush1.msra.mxu0 %v2003
      %2045 = vmatprep.subr.mxu0 0.0
      %2046 = vmatpush1.msra.mxu0 %v2004
      %2047 = vmatprep.subr.mxu0 0.0
      %2048 = vmatpush1.msra.mxu0 %v2005
      %2049 = vmatprep.subr.mxu0 0.0
      %2050 = vmatpush1.msra.mxu0 %v2006
      %2051 = vmatprep.subr.mxu0 0.0
      %2052 = vmatpush1.msra.mxu0 0.0
      %2053 = vmatprep.subr.mxu0 0.0
      %2054 = vmatpush1.msra.mxu0 0.0
      %2055 = vmatprep.subr.mxu0 0.0
      %2056 = vmatpush1.msra.mxu0 0.0
      %2057 = vmatprep.subr.mxu0 0.0
      %2058 = vmatpush1.msra.mxu0 0.0
      %2059 = vmatprep.subr.mxu0 0.0
      %2060 = vmatpush1.msra.mxu0 0.0
      %2061 = vmatprep.subr.mxu0 0.0
      %2062 = vmatpush1.msra.mxu0 0.0
      %2063 = vmatprep.subr.mxu0 0.0
      %2064 = vmatpush1.msra.mxu0 0.0
      %2065 = vmatprep.subr.mxu0 0.0
      %2066 = vmatpush1.msra.mxu0 0.0
      %2067 = vmatprep.subr.mxu0 0.0
      %2068 = vmatpush1.msra.mxu0 0.0
      %2069 = vmatprep.subr.mxu0 0.0
      %2070 = vmatpush1.msra.mxu0 0.0
      %2071 = vmatprep.subr.mxu0 0.0
      %2072 = vmatpush1.msra.mxu0 0.0
      %2073 = vmatprep.subr.mxu0 0.0
      %2074 = vmatpush1.msra.mxu0 0.0
      %2075 = vmatprep.subr.mxu0 0.0
      %2076 = vmatpush1.msra.mxu0 0.0
      %2077 = vmatprep.subr.mxu0 0.0
      %2078 = vmatpush1.msra.mxu0 0.0
      %2079 = vmatprep.subr.mxu0 0.0
      %2080 = vmatpush1.msra.mxu0 0.0
      %2081 = vmatprep.subr.mxu0 0.0
      %2082 = vmatpush1.msra.mxu0 0.0
      %2083 = vmatprep.subr.mxu0 0.0
      %2084 = vmatpush1.msra.mxu0 0.0
      %2085 = vmatprep.subr.mxu0 0.0
      %2086 = vmatpush1.msra.mxu0 0.0
      %2087 = vmatprep.subr.mxu0 0.0
      %2088 = vmatpush1.msra.mxu0 0.0
      %2089 = vmatprep.subr.mxu0 0.0
      %2090 = vmatpush1.msra.mxu0 0.0
      %2091 = vmatprep.subr.mxu0 0.0
      %2092 = vmatpush1.msra.mxu0 0.0
      %2093 = vmatprep.subr.mxu0 0.0
      %2094 = vmatpush1.msra.mxu0 0.0
      %2095 = vmatprep.subr.mxu0 0.0
      %2096 = vmatpush1.msra.mxu0 0.0
      %2097 = vmatprep.subr.mxu0 0.0
      %2098 = vmatpush1.msra.mxu0 0.0
      %2099 = vmatprep.mubr.f32.mxu0 0.0
      %2100 = vmatmul.mubr.f32.gmra.mrb[0].mxu0 %v2033
      %v2101 = vpop.f32.mrb[0].mxu0
      %v2102 = vadd.f32 0.0, %v2101
      %v2103 = vpop.f32.mrb[0].mxu0
      %2104 = vdwg.mxu0
      %v2105 = vmul.f32 %v2102, 0.0078125
      %vm2106 = vcmask 261120
      %v2108 = vsel %vm2106, %v2105, 0
      %2110 = vmatprep.subr.mxu0 0.0
      %2111 = vmatpush1.msra.mxu0 %v2007
      %2112 = vmatprep.subr.mxu0 0.0
      %2113 = vmatpush1.msra.mxu0 %v2008
      %2114 = vmatprep.subr.mxu0 0.0
      %2115 = vmatpush1.msra.mxu0 %v2009
      %2116 = vmatprep.subr.mxu0 0.0
      %2117 = vmatpush1.msra.mxu0 %v2010
      %2118 = vmatprep.subr.mxu0 0.0
      %2119 = vmatpush1.msra.mxu0 0.0
      %2120 = vmatprep.subr.mxu0 0.0
      %2121 = vmatpush1.msra.mxu0 0.0
      %2122 = vmatprep.subr.mxu0 0.0
      %2123 = vmatpush1.msra.mxu0 0.0
      %2124 = vmatprep.subr.mxu0 0.0
      %2125 = vmatpush1.msra.mxu0 0.0
      %2126 = vmatprep.subr.mxu0 0.0
      %2127 = vmatpush1.msra.mxu0 0.0
      %2128 = vmatprep.subr.mxu0 0.0
      %2129 = vmatpush1.msra.mxu0 0.0
      %2130 = vmatprep.subr.mxu0 0.0
      %2131 = vmatpush1.msra.mxu0 0.0
      %2132 = vmatprep.subr.mxu0 0.0
      %2133 = vmatpush1.msra.mxu0 0.0
      %2134 = vmatprep.subr.mxu0 0.0
      %2135 = vmatpush1.msra.mxu0 0.0
      %2136 = vmatprep.subr.mxu0 0.0
      %2137 = vmatpush1.msra.mxu0 0.0
      %2138 = vmatprep.subr.mxu0 0.0
      %2139 = vmatpush1.msra.mxu0 0.0
      %2140 = vmatprep.subr.mxu0 0.0
      %2141 = vmatpush1.msra.mxu0 0.0
      %2142 = vmatprep.subr.mxu0 0.0
      %2143 = vmatpush1.msra.mxu0 0.0
      %2144 = vmatprep.subr.mxu0 0.0
      %2145 = vmatpush1.msra.mxu0 0.0
      %2146 = vmatprep.subr.mxu0 0.0
      %2147 = vmatpush1.msra.mxu0 0.0
      %2148 = vmatprep.subr.mxu0 0.0
      %2149 = vmatpush1.msra.mxu0 0.0
      %2150 = vmatprep.subr.mxu0 0.0
      %2151 = vmatpush1.msra.mxu0 0.0
      %2152 = vmatprep.subr.mxu0 0.0
      %2153 = vmatpush1.msra.mxu0 0.0
      %2154 = vmatprep.subr.mxu0 0.0
      %2155 = vmatpush1.msra.mxu0 0.0
      %2156 = vmatprep.subr.mxu0 0.0
      %2157 = vmatpush1.msra.mxu0 0.0
      %2158 = vmatprep.subr.mxu0 0.0
      %2159 = vmatpush1.msra.mxu0 0.0
      %2160 = vmatprep.subr.mxu0 0.0
      %2161 = vmatpush1.msra.mxu0 0.0
      %2162 = vmatprep.subr.mxu0 0.0
      %2163 = vmatpush1.msra.mxu0 0.0
      %2164 = vmatprep.subr.mxu0 0.0
      %2165 = vmatpush1.msra.mxu0 0.0
      %2166 = vmatprep.subr.mxu0 0.0
      %2167 = vmatpush1.msra.mxu0 0.0
      %2168 = vmatprep.subr.mxu0 0.0
      %2169 = vmatpush1.msra.mxu0 0.0
      %2170 = vmatprep.subr.mxu0 0.0
      %2171 = vmatpush1.msra.mxu0 0.0
      %2172 = vmatprep.subr.mxu0 0.0
      %2173 = vmatpush1.msra.mxu0 0.0
      %2174 = vmatprep.mubr.f32.mxu0 0.0
      %2175 = vmatmul.mubr.f32.gmra.mrb[0].mxu0 %v2108
      %v2176 = vpop.f32.mrb[0].mxu0
      %v2177 = vadd.f32 0.0, %v2176
      %v2178 = vpop.f32.mrb[0].mxu0
      %2179 = vdwg.mxu0
      %v2180 = vlaneseq
      %v2181 = vshrl.u32 %v2180, 7
      %v2182 = vsub.s32 0, %v2181
      %v2183 = vrot.slane %v2177, %v2182
      %v2184 = vsub.f32 %v1991, %v2183
      %v2185 = vsub.f32 %v1992, %v2183
      %v2186 = vsub.f32 %v1993, %v2183
      %v2187 = vsub.f32 %v1994, %v2183
      %v2188 = vsub.f32 %v1995, %v2183
      %v2189 = vsub.f32 %v1996, %v2183
      %v2190 = vsub.f32 %v1997, %v2183
      %v2191 = vsub.f32 %v1998, %v2183
      %v2192 = vmul.f32 %v2184, %v2184
      %v2193 = vmul.f32 %v2185, %v2185
      %v2194 = vmul.f32 %v2186, %v2186
      %v2195 = vmul.f32 %v2187, %v2187
      %v2196 = vmul.f32 %v2188, %v2188
      %v2197 = vmul.f32 %v2189, %v2189
      %v2198 = vmul.f32 %v2190, %v2190
      %v2199 = vmul.f32 %v2191, %v2191
      %v2200 = vsel %vm436, %v2192, 0.0
      %v2201 = vsel %vm436, %v2193, 0.0
      %v2202 = vadd.f32 %v2200, %v2201
      %v2203 = vsel %vm436, %v2194, 0.0
      %v2204 = vadd.f32 %v2202, %v2203
      %v2205 = vsel %vm436, %v2195, 0.0
      %v2206 = vadd.f32 %v2204, %v2205
      %v2207 = vsel %vm436, %v2196, 0.0
      %v2208 = vadd.f32 %v2206, %v2207
      %v2209 = vsel %vm436, %v2197, 0.0
      %v2210 = vadd.f32 %v2208, %v2209
      %v2211 = vsel %vm436, %v2198, 0.0
      %v2212 = vadd.f32 %v2210, %v2211
      %v2213 = vsel %vm436, %v2199, 0.0
      %v2214 = vadd.f32 %v2212, %v2213
      %v2215 = vrot.slane %v2214, 4
      %v2216 = vadd.f32 %v2214, %v2215
      %v2217 = vrot.slane %v2216, 2
      %v2218 = vadd.f32 %v2216, %v2217
      %v2219 = vrot.slane %v2218, 1
      %v2220 = vadd.f32 %v2218, %v2219
      %v2222 = vsel %vm436, %v2220, 0
      %2224 = vmatprep.subr.mxu0 0.0
      %2225 = vmatpush1.msra.mxu0 %v1999
      %2226 = vmatprep.subr.mxu0 0.0
      %2227 = vmatpush1.msra.mxu0 %v2000
      %2228 = vmatprep.subr.mxu0 0.0
      %2229 = vmatpush1.msra.mxu0 %v2001
      %2230 = vmatprep.subr.mxu0 0.0
      %2231 = vmatpush1.msra.mxu0 %v2002
      %2232 = vmatprep.subr.mxu0 0.0
      %2233 = vmatpush1.msra.mxu0 %v2003
      %2234 = vmatprep.subr.mxu0 0.0
      %2235 = vmatpush1.msra.mxu0 %v2004
      %2236 = vmatprep.subr.mxu0 0.0
      %2237 = vmatpush1.msra.mxu0 %v2005
      %2238 = vmatprep.subr.mxu0 0.0
      %2239 = vmatpush1.msra.mxu0 %v2006
      %2240 = vmatprep.subr.mxu0 0.0
      %2241 = vmatpush1.msra.mxu0 0.0
      %2242 = vmatprep.subr.mxu0 0.0
      %2243 = vmatpush1.msra.mxu0 0.0
      %2244 = vmatprep.subr.mxu0 0.0
      %2245 = vmatpush1.msra.mxu0 0.0
      %2246 = vmatprep.subr.mxu0 0.0
      %2247 = vmatpush1.msra.mxu0 0.0
      %2248 = vmatprep.subr.mxu0 0.0
      %2249 = vmatpush1.msra.mxu0 0.0
      %2250 = vmatprep.subr.mxu0 0.0
      %2251 = vmatpush1.msra.mxu0 0.0
      %2252 = vmatprep.subr.mxu0 0.0
      %2253 = vmatpush1.msra.mxu0 0.0
      %2254 = vmatprep.subr.mxu0 0.0
      %2255 = vmatpush1.msra.mxu0 0.0
      %2256 = vmatprep.subr.mxu0 0.0
      %2257 = vmatpush1.msra.mxu0 0.0
      %2258 = vmatprep.subr.mxu0 0.0
      %2259 = vmatpush1.msra.mxu0 0.0
      %2260 = vmatprep.subr.mxu0 0.0
      %2261 = vmatpush1.msra.mxu0 0.0
      %2262 = vmatprep.subr.mxu0 0.0
      %2263 = vmatpush1.msra.mxu0 0.0
      %2264 = vmatprep.subr.mxu0 0.0
      %2265 = vmatpush1.msra.mxu0 0.0
      %2266 = vmatprep.subr.mxu0 0.0
      %2267 = vmatpush1.msra.mxu0 0.0
      %2268 = vmatprep.subr.mxu0 0.0
      %2269 = vmatpush1.msra.mxu0 0.0
      %2270 = vmatprep.subr.mxu0 0.0
      %2271 = vmatpush1.msra.mxu0 0.0
      %2272 = vmatprep.subr.mxu0 0.0
      %2273 = vmatpush1.msra.mxu0 0.0
      %2274 = vmatprep.subr.mxu0 0.0
      %2275 = vmatpush1.msra.mxu0 0.0
      %2276 = vmatprep.subr.mxu0 0.0
      %2277 = vmatpush1.msra.mxu0 0.0
      %2278 = vmatprep.subr.mxu0 0.0
      %2279 = vmatpush1.msra.mxu0 0.0
      %2280 = vmatprep.subr.mxu0 0.0
      %2281 = vmatpush1.msra.mxu0 0.0
      %2282 = vmatprep.subr.mxu0 0.0
      %2283 = vmatpush1.msra.mxu0 0.0
      %2284 = vmatprep.subr.mxu0 0.0
      %2285 = vmatpush1.msra.mxu0 0.0
      %2286 = vmatprep.subr.mxu0 0.0
      %2287 = vmatpush1.msra.mxu0 0.0
      %2288 = vmatprep.mubr.f32.mxu0 0.0
      %2289 = vmatmul.mubr.f32.gmra.mrb[0].mxu0 %v2222
      %v2290 = vpop.f32.mrb[0].mxu0
      %v2291 = vadd.f32 0.0, %v2290
      %v2292 = vpop.f32.mrb[0].mxu0
      %2293 = vdwg.mxu0
      %v2294 = vmul.f32 %v2291, 0.0078125
      %v2295 = vadd.f32 %v2294, 1e-05
      %v2296 = vrsqrt.pop %v2295
      %v2298 = vsel %vm2106, %v2296, 0
      %2300 = vmatprep.subr.mxu0 0.0
      %2301 = vmatpush1.msra.mxu0 %v2007
      %2302 = vmatprep.subr.mxu0 0.0
      %2303 = vmatpush1.msra.mxu0 %v2008
      %2304 = vmatprep.subr.mxu0 0.0
      %2305 = vmatpush1.msra.mxu0 %v2009
      %2306 = vmatprep.subr.mxu0 0.0
      %2307 = vmatpush1.msra.mxu0 %v2010
      %2308 = vmatprep.subr.mxu0 0.0
      %2309 = vmatpush1.msra.mxu0 0.0
      %2310 = vmatprep.subr.mxu0 0.0
      %2311 = vmatpush1.msra.mxu0 0.0
      %2312 = vmatprep.subr.mxu0 0.0
      %2313 = vmatpush1.msra.mxu0 0.0
      %2314 = vmatprep.subr.mxu0 0.0
      %2315 = vmatpush1.msra.mxu0 0.0
      %2316 = vmatprep.subr.mxu0 0.0
      %2317 = vmatpush1.msra.mxu0 0.0
      %2318 = vmatprep.subr.mxu0 0.0
      %2319 = vmatpush1.msra.mxu0 0.0
      %2320 = vmatprep.subr.mxu0 0.0
      %2321 = vmatpush1.msra.mxu0 0.0
      %2322 = vmatprep.subr.mxu0 0.0
      %2323 = vmatpush1.msra.mxu0 0.0
      %2324 = vmatprep.subr.mxu0 0.0
      %2325 = vmatpush1.msra.mxu0 0.0
      %2326 = vmatprep.subr.mxu0 0.0
      %2327 = vmatpush1.msra.mxu0 0.0
      %2328 = vmatprep.subr.mxu0 0.0
      %2329 = vmatpush1.msra.mxu0 0.0
      %2330 = vmatprep.subr.mxu0 0.0
      %2331 = vmatpush1.msra.mxu0 0.0
      %2332 = vmatprep.subr.mxu0 0.0
      %2333 = vmatpush1.msra.mxu0 0.0
      %2334 = vmatprep.subr.mxu0 0.0
      %2335 = vmatpush1.msra.mxu0 0.0
      %2336 = vmatprep.subr.mxu0 0.0
      %2337 = vmatpush1.msra.mxu0 0.0
      %2338 = vmatprep.subr.mxu0 0.0
      %2339 = vmatpush1.msra.mxu0 0.0
      %2340 = vmatprep.subr.mxu0 0.0
      %2341 = vmatpush1.msra.mxu0 0.0
      %2342 = vmatprep.subr.mxu0 0.0
      %2343 = vmatpush1.msra.mxu0 0.0
      %2344 = vmatprep.subr.mxu0 0.0
      %2345 = vmatpush1.msra.mxu0 0.0
      %2346 = vmatprep.subr.mxu0 0.0
      %2347 = vmatpush1.msra.mxu0 0.0
      %2348 = vmatprep.subr.mxu0 0.0
      %2349 = vmatpush1.msra.mxu0 0.0
      %2350 = vmatprep.subr.mxu0 0.0
      %2351 = vmatpush1.msra.mxu0 0.0
      %2352 = vmatprep.subr.mxu0 0.0
      %2353 = vmatpush1.msra.mxu0 0.0
      %2354 = vmatprep.subr.mxu0 0.0
      %2355 = vmatpush1.msra.mxu0 0.0
      %2356 = vmatprep.subr.mxu0 0.0
      %2357 = vmatpush1.msra.mxu0 0.0
      %2358 = vmatprep.subr.mxu0 0.0
      %2359 = vmatpush1.msra.mxu0 0.0
      %2360 = vmatprep.subr.mxu0 0.0
      %2361 = vmatpush1.msra.mxu0 0.0
      %2362 = vmatprep.subr.mxu0 0.0
      %2363 = vmatpush1.msra.mxu0 0.0
      %2364 = vmatprep.mubr.f32.mxu0 0.0
      %2365 = vmatmul.mubr.f32.gmra.mrb[0].mxu0 %v2298
      %v2366 = vpop.f32.mrb[0].mxu0
      %v2367 = vadd.f32 0.0, %v2366
      %v2368 = vpop.f32.mrb[0].mxu0
      %2369 = vdwg.mxu0
      %v2370 = vlaneseq
      %v2371 = vshrl.u32 %v2370, 7
      %v2372 = vsub.s32 0, %v2371
      %v2373 = vrot.slane %v2367, %v2372
      %v2374 = vmul.f32 %v2184, %v2373
      %v2375 = vmul.f32 %v2185, %v2373
      %v2376 = vmul.f32 %v2186, %v2373
      %v2377 = vmul.f32 %v2187, %v2373
      %v2378 = vmul.f32 %v2188, %v2373
      %v2379 = vmul.f32 %v2189, %v2373
      %v2380 = vmul.f32 %v2190, %v2373
      %v2381 = vmul.f32 %v2191, %v2373
      %v2382 = vld [vmem:[%s4] sm:$0x1]
      %v2384 = vlaneseq
      %v2385 = vshrl.u32 %v2384, 7
      %v2386 = vsub.s32 0, %v2385
      %v2387 = vrot.slane %v2382, %v2386
      %v2389 = vmul.f32 %v2374, %v2387
      %v2390 = vmul.f32 %v2375, %v2387
      %v2391 = vmul.f32 %v2376, %v2387
      %v2392 = vmul.f32 %v2377, %v2387
      %v2393 = vmul.f32 %v2378, %v2387
      %v2394 = vmul.f32 %v2379, %v2387
      %v2395 = vmul.f32 %v2380, %v2387
      %v2396 = vmul.f32 %v2381, %v2387
      %v2397 = vld [vmem:[%s5] sm:$0x1]
      %v2399 = vlaneseq
      %v2400 = vshrl.u32 %v2399, 7
      %v2401 = vsub.s32 0, %v2400
      %v2402 = vrot.slane %v2397, %v2401
      %v2404 = vadd.f32 %v2389, %v2402
      %v2405 = vadd.f32 %v2390, %v2402
      %v2406 = vadd.f32 %v2391, %v2402
      %v2407 = vadd.f32 %v2392, %v2402
      %v2408 = vadd.f32 %v2393, %v2402
      %v2409 = vadd.f32 %v2394, %v2402
      %v2410 = vadd.f32 %v2395, %v2402
      %v2411 = vadd.f32 %v2396, %v2402
      %v2412 = vmax.f32 %v2404, 0.0
      %v2413 = vmax.f32 %v2405, 0.0
      %v2414 = vmax.f32 %v2406, 0.0
      %v2415 = vmax.f32 %v2407, 0.0
      %v2416 = vmax.f32 %v2408, 0.0
      %v2417 = vmax.f32 %v2409, 0.0
      %v2418 = vmax.f32 %v2410, 0.0
      %v2419 = vmax.f32 %v2411, 0.0
      %v2420 = vpack.c.bf16 %v2413, %v2412
      %v2421 = vpack.c.bf16 %v2415, %v2414
      %v2422 = vpack.c.bf16 %v2417, %v2416
      %v2423 = vpack.c.bf16 %v2419, %v2418
      %v2428 = vunpack.c.l.b16 %v2420
      %v2429 = vunpack.c.h.b16 %v2420
      %v2430 = vunpack.c.l.b16 %v2421
      %v2431 = vunpack.c.h.b16 %v2421
      %v2432 = vunpack.c.l.b16 %v2422
      %v2433 = vunpack.c.h.b16 %v2422
      %v2434 = vunpack.c.l.b16 %v2423
      %v2435 = vunpack.c.h.b16 %v2423
      %v2436 = vpack.c.b16 %v2428, %v2428
      %v2437 = vpack.c.b16 %v2429, %v2429
      %v2438 = vpack.c.b16 %v2430, %v2430
      %v2439 = vpack.c.b16 %v2431, %v2431
      %v2440 = vpack.c.b16 %v2432, %v2432
      %v2441 = vpack.c.b16 %v2433, %v2433
      %v2442 = vpack.c.b16 %v2434, %v2434
      %v2443 = vpack.c.b16 %v2435, %v2435
      %vm2452 = vcmask 519168
      %2453 = vst.msk [vmem:[%s251] sm:$0xf] %vm2452, %v2436
      %2454 = vst.msk [vmem:[%s251 + $0x4] sm:$0xf] %vm2452, %v2437
      %2455 = vst.msk [vmem:[%s251 + $0x8] sm:$0xf] %vm2452, %v2438
      %2456 = vst.msk [vmem:[%s251 + $0xc] sm:$0xf] %vm2452, %v2439
      %2457 = vst.msk [vmem:[%s251 + $0x10] sm:$0xf] %vm2452, %v2440
      %2458 = vst.msk [vmem:[%s251 + $0x14] sm:$0xf] %vm2452, %v2441
      %2459 = vst.msk [vmem:[%s251 + $0x18] sm:$0xf] %vm2452, %v2442
      %2460 = vst.msk [vmem:[%s251 + $0x1c] sm:$0xf] %vm2452, %v2443
      %p2461 = scmp.lt.s32.totalorder %s17, 1
      %s2462 = scalar_select %p2461, %s17, 1
      %s2463 = smul.addr %s2462, 8
      %s2464 = smul.addr %s2463, 4
      %s2465 = scalar_lea.vmem %s6, %s2464
      // Predicated region
      $region45: #{_lambda_.8} parent=43 // pred_check
        %p2466 = pneg %p166
      $region46: #{_lambda_.8} parent=43 // pred_check_branch
        %2468 = sbr.rel (%p2466) target = $region48
      $region47: #{_lambda_.8} parent=43 // pred_region
        _
      $region48: #{_lambda_.8} parent=43 // pred_fallthru
        _
    $region44: #{_lambda_.8} parent=5 // pred_fallthru
      _
    %p2469 = scmp.le.s32.totalorder 2, %s12
    // Predicated region
    $region49: #{_lambda_.8} parent=5 // pred_check
      %p2470 = pneg %p2469
    $region50: #{_lambda_.8} parent=5 // pred_check_branch
      %2472 = sbr.rel (%p2470) target = $region52
    $region51: #{_lambda_.8} parent=5 // pred_region
      %s2473 = ssub.s32 %s12, 2
      // Predicated region
      $region53: #{_lambda_.8} parent=51 // pred_check
        %p2474 = pneg %p172
      $region54: #{_lambda_.8} parent=51 // pred_check_branch
        %2476 = sbr.rel (%p2474) target = $region56
      $region55: #{_lambda_.8} parent=51 // pred_region
        %p2477 = scmp.lt.s32.totalorder %s18, 1
        %s2478 = scalar_select %p2477, %s18, 1
        %s2479 = smul.addr %s2478, 8
        %s2480 = smul.addr %s2479, 4
        %s2481 = scalar_lea.vmem %s6, %s2480
      $region56: #{_lambda_.8} parent=51 // pred_fallthru
        _
    $region52: #{_lambda_.8} parent=5 // pred_fallthru
      _
  $region6: #{_lambda_.8} parent=0 // loop_footer
    %s16 = sadd.s32 1, %s12
  $region7: #{_lambda_.8} parent=0 // loop_footer_branch
    %11 = sbr.rel target = $region3
  $region8: #{_lambda_.8} parent=0 // loop_exit
    _

// kernel: _lambda_.7
$region0: #{_lambda_.7}
  #allocation0 [shape = 'u32[]', space=smem, size = 0x4, offset = 0x4, fixed_abs, tag = 'smem constant byte address 0x4 - core index']
  #allocation1 [shape = 'u32[144,128]{1,0:T(1,128)}', space=vmem, size = 0x12000, scoped, tag = 'internal scratch']
  %s0 = inlined_call_operand.vmem [shape: bf16[2,10,10,64], index: 0, kind: input, shape index: {}]
  %s1 = inlined_call_operand.vmem [shape: bf16[576,64], index: 1, kind: input, shape index: {}]
  %s2 = inlined_call_operand.vmem [shape: f32[64,32], index: 2, kind: input, shape index: {}]
  %s3 = inlined_call_operand.vmem [shape: f32[32,64], index: 3, kind: input, shape index: {}]
  %s4 = inlined_call_operand.vmem [shape: f32[1,64], index: 4, kind: input, shape index: {}]
  %s5 = inlined_call_operand.vmem [shape: f32[1,64], index: 5, kind: input, shape index: {}]
  %s6 = inlined_call_operand.vmem [shape: bf16[2,64,64], index: 6, kind: input, shape index: {}]
  %s7 = inlined_call_operand.vmem [shape: bf16[2,64,64], index: 7, kind: output, shape index: {}]
  %s8 = sld [smem:[#allocation0]]
  $region61: #{_lambda_.7} parent=0
    _
  %s10 = ssub.s32 1, %s8
  %s11 = scalar_select 0, %s10, %s8
  loop: start=0, step=1, limit=4
  $region2: #{_lambda_.7} parent=0 // loop_pre_header
    _
  $region3: #{_lambda_.7} parent=0 // loop_header
    %s13 = sphi 0, %s17
    %p14 = scmp.ge.s32.totalorder %s13, 4
    %s23 = sphi 0, %s25
    %s26 = sphi 0, %s23
    %s27 = sphi 0, %s26
    %s43 = sphi 0, %s27
    %s47 = sphi 0, %s47
    %s49 = sphi 0, %s47
    %s50 = sphi 0, %s49
    %s64 = sphi 0, %s50
    %s68 = sphi 0, %s68
    %s70 = sphi 0, %s68
    %s71 = sphi 0, %s70
    %s85 = sphi 0, %s71
    %s89 = sphi 0, %s89
    %s91 = sphi 0, %s89
    %s92 = sphi 0, %s91
    %s106 = sphi 0, %s92
    %s110 = sphi 0, %s110
    %s112 = sphi 0, %s110
    %s113 = sphi 0, %s112
    %s127 = sphi 0, %s113
    %s131 = sphi 0, %s131
    %s133 = sphi 0, %s131
    %s134 = sphi 0, %s133
    %s148 = sphi 0, %s134
    %s154 = sphi 0, %s156
    %s157 = sphi 0, %s154
    %s158 = sphi 0, %s157
    %s174 = sphi 0, %s158
    %s180 = sphi 0, %s182
    %s183 = sphi 0, %s180
    %s184 = sphi 0, %s183
    %s200 = sphi 0, %s184
  $region4: #{_lambda_.7} parent=0 // loop_header_branch
    %16 = sbr.rel (%p14) target = $region8
  $region5: #{_lambda_.7} parent=0 // loop_body
    %s18 = ssub.s32 %s13, 1
    %s19 = ssub.s32 %s13, 2
    %s20 = sadd.s32 %s13, 1
    %s21 = ssub.s32 %s13, %s20
    %p22 = scmp.eq.s32.totalorder %s21, 0
    %s24 = sadd.s32 %s23, 1
    %s25 = scalar_select %p22, %s23, %s24
    %p28 = pneg %p22
    %p29 = scmp.eq.s32.totalorder %s13, 1
    %p30 = por %p28, %p29
    %p31 = scmp.ne.s32.totalorder %s23, %s26
    %p32 = scmp.eq.s32.totalorder %s13, 0
    %p33 = por %p31, %p32
    %p34 = scmp.ne.s32.totalorder %s23, %s26
    %p35 = scmp.eq.s32.totalorder %s18, 1
    %p36 = por %p34, %p35
    %p37 = scmp.ne.s32.totalorder %s26, %s27
    %p38 = scmp.eq.s32.totalorder %s18, 0
    %p39 = por %p37, %p38
    %p40 = scmp.ne.s32.totalorder %s26, %s27
    %p41 = scmp.eq.s32.totalorder %s19, 1
    %p42 = por %p40, %p41
    %p44 = scmp.ne.s32.totalorder %s27, %s43
    %p45 = scmp.eq.s32.totalorder %s19, 0
    %p46 = por %p44, %p45
    %s48 = sadd.s32 %s47, 1
    %p51 = scmp.eq.s32.totalorder %s13, 1
    %p52 = scmp.ne.s32.totalorder %s47, %s49
    %p53 = scmp.eq.s32.totalorder %s13, 0
    %p54 = por %p52, %p53
    %p55 = scmp.ne.s32.totalorder %s47, %s49
    %p56 = scmp.eq.s32.totalorder %s18, 1
    %p57 = por %p55, %p56
    %p58 = scmp.ne.s32.totalorder %s49, %s50
    %p59 = scmp.eq.s32.totalorder %s18, 0
    %p60 = por %p58, %p59
    %p61 = scmp.ne.s32.totalorder %s49, %s50
    %p62 = scmp.eq.s32.totalorder %s19, 1
    %p63 = por %p61, %p62
    %p65 = scmp.ne.s32.totalorder %s50, %s64
    %p66 = scmp.eq.s32.totalorder %s19, 0
    %p67 = por %p65, %p66
    %s69 = sadd.s32 %s68, 1
    %p72 = scmp.eq.s32.totalorder %s13, 1
    %p73 = scmp.ne.s32.totalorder %s68, %s70
    %p74 = scmp.eq.s32.totalorder %s13, 0
    %p75 = por %p73, %p74
    %p76 = scmp.ne.s32.totalorder %s68, %s70
    %p77 = scmp.eq.s32.totalorder %s18, 1
    %p78 = por %p76, %p77
    %p79 = scmp.ne.s32.totalorder %s70, %s71
    %p80 = scmp.eq.s32.totalorder %s18, 0
    %p81 = por %p79, %p80
    %p82 = scmp.ne.s32.totalorder %s70, %s71
    %p83 = scmp.eq.s32.totalorder %s19, 1
    %p84 = por %p82, %p83
    %p86 = scmp.ne.s32.totalorder %s71, %s85
    %p87 = scmp.eq.s32.totalorder %s19, 0
    %p88 = por %p86, %p87
    %s90 = sadd.s32 %s89, 1
    %p93 = scmp.eq.s32.totalorder %s13, 1
    %p94 = scmp.ne.s32.totalorder %s89, %s91
    %p95 = scmp.eq.s32.totalorder %s13, 0
    %p96 = por %p94, %p95
    %p97 = scmp.ne.s32.totalorder %s89, %s91
    %p98 = scmp.eq.s32.totalorder %s18, 1
    %p99 = por %p97, %p98
    %p100 = scmp.ne.s32.totalorder %s91, %s92
    %p101 = scmp.eq.s32.totalorder %s18, 0
    %p102 = por %p100, %p101
    %p103 = scmp.ne.s32.totalorder %s91, %s92
    %p104 = scmp.eq.s32.totalorder %s19, 1
    %p105 = por %p103, %p104
    %p107 = scmp.ne.s32.totalorder %s92, %s106
    %p108 = scmp.eq.s32.totalorder %s19, 0
    %p109 = por %p107, %p108
    %s111 = sadd.s32 %s110, 1
    %p114 = scmp.eq.s32.totalorder %s13, 1
    %p115 = scmp.ne.s32.totalorder %s110, %s112
    %p116 = scmp.eq.s32.totalorder %s13, 0
    %p117 = por %p115, %p116
    %p118 = scmp.ne.s32.totalorder %s110, %s112
    %p119 = scmp.eq.s32.totalorder %s18, 1
    %p120 = por %p118, %p119
    %p121 = scmp.ne.s32.totalorder %s112, %s113
    %p122 = scmp.eq.s32.totalorder %s18, 0
    %p123 = por %p121, %p122
    %p124 = scmp.ne.s32.totalorder %s112, %s113
    %p125 = scmp.eq.s32.totalorder %s19, 1
    %p126 = por %p124, %p125
    %p128 = scmp.ne.s32.totalorder %s113, %s127
    %p129 = scmp.eq.s32.totalorder %s19, 0
    %p130 = por %p128, %p129
    %s132 = sadd.s32 %s131, 1
    %p135 = scmp.eq.s32.totalorder %s13, 1
    %p136 = scmp.ne.s32.totalorder %s131, %s133
    %p137 = scmp.eq.s32.totalorder %s13, 0
    %p138 = por %p136, %p137
    %p139 = scmp.ne.s32.totalorder %s131, %s133
    %p140 = scmp.eq.s32.totalorder %s18, 1
    %p141 = por %p139, %p140
    %p142 = scmp.ne.s32.totalorder %s133, %s134
    %p143 = scmp.eq.s32.totalorder %s18, 0
    %p144 = por %p142, %p143
    %p145 = scmp.ne.s32.totalorder %s133, %s134
    %p146 = scmp.eq.s32.totalorder %s19, 1
    %p147 = por %p145, %p146
    %p149 = scmp.ne.s32.totalorder %s134, %s148
    %p150 = scmp.eq.s32.totalorder %s19, 0
    %p151 = por %p149, %p150
    %s152 = ssub.s32 %s13, %s20
    %p153 = scmp.eq.s32.totalorder %s152, 0
    %s155 = sadd.s32 %s154, 1
    %s156 = scalar_select %p153, %s154, %s155
    %p159 = pneg %p153
    %p160 = scmp.eq.s32.totalorder %s13, 1
    %p161 = por %p159, %p160
    %p162 = scmp.ne.s32.totalorder %s154, %s157
    %p163 = scmp.eq.s32.totalorder %s13, 0
    %p164 = por %p162, %p163
    %p165 = scmp.ne.s32.totalorder %s154, %s157
    %p166 = scmp.eq.s32.totalorder %s18, 1
    %p167 = por %p165, %p166
    %p168 = scmp.ne.s32.totalorder %s157, %s158
    %p169 = scmp.eq.s32.totalorder %s18, 0
    %p170 = por %p168, %p169
    %p171 = scmp.ne.s32.totalorder %s157, %s158
    %p172 = scmp.eq.s32.totalorder %s19, 1
    %p173 = por %p171, %p172
    %p175 = scmp.ne.s32.totalorder %s158, %s174
    %p176 = scmp.eq.s32.totalorder %s19, 0
    %p177 = por %p175, %p176
    %s178 = ssub.s32 %s13, %s20
    %p179 = scmp.eq.s32.totalorder %s178, 0
    %s181 = sadd.s32 %s180, 1
    %s182 = scalar_select %p179, %s180, %s181
    %p185 = pneg %p179
    %p186 = scmp.eq.s32.totalorder %s13, 1
    %p187 = por %p185, %p186
    %p188 = scmp.ne.s32.totalorder %s180, %s183
    %p189 = scmp.eq.s32.totalorder %s13, 0
    %p190 = por %p188, %p189
    %p191 = scmp.ne.s32.totalorder %s180, %s183
    %p192 = scmp.eq.s32.totalorder %s18, 1
    %p193 = por %p191, %p192
    %p194 = scmp.ne.s32.totalorder %s183, %s184
    %p195 = scmp.eq.s32.totalorder %s18, 0
    %p196 = por %p194, %p195
    %p197 = scmp.ne.s32.totalorder %s183, %s184
    %p198 = scmp.eq.s32.totalorder %s19, 1
    %p199 = por %p197, %p198
    %p201 = scmp.ne.s32.totalorder %s184, %s200
    %p202 = scmp.eq.s32.totalorder %s19, 0
    %p203 = por %p201, %p202
    %p204 = scmp.le.s32.totalorder 1, %s13
    %p205 = scmp.lt.s32.totalorder %s13, 3
    %p206 = pnand %p204, %p205
    %p207 = pneg %p206
    // Predicated region
    $region9: #{_lambda_.7} parent=5 // pred_check
      _
    $region10: #{_lambda_.7} parent=5 // pred_check_branch
      %209 = sbr.rel (%p206) target = $region12
    $region11: #{_lambda_.7} parent=5 // pred_region
      %s210 = ssub.s32 %s13, 1
      // Predicated region
      $region13: #{_lambda_.7} parent=11 // pred_check
        %p211 = pneg %p60
      $region14: #{_lambda_.7} parent=11 // pred_check_branch
        %213 = sbr.rel (%p211) target = $region16
      $region15: #{_lambda_.7} parent=11 // pred_region
        _
      $region16: #{_lambda_.7} parent=11 // pred_fallthru
        _
      // Predicated region
      $region17: #{_lambda_.7} parent=11 // pred_check
        %p214 = pneg %p81
      $region18: #{_lambda_.7} parent=11 // pred_check_branch
        %216 = sbr.rel (%p214) target = $region20
      $region19: #{_lambda_.7} parent=11 // pred_region
        _
      $region20: #{_lambda_.7} parent=11 // pred_fallthru
        _
      // Predicated region
      $region21: #{_lambda_.7} parent=11 // pred_check
        %p217 = pneg %p102
      $region22: #{_lambda_.7} parent=11 // pred_check_branch
        %219 = sbr.rel (%p217) target = $region24
      $region23: #{_lambda_.7} parent=11 // pred_region
        _
      $region24: #{_lambda_.7} parent=11 // pred_fallthru
        _
      // Predicated region
      $region25: #{_lambda_.7} parent=11 // pred_check
        %p220 = pneg %p123
      $region26: #{_lambda_.7} parent=11 // pred_check_branch
        %222 = sbr.rel (%p220) target = $region28
      $region27: #{_lambda_.7} parent=11 // pred_region
        _
      $region28: #{_lambda_.7} parent=11 // pred_fallthru
        _
      // Predicated region
      $region29: #{_lambda_.7} parent=11 // pred_check
        %p223 = pneg %p144
      $region30: #{_lambda_.7} parent=11 // pred_check_branch
        %225 = sbr.rel (%p223) target = $region32
      $region31: #{_lambda_.7} parent=11 // pred_region
        _
      $region32: #{_lambda_.7} parent=11 // pred_fallthru
        _
    $region12: #{_lambda_.7} parent=5 // pred_fallthru
      _
    %p226 = scmp.lt.s32.totalorder %s13, 2
    // Predicated region
    $region33: #{_lambda_.7} parent=5 // pred_check
      %p227 = pneg %p226
    $region34: #{_lambda_.7} parent=5 // pred_check_branch
      %229 = sbr.rel (%p227) target = $region36
    $region35: #{_lambda_.7} parent=5 // pred_region
      // Predicated region
      $region37: #{_lambda_.7} parent=35 // pred_check
        %p230 = pneg %p33
      $region38: #{_lambda_.7} parent=35 // pred_check_branch
        %232 = sbr.rel (%p230) target = $region40
      $region39: #{_lambda_.7} parent=35 // pred_region
        %p233 = scmp.lt.s32.totalorder %s13, 1
        %s234 = scalar_select %p233, %s13, 1
        %s235 = smul.addr %s234, 20
        %s236 = smul.addr %s235, 4
        %s237 = scalar_lea.vmem %s0, %s236
      $region40: #{_lambda_.7} parent=35 // pred_fallthru
        _
      // Predicated region
      $region41: #{_lambda_.7} parent=35 // pred_check
        %p238 = pneg %p164
      $region42: #{_lambda_.7} parent=35 // pred_check_branch
        %240 = sbr.rel (%p238) target = $region44
      $region43: #{_lambda_.7} parent=35 // pred_region
        %p241 = scmp.lt.s32.totalorder %s13, 1
        %s242 = scalar_select %p241, %s13, 1
        %s243 = smul.addr %s242, 8
        %s244 = smul.addr %s243, 4
        %s245 = scalar_lea.vmem %s6, %s244
      $region44: #{_lambda_.7} parent=35 // pred_fallthru
        _
    $region36: #{_lambda_.7} parent=5 // pred_fallthru
      _
    %p246 = scmp.le.s32.totalorder 1, %s13
    %p247 = scmp.lt.s32.totalorder %s13, 3
    %p248 = pnand %p246, %p247
    %p249 = pneg %p248
    // Predicated region
    $region45: #{_lambda_.7} parent=5 // pred_check
      _
    $region46: #{_lambda_.7} parent=5 // pred_check_branch
      %251 = sbr.rel (%p248) target = $region48
    $region47: #{_lambda_.7} parent=5 // pred_region
      %s252 = ssub.s32 %s13, 1
      %p253 = scmp.lt.s32.totalorder %s18, 1
      %s254 = scalar_select %p253, %s18, 1
      %s255 = smul.addr %s254, 20
      %s256 = smul.addr %s255, 4
      %s257 = scalar_lea.vmem %s0, %s256
      %p258 = pneg %p39
      %p259 = pneg %p36
      %p260 = pneg %p60
      %p261 = pneg %p57
      %p262 = pneg %p81
      %p263 = pneg %p78
      %p264 = pneg %p102
      %p265 = pneg %p99
      %p266 = pneg %p123
      %p267 = pneg %p120
      %p268 = pneg %p144
      %p269 = pneg %p141
      %p270 = scmp.lt.s32.totalorder %s18, 1
      %s271 = scalar_select %p270, %s18, 1
      %s272 = smul.addr %s271, 8
      %s273 = smul.addr %s272, 4
      %s274 = scalar_lea.vmem %s6, %s273
      %p275 = pneg %p170
      %p276 = pneg %p167
      %p277 = pneg %p196
      %p278 = pneg %p193
      %p279 = scmp.lt.s32.totalorder %s18, 1
      %s280 = scalar_select %p279, %s18, 1
      %s281 = smul.addr %s280, 8
      %s282 = smul.addr %s281, 4
      %s283 = scalar_lea.vmem %s7, %s282
      %p284 = scmp.lt.s32.totalorder %s18, 1
      %s285 = scalar_select %p284, %s18, 1
      %s286 = smul.addr %s285, 20
      %s287 = smul.addr %s286, 4
      %s288 = scalar_lea.vmem %s0, %s287
      %p289 = scmp.lt.s32.totalorder %s18, 1
      %s290 = scalar_select %p289, %s18, 1
      %s291 = smul.addr %s290, 8
      %s292 = smul.addr %s291, 4
      %s293 = scalar_lea.vmem %s6, %s292
      %p294 = scmp.lt.s32.totalorder %s18, 1
      %s295 = scalar_select %p294, %s18, 1
      %s296 = smul.addr %s295, 8
      %s297 = smul.addr %s296, 4
      %s298 = scalar_lea.vmem %s7, %s297
      %v300 = vld [vmem:[%s288] sm:$0xf]
      %v301 = vld [vmem:[%s288 + $0x8] sm:$0xf]
      %v302 = vld [vmem:[%s288 + $0x10] sm:$0xf]
      %v303 = vld [vmem:[%s288 + $0x18] sm:$0xf]
      %v304 = vld [vmem:[%s288 + $0x20] sm:$0xf]
      %v305 = vld [vmem:[%s288 + $0x28] sm:$0xf]
      %v306 = vld [vmem:[%s288 + $0x30] sm:$0xf]
      %v307 = vld [vmem:[%s288 + $0x38] sm:$0xf]
      %v308 = vld [vmem:[%s1] sm:$0xf]
      %v309 = vld [vmem:[%s1 + $0x4] sm:$0xf]
      %v310 = vld [vmem:[%s1 + $0x8] sm:$0xf]
      %v311 = vld [vmem:[%s1 + $0xc] sm:$0xf]
      %v312 = vld [vmem:[%s1 + $0x10] sm:$0xf]
      %v313 = vld [vmem:[%s1 + $0x14] sm:$0xf]
      %v314 = vld [vmem:[%s1 + $0x18] sm:$0xf]
      %v315 = vld [vmem:[%s1 + $0x1c] sm:$0xf]
      %v316 = vld [vmem:[%s288 + $0x4] sm:$0x1]
      %v317 = vld [vmem:[%s288 + $0xc] sm:$0x1]
      %v318 = vld [vmem:[%s288 + $0x14] sm:$0x1]
      %v319 = vld [vmem:[%s288 + $0x1c] sm:$0x1]
      %v320 = vld [vmem:[%s288 + $0x24] sm:$0x1]
      %v321 = vld [vmem:[%s288 + $0x2c] sm:$0x1]
      %v322 = vld [vmem:[%s288 + $0x34] sm:$0x1]
      %v323 = vld [vmem:[%s288 + $0x3c] sm:$0x1]
      %vm324 = vsmask.f32 3328
      %vm325 = vsmask.f32 7440
      %vm326 = vmor %vm324, %vm325
      %v328 = vshrl.u32 %v300, 16
      %v330 = vrot.slane %v328, 4
      %v331 = vshll.u32 %v300, 16
      %v333 = vrot.slane %v331, 5
      %v334 = vor.u32 %v330, %v333
      %v335 = vrot.slane %v334, 4
      %v337 = vshll.u32 %v316, 16
      %v339 = vrot.slane %v337, 5
      %v340 = vsel %vm326, %v335, %v339
      %v342 = vshrl.u32 %v301, 16
      %v344 = vrot.slane %v342, 4
      %v345 = vshll.u32 %v301, 16
      %v347 = vrot.slane %v345, 5
      %v348 = vor.u32 %v344, %v347
      %v349 = vrot.slane %v348, 4
      %v351 = vshll.u32 %v317, 16
      %v353 = vrot.slane %v351, 5
      %v354 = vsel %vm326, %v349, %v353
      %v356 = vshrl.u32 %v302, 16
      %v358 = vrot.slane %v356, 4
      %v359 = vshll.u32 %v302, 16
      %v361 = vrot.slane %v359, 5
      %v362 = vor.u32 %v358, %v361
      %v363 = vrot.slane %v362, 4
      %v365 = vshll.u32 %v318, 16
      %v367 = vrot.slane %v365, 5
      %v368 = vsel %vm326, %v363, %v367
      %v370 = vshrl.u32 %v303, 16
      %v372 = vrot.slane %v370, 4
      %v373 = vshll.u32 %v303, 16
      %v375 = vrot.slane %v373, 5
      %v376 = vor.u32 %v372, %v375
      %v377 = vrot.slane %v376, 4
      %v379 = vshll.u32 %v319, 16
      %v381 = vrot.slane %v379, 5
      %v382 = vsel %vm326, %v377, %v381
      %v384 = vshrl.u32 %v304, 16
      %v386 = vrot.slane %v384, 4
      %v387 = vshll.u32 %v304, 16
      %v389 = vrot.slane %v387, 5
      %v390 = vor.u32 %v386, %v389
      %v391 = vrot.slane %v390, 4
      %v393 = vshll.u32 %v320, 16
      %v395 = vrot.slane %v393, 5
      %v396 = vsel %vm326, %v391, %v395
      %v398 = vshrl.u32 %v305, 16
      %v400 = vrot.slane %v398, 4
      %v401 = vshll.u32 %v305, 16
      %v403 = vrot.slane %v401, 5
      %v404 = vor.u32 %v400, %v403
      %v405 = vrot.slane %v404, 4
      %v407 = vshll.u32 %v321, 16
      %v409 = vrot.slane %v407, 5
      %v410 = vsel %vm326, %v405, %v409
      %v412 = vshrl.u32 %v306, 16
      %v414 = vrot.slane %v412, 4
      %v415 = vshll.u32 %v306, 16
      %v417 = vrot.slane %v415, 5
      %v418 = vor.u32 %v414, %v417
      %v419 = vrot.slane %v418, 4
      %v421 = vshll.u32 %v322, 16
      %v423 = vrot.slane %v421, 5
      %v424 = vsel %vm326, %v419, %v423
      %v426 = vshrl.u32 %v307, 16
      %v428 = vrot.slane %v426, 4
      %v429 = vshll.u32 %v307, 16
      %v431 = vrot.slane %v429, 5
      %v432 = vor.u32 %v428, %v431
      %v433 = vrot.slane %v432, 4
      %v435 = vshll.u32 %v323, 16
      %v437 = vrot.slane %v435, 5
      %v438 = vsel %vm326, %v433, %v437
      %v439 = vld [vmem:[%s1 + $0x20] sm:$0xf]
      %v440 = vld [vmem:[%s1 + $0x24] sm:$0xf]
      %v441 = vld [vmem:[%s1 + $0x28] sm:$0xf]
      %v442 = vld [vmem:[%s1 + $0x2c] sm:$0xf]
      %v443 = vld [vmem:[%s1 + $0x30] sm:$0xf]
      %v444 = vld [vmem:[%s1 + $0x34] sm:$0xf]
      %v445 = vld [vmem:[%s1 + $0x38] sm:$0xf]
      %v446 = vld [vmem:[%s1 + $0x3c] sm:$0xf]
      %v447 = vunpack.c.l.b16 %v340
      %v448 = vunpack.c.l.b16 %v354
      %v449 = vunpack.c.l.b16 %v368
      %v450 = vunpack.c.l.b16 %v382
      %v451 = vunpack.c.l.b16 %v396
      %v452 = vunpack.c.l.b16 %v410
      %v453 = vunpack.c.l.b16 %v424
      %v454 = vunpack.c.l.b16 %v438
      %v455 = vpack.c.b16 %v448, %v447
      %v456 = vpack.c.b16 %v450, %v449
      %v457 = vpack.c.b16 %v452, %v451
      %v458 = vpack.c.b16 %v454, %v453
      %v467 = vunpack.c.l.b16 %v439
      %v468 = vunpack.c.l.b16 %v440
      %v469 = vunpack.c.l.b16 %v441
      %v470 = vunpack.c.l.b16 %v442
      %v471 = vunpack.c.l.b16 %v443
      %v472 = vunpack.c.l.b16 %v444
      %v473 = vunpack.c.l.b16 %v445
      %v474 = vunpack.c.l.b16 %v446
      %v475 = vpack.c.b16 %v468, %v467
      %v476 = vpack.c.b16 %v470, %v469
      %v477 = vpack.c.b16 %v472, %v471
      %v478 = vpack.c.b16 %v474, %v473
      %vm483 = vcmask 523264
      %v485 = vsel %vm483, %v455, 0
      %v488 = vsel %vm483, %v456, 0
      %v491 = vsel %vm483, %v457, 0
      %v494 = vsel %vm483, %v458, 0
      %496 = vmatprep.subr.bf16.mxu0 0
      %497 = vmatpush1.bf16.msra.mxu0 %v475
      %498 = vmatprep.subr.bf16.mxu0 0
      %499 = vmatpush1.bf16.msra.mxu0 %v476
      %500 = vmatprep.subr.bf16.mxu0 0
      %501 = vmatpush1.bf16.msra.mxu0 %v477
      %502 = vmatprep.subr.bf16.mxu0 0
      %503 = vmatpush1.bf16.msra.mxu0 %v478
      %504 = vmatprep.subr.bf16.mxu0 0
      %505 = vmatpush1.bf16.msra.mxu0 0
      %506 = vmatprep.subr.bf16.mxu0 0
      %507 = vmatpush1.bf16.msra.mxu0 0
      %508 = vmatprep.subr.bf16.mxu0 0
      %509 = vmatpush1.bf16.msra.mxu0 0
      %510 = vmatprep.subr.bf16.mxu0 0
      %511 = vmatpush1.bf16.msra.mxu0 0
      %512 = vmatprep.subr.bf16.mxu0 0
      %513 = vmatpush1.bf16.msra.mxu0 0
      %514 = vmatprep.subr.bf16.mxu0 0
      %515 = vmatpush1.bf16.msra.mxu0 0
      %516 = vmatprep.subr.bf16.mxu0 0
      %517 = vmatpush1.bf16.msra.mxu0 0
      %518 = vmatprep.subr.bf16.mxu0 0
      %519 = vmatpush1.bf16.msra.mxu0 0
      %520 = vmatprep.subr.bf16.mxu0 0
      %521 = vmatpush1.bf16.msra.mxu0 0
      %522 = vmatprep.subr.bf16.mxu0 0
      %523 = vmatpush1.bf16.msra.mxu0 0
      %524 = vmatprep.subr.bf16.mxu0 0
      %525 = vmatpush1.bf16.msra.mxu0 0
      %526 = vmatprep.subr.bf16.mxu0 0
      %527 = vmatpush1.bf16.msra.mxu0 0
      %528 = vmatprep.mubr.bf16.mxu0 0
      %529 = vmatmul.mubr.bf16.gmra.mrb[0].mxu0 %v485
      %v530 = vpop.f32.mrb[0].mxu0
      %v531 = vadd.f32 0.0, %v530
      %v532 = vpop.f32.mrb[0].mxu0
      %v533 = vpop.f32.mrb[0].mxu0
      %v534 = vadd.f32 0.0, %v533
      %v535 = vpop.f32.mrb[0].mxu0
      %536 = vmatprep.mubr.bf16.mxu0 0
      %537 = vmatmul.mubr.bf16.gmra.mrb[0].mxu0 %v488
      %v538 = vpop.f32.mrb[0].mxu0
      %v539 = vadd.f32 0.0, %v538
      %v540 = vpop.f32.mrb[0].mxu0
      %v541 = vpop.f32.mrb[0].mxu0
      %v542 = vadd.f32 0.0, %v541
      %v543 = vpop.f32.mrb[0].mxu0
      %544 = vmatprep.mubr.bf16.mxu0 0
      %545 = vmatmul.mubr.bf16.gmra.mrb[0].mxu0 %v491
      %v546 = vpop.f32.mrb[0].mxu0
      %v547 = vadd.f32 0.0, %v546
      %v548 = vpop.f32.mrb[0].mxu0
      %v549 = vpop.f32.mrb[0].mxu0
      %v550 = vadd.f32 0.0, %v549
      %v551 = vpop.f32.mrb[0].mxu0
      %552 = vmatprep.mubr.bf16.mxu0 0
      %553 = vmatmul.mubr.bf16.gmra.mrb[0].mxu0 %v494
      %v554 = vpop.f32.mrb[0].mxu0
      %v555 = vadd.f32 0.0, %v554
      %v556 = vpop.f32.mrb[0].mxu0
      %v557 = vpop.f32.mrb[0].mxu0
      %v558 = vadd.f32 0.0, %v557
      %v559 = vpop.f32.mrb[0].mxu0
      %560 = vdwg.mxu0
      %v569 = vunpack.c.l.b16 %v300
      %v570 = vunpack.c.l.b16 %v301
      %v571 = vunpack.c.l.b16 %v302
      %v572 = vunpack.c.l.b16 %v303
      %v573 = vunpack.c.l.b16 %v304
      %v574 = vunpack.c.l.b16 %v305
      %v575 = vunpack.c.l.b16 %v306
      %v576 = vunpack.c.l.b16 %v307
      %v577 = vpack.c.b16 %v570, %v569
      %v578 = vpack.c.b16 %v572, %v571
      %v579 = vpack.c.b16 %v574, %v573
      %v580 = vpack.c.b16 %v576, %v575
      %v589 = vunpack.c.l.b16 %v308
      %v590 = vunpack.c.l.b16 %v309
      %v591 = vunpack.c.l.b16 %v310
      %v592 = vunpack.c.l.b16 %v311
      %v593 = vunpack.c.l.b16 %v312
      %v594 = vunpack.c.l.b16 %v313
      %v595 = vunpack.c.l.b16 %v314
      %v596 = vunpack.c.l.b16 %v315
      %v597 = vpack.c.b16 %v590, %v589
      %v598 = vpack.c.b16 %v592, %v591
      %v599 = vpack.c.b16 %v594, %v593
      %v600 = vpack.c.b16 %v596, %v595
      %v606 = vsel %vm483, %v577, 0
      %v609 = vsel %vm483, %v578, 0
      %v612 = vsel %vm483, %v579, 0
      %v615 = vsel %vm483, %v580, 0
      %617 = vmatprep.subr.bf16.mxu0 0
      %618 = vmatpush1.bf16.msra.mxu0 %v597
      %619 = vmatprep.subr.bf16.mxu0 0
      %620 = vmatpush1.bf16.msra.mxu0 %v598
      %621 = vmatprep.subr.bf16.mxu0 0
      %622 = vmatpush1.bf16.msra.mxu0 %v599
      %623 = vmatprep.subr.bf16.mxu0 0
      %624 = vmatpush1.bf16.msra.mxu0 %v600
      %625 = vmatprep.subr.bf16.mxu0 0
      %626 = vmatpush1.bf16.msra.mxu0 0
      %627 = vmatprep.subr.bf16.mxu0 0
      %628 = vmatpush1.bf16.msra.mxu0 0
      %629 = vmatprep.subr.bf16.mxu0 0
      %630 = vmatpush1.bf16.msra.mxu0 0
      %631 = vmatprep.subr.bf16.mxu0 0
      %632 = vmatpush1.bf16.msra.mxu0 0
      %633 = vmatprep.subr.bf16.mxu0 0
      %634 = vmatpush1.bf16.msra.mxu0 0
      %635 = vmatprep.subr.bf16.mxu0 0
      %636 = vmatpush1.bf16.msra.mxu0 0
      %637 = vmatprep.subr.bf16.mxu0 0
      %638 = vmatpush1.bf16.msra.mxu0 0
      %639 = vmatprep.subr.bf16.mxu0 0
      %640 = vmatpush1.bf16.msra.mxu0 0
      %641 = vmatprep.subr.bf16.mxu0 0
      %642 = vmatpush1.bf16.msra.mxu0 0
      %643 = vmatprep.subr.bf16.mxu0 0
      %644 = vmatpush1.bf16.msra.mxu0 0
      %645 = vmatprep.subr.bf16.mxu0 0
      %646 = vmatpush1.bf16.msra.mxu0 0
      %647 = vmatprep.subr.bf16.mxu0 0
      %648 = vmatpush1.bf16.msra.mxu0 0
      %649 = vmatprep.mubr.bf16.mxu0 0
      %650 = vmatmul.mubr.bf16.gmra.mrb[0].mxu0 %v606
      %v651 = vpop.f32.mrb[0].mxu0
      %v652 = vadd.f32 %v531, %v651
      %v653 = vpop.f32.mrb[0].mxu0
      %v654 = vpop.f32.mrb[0].mxu0
      %v655 = vadd.f32 %v534, %v654
      %v656 = vpop.f32.mrb[0].mxu0
      %657 = vmatprep.mubr.bf16.mxu0 0
      %658 = vmatmul.mubr.bf16.gmra.mrb[0].mxu0 %v609
      %v659 = vpop.f32.mrb[0].mxu0
      %v660 = vadd.f32 %v539, %v659
      %v661 = vpop.f32.mrb[0].mxu0
      %v662 = vpop.f32.mrb[0].mxu0
      %v663 = vadd.f32 %v542, %v662
      %v664 = vpop.f32.mrb[0].mxu0
      %665 = vmatprep.mubr.bf16.mxu0 0
      %666 = vmatmul.mubr.bf16.gmra.mrb[0].mxu0 %v612
      %v667 = vpop.f32.mrb[0].mxu0
      %v668 = vadd.f32 %v547, %v667
      %v669 = vpop.f32.mrb[0].mxu0
      %v670 = vpop.f32.mrb[0].mxu0
      %v671 = vadd.f32 %v550, %v670
      %v672 = vpop.f32.mrb[0].mxu0
      %673 = vmatprep.mubr.bf16.mxu0 0
      %674 = vmatmul.mubr.bf16.gmra.mrb[0].mxu0 %v615
      %v675 = vpop.f32.mrb[0].mxu0
      %v676 = vadd.f32 %v555, %v675
      %v677 = vpop.f32.mrb[0].mxu0
      %v678 = vpop.f32.mrb[0].mxu0
      %v679 = vadd.f32 %v558, %v678
      %v680 = vpop.f32.mrb[0].mxu0
      %681 = vdwg.mxu0
      %v682 = vld [vmem:[%s288] sm:$0xe]
      %v683 = vld [vmem:[%s288 + $0x8] sm:$0xe]
      %v684 = vld [vmem:[%s288 + $0x10] sm:$0xe]
      %v685 = vld [vmem:[%s288 + $0x18] sm:$0xe]
      %v686 = vld [vmem:[%s288 + $0x20] sm:$0xe]
      %v687 = vld [vmem:[%s288 + $0x28] sm:$0xe]
      %v688 = vld [vmem:[%s288 + $0x30] sm:$0xe]
      %v689 = vld [vmem:[%s288 + $0x38] sm:$0xe]
      %vm706 = vcmask 1042432
      %vm707 = vcmask 1046532
      %vm708 = vmor %vm706, %vm707
      %v709 = vrot.slane %v682, 5
      %v710 = vrot.slane %v709, 4
      %v711 = vrot.slane %v316, 5
      %v712 = vsel %vm708, %v710, %v711
      %v713 = vrot.slane %v683, 5
      %v714 = vrot.slane %v713, 4
      %v715 = vrot.slane %v317, 5
      %v716 = vsel %vm708, %v714, %v715
      %v717 = vrot.slane %v684, 5
      %v718 = vrot.slane %v717, 4
      %v719 = vrot.slane %v318, 5
      %v720 = vsel %vm708, %v718, %v719
      %v721 = vrot.slane %v685, 5
      %v722 = vrot.slane %v721, 4
      %v723 = vrot.slane %v319, 5
      %v724 = vsel %vm708, %v722, %v723
      %v725 = vrot.slane %v686, 5
      %v726 = vrot.slane %v725, 4
      %v727 = vrot.slane %v320, 5
      %v728 = vsel %vm708, %v726, %v727
      %v729 = vrot.slane %v687, 5
      %v730 = vrot.slane %v729, 4
      %v731 = vrot.slane %v321, 5
      %v732 = vsel %vm708, %v730, %v731
      %v733 = vrot.slane %v688, 5
      %v734 = vrot.slane %v733, 4
      %v735 = vrot.slane %v322, 5
      %v736 = vsel %vm708, %v734, %v735
      %v737 = vrot.slane %v689, 5
      %v738 = vrot.slane %v737, 4
      %v739 = vrot.slane %v323, 5
      %v740 = vsel %vm708, %v738, %v739
      %v741 = vld [vmem:[%s1 + $0x40] sm:$0xf]
      %v742 = vld [vmem:[%s1 + $0x44] sm:$0xf]
      %v743 = vld [vmem:[%s1 + $0x48] sm:$0xf]
      %v744 = vld [vmem:[%s1 + $0x4c] sm:$0xf]
      %v745 = vld [vmem:[%s1 + $0x50] sm:$0xf]
      %v746 = vld [vmem:[%s1 + $0x54] sm:$0xf]
      %v747 = vld [vmem:[%s1 + $0x58] sm:$0xf]
      %v748 = vld [vmem:[%s1 + $0x5c] sm:$0xf]
      %v749 = vunpack.c.l.b16 %v712
      %v750 = vunpack.c.l.b16 %v716
      %v751 = vunpack.c.l.b16 %v720
      %v752 = vunpack.c.l.b16 %v724
      %v753 = vunpack.c.l.b16 %v728
      %v754 = vunpack.c.l.b16 %v732
      %v755 = vunpack.c.l.b16 %v736
      %v756 = vunpack.c.l.b16 %v740
      %v757 = vpack.c.b16 %v750, %v749
      %v758 = vpack.c.b16 %v752, %v751
      %v759 = vpack.c.b16 %v754, %v753
      %v760 = vpack.c.b16 %v756, %v755
      %v769 = vunpack.c.l.b16 %v741
      %v770 = vunpack.c.l.b16 %v742
      %v771 = vunpack.c.l.b16 %v743
      %v772 = vunpack.c.l.b16 %v744
      %v773 = vunpack.c.l.b16 %v745
      %v774 = vunpack.c.l.b16 %v746
      %v775 = vunpack.c.l.b16 %v747
      %v776 = vunpack.c.l.b16 %v748
      %v777 = vpack.c.b16 %v770, %v769
      %v778 = vpack.c.b16 %v772, %v771
      %v779 = vpack.c.b16 %v774, %v773
      %v780 = vpack.c.b16 %v776, %v775
      %v786 = vsel %vm483, %v757, 0
      %v789 = vsel %vm483, %v758, 0
      %v792 = vsel %vm483, %v759, 0
      %v795 = vsel %vm483, %v760, 0
      %797 = vmatprep.subr.bf16.mxu0 0
      %798 = vmatpush1.bf16.msra.mxu0 %v777
      %799 = vmatprep.subr.bf16.mxu0 0
      %800 = vmatpush1.bf16.msra.mxu0 %v778
      %801 = vmatprep.subr.bf16.mxu0 0
      %802 = vmatpush1.bf16.msra.mxu0 %v779
      %803 = vmatprep.subr.bf16.mxu0 0
      %804 = vmatpush1.bf16.msra.mxu0 %v780
      %805 = vmatprep.subr.bf16.mxu0 0
      %806 = vmatpush1.bf16.msra.mxu0 0
      %807 = vmatprep.subr.bf16.mxu0 0
      %808 = vmatpush1.bf16.msra.mxu0 0
      %809 = vmatprep.subr.bf16.mxu0 0
      %810 = vmatpush1.bf16.msra.mxu0 0
      %811 = vmatprep.subr.bf16.mxu0 0
      %812 = vmatpush1.bf16.msra.mxu0 0
      %813 = vmatprep.subr.bf16.mxu0 0
      %814 = vmatpush1.bf16.msra.mxu0 0
      %815 = vmatprep.subr.bf16.mxu0 0
      %816 = vmatpush1.bf16.msra.mxu0 0
      %817 = vmatprep.subr.bf16.mxu0 0
      %818 = vmatpush1.bf16.msra.mxu0 0
      %819 = vmatprep.subr.bf16.mxu0 0
      %820 = vmatpush1.bf16.msra.mxu0 0
      %821 = vmatprep.subr.bf16.mxu0 0
      %822 = vmatpush1.bf16.msra.mxu0 0
      %823 = vmatprep.subr.bf16.mxu0 0
      %824 = vmatpush1.bf16.msra.mxu0 0
      %825 = vmatprep.subr.bf16.mxu0 0
      %826 = vmatpush1.bf16.msra.mxu0 0
      %827 = vmatprep.subr.bf16.mxu0 0
      %828 = vmatpush1.bf16.msra.mxu0 0
      %829 = vmatprep.mubr.bf16.mxu0 0
      %830 = vmatmul.mubr.bf16.gmra.mrb[0].mxu0 %v786
      %v831 = vpop.f32.mrb[0].mxu0
      %v832 = vadd.f32 0.0, %v831
      %v833 = vpop.f32.mrb[0].mxu0
      %v834 = vpop.f32.mrb[0].mxu0
      %v835 = vadd.f32 0.0, %v834
      %v836 = vpop.f32.mrb[0].mxu0
      %837 = vmatprep.mubr.bf16.mxu0 0
      %838 = vmatmul.mubr.bf16.gmra.mrb[0].mxu0 %v789
      %v839 = vpop.f32.mrb[0].mxu0
      %v840 = vadd.f32 0.0, %v839
      %v841 = vpop.f32.mrb[0].mxu0
      %v842 = vpop.f32.mrb[0].mxu0
      %v843 = vadd.f32 0.0, %v842
      %v844 = vpop.f32.mrb[0].mxu0
      %845 = vmatprep.mubr.bf16.mxu0 0
      %846 = vmatmul.mubr.bf16.gmra.mrb[0].mxu0 %v792
      %v847 = vpop.f32.mrb[0].mxu0
      %v848 = vadd.f32 0.0, %v847
      %v849 = vpop.f32.mrb[0].mxu0
      %v850 = vpop.f32.mrb[0].mxu0
      %v851 = vadd.f32 0.0, %v850
      %v852 = vpop.f32.mrb[0].mxu0
      %853 = vmatprep.mubr.bf16.mxu0 0
      %854 = vmatmul.mubr.bf16.gmra.mrb[0].mxu0 %v795
      %v855 = vpop.f32.mrb[0].mxu0
      %v856 = vadd.f32 0.0, %v855
      %v857 = vpop.f32.mrb[0].mxu0
      %v858 = vpop.f32.mrb[0].mxu0
      %v859 = vadd.f32 0.0, %v858
      %v860 = vpop.f32.mrb[0].mxu0
      %861 = vdwg.mxu0
      %v862 = vadd.f32 %v652, %v832
      %v863 = vadd.f32 %v655, %v835
      %v864 = vadd.f32 %v660, %v840
      %v865 = vadd.f32 %v663, %v843
      %v866 = vadd.f32 %v668, %v848
      %v867 = vadd.f32 %v671, %v851
      %v868 = vadd.f32 %v676, %v856
      %v869 = vadd.f32 %v679, %v859
      %s870 = scalar_lea.vmem %s288, 8
      %v871 = vld [vmem:[%s870] sm:$0xf]
      %v872 = vld [vmem:[%s870 + $0x8] sm:$0xf]
      %v873 = vld [vmem:[%s870 + $0x10] sm:$0xf]
      %v874 = vld [vmem:[%s870 + $0x18] sm:$0xf]
      %v875 = vld [vmem:[%s870 + $0x20] sm:$0xf]
      %v876 = vld [vmem:[%s870 + $0x28] sm:$0xf]
      %v877 = vld [vmem:[%s870 + $0x30] sm:$0xf]
      %v878 = vld [vmem:[%s870 + $0x38] sm:$0xf]
      %v879 = vld [vmem:[%s1 + $0x60] sm:$0xf]
      %v880 = vld [vmem:[%s1 + $0x64] sm:$0xf]
      %v881 = vld [vmem:[%s1 + $0x68] sm:$0xf]
      %v882 = vld [vmem:[%s1 + $0x6c] sm:$0xf]
      %v883 = vld [vmem:[%s1 + $0x70] sm:$0xf]
      %v884 = vld [vmem:[%s1 + $0x74] sm:$0xf]
      %v885 = vld [vmem:[%s1 + $0x78] sm:$0xf]
      %v886 = vld [vmem:[%s1 + $0x7c] sm:$0xf]
      %v895 = vunpack.c.l.b16 %v871
      %v896 = vunpack.c.l.b16 %v872
      %v897 = vunpack.c.l.b16 %v873
      %v898 = vunpack.c.l.b16 %v874
      %v899 = vunpack.c.l.b16 %v875
      %v900 = vunpack.c.l.b16 %v876
      %v901 = vunpack.c.l.b16 %v877
      %v902 = vunpack.c.l.b16 %v878
      %v903 = vpack.c.b16 %v896, %v895
      %v904 = vpack.c.b16 %v898, %v897
      %v905 = vpack.c.b16 %v900, %v899
      %v906 = vpack.c.b16 %v902, %v901
      %v915 = vunpack.c.l.b16 %v879
      %v916 = vunpack.c.l.b16 %v880
      %v917 = vunpack.c.l.b16 %v881
      %v918 = vunpack.c.l.b16 %v882
      %v919 = vunpack.c.l.b16 %v883
      %v920 = vunpack.c.l.b16 %v884
      %v921 = vunpack.c.l.b16 %v885
      %v922 = vunpack.c.l.b16 %v886
      %v923 = vpack.c.b16 %v916, %v915
      %v924 = vpack.c.b16 %v918, %v917
      %v925 = vpack.c.b16 %v920, %v919
      %v926 = vpack.c.b16 %v922, %v921
      %v932 = vsel %vm483, %v903, 0
      %v935 = vsel %vm483, %v904, 0
      %v938 = vsel %vm483, %v905, 0
      %v941 = vsel %vm483, %v906, 0
      %943 = vmatprep.subr.bf16.mxu0 0
      %944 = vmatpush1.bf16.msra.mxu0 %v923
      %945 = vmatprep.subr.bf16.mxu0 0
      %946 = vmatpush1.bf16.msra.mxu0 %v924
      %947 = vmatprep.subr.bf16.mxu0 0
      %948 = vmatpush1.bf16.msra.mxu0 %v925
      %949 = vmatprep.subr.bf16.mxu0 0
      %950 = vmatpush1.bf16.msra.mxu0 %v926
      %951 = vmatprep.subr.bf16.mxu0 0
      %952 = vmatpush1.bf16.msra.mxu0 0
      %953 = vmatprep.subr.bf16.mxu0 0
      %954 = vmatpush1.bf16.msra.mxu0 0
      %955 = vmatprep.subr.bf16.mxu0 0
      %956 = vmatpush1.bf16.msra.mxu0 0
      %957 = vmatprep.subr.bf16.mxu0 0
      %958 = vmatpush1.bf16.msra.mxu0 0
      %959 = vmatprep.subr.bf16.mxu0 0
      %960 = vmatpush1.bf16.msra.mxu0 0
      %961 = vmatprep.subr.bf16.mxu0 0
      %962 = vmatpush1.bf16.msra.mxu0 0
      %963 = vmatprep.subr.bf16.mxu0 0
      %964 = vmatpush1.bf16.msra.mxu0 0
      %965 = vmatprep.subr.bf16.mxu0 0
      %966 = vmatpush1.bf16.msra.mxu0 0
      %967 = vmatprep.subr.bf16.mxu0 0
      %968 = vmatpush1.bf16.msra.mxu0 0
      %969 = vmatprep.subr.bf16.mxu0 0
      %970 = vmatpush1.bf16.msra.mxu0 0
      %971 = vmatprep.subr.bf16.mxu0 0
      %972 = vmatpush1.bf16.msra.mxu0 0
      %973 = vmatprep.subr.bf16.mxu0 0
      %974 = vmatpush1.bf16.msra.mxu0 0
      %975 = vmatprep.mubr.bf16.mxu0 0
      %976 = vmatmul.mubr.bf16.gmra.mrb[0].mxu0 %v932
      %v977 = vpop.f32.mrb[0].mxu0
      %v978 = vadd.f32 0.0, %v977
      %v979 = vpop.f32.mrb[0].mxu0
      %v980 = vpop.f32.mrb[0].mxu0
      %v981 = vadd.f32 0.0, %v980
      %v982 = vpop.f32.mrb[0].mxu0
      %983 = vmatprep.mubr.bf16.mxu0 0
      %984 = vmatmul.mubr.bf16.gmra.mrb[0].mxu0 %v935
      %v985 = vpop.f32.mrb[0].mxu0
      %v986 = vadd.f32 0.0, %v985
      %v987 = vpop.f32.mrb[0].mxu0
      %v988 = vpop.f32.mrb[0].mxu0
      %v989 = vadd.f32 0.0, %v988
      %v990 = vpop.f32.mrb[0].mxu0
      %991 = vmatprep.mubr.bf16.mxu0 0
      %992 = vmatmul.mubr.bf16.gmra.mrb[0].mxu0 %v938
      %v993 = vpop.f32.mrb[0].mxu0
      %v994 = vadd.f32 0.0, %v993
      %v995 = vpop.f32.mrb[0].mxu0
      %v996 = vpop.f32.mrb[0].mxu0
      %v997 = vadd.f32 0.0, %v996
      %v998 = vpop.f32.mrb[0].mxu0
      %999 = vmatprep.mubr.bf16.mxu0 0
      %1000 = vmatmul.mubr.bf16.gmra.mrb[0].mxu0 %v941
      %v1001 = vpop.f32.mrb[0].mxu0
      %v1002 = vadd.f32 0.0, %v1001
      %v1003 = vpop.f32.mrb[0].mxu0
      %v1004 = vpop.f32.mrb[0].mxu0
      %v1005 = vadd.f32 0.0, %v1004
      %v1006 = vpop.f32.mrb[0].mxu0
      %1007 = vdwg.mxu0
      %v1008 = vadd.f32 %v862, %v978
      %v1009 = vadd.f32 %v863, %v981
      %v1010 = vadd.f32 %v864, %v986
      %v1011 = vadd.f32 %v865, %v989
      %v1012 = vadd.f32 %v866, %v994
      %v1013 = vadd.f32 %v867, %v997
      %v1014 = vadd.f32 %v868, %v1002
      %v1015 = vadd.f32 %v869, %v1005
      %v1016 = vld [vmem:[%s870] sm:$0xf]
      %v1017 = vld [vmem:[%s870 + $0x4] sm:$0x1]
      %v1018 = vld [vmem:[%s870 + $0x8] sm:$0xf]
      %v1019 = vld [vmem:[%s870 + $0xc] sm:$0x1]
      %v1020 = vld [vmem:[%s870 + $0x10] sm:$0xf]
      %v1021 = vld [vmem:[%s870 + $0x14] sm:$0x1]
      %v1022 = vld [vmem:[%s870 + $0x18] sm:$0xf]
      %v1023 = vld [vmem:[%s870 + $0x1c] sm:$0x1]
      %v1024 = vld [vmem:[%s870 + $0x20] sm:$0xf]
      %v1025 = vld [vmem:[%s870 + $0x24] sm:$0x1]
      %v1026 = vld [vmem:[%s870 + $0x28] sm:$0xf]
      %v1027 = vld [vmem:[%s870 + $0x2c] sm:$0x1]
      %v1028 = vld [vmem:[%s870 + $0x30] sm:$0xf]
      %v1029 = vld [vmem:[%s870 + $0x34] sm:$0x1]
      %v1030 = vld [vmem:[%s870 + $0x38] sm:$0xf]
      %v1031 = vld [vmem:[%s870 + $0x3c] sm:$0x1]
      %v1033 = vshrl.u32 %v1016, 16
      %v1035 = vrot.slane %v1033, 4
      %v1036 = vshll.u32 %v1016, 16
      %v1038 = vrot.slane %v1036, 5
      %v1039 = vor.u32 %v1035, %v1038
      %v1040 = vrot.slane %v1039, 4
      %v1042 = vshll.u32 %v1017, 16
      %v1044 = vrot.slane %v1042, 5
      %v1045 = vsel %vm326, %v1040, %v1044
      %v1047 = vshrl.u32 %v1018, 16
      %v1049 = vrot.slane %v1047, 4
      %v1050 = vshll.u32 %v1018, 16
      %v1052 = vrot.slane %v1050, 5
      %v1053 = vor.u32 %v1049, %v1052
      %v1054 = vrot.slane %v1053, 4
      %v1056 = vshll.u32 %v1019, 16
      %v1058 = vrot.slane %v1056, 5
      %v1059 = vsel %vm326, %v1054, %v1058
      %v1061 = vshrl.u32 %v1020, 16
      %v1063 = vrot.slane %v1061, 4
      %v1064 = vshll.u32 %v1020, 16
      %v1066 = vrot.slane %v1064, 5
      %v1067 = vor.u32 %v1063, %v1066
      %v1068 = vrot.slane %v1067, 4
      %v1070 = vshll.u32 %v1021, 16
      %v1072 = vrot.slane %v1070, 5
      %v1073 = vsel %vm326, %v1068, %v1072
      %v1075 = vshrl.u32 %v1022, 16
      %v1077 = vrot.slane %v1075, 4
      %v1078 = vshll.u32 %v1022, 16
      %v1080 = vrot.slane %v1078, 5
      %v1081 = vor.u32 %v1077, %v1080
      %v1082 = vrot.slane %v1081, 4
      %v1084 = vshll.u32 %v1023, 16
      %v1086 = vrot.slane %v1084, 5
      %v1087 = vsel %vm326, %v1082, %v1086
      %v1089 = vshrl.u32 %v1024, 16
      %v1091 = vrot.slane %v1089, 4
      %v1092 = vshll.u32 %v1024, 16
      %v1094 = vrot.slane %v1092, 5
      %v1095 = vor.u32 %v1091, %v1094
      %v1096 = vrot.slane %v1095, 4
      %v1098 = vshll.u32 %v1025, 16
      %v1100 = vrot.slane %v1098, 5
      %v1101 = vsel %vm326, %v1096, %v1100
      %v1103 = vshrl.u32 %v1026, 16
      %v1105 = vrot.slane %v1103, 4
      %v1106 = vshll.u32 %v1026, 16
      %v1108 = vrot.slane %v1106, 5
      %v1109 = vor.u32 %v1105, %v1108
      %v1110 = vrot.slane %v1109, 4
      %v1112 = vshll.u32 %v1027, 16
      %v1114 = vrot.slane %v1112, 5
      %v1115 = vsel %vm326, %v1110, %v1114
      %v1117 = vshrl.u32 %v1028, 16
      %v1119 = vrot.slane %v1117, 4
      %v1120 = vshll.u32 %v1028, 16
      %v1122 = vrot.slane %v1120, 5
      %v1123 = vor.u32 %v1119, %v1122
      %v1124 = vrot.slane %v1123, 4
      %v1126 = vshll.u32 %v1029, 16
      %v1128 = vrot.slane %v1126, 5
      %v1129 = vsel %vm326, %v1124, %v1128
      %v1131 = vshrl.u32 %v1030, 16
      %v1133 = vrot.slane %v1131, 4
      %v1134 = vshll.u32 %v1030, 16
      %v1136 = vrot.slane %v1134, 5
      %v1137 = vor.u32 %v1133, %v1136
      %v1138 = vrot.slane %v1137, 4
      %v1140 = vshll.u32 %v1031, 16
      %v1142 = vrot.slane %v1140, 5
      %v1143 = vsel %vm326, %v1138, %v1142
      %v1144 = vld [vmem:[%s1 + $0x80] sm:$0xf]
      %v1145 = vld [vmem:[%s1 + $0x84] sm:$0xf]
      %v1146 = vld [vmem:[%s1 + $0x88] sm:$0xf]
      %v1147 = vld [vmem:[%s1 + $0x8c] sm:$0xf]
      %v1148 = vld [vmem:[%s1 + $0x90] sm:$0xf]
      %v1149 = vld [vmem:[%s1 + $0x94] sm:$0xf]
      %v1150 = vld [vmem:[%s1 + $0x98] sm:$0xf]
      %v1151 = vld [vmem:[%s1 + $0x9c] sm:$0xf]
      %v1152 = vunpack.c.l.b16 %v1045
      %v1153 = vunpack.c.l.b16 %v1059
      %v1154 = vunpack.c.l.b16 %v1073
      %v1155 = vunpack.c.l.b16 %v1087
      %v1156 = vunpack.c.l.b16 %v1101
      %v1157 = vunpack.c.l.b16 %v1115
      %v1158 = vunpack.c.l.b16 %v1129
      %v1159 = vunpack.c.l.b16 %v1143
      %v1160 = vpack.c.b16 %v1153, %v1152
      %v1161 = vpack.c.b16 %v1155, %v1154
      %v1162 = vpack.c.b16 %v1157, %v1156
      %v1163 = vpack.c.b16 %v1159, %v1158
      %v1172 = vunpack.c.l.b16 %v1144
      %v1173 = vunpack.c.l.b16 %v1145
      %v1174 = vunpack.c.l.b16 %v1146
      %v1175 = vunpack.c.l.b16 %v1147
      %v1176 = vunpack.c.l.b16 %v1148
      %v1177 = vunpack.c.l.b16 %v1149
      %v1178 = vunpack.c.l.b16 %v1150
      %v1179 = vunpack.c.l.b16 %v1151
      %v1180 = vpack.c.b16 %v1173, %v1172
      %v1181 = vpack.c.b16 %v1175, %v1174
      %v1182 = vpack.c.b16 %v1177, %v1176
      %v1183 = vpack.c.b16 %v1179, %v1178
      %v1189 = vsel %vm483, %v1160, 0
      %v1192 = vsel %vm483, %v1161, 0
      %v1195 = vsel %vm483, %v1162, 0
      %v1198 = vsel %vm483, %v1163, 0
      %1200 = vmatprep.subr.bf16.mxu0 0
      %1201 = vmatpush1.bf16.msra.mxu0 %v1180
      %1202 = vmatprep.subr.bf16.mxu0 0
      %1203 = vmatpush1.bf16.msra.mxu0 %v1181
      %1204 = vmatprep.subr.bf16.mxu0 0
      %1205 = vmatpush1.bf16.msra.mxu0 %v1182
      %1206 = vmatprep.subr.bf16.mxu0 0
      %1207 = vmatpush1.bf16.msra.mxu0 %v1183
      %1208 = vmatprep.subr.bf16.mxu0 0
      %1209 = vmatpush1.bf16.msra.mxu0 0
      %1210 = vmatprep.subr.bf16.mxu0 0
      %1211 = vmatpush1.bf16.msra.mxu0 0
      %1212 = vmatprep.subr.bf16.mxu0 0
      %1213 = vmatpush1.bf16.msra.mxu0 0
      %1214 = vmatprep.subr.bf16.mxu0 0
      %1215 = vmatpush1.bf16.msra.mxu0 0
      %1216 = vmatprep.subr.bf16.mxu0 0
      %1217 = vmatpush1.bf16.msra.mxu0 0
      %1218 = vmatprep.subr.bf16.mxu0 0
      %1219 = vmatpush1.bf16.msra.mxu0 0
      %1220 = vmatprep.subr.bf16.mxu0 0
      %1221 = vmatpush1.bf16.msra.mxu0 0
      %1222 = vmatprep.subr.bf16.mxu0 0
      %1223 = vmatpush1.bf16.msra.mxu0 0
      %1224 = vmatprep.subr.bf16.mxu0 0
      %1225 = vmatpush1.bf16.msra.mxu0 0
      %1226 = vmatprep.subr.bf16.mxu0 0
      %1227 = vmatpush1.bf16.msra.mxu0 0
      %1228 = vmatprep.subr.bf16.mxu0 0
      %1229 = vmatpush1.bf16.msra.mxu0 0
      %1230 = vmatprep.subr.bf16.mxu0 0
      %1231 = vmatpush1.bf16.msra.mxu0 0
      %1232 = vmatprep.mubr.bf16.mxu0 0
      %1233 = vmatmul.mubr.bf16.gmra.mrb[0].mxu0 %v1189
      %v1234 = vpop.f32.mrb[0].mxu0
      %v1235 = vadd.f32 0.0, %v1234
      %v1236 = vpop.f32.mrb[0].mxu0
      %v1237 = vpop.f32.mrb[0].mxu0
      %v1238 = vadd.f32 0.0, %v1237
      %v1239 = vpop.f32.mrb[0].mxu0
      %1240 = vmatprep.mubr.bf16.mxu0 0
      %1241 = vmatmul.mubr.bf16.gmra.mrb[0].mxu0 %v1192
      %v1242 = vpop.f32.mrb[0].mxu0
      %v1243 = vadd.f32 0.0, %v1242
      %v1244 = vpop.f32.mrb[0].mxu0
      %v1245 = vpop.f32.mrb[0].mxu0
      %v1246 = vadd.f32 0.0, %v1245
      %v1247 = vpop.f32.mrb[0].mxu0
      %1248 = vmatprep.mubr.bf16.mxu0 0
      %1249 = vmatmul.mubr.bf16.gmra.mrb[0].mxu0 %v1195
      %v1250 = vpop.f32.mrb[0].mxu0
      %v1251 = vadd.f32 0.0, %v1250
      %v1252 = vpop.f32.mrb[0].mxu0
      %v1253 = vpop.f32.mrb[0].mxu0
      %v1254 = vadd.f32 0.0, %v1253
      %v1255 = vpop.f32.mrb[0].mxu0
      %1256 = vmatprep.mubr.bf16.mxu0 0
      %1257 = vmatmul.mubr.bf16.gmra.mrb[0].mxu0 %v1198
      %v1258 = vpop.f32.mrb[0].mxu0
      %v1259 = vadd.f32 0.0, %v1258
      %v1260 = vpop.f32.mrb[0].mxu0
      %v1261 = vpop.f32.mrb[0].mxu0
      %v1262 = vadd.f32 0.0, %v1261
      %v1263 = vpop.f32.mrb[0].mxu0
      %1264 = vdwg.mxu0
      %v1265 = vadd.f32 %v1008, %v1235
      %v1266 = vadd.f32 %v1009, %v1238
      %v1267 = vadd.f32 %v1010, %v1243
      %v1268 = vadd.f32 %v1011, %v1246
      %v1269 = vadd.f32 %v1012, %v1251
      %v1270 = vadd.f32 %v1013, %v1254
      %v1271 = vadd.f32 %v1014, %v1259
      %v1272 = vadd.f32 %v1015, %v1262
      %v1273 = vld [vmem:[%s870] sm:$0xe]
      %v1274 = vld [vmem:[%s870 + $0x8] sm:$0xe]
      %v1275 = vld [vmem:[%s870 + $0x10] sm:$0xe]
      %v1276 = vld [vmem:[%s870 + $0x18] sm:$0xe]
      %v1277 = vld [vmem:[%s870 + $0x20] sm:$0xe]
      %v1278 = vld [vmem:[%s870 + $0x28] sm:$0xe]
      %v1279 = vld [vmem:[%s870 + $0x30] sm:$0xe]
      %v1280 = vld [vmem:[%s870 + $0x38] sm:$0xe]
      %v1297 = vrot.slane %v1273, 5
      %v1298 = vrot.slane %v1297, 4
      %v1299 = vrot.slane %v1017, 5
      %v1300 = vsel %vm708, %v1298, %v1299
      %v1301 = vrot.slane %v1274, 5
      %v1302 = vrot.slane %v1301, 4
      %v1303 = vrot.slane %v1019, 5
      %v1304 = vsel %vm708, %v1302, %v1303
      %v1305 = vrot.slane %v1275, 5
      %v1306 = vrot.slane %v1305, 4
      %v1307 = vrot.slane %v1021, 5
      %v1308 = vsel %vm708, %v1306, %v1307
      %v1309 = vrot.slane %v1276, 5
      %v1310 = vrot.slane %v1309, 4
      %v1311 = vrot.slane %v1023, 5
      %v1312 = vsel %vm708, %v1310, %v1311
      %v1313 = vrot.slane %v1277, 5
      %v1314 = vrot.slane %v1313, 4
      %v1315 = vrot.slane %v1025, 5
      %v1316 = vsel %vm708, %v1314, %v1315
      %v1317 = vrot.slane %v1278, 5
      %v1318 = vrot.slane %v1317, 4
      %v1319 = vrot.slane %v1027, 5
      %v1320 = vsel %vm708, %v1318, %v1319
      %v1321 = vrot.slane %v1279, 5
      %v1322 = vrot.slane %v1321, 4
      %v1323 = vrot.slane %v1029, 5
      %v1324 = vsel %vm708, %v1322, %v1323
      %v1325 = vrot.slane %v1280, 5
      %v1326 = vrot.slane %v1325, 4
      %v1327 = vrot.slane %v1031, 5
      %v1328 = vsel %vm708, %v1326, %v1327
      %v1329 = vld [vmem:[%s1 + $0xa0] sm:$0xf]
      %v1330 = vld [vmem:[%s1 + $0xa4] sm:$0xf]
      %v1331 = vld [vmem:[%s1 + $0xa8] sm:$0xf]
      %v1332 = vld [vmem:[%s1 + $0xac] sm:$0xf]
      %v1333 = vld [vmem:[%s1 + $0xb0] sm:$0xf]
      %v1334 = vld [vmem:[%s1 + $0xb4] sm:$0xf]
      %v1335 = vld [vmem:[%s1 + $0xb8] sm:$0xf]
      %v1336 = vld [vmem:[%s1 + $0xbc] sm:$0xf]
      %v1337 = vunpack.c.l.b16 %v1300
      %v1338 = vunpack.c.l.b16 %v1304
      %v1339 = vunpack.c.l.b16 %v1308
      %v1340 = vunpack.c.l.b16 %v1312
      %v1341 = vunpack.c.l.b16 %v1316
      %v1342 = vunpack.c.l.b16 %v1320
      %v1343 = vunpack.c.l.b16 %v1324
      %v1344 = vunpack.c.l.b16 %v1328
      %v1345 = vpack.c.b16 %v1338, %v1337
      %v1346 = vpack.c.b16 %v1340, %v1339
      %v1347 = vpack.c.b16 %v1342, %v1341
      %v1348 = vpack.c.b16 %v1344, %v1343
      %v1357 = vunpack.c.l.b16 %v1329
      %v1358 = vunpack.c.l.b16 %v1330
      %v1359 = vunpack.c.l.b16 %v1331
      %v1360 = vunpack.c.l.b16 %v1332
      %v1361 = vunpack.c.l.b16 %v1333
      %v1362 = vunpack.c.l.b16 %v1334
      %v1363 = vunpack.c.l.b16 %v1335
      %v1364 = vunpack.c.l.b16 %v1336
      %v1365 = vpack.c.b16 %v1358, %v1357
      %v1366 = vpack.c.b16 %v1360, %v1359
      %v1367 = vpack.c.b16 %v1362, %v1361
      %v1368 = vpack.c.b16 %v1364, %v1363
      %v1374 = vsel %vm483, %v1345, 0
      %v1377 = vsel %vm483, %v1346, 0
      %v1380 = vsel %vm483, %v1347, 0
      %v1383 = vsel %vm483, %v1348, 0
      %1385 = vmatprep.subr.bf16.mxu0 0
      %1386 = vmatpush1.bf16.msra.mxu0 %v1365
      %1387 = vmatprep.subr.bf16.mxu0 0
      %1388 = vmatpush1.bf16.msra.mxu0 %v1366
      %1389 = vmatprep.subr.bf16.mxu0 0
      %1390 = vmatpush1.bf16.msra.mxu0 %v1367
      %1391 = vmatprep.subr.bf16.mxu0 0
      %1392 = vmatpush1.bf16.msra.mxu0 %v1368
      %1393 = vmatprep.subr.bf16.mxu0 0
      %1394 = vmatpush1.bf16.msra.mxu0 0
      %1395 = vmatprep.subr.bf16.mxu0 0
      %1396 = vmatpush1.bf16.msra.mxu0 0
      %1397 = vmatprep.subr.bf16.mxu0 0
      %1398 = vmatpush1.bf16.msra.mxu0 0
      %1399 = vmatprep.subr.bf16.mxu0 0
      %1400 = vmatpush1.bf16.msra.mxu0 0
      %1401 = vmatprep.subr.bf16.mxu0 0
      %1402 = vmatpush1.bf16.msra.mxu0 0
      %1403 = vmatprep.subr.bf16.mxu0 0
      %1404 = vmatpush1.bf16.msra.mxu0 0
      %1405 = vmatprep.subr.bf16.mxu0 0
      %1406 = vmatpush1.bf16.msra.mxu0 0
      %1407 = vmatprep.subr.bf16.mxu0 0
      %1408 = vmatpush1.bf16.msra.mxu0 0
      %1409 = vmatprep.subr.bf16.mxu0 0
      %1410 = vmatpush1.bf16.msra.mxu0 0
      %1411 = vmatprep.subr.bf16.mxu0 0
      %1412 = vmatpush1.bf16.msra.mxu0 0
      %1413 = vmatprep.subr.bf16.mxu0 0
      %1414 = vmatpush1.bf16.msra.mxu0 0
      %1415 = vmatprep.subr.bf16.mxu0 0
      %1416 = vmatpush1.bf16.msra.mxu0 0
      %1417 = vmatprep.mubr.bf16.mxu0 0
      %1418 = vmatmul.mubr.bf16.gmra.mrb[0].mxu0 %v1374
      %v1419 = vpop.f32.mrb[0].mxu0
      %v1420 = vadd.f32 0.0, %v1419
      %v1421 = vpop.f32.mrb[0].mxu0
      %v1422 = vpop.f32.mrb[0].mxu0
      %v1423 = vadd.f32 0.0, %v1422
      %v1424 = vpop.f32.mrb[0].mxu0
      %1425 = vmatprep.mubr.bf16.mxu0 0
      %1426 = vmatmul.mubr.bf16.gmra.mrb[0].mxu0 %v1377
      %v1427 = vpop.f32.mrb[0].mxu0
      %v1428 = vadd.f32 0.0, %v1427
      %v1429 = vpop.f32.mrb[0].mxu0
      %v1430 = vpop.f32.mrb[0].mxu0
      %v1431 = vadd.f32 0.0, %v1430
      %v1432 = vpop.f32.mrb[0].mxu0
      %1433 = vmatprep.mubr.bf16.mxu0 0
      %1434 = vmatmul.mubr.bf16.gmra.mrb[0].mxu0 %v1380
      %v1435 = vpop.f32.mrb[0].mxu0
      %v1436 = vadd.f32 0.0, %v1435
      %v1437 = vpop.f32.mrb[0].mxu0
      %v1438 = vpop.f32.mrb[0].mxu0
      %v1439 = vadd.f32 0.0, %v1438
      %v1440 = vpop.f32.mrb[0].mxu0
      %1441 = vmatprep.mubr.bf16.mxu0 0
      %1442 = vmatmul.mubr.bf16.gmra.mrb[0].mxu0 %v1383
      %v1443 = vpop.f32.mrb[0].mxu0
      %v1444 = vadd.f32 0.0, %v1443
      %v1445 = vpop.f32.mrb[0].mxu0
      %v1446 = vpop.f32.mrb[0].mxu0
      %v1447 = vadd.f32 0.0, %v1446
      %v1448 = vpop.f32.mrb[0].mxu0
      %1449 = vdwg.mxu0
      %v1450 = vadd.f32 %v1265, %v1420
      %v1451 = vadd.f32 %v1266, %v1423
      %v1452 = vadd.f32 %v1267, %v1428
      %v1453 = vadd.f32 %v1268, %v1431
      %v1454 = vadd.f32 %v1269, %v1436
      %v1455 = vadd.f32 %v1270, %v1439
      %v1456 = vadd.f32 %v1271, %v1444
      %v1457 = vadd.f32 %v1272, %v1447
      %s1458 = scalar_lea.vmem %s288, 16
      %v1459 = vld [vmem:[%s1458] sm:$0xf]
      %v1460 = vld [vmem:[%s1458 + $0x8] sm:$0xf]
      %v1461 = vld [vmem:[%s1458 + $0x10] sm:$0xf]
      %v1462 = vld [vmem:[%s1458 + $0x18] sm:$0xf]
      %v1463 = vld [vmem:[%s1458 + $0x20] sm:$0xf]
      %v1464 = vld [vmem:[%s1458 + $0x28] sm:$0xf]
      %v1465 = vld [vmem:[%s1458 + $0x30] sm:$0xf]
      %v1466 = vld [vmem:[%s1458 + $0x38] sm:$0xf]
      %v1467 = vld [vmem:[%s1 + $0xc0] sm:$0xf]
      %v1468 = vld [vmem:[%s1 + $0xc4] sm:$0xf]
      %v1469 = vld [vmem:[%s1 + $0xc8] sm:$0xf]
      %v1470 = vld [vmem:[%s1 + $0xcc] sm:$0xf]
      %v1471 = vld [vmem:[%s1 + $0xd0] sm:$0xf]
      %v1472 = vld [vmem:[%s1 + $0xd4] sm:$0xf]
      %v1473 = vld [vmem:[%s1 + $0xd8] sm:$0xf]
      %v1474 = vld [vmem:[%s1 + $0xdc] sm:$0xf]
      %v1483 = vunpack.c.l.b16 %v1459
      %v1484 = vunpack.c.l.b16 %v1460
      %v1485 = vunpack.c.l.b16 %v1461
      %v1486 = vunpack.c.l.b16 %v1462
      %v1487 = vunpack.c.l.b16 %v1463
      %v1488 = vunpack.c.l.b16 %v1464
      %v1489 = vunpack.c.l.b16 %v1465
      %v1490 = vunpack.c.l.b16 %v1466
      %v1491 = vpack.c.b16 %v1484, %v1483
      %v1492 = vpack.c.b16 %v1486, %v1485
      %v1493 = vpack.c.b16 %v1488, %v1487
      %v1494 = vpack.c.b16 %v1490, %v1489
      %v1503 = vunpack.c.l.b16 %v1467
      %v1504 = vunpack.c.l.b16 %v1468
      %v1505 = vunpack.c.l.b16 %v1469
      %v1506 = vunpack.c.l.b16 %v1470
      %v1507 = vunpack.c.l.b16 %v1471
      %v1508 = vunpack.c.l.b16 %v1472
      %v1509 = vunpack.c.l.b16 %v1473
      %v1510 = vunpack.c.l.b16 %v1474
      %v1511 = vpack.c.b16 %v1504, %v1503
      %v1512 = vpack.c.b16 %v1506, %v1505
      %v1513 = vpack.c.b16 %v1508, %v1507
      %v1514 = vpack.c.b16 %v1510, %v1509
      %v1520 = vsel %vm483, %v1491, 0
      %v1523 = vsel %vm483, %v1492, 0
      %v1526 = vsel %vm483, %v1493, 0
      %v1529 = vsel %vm483, %v1494, 0
      %1531 = vmatprep.subr.bf16.mxu0 0
      %1532 = vmatpush1.bf16.msra.mxu0 %v1511
      %1533 = vmatprep.subr.bf16.mxu0 0
      %1534 = vmatpush1.bf16.msra.mxu0 %v1512
      %1535 = vmatprep.subr.bf16.mxu0 0
      %1536 = vmatpush1.bf16.msra.mxu0 %v1513
      %1537 = vmatprep.subr.bf16.mxu0 0
      %1538 = vmatpush1.bf16.msra.mxu0 %v1514
      %1539 = vmatprep.subr.bf16.mxu0 0
      %1540 = vmatpush1.bf16.msra.mxu0 0
      %1541 = vmatprep.subr.bf16.mxu0 0
      %1542 = vmatpush1.bf16.msra.mxu0 0
      %1543 = vmatprep.subr.bf16.mxu0 0
      %1544 = vmatpush1.bf16.msra.mxu0 0
      %1545 = vmatprep.subr.bf16.mxu0 0
      %1546 = vmatpush1.bf16.msra.mxu0 0
      %1547 = vmatprep.subr.bf16.mxu0 0
      %1548 = vmatpush1.bf16.msra.mxu0 0
      %1549 = vmatprep.subr.bf16.mxu0 0
      %1550 = vmatpush1.bf16.msra.mxu0 0
      %1551 = vmatprep.subr.bf16.mxu0 0
      %1552 = vmatpush1.bf16.msra.mxu0 0
      %1553 = vmatprep.subr.bf16.mxu0 0
      %1554 = vmatpush1.bf16.msra.mxu0 0
      %1555 = vmatprep.subr.bf16.mxu0 0
      %1556 = vmatpush1.bf16.msra.mxu0 0
      %1557 = vmatprep.subr.bf16.mxu0 0
      %1558 = vmatpush1.bf16.msra.mxu0 0
      %1559 = vmatprep.subr.bf16.mxu0 0
      %1560 = vmatpush1.bf16.msra.mxu0 0
      %1561 = vmatprep.subr.bf16.mxu0 0
      %1562 = vmatpush1.bf16.msra.mxu0 0
      %1563 = vmatprep.mubr.bf16.mxu0 0
      %1564 = vmatmul.mubr.bf16.gmra.mrb[0].mxu0 %v1520
      %v1565 = vpop.f32.mrb[0].mxu0
      %v1566 = vadd.f32 0.0, %v1565
      %v1567 = vpop.f32.mrb[0].mxu0
      %v1568 = vpop.f32.mrb[0].mxu0
      %v1569 = vadd.f32 0.0, %v1568
      %v1570 = vpop.f32.mrb[0].mxu0
      %1571 = vmatprep.mubr.bf16.mxu0 0
      %1572 = vmatmul.mubr.bf16.gmra.mrb[0].mxu0 %v1523
      %v1573 = vpop.f32.mrb[0].mxu0
      %v1574 = vadd.f32 0.0, %v1573
      %v1575 = vpop.f32.mrb[0].mxu0
      %v1576 = vpop.f32.mrb[0].mxu0
      %v1577 = vadd.f32 0.0, %v1576
      %v1578 = vpop.f32.mrb[0].mxu0
      %1579 = vmatprep.mubr.bf16.mxu0 0
      %1580 = vmatmul.mubr.bf16.gmra.mrb[0].mxu0 %v1526
      %v1581 = vpop.f32.mrb[0].mxu0
      %v1582 = vadd.f32 0.0, %v1581
      %v1583 = vpop.f32.mrb[0].mxu0
      %v1584 = vpop.f32.mrb[0].mxu0
      %v1585 = vadd.f32 0.0, %v1584
      %v1586 = vpop.f32.mrb[0].mxu0
      %1587 = vmatprep.mubr.bf16.mxu0 0
      %1588 = vmatmul.mubr.bf16.gmra.mrb[0].mxu0 %v1529
      %v1589 = vpop.f32.mrb[0].mxu0
      %v1590 = vadd.f32 0.0, %v1589
      %v1591 = vpop.f32.mrb[0].mxu0
      %v1592 = vpop.f32.mrb[0].mxu0
      %v1593 = vadd.f32 0.0, %v1592
      %v1594 = vpop.f32.mrb[0].mxu0
      %1595 = vdwg.mxu0
      %v1596 = vadd.f32 %v1450, %v1566
      %v1597 = vadd.f32 %v1451, %v1569
      %v1598 = vadd.f32 %v1452, %v1574
      %v1599 = vadd.f32 %v1453, %v1577
      %v1600 = vadd.f32 %v1454, %v1582
      %v1601 = vadd.f32 %v1455, %v1585
      %v1602 = vadd.f32 %v1456, %v1590
      %v1603 = vadd.f32 %v1457, %v1593
      %v1604 = vld [vmem:[%s1458] sm:$0xf]
      %v1605 = vld [vmem:[%s1458 + $0x4] sm:$0x1]
      %v1606 = vld [vmem:[%s1458 + $0x8] sm:$0xf]
      %v1607 = vld [vmem:[%s1458 + $0xc] sm:$0x1]
      %v1608 = vld [vmem:[%s1458 + $0x10] sm:$0xf]
      %v1609 = vld [vmem:[%s1458 + $0x14] sm:$0x1]
      %v1610 = vld [vmem:[%s1458 + $0x18] sm:$0xf]
      %v1611 = vld [vmem:[%s1458 + $0x1c] sm:$0x1]
      %v1612 = vld [vmem:[%s1458 + $0x20] sm:$0xf]
      %v1613 = vld [vmem:[%s1458 + $0x24] sm:$0x1]
      %v1614 = vld [vmem:[%s1458 + $0x28] sm:$0xf]
      %v1615 = vld [vmem:[%s1458 + $0x2c] sm:$0x1]
      %v1616 = vld [vmem:[%s1458 + $0x30] sm:$0xf]
      %v1617 = vld [vmem:[%s1458 + $0x34] sm:$0x1]
      %v1618 = vld [vmem:[%s1458 + $0x38] sm:$0xf]
      %v1619 = vld [vmem:[%s1458 + $0x3c] sm:$0x1]
      %v1621 = vshrl.u32 %v1604, 16
      %v1623 = vrot.slane %v1621, 4
      %v1624 = vshll.u32 %v1604, 16
      %v1626 = vrot.slane %v1624, 5
      %v1627 = vor.u32 %v1623, %v1626
      %v1628 = vrot.slane %v1627, 4
      %v1630 = vshll.u32 %v1605, 16
      %v1632 = vrot.slane %v1630, 5
      %v1633 = vsel %vm326, %v1628, %v1632
      %v1635 = vshrl.u32 %v1606, 16
      %v1637 = vrot.slane %v1635, 4
      %v1638 = vshll.u32 %v1606, 16
      %v1640 = vrot.slane %v1638, 5
      %v1641 = vor.u32 %v1637, %v1640
      %v1642 = vrot.slane %v1641, 4
      %v1644 = vshll.u32 %v1607, 16
      %v1646 = vrot.slane %v1644, 5
      %v1647 = vsel %vm326, %v1642, %v1646
      %v1649 = vshrl.u32 %v1608, 16
      %v1651 = vrot.slane %v1649, 4
      %v1652 = vshll.u32 %v1608, 16
      %v1654 = vrot.slane %v1652, 5
      %v1655 = vor.u32 %v1651, %v1654
      %v1656 = vrot.slane %v1655, 4
      %v1658 = vshll.u32 %v1609, 16
      %v1660 = vrot.slane %v1658, 5
      %v1661 = vsel %vm326, %v1656, %v1660
      %v1663 = vshrl.u32 %v1610, 16
      %v1665 = vrot.slane %v1663, 4
      %v1666 = vshll.u32 %v1610, 16
      %v1668 = vrot.slane %v1666, 5
      %v1669 = vor.u32 %v1665, %v1668
      %v1670 = vrot.slane %v1669, 4
      %v1672 = vshll.u32 %v1611, 16
      %v1674 = vrot.slane %v1672, 5
      %v1675 = vsel %vm326, %v1670, %v1674
      %v1677 = vshrl.u32 %v1612, 16
      %v1679 = vrot.slane %v1677, 4
      %v1680 = vshll.u32 %v1612, 16
      %v1682 = vrot.slane %v1680, 5
      %v1683 = vor.u32 %v1679, %v1682
      %v1684 = vrot.slane %v1683, 4
      %v1686 = vshll.u32 %v1613, 16
      %v1688 = vrot.slane %v1686, 5
      %v1689 = vsel %vm326, %v1684, %v1688
      %v1691 = vshrl.u32 %v1614, 16
      %v1693 = vrot.slane %v1691, 4
      %v1694 = vshll.u32 %v1614, 16
      %v1696 = vrot.slane %v1694, 5
      %v1697 = vor.u32 %v1693, %v1696
      %v1698 = vrot.slane %v1697, 4
      %v1700 = vshll.u32 %v1615, 16
      %v1702 = vrot.slane %v1700, 5
      %v1703 = vsel %vm326, %v1698, %v1702
      %v1705 = vshrl.u32 %v1616, 16
      %v1707 = vrot.slane %v1705, 4
      %v1708 = vshll.u32 %v1616, 16
      %v1710 = vrot.slane %v1708, 5
      %v1711 = vor.u32 %v1707, %v1710
      %v1712 = vrot.slane %v1711, 4
      %v1714 = vshll.u32 %v1617, 16
      %v1716 = vrot.slane %v1714, 5
      %v1717 = vsel %vm326, %v1712, %v1716
      %v1719 = vshrl.u32 %v1618, 16
      %v1721 = vrot.slane %v1719, 4
      %v1722 = vshll.u32 %v1618, 16
      %v1724 = vrot.slane %v1722, 5
      %v1725 = vor.u32 %v1721, %v1724
      %v1726 = vrot.slane %v1725, 4
      %v1728 = vshll.u32 %v1619, 16
      %v1730 = vrot.slane %v1728, 5
      %v1731 = vsel %vm326, %v1726, %v1730
      %v1732 = vld [vmem:[%s1 + $0xe0] sm:$0xf]
      %v1733 = vld [vmem:[%s1 + $0xe4] sm:$0xf]
      %v1734 = vld [vmem:[%s1 + $0xe8] sm:$0xf]
      %v1735 = vld [vmem:[%s1 + $0xec] sm:$0xf]
      %v1736 = vld [vmem:[%s1 + $0xf0] sm:$0xf]
      %v1737 = vld [vmem:[%s1 + $0xf4] sm:$0xf]
      %v1738 = vld [vmem:[%s1 + $0xf8] sm:$0xf]
      %v1739 = vld [vmem:[%s1 + $0xfc] sm:$0xf]
      %v1740 = vunpack.c.l.b16 %v1633
      %v1741 = vunpack.c.l.b16 %v1647
      %v1742 = vunpack.c.l.b16 %v1661
      %v1743 = vunpack.c.l.b16 %v1675
      %v1744 = vunpack.c.l.b16 %v1689
      %v1745 = vunpack.c.l.b16 %v1703
      %v1746 = vunpack.c.l.b16 %v1717
      %v1747 = vunpack.c.l.b16 %v1731
      %v1748 = vpack.c.b16 %v1741, %v1740
      %v1749 = vpack.c.b16 %v1743, %v1742
      %v1750 = vpack.c.b16 %v1745, %v1744
      %v1751 = vpack.c.b16 %v1747, %v1746
      %v1760 = vunpack.c.l.b16 %v1732
      %v1761 = vunpack.c.l.b16 %v1733
      %v1762 = vunpack.c.l.b16 %v1734
      %v1763 = vunpack.c.l.b16 %v1735
      %v1764 = vunpack.c.l.b16 %v1736
      %v1765 = vunpack.c.l.b16 %v1737
      %v1766 = vunpack.c.l.b16 %v1738
      %v1767 = vunpack.c.l.b16 %v1739
      %v1768 = vpack.c.b16 %v1761, %v1760
      %v1769 = vpack.c.b16 %v1763, %v1762
      %v1770 = vpack.c.b16 %v1765, %v1764
      %v1771 = vpack.c.b16 %v1767, %v1766
      %v1777 = vsel %vm483, %v1748, 0
      %v1780 = vsel %vm483, %v1749, 0
      %v1783 = vsel %vm483, %v1750, 0
      %v1786 = vsel %vm483, %v1751, 0
      %1788 = vmatprep.subr.bf16.mxu0 0
      %1789 = vmatpush1.bf16.msra.mxu0 %v1768
      %1790 = vmatprep.subr.bf16.mxu0 0
      %1791 = vmatpush1.bf16.msra.mxu0 %v1769
      %1792 = vmatprep.subr.bf16.mxu0 0
      %1793 = vmatpush1.bf16.msra.mxu0 %v1770
      %1794 = vmatprep.subr.bf16.mxu0 0
      %1795 = vmatpush1.bf16.msra.mxu0 %v1771
      %1796 = vmatprep.subr.bf16.mxu0 0
      %1797 = vmatpush1.bf16.msra.mxu0 0
      %1798 = vmatprep.subr.bf16.mxu0 0
      %1799 = vmatpush1.bf16.msra.mxu0 0
      %1800 = vmatprep.subr.bf16.mxu0 0
      %1801 = vmatpush1.bf16.msra.mxu0 0
      %1802 = vmatprep.subr.bf16.mxu0 0
      %1803 = vmatpush1.bf16.msra.mxu0 0
      %1804 = vmatprep.subr.bf16.mxu0 0
      %1805 = vmatpush1.bf16.msra.mxu0 0
      %1806 = vmatprep.subr.bf16.mxu0 0
      %1807 = vmatpush1.bf16.msra.mxu0 0
      %1808 = vmatprep.subr.bf16.mxu0 0
      %1809 = vmatpush1.bf16.msra.mxu0 0
      %1810 = vmatprep.subr.bf16.mxu0 0
      %1811 = vmatpush1.bf16.msra.mxu0 0
      %1812 = vmatprep.subr.bf16.mxu0 0
      %1813 = vmatpush1.bf16.msra.mxu0 0
      %1814 = vmatprep.subr.bf16.mxu0 0
      %1815 = vmatpush1.bf16.msra.mxu0 0
      %1816 = vmatprep.subr.bf16.mxu0 0
      %1817 = vmatpush1.bf16.msra.mxu0 0
      %1818 = vmatprep.subr.bf16.mxu0 0
      %1819 = vmatpush1.bf16.msra.mxu0 0
      %1820 = vmatprep.mubr.bf16.mxu0 0
      %1821 = vmatmul.mubr.bf16.gmra.mrb[0].mxu0 %v1777
      %v1822 = vpop.f32.mrb[0].mxu0
      %v1823 = vadd.f32 0.0, %v1822
      %v1824 = vpop.f32.mrb[0].mxu0
      %v1825 = vpop.f32.mrb[0].mxu0
      %v1826 = vadd.f32 0.0, %v1825
      %v1827 = vpop.f32.mrb[0].mxu0
      %1828 = vmatprep.mubr.bf16.mxu0 0
      %1829 = vmatmul.mubr.bf16.gmra.mrb[0].mxu0 %v1780
      %v1830 = vpop.f32.mrb[0].mxu0
      %v1831 = vadd.f32 0.0, %v1830
      %v1832 = vpop.f32.mrb[0].mxu0
      %v1833 = vpop.f32.mrb[0].mxu0
      %v1834 = vadd.f32 0.0, %v1833
      %v1835 = vpop.f32.mrb[0].mxu0
      %1836 = vmatprep.mubr.bf16.mxu0 0
      %1837 = vmatmul.mubr.bf16.gmra.mrb[0].mxu0 %v1783
      %v1838 = vpop.f32.mrb[0].mxu0
      %v1839 = vadd.f32 0.0, %v1838
      %v1840 = vpop.f32.mrb[0].mxu0
      %v1841 = vpop.f32.mrb[0].mxu0
      %v1842 = vadd.f32 0.0, %v1841
      %v1843 = vpop.f32.mrb[0].mxu0
      %1844 = vmatprep.mubr.bf16.mxu0 0
      %1845 = vmatmul.mubr.bf16.gmra.mrb[0].mxu0 %v1786
      %v1846 = vpop.f32.mrb[0].mxu0
      %v1847 = vadd.f32 0.0, %v1846
      %v1848 = vpop.f32.mrb[0].mxu0
      %v1849 = vpop.f32.mrb[0].mxu0
      %v1850 = vadd.f32 0.0, %v1849
      %v1851 = vpop.f32.mrb[0].mxu0
      %1852 = vdwg.mxu0
      %v1853 = vadd.f32 %v1596, %v1823
      %v1854 = vadd.f32 %v1597, %v1826
      %v1855 = vadd.f32 %v1598, %v1831
      %v1856 = vadd.f32 %v1599, %v1834
      %v1857 = vadd.f32 %v1600, %v1839
      %v1858 = vadd.f32 %v1601, %v1842
      %v1859 = vadd.f32 %v1602, %v1847
      %v1860 = vadd.f32 %v1603, %v1850
      %v1861 = vld [vmem:[%s1458] sm:$0xe]
      %v1862 = vld [vmem:[%s1458 + $0x8] sm:$0xe]
      %v1863 = vld [vmem:[%s1458 + $0x10] sm:$0xe]
      %v1864 = vld [vmem:[%s1458 + $0x18] sm:$0xe]
      %v1865 = vld [vmem:[%s1458 + $0x20] sm:$0xe]
      %v1866 = vld [vmem:[%s1458 + $0x28] sm:$0xe]
      %v1867 = vld [vmem:[%s1458 + $0x30] sm:$0xe]
      %v1868 = vld [vmem:[%s1458 + $0x38] sm:$0xe]
      %v1885 = vrot.slane %v1861, 5
      %v1886 = vrot.slane %v1885, 4
      %v1887 = vrot.slane %v1605, 5
      %v1888 = vsel %vm708, %v1886, %v1887
      %v1889 = vrot.slane %v1862, 5
      %v1890 = vrot.slane %v1889, 4
      %v1891 = vrot.slane %v1607, 5
      %v1892 = vsel %vm708, %v1890, %v1891
      %v1893 = vrot.slane %v1863, 5
      %v1894 = vrot.slane %v1893, 4
      %v1895 = vrot.slane %v1609, 5
      %v1896 = vsel %vm708, %v1894, %v1895
      %v1897 = vrot.slane %v1864, 5
      %v1898 = vrot.slane %v1897, 4
      %v1899 = vrot.slane %v1611, 5
      %v1900 = vsel %vm708, %v1898, %v1899
      %v1901 = vrot.slane %v1865, 5
      %v1902 = vrot.slane %v1901, 4
      %v1903 = vrot.slane %v1613, 5
      %v1904 = vsel %vm708, %v1902, %v1903
      %v1905 = vrot.slane %v1866, 5
      %v1906 = vrot.slane %v1905, 4
      %v1907 = vrot.slane %v1615, 5
      %v1908 = vsel %vm708, %v1906, %v1907
      %v1909 = vrot.slane %v1867, 5
      %v1910 = vrot.slane %v1909, 4
      %v1911 = vrot.slane %v1617, 5
      %v1912 = vsel %vm708, %v1910, %v1911
      %v1913 = vrot.slane %v1868, 5
      %v1914 = vrot.slane %v1913, 4
      %v1915 = vrot.slane %v1619, 5
      %v1916 = vsel %vm708, %v1914, %v1915
      %v1917 = vld [vmem:[%s1 + $0x100] sm:$0xf]
      %v1918 = vld [vmem:[%s1 + $0x104] sm:$0xf]
      %v1919 = vld [vmem:[%s1 + $0x108] sm:$0xf]
      %v1920 = vld [vmem:[%s1 + $0x10c] sm:$0xf]
      %v1921 = vld [vmem:[%s1 + $0x110] sm:$0xf]
      %v1922 = vld [vmem:[%s1 + $0x114] sm:$0xf]
      %v1923 = vld [vmem:[%s1 + $0x118] sm:$0xf]
      %v1924 = vld [vmem:[%s1 + $0x11c] sm:$0xf]
      %v1925 = vunpack.c.l.b16 %v1888
      %v1926 = vunpack.c.l.b16 %v1892
      %v1927 = vunpack.c.l.b16 %v1896
      %v1928 = vunpack.c.l.b16 %v1900
      %v1929 = vunpack.c.l.b16 %v1904
      %v1930 = vunpack.c.l.b16 %v1908
      %v1931 = vunpack.c.l.b16 %v1912
      %v1932 = vunpack.c.l.b16 %v1916
      %v1933 = vpack.c.b16 %v1926, %v1925
      %v1934 = vpack.c.b16 %v1928, %v1927
      %v1935 = vpack.c.b16 %v1930, %v1929
      %v1936 = vpack.c.b16 %v1932, %v1931
      %v1945 = vunpack.c.l.b16 %v1917
      %v1946 = vunpack.c.l.b16 %v1918
      %v1947 = vunpack.c.l.b16 %v1919
      %v1948 = vunpack.c.l.b16 %v1920
      %v1949 = vunpack.c.l.b16 %v1921
      %v1950 = vunpack.c.l.b16 %v1922
      %v1951 = vunpack.c.l.b16 %v1923
      %v1952 = vunpack.c.l.b16 %v1924
      %v1953 = vpack.c.b16 %v1946, %v1945
      %v1954 = vpack.c.b16 %v1948, %v1947
      %v1955 = vpack.c.b16 %v1950, %v1949
      %v1956 = vpack.c.b16 %v1952, %v1951
      %v1962 = vsel %vm483, %v1933, 0
      %v1965 = vsel %vm483, %v1934, 0
      %v1968 = vsel %vm483, %v1935, 0
      %v1971 = vsel %vm483, %v1936, 0
      %1973 = vmatprep.subr.bf16.mxu0 0
      %1974 = vmatpush1.bf16.msra.mxu0 %v1953
      %1975 = vmatprep.subr.bf16.mxu0 0
      %1976 = vmatpush1.bf16.msra.mxu0 %v1954
      %1977 = vmatprep.subr.bf16.mxu0 0
      %1978 = vmatpush1.bf16.msra.mxu0 %v1955
      %1979 = vmatprep.subr.bf16.mxu0 0
      %1980 = vmatpush1.bf16.msra.mxu0 %v1956
      %1981 = vmatprep.subr.bf16.mxu0 0
      %1982 = vmatpush1.bf16.msra.mxu0 0
      %1983 = vmatprep.subr.bf16.mxu0 0
      %1984 = vmatpush1.bf16.msra.mxu0 0
      %1985 = vmatprep.subr.bf16.mxu0 0
      %1986 = vmatpush1.bf16.msra.mxu0 0
      %1987 = vmatprep.subr.bf16.mxu0 0
      %1988 = vmatpush1.bf16.msra.mxu0 0
      %1989 = vmatprep.subr.bf16.mxu0 0
      %1990 = vmatpush1.bf16.msra.mxu0 0
      %1991 = vmatprep.subr.bf16.mxu0 0
      %1992 = vmatpush1.bf16.msra.mxu0 0
      %1993 = vmatprep.subr.bf16.mxu0 0
      %1994 = vmatpush1.bf16.msra.mxu0 0
      %1995 = vmatprep.subr.bf16.mxu0 0
      %1996 = vmatpush1.bf16.msra.mxu0 0
      %1997 = vmatprep.subr.bf16.mxu0 0
      %1998 = vmatpush1.bf16.msra.mxu0 0
      %1999 = vmatprep.subr.bf16.mxu0 0
      %2000 = vmatpush1.bf16.msra.mxu0 0
      %2001 = vmatprep.subr.bf16.mxu0 0
      %2002 = vmatpush1.bf16.msra.mxu0 0
      %2003 = vmatprep.subr.bf16.mxu0 0
      %2004 = vmatpush1.bf16.msra.mxu0 0
      %2005 = vmatprep.mubr.bf16.mxu0 0
      %2006 = vmatmul.mubr.bf16.gmra.mrb[0].mxu0 %v1962
      %v2007 = vpop.f32.mrb[0].mxu0
      %v2008 = vadd.f32 0.0, %v2007
      %v2009 = vpop.f32.mrb[0].mxu0
      %v2010 = vpop.f32.mrb[0].mxu0
      %v2011 = vadd.f32 0.0, %v2010
      %v2012 = vpop.f32.mrb[0].mxu0
      %2013 = vmatprep.mubr.bf16.mxu0 0
      %2014 = vmatmul.mubr.bf16.gmra.mrb[0].mxu0 %v1965
      %v2015 = vpop.f32.mrb[0].mxu0
      %v2016 = vadd.f32 0.0, %v2015
      %v2017 = vpop.f32.mrb[0].mxu0
      %v2018 = vpop.f32.mrb[0].mxu0
      %v2019 = vadd.f32 0.0, %v2018
      %v2020 = vpop.f32.mrb[0].mxu0
      %2021 = vmatprep.mubr.bf16.mxu0 0
      %2022 = vmatmul.mubr.bf16.gmra.mrb[0].mxu0 %v1968
      %v2023 = vpop.f32.mrb[0].mxu0
      %v2024 = vadd.f32 0.0, %v2023
      %v2025 = vpop.f32.mrb[0].mxu0
      %v2026 = vpop.f32.mrb[0].mxu0
      %v2027 = vadd.f32 0.0, %v2026
      %v2028 = vpop.f32.mrb[0].mxu0
      %2029 = vmatprep.mubr.bf16.mxu0 0
      %2030 = vmatmul.mubr.bf16.gmra.mrb[0].mxu0 %v1971
      %v2031 = vpop.f32.mrb[0].mxu0
      %v2032 = vadd.f32 0.0, %v2031
      %v2033 = vpop.f32.mrb[0].mxu0
      %v2034 = vpop.f32.mrb[0].mxu0
      %v2035 = vadd.f32 0.0, %v2034
      %v2036 = vpop.f32.mrb[0].mxu0
      %2037 = vdwg.mxu0
      %v2038 = vadd.f32 %v1853, %v2008
      %v2039 = vadd.f32 %v1854, %v2011
      %v2040 = vadd.f32 %v1855, %v2016
      %v2041 = vadd.f32 %v1856, %v2019
      %v2042 = vadd.f32 %v1857, %v2024
      %v2043 = vadd.f32 %v1858, %v2027
      %v2044 = vadd.f32 %v1859, %v2032
      %v2045 = vadd.f32 %v1860, %v2035
      %v2046 = vld [vmem:[%s2] sm:$0xff]
      %v2047 = vld [vmem:[%s2 + $0x8] sm:$0xff]
      %v2048 = vld [vmem:[%s2 + $0x10] sm:$0xff]
      %v2049 = vld [vmem:[%s2 + $0x18] sm:$0xff]
      %v2050 = vld [vmem:[%s2 + $0x20] sm:$0xff]
      %v2051 = vld [vmem:[%s2 + $0x28] sm:$0xff]
      %v2052 = vld [vmem:[%s2 + $0x30] sm:$0xff]
      %v2053 = vld [vmem:[%s2 + $0x38] sm:$0xff]
      %v2054 = vld [vmem:[%s3] sm:$0xff]
      %v2055 = vld [vmem:[%s3 + $0x8] sm:$0xff]
      %v2056 = vld [vmem:[%s3 + $0x10] sm:$0xff]
      %v2057 = vld [vmem:[%s3 + $0x18] sm:$0xff]
      %v2058 = vsel %vm483, %v2038, 0.0
      %v2059 = vsel %vm483, %v2039, 0.0
      %v2060 = vadd.f32 %v2058, %v2059
      %v2061 = vsel %vm483, %v2040, 0.0
      %v2062 = vadd.f32 %v2060, %v2061
      %v2063 = vsel %vm483, %v2041, 0.0
      %v2064 = vadd.f32 %v2062, %v2063
      %v2065 = vsel %vm483, %v2042, 0.0
      %v2066 = vadd.f32 %v2064, %v2065
      %v2067 = vsel %vm483, %v2043, 0.0
      %v2068 = vadd.f32 %v2066, %v2067
      %v2069 = vsel %vm483, %v2044, 0.0
      %v2070 = vadd.f32 %v2068, %v2069
      %v2071 = vsel %vm483, %v2045, 0.0
      %v2072 = vadd.f32 %v2070, %v2071
      %v2073 = vrot.slane %v2072, 4
      %v2074 = vadd.f32 %v2072, %v2073
      %v2075 = vrot.slane %v2074, 2
      %v2076 = vadd.f32 %v2074, %v2075
      %v2077 = vrot.slane %v2076, 1
      %v2078 = vadd.f32 %v2076, %v2077
      %v2080 = vsel %vm483, %v2078, 0
      %2082 = vmatprep.subr.mxu0 0.0
      %2083 = vmatpush1.msra.mxu0 %v2046
      %2084 = vmatprep.subr.mxu0 0.0
      %2085 = vmatpush1.msra.mxu0 %v2047
      %2086 = vmatprep.subr.mxu0 0.0
      %2087 = vmatpush1.msra.mxu0 %v2048
      %2088 = vmatprep.subr.mxu0 0.0
      %2089 = vmatpush1.msra.mxu0 %v2049
      %2090 = vmatprep.subr.mxu0 0.0
      %2091 = vmatpush1.msra.mxu0 %v2050
      %2092 = vmatprep.subr.mxu0 0.0
      %2093 = vmatpush1.msra.mxu0 %v2051
      %2094 = vmatprep.subr.mxu0 0.0
      %2095 = vmatpush1.msra.mxu0 %v2052
      %2096 = vmatprep.subr.mxu0 0.0
      %2097 = vmatpush1.msra.mxu0 %v2053
      %2098 = vmatprep.subr.mxu0 0.0
      %2099 = vmatpush1.msra.mxu0 0.0
      %2100 = vmatprep.subr.mxu0 0.0
      %2101 = vmatpush1.msra.mxu0 0.0
      %2102 = vmatprep.subr.mxu0 0.0
      %2103 = vmatpush1.msra.mxu0 0.0
      %2104 = vmatprep.subr.mxu0 0.0
      %2105 = vmatpush1.msra.mxu0 0.0
      %2106 = vmatprep.subr.mxu0 0.0
      %2107 = vmatpush1.msra.mxu0 0.0
      %2108 = vmatprep.subr.mxu0 0.0
      %2109 = vmatpush1.msra.mxu0 0.0
      %2110 = vmatprep.subr.mxu0 0.0
      %2111 = vmatpush1.msra.mxu0 0.0
      %2112 = vmatprep.subr.mxu0 0.0
      %2113 = vmatpush1.msra.mxu0 0.0
      %2114 = vmatprep.subr.mxu0 0.0
      %2115 = vmatpush1.msra.mxu0 0.0
      %2116 = vmatprep.subr.mxu0 0.0
      %2117 = vmatpush1.msra.mxu0 0.0
      %2118 = vmatprep.subr.mxu0 0.0
      %2119 = vmatpush1.msra.mxu0 0.0
      %2120 = vmatprep.subr.mxu0 0.0
      %2121 = vmatpush1.msra.mxu0 0.0
      %2122 = vmatprep.subr.mxu0 0.0
      %2123 = vmatpush1.msra.mxu0 0.0
      %2124 = vmatprep.subr.mxu0 0.0
      %2125 = vmatpush1.msra.mxu0 0.0
      %2126 = vmatprep.subr.mxu0 0.0
      %2127 = vmatpush1.msra.mxu0 0.0
      %2128 = vmatprep.subr.mxu0 0.0
      %2129 = vmatpush1.msra.mxu0 0.0
      %2130 = vmatprep.subr.mxu0 0.0
      %2131 = vmatpush1.msra.mxu0 0.0
      %2132 = vmatprep.subr.mxu0 0.0
      %2133 = vmatpush1.msra.mxu0 0.0
      %2134 = vmatprep.subr.mxu0 0.0
      %2135 = vmatpush1.msra.mxu0 0.0
      %2136 = vmatprep.subr.mxu0 0.0
      %2137 = vmatpush1.msra.mxu0 0.0
      %2138 = vmatprep.subr.mxu0 0.0
      %2139 = vmatpush1.msra.mxu0 0.0
      %2140 = vmatprep.subr.mxu0 0.0
      %2141 = vmatpush1.msra.mxu0 0.0
      %2142 = vmatprep.subr.mxu0 0.0
      %2143 = vmatpush1.msra.mxu0 0.0
      %2144 = vmatprep.subr.mxu0 0.0
      %2145 = vmatpush1.msra.mxu0 0.0
      %2146 = vmatprep.mubr.f32.mxu0 0.0
      %2147 = vmatmul.mubr.f32.gmra.mrb[0].mxu0 %v2080
      %v2148 = vpop.f32.mrb[0].mxu0
      %v2149 = vadd.f32 0.0, %v2148
      %v2150 = vpop.f32.mrb[0].mxu0
      %2151 = vdwg.mxu0
      %v2152 = vmul.f32 %v2149, 0.0078125
      %vm2153 = vcmask 261120
      %v2155 = vsel %vm2153, %v2152, 0
      %2157 = vmatprep.subr.mxu0 0.0
      %2158 = vmatpush1.msra.mxu0 %v2054
      %2159 = vmatprep.subr.mxu0 0.0
      %2160 = vmatpush1.msra.mxu0 %v2055
      %2161 = vmatprep.subr.mxu0 0.0
      %2162 = vmatpush1.msra.mxu0 %v2056
      %2163 = vmatprep.subr.mxu0 0.0
      %2164 = vmatpush1.msra.mxu0 %v2057
      %2165 = vmatprep.subr.mxu0 0.0
      %2166 = vmatpush1.msra.mxu0 0.0
      %2167 = vmatprep.subr.mxu0 0.0
      %2168 = vmatpush1.msra.mxu0 0.0
      %2169 = vmatprep.subr.mxu0 0.0
      %2170 = vmatpush1.msra.mxu0 0.0
      %2171 = vmatprep.subr.mxu0 0.0
      %2172 = vmatpush1.msra.mxu0 0.0
      %2173 = vmatprep.subr.mxu0 0.0
      %2174 = vmatpush1.msra.mxu0 0.0
      %2175 = vmatprep.subr.mxu0 0.0
      %2176 = vmatpush1.msra.mxu0 0.0
      %2177 = vmatprep.subr.mxu0 0.0
      %2178 = vmatpush1.msra.mxu0 0.0
      %2179 = vmatprep.subr.mxu0 0.0
      %2180 = vmatpush1.msra.mxu0 0.0
      %2181 = vmatprep.subr.mxu0 0.0
      %2182 = vmatpush1.msra.mxu0 0.0
      %2183 = vmatprep.subr.mxu0 0.0
      %2184 = vmatpush1.msra.mxu0 0.0
      %2185 = vmatprep.subr.mxu0 0.0
      %2186 = vmatpush1.msra.mxu0 0.0
      %2187 = vmatprep.subr.mxu0 0.0
      %2188 = vmatpush1.msra.mxu0 0.0
      %2189 = vmatprep.subr.mxu0 0.0
      %2190 = vmatpush1.msra.mxu0 0.0
      %2191 = vmatprep.subr.mxu0 0.0
      %2192 = vmatpush1.msra.mxu0 0.0
      %2193 = vmatprep.subr.mxu0 0.0
      %2194 = vmatpush1.msra.mxu0 0.0
      %2195 = vmatprep.subr.mxu0 0.0
      %2196 = vmatpush1.msra.mxu0 0.0
      %2197 = vmatprep.subr.mxu0 0.0
      %2198 = vmatpush1.msra.mxu0 0.0
      %2199 = vmatprep.subr.mxu0 0.0
      %2200 = vmatpush1.msra.mxu0 0.0
      %2201 = vmatprep.subr.mxu0 0.0
      %2202 = vmatpush1.msra.mxu0 0.0
      %2203 = vmatprep.subr.mxu0 0.0
      %2204 = vmatpush1.msra.mxu0 0.0
      %2205 = vmatprep.subr.mxu0 0.0
      %2206 = vmatpush1.msra.mxu0 0.0
      %2207 = vmatprep.subr.mxu0 0.0
      %2208 = vmatpush1.msra.mxu0 0.0
      %2209 = vmatprep.subr.mxu0 0.0
      %2210 = vmatpush1.msra.mxu0 0.0
      %2211 = vmatprep.subr.mxu0 0.0
      %2212 = vmatpush1.msra.mxu0 0.0
      %2213 = vmatprep.subr.mxu0 0.0
      %2214 = vmatpush1.msra.mxu0 0.0
      %2215 = vmatprep.subr.mxu0 0.0
      %2216 = vmatpush1.msra.mxu0 0.0
      %2217 = vmatprep.subr.mxu0 0.0
      %2218 = vmatpush1.msra.mxu0 0.0
      %2219 = vmatprep.subr.mxu0 0.0
      %2220 = vmatpush1.msra.mxu0 0.0
      %2221 = vmatprep.mubr.f32.mxu0 0.0
      %2222 = vmatmul.mubr.f32.gmra.mrb[0].mxu0 %v2155
      %v2223 = vpop.f32.mrb[0].mxu0
      %v2224 = vadd.f32 0.0, %v2223
      %v2225 = vpop.f32.mrb[0].mxu0
      %2226 = vdwg.mxu0
      %v2227 = vlaneseq
      %v2228 = vshrl.u32 %v2227, 7
      %v2229 = vsub.s32 0, %v2228
      %v2230 = vrot.slane %v2224, %v2229
      %v2231 = vsub.f32 %v2038, %v2230
      %v2232 = vsub.f32 %v2039, %v2230
      %v2233 = vsub.f32 %v2040, %v2230
      %v2234 = vsub.f32 %v2041, %v2230
      %v2235 = vsub.f32 %v2042, %v2230
      %v2236 = vsub.f32 %v2043, %v2230
      %v2237 = vsub.f32 %v2044, %v2230
      %v2238 = vsub.f32 %v2045, %v2230
      %v2239 = vmul.f32 %v2231, %v2231
      %v2240 = vmul.f32 %v2232, %v2232
      %v2241 = vmul.f32 %v2233, %v2233
      %v2242 = vmul.f32 %v2234, %v2234
      %v2243 = vmul.f32 %v2235, %v2235
      %v2244 = vmul.f32 %v2236, %v2236
      %v2245 = vmul.f32 %v2237, %v2237
      %v2246 = vmul.f32 %v2238, %v2238
      %v2247 = vsel %vm483, %v2239, 0.0
      %v2248 = vsel %vm483, %v2240, 0.0
      %v2249 = vadd.f32 %v2247, %v2248
      %v2250 = vsel %vm483, %v2241, 0.0
      %v2251 = vadd.f32 %v2249, %v2250
      %v2252 = vsel %vm483, %v2242, 0.0
      %v2253 = vadd.f32 %v2251, %v2252
      %v2254 = vsel %vm483, %v2243, 0.0
      %v2255 = vadd.f32 %v2253, %v2254
      %v2256 = vsel %vm483, %v2244, 0.0
      %v2257 = vadd.f32 %v2255, %v2256
      %v2258 = vsel %vm483, %v2245, 0.0
      %v2259 = vadd.f32 %v2257, %v2258
      %v2260 = vsel %vm483, %v2246, 0.0
      %v2261 = vadd.f32 %v2259, %v2260
      %v2262 = vrot.slane %v2261, 4
      %v2263 = vadd.f32 %v2261, %v2262
      %v2264 = vrot.slane %v2263, 2
      %v2265 = vadd.f32 %v2263, %v2264
      %v2266 = vrot.slane %v2265, 1
      %v2267 = vadd.f32 %v2265, %v2266
      %v2269 = vsel %vm483, %v2267, 0
      %2271 = vmatprep.subr.mxu0 0.0
      %2272 = vmatpush1.msra.mxu0 %v2046
      %2273 = vmatprep.subr.mxu0 0.0
      %2274 = vmatpush1.msra.mxu0 %v2047
      %2275 = vmatprep.subr.mxu0 0.0
      %2276 = vmatpush1.msra.mxu0 %v2048
      %2277 = vmatprep.subr.mxu0 0.0
      %2278 = vmatpush1.msra.mxu0 %v2049
      %2279 = vmatprep.subr.mxu0 0.0
      %2280 = vmatpush1.msra.mxu0 %v2050
      %2281 = vmatprep.subr.mxu0 0.0
      %2282 = vmatpush1.msra.mxu0 %v2051
      %2283 = vmatprep.subr.mxu0 0.0
      %2284 = vmatpush1.msra.mxu0 %v2052
      %2285 = vmatprep.subr.mxu0 0.0
      %2286 = vmatpush1.msra.mxu0 %v2053
      %2287 = vmatprep.subr.mxu0 0.0
      %2288 = vmatpush1.msra.mxu0 0.0
      %2289 = vmatprep.subr.mxu0 0.0
      %2290 = vmatpush1.msra.mxu0 0.0
      %2291 = vmatprep.subr.mxu0 0.0
      %2292 = vmatpush1.msra.mxu0 0.0
      %2293 = vmatprep.subr.mxu0 0.0
      %2294 = vmatpush1.msra.mxu0 0.0
      %2295 = vmatprep.subr.mxu0 0.0
      %2296 = vmatpush1.msra.mxu0 0.0
      %2297 = vmatprep.subr.mxu0 0.0
      %2298 = vmatpush1.msra.mxu0 0.0
      %2299 = vmatprep.subr.mxu0 0.0
      %2300 = vmatpush1.msra.mxu0 0.0
      %2301 = vmatprep.subr.mxu0 0.0
      %2302 = vmatpush1.msra.mxu0 0.0
      %2303 = vmatprep.subr.mxu0 0.0
      %2304 = vmatpush1.msra.mxu0 0.0
      %2305 = vmatprep.subr.mxu0 0.0
      %2306 = vmatpush1.msra.mxu0 0.0
      %2307 = vmatprep.subr.mxu0 0.0
      %2308 = vmatpush1.msra.mxu0 0.0
      %2309 = vmatprep.subr.mxu0 0.0
      %2310 = vmatpush1.msra.mxu0 0.0
      %2311 = vmatprep.subr.mxu0 0.0
      %2312 = vmatpush1.msra.mxu0 0.0
      %2313 = vmatprep.subr.mxu0 0.0
      %2314 = vmatpush1.msra.mxu0 0.0
      %2315 = vmatprep.subr.mxu0 0.0
      %2316 = vmatpush1.msra.mxu0 0.0
      %2317 = vmatprep.subr.mxu0 0.0
      %2318 = vmatpush1.msra.mxu0 0.0
      %2319 = vmatprep.subr.mxu0 0.0
      %2320 = vmatpush1.msra.mxu0 0.0
      %2321 = vmatprep.subr.mxu0 0.0
      %2322 = vmatpush1.msra.mxu0 0.0
      %2323 = vmatprep.subr.mxu0 0.0
      %2324 = vmatpush1.msra.mxu0 0.0
      %2325 = vmatprep.subr.mxu0 0.0
      %2326 = vmatpush1.msra.mxu0 0.0
      %2327 = vmatprep.subr.mxu0 0.0
      %2328 = vmatpush1.msra.mxu0 0.0
      %2329 = vmatprep.subr.mxu0 0.0
      %2330 = vmatpush1.msra.mxu0 0.0
      %2331 = vmatprep.subr.mxu0 0.0
      %2332 = vmatpush1.msra.mxu0 0.0
      %2333 = vmatprep.subr.mxu0 0.0
      %2334 = vmatpush1.msra.mxu0 0.0
      %2335 = vmatprep.mubr.f32.mxu0 0.0
      %2336 = vmatmul.mubr.f32.gmra.mrb[0].mxu0 %v2269
      %v2337 = vpop.f32.mrb[0].mxu0
      %v2338 = vadd.f32 0.0, %v2337
      %v2339 = vpop.f32.mrb[0].mxu0
      %2340 = vdwg.mxu0
      %v2341 = vmul.f32 %v2338, 0.0078125
      %v2342 = vadd.f32 %v2341, 1e-05
      %v2343 = vrsqrt.pop %v2342
      %v2345 = vsel %vm2153, %v2343, 0
      %2347 = vmatprep.subr.mxu0 0.0
      %2348 = vmatpush1.msra.mxu0 %v2054
      %2349 = vmatprep.subr.mxu0 0.0
      %2350 = vmatpush1.msra.mxu0 %v2055
      %2351 = vmatprep.subr.mxu0 0.0
      %2352 = vmatpush1.msra.mxu0 %v2056
      %2353 = vmatprep.subr.mxu0 0.0
      %2354 = vmatpush1.msra.mxu0 %v2057
      %2355 = vmatprep.subr.mxu0 0.0
      %2356 = vmatpush1.msra.mxu0 0.0
      %2357 = vmatprep.subr.mxu0 0.0
      %2358 = vmatpush1.msra.mxu0 0.0
      %2359 = vmatprep.subr.mxu0 0.0
      %2360 = vmatpush1.msra.mxu0 0.0
      %2361 = vmatprep.subr.mxu0 0.0
      %2362 = vmatpush1.msra.mxu0 0.0
      %2363 = vmatprep.subr.mxu0 0.0
      %2364 = vmatpush1.msra.mxu0 0.0
      %2365 = vmatprep.subr.mxu0 0.0
      %2366 = vmatpush1.msra.mxu0 0.0
      %2367 = vmatprep.subr.mxu0 0.0
      %2368 = vmatpush1.msra.mxu0 0.0
      %2369 = vmatprep.subr.mxu0 0.0
      %2370 = vmatpush1.msra.mxu0 0.0
      %2371 = vmatprep.subr.mxu0 0.0
      %2372 = vmatpush1.msra.mxu0 0.0
      %2373 = vmatprep.subr.mxu0 0.0
      %2374 = vmatpush1.msra.mxu0 0.0
      %2375 = vmatprep.subr.mxu0 0.0
      %2376 = vmatpush1.msra.mxu0 0.0
      %2377 = vmatprep.subr.mxu0 0.0
      %2378 = vmatpush1.msra.mxu0 0.0
      %2379 = vmatprep.subr.mxu0 0.0
      %2380 = vmatpush1.msra.mxu0 0.0
      %2381 = vmatprep.subr.mxu0 0.0
      %2382 = vmatpush1.msra.mxu0 0.0
      %2383 = vmatprep.subr.mxu0 0.0
      %2384 = vmatpush1.msra.mxu0 0.0
      %2385 = vmatprep.subr.mxu0 0.0
      %2386 = vmatpush1.msra.mxu0 0.0
      %2387 = vmatprep.subr.mxu0 0.0
      %2388 = vmatpush1.msra.mxu0 0.0
      %2389 = vmatprep.subr.mxu0 0.0
      %2390 = vmatpush1.msra.mxu0 0.0
      %2391 = vmatprep.subr.mxu0 0.0
      %2392 = vmatpush1.msra.mxu0 0.0
      %2393 = vmatprep.subr.mxu0 0.0
      %2394 = vmatpush1.msra.mxu0 0.0
      %2395 = vmatprep.subr.mxu0 0.0
      %2396 = vmatpush1.msra.mxu0 0.0
      %2397 = vmatprep.subr.mxu0 0.0
      %2398 = vmatpush1.msra.mxu0 0.0
      %2399 = vmatprep.subr.mxu0 0.0
      %2400 = vmatpush1.msra.mxu0 0.0
      %2401 = vmatprep.subr.mxu0 0.0
      %2402 = vmatpush1.msra.mxu0 0.0
      %2403 = vmatprep.subr.mxu0 0.0
      %2404 = vmatpush1.msra.mxu0 0.0
      %2405 = vmatprep.subr.mxu0 0.0
      %2406 = vmatpush1.msra.mxu0 0.0
      %2407 = vmatprep.subr.mxu0 0.0
      %2408 = vmatpush1.msra.mxu0 0.0
      %2409 = vmatprep.subr.mxu0 0.0
      %2410 = vmatpush1.msra.mxu0 0.0
      %2411 = vmatprep.mubr.f32.mxu0 0.0
      %2412 = vmatmul.mubr.f32.gmra.mrb[0].mxu0 %v2345
      %v2413 = vpop.f32.mrb[0].mxu0
      %v2414 = vadd.f32 0.0, %v2413
      %v2415 = vpop.f32.mrb[0].mxu0
      %2416 = vdwg.mxu0
      %v2417 = vlaneseq
      %v2418 = vshrl.u32 %v2417, 7
      %v2419 = vsub.s32 0, %v2418
      %v2420 = vrot.slane %v2414, %v2419
      %v2421 = vmul.f32 %v2231, %v2420
      %v2422 = vmul.f32 %v2232, %v2420
      %v2423 = vmul.f32 %v2233, %v2420
      %v2424 = vmul.f32 %v2234, %v2420
      %v2425 = vmul.f32 %v2235, %v2420
      %v2426 = vmul.f32 %v2236, %v2420
      %v2427 = vmul.f32 %v2237, %v2420
      %v2428 = vmul.f32 %v2238, %v2420
      %v2429 = vld [vmem:[%s4] sm:$0x1]
      %v2431 = vlaneseq
      %v2432 = vshrl.u32 %v2431, 7
      %v2433 = vsub.s32 0, %v2432
      %v2434 = vrot.slane %v2429, %v2433
      %v2436 = vmul.f32 %v2421, %v2434
      %v2437 = vmul.f32 %v2422, %v2434
      %v2438 = vmul.f32 %v2423, %v2434
      %v2439 = vmul.f32 %v2424, %v2434
      %v2440 = vmul.f32 %v2425, %v2434
      %v2441 = vmul.f32 %v2426, %v2434
      %v2442 = vmul.f32 %v2427, %v2434
      %v2443 = vmul.f32 %v2428, %v2434
      %v2444 = vld [vmem:[%s5] sm:$0x1]
      %v2446 = vlaneseq
      %v2447 = vshrl.u32 %v2446, 7
      %v2448 = vsub.s32 0, %v2447
      %v2449 = vrot.slane %v2444, %v2448
      %v2451 = vadd.f32 %v2436, %v2449
      %v2452 = vadd.f32 %v2437, %v2449
      %v2453 = vadd.f32 %v2438, %v2449
      %v2454 = vadd.f32 %v2439, %v2449
      %v2455 = vadd.f32 %v2440, %v2449
      %v2456 = vadd.f32 %v2441, %v2449
      %v2457 = vadd.f32 %v2442, %v2449
      %v2458 = vadd.f32 %v2443, %v2449
      %v2459 = vld [vmem:[%s293] sm:$0xf]
      %v2460 = vld [vmem:[%s293 + $0x4] sm:$0xf]
      %v2461 = vld [vmem:[%s293 + $0x8] sm:$0xf]
      %v2462 = vld [vmem:[%s293 + $0xc] sm:$0xf]
      %v2463 = vld [vmem:[%s293 + $0x10] sm:$0xf]
      %v2464 = vld [vmem:[%s293 + $0x14] sm:$0xf]
      %v2465 = vld [vmem:[%s293 + $0x18] sm:$0xf]
      %v2466 = vld [vmem:[%s293 + $0x1c] sm:$0xf]
      %v2467 = vunpack.c.l.bf16 %v2459
      %v2468 = vunpack.c.l.bf16 %v2460
      %v2469 = vunpack.c.l.bf16 %v2461
      %v2470 = vunpack.c.l.bf16 %v2462
      %v2471 = vunpack.c.l.bf16 %v2463
      %v2472 = vunpack.c.l.bf16 %v2464
      %v2473 = vunpack.c.l.bf16 %v2465
      %v2474 = vunpack.c.l.bf16 %v2466
      %v2475 = vadd.f32 %v2451, %v2467
      %v2476 = vadd.f32 %v2452, %v2468
      %v2477 = vadd.f32 %v2453, %v2469
      %v2478 = vadd.f32 %v2454, %v2470
      %v2479 = vadd.f32 %v2455, %v2471
      %v2480 = vadd.f32 %v2456, %v2472
      %v2481 = vadd.f32 %v2457, %v2473
      %v2482 = vadd.f32 %v2458, %v2474
      %v2483 = vmax.f32 %v2475, 0.0
      %v2484 = vmax.f32 %v2476, 0.0
      %v2485 = vmax.f32 %v2477, 0.0
      %v2486 = vmax.f32 %v2478, 0.0
      %v2487 = vmax.f32 %v2479, 0.0
      %v2488 = vmax.f32 %v2480, 0.0
      %v2489 = vmax.f32 %v2481, 0.0
      %v2490 = vmax.f32 %v2482, 0.0
      %v2491 = vpack.c.bf16 %v2484, %v2483
      %v2492 = vpack.c.bf16 %v2486, %v2485
      %v2493 = vpack.c.bf16 %v2488, %v2487
      %v2494 = vpack.c.bf16 %v2490, %v2489
      %v2499 = vunpack.c.l.b16 %v2491
      %v2500 = vunpack.c.h.b16 %v2491
      %v2501 = vunpack.c.l.b16 %v2492
      %v2502 = vunpack.c.h.b16 %v2492
      %v2503 = vunpack.c.l.b16 %v2493
      %v2504 = vunpack.c.h.b16 %v2493
      %v2505 = vunpack.c.l.b16 %v2494
      %v2506 = vunpack.c.h.b16 %v2494
      %v2507 = vpack.c.b16 %v2499, %v2499
      %v2508 = vpack.c.b16 %v2500, %v2500
      %v2509 = vpack.c.b16 %v2501, %v2501
      %v2510 = vpack.c.b16 %v2502, %v2502
      %v2511 = vpack.c.b16 %v2503, %v2503
      %v2512 = vpack.c.b16 %v2504, %v2504
      %v2513 = vpack.c.b16 %v2505, %v2505
      %v2514 = vpack.c.b16 %v2506, %v2506
      %vm2523 = vcmask 519168
      %2524 = vst.msk [vmem:[%s298] sm:$0xf] %vm2523, %v2507
      %2525 = vst.msk [vmem:[%s298 + $0x4] sm:$0xf] %vm2523, %v2508
      %2526 = vst.msk [vmem:[%s298 + $0x8] sm:$0xf] %vm2523, %v2509
      %2527 = vst.msk [vmem:[%s298 + $0xc] sm:$0xf] %vm2523, %v2510
      %2528 = vst.msk [vmem:[%s298 + $0x10] sm:$0xf] %vm2523, %v2511
      %2529 = vst.msk [vmem:[%s298 + $0x14] sm:$0xf] %vm2523, %v2512
      %2530 = vst.msk [vmem:[%s298 + $0x18] sm:$0xf] %vm2523, %v2513
      %2531 = vst.msk [vmem:[%s298 + $0x1c] sm:$0xf] %vm2523, %v2514
      %p2532 = scmp.lt.s32.totalorder %s18, 1
      %s2533 = scalar_select %p2532, %s18, 1
      %s2534 = smul.addr %s2533, 8
      %s2535 = smul.addr %s2534, 4
      %s2536 = scalar_lea.vmem %s7, %s2535
      // Predicated region
      $region49: #{_lambda_.7} parent=47 // pred_check
        %p2537 = pneg %p193
      $region50: #{_lambda_.7} parent=47 // pred_check_branch
        %2539 = sbr.rel (%p2537) target = $region52
      $region51: #{_lambda_.7} parent=47 // pred_region
        _
      $region52: #{_lambda_.7} parent=47 // pred_fallthru
        _
    $region48: #{_lambda_.7} parent=5 // pred_fallthru
      _
    %p2540 = scmp.le.s32.totalorder 2, %s13
    // Predicated region
    $region53: #{_lambda_.7} parent=5 // pred_check
      %p2541 = pneg %p2540
    $region54: #{_lambda_.7} parent=5 // pred_check_branch
      %2543 = sbr.rel (%p2541) target = $region56
    $region55: #{_lambda_.7} parent=5 // pred_region
      %s2544 = ssub.s32 %s13, 2
      // Predicated region
      $region57: #{_lambda_.7} parent=55 // pred_check
        %p2545 = pneg %p199
      $region58: #{_lambda_.7} parent=55 // pred_check_branch
        %2547 = sbr.rel (%p2545) target = $region60
      $region59: #{_lambda_.7} parent=55 // pred_region
        %p2548 = scmp.lt.s32.totalorder %s19, 1
        %s2549 = scalar_select %p2548, %s19, 1
        %s2550 = smul.addr %s2549, 8
        %s2551 = smul.addr %s2550, 4
        %s2552 = scalar_lea.vmem %s7, %s2551
      $region60: #{_lambda_.7} parent=55 // pred_fallthru
        _
    $region56: #{_lambda_.7} parent=5 // pred_fallthru
      _
  $region6: #{_lambda_.7} parent=0 // loop_footer
    %s17 = sadd.s32 1, %s13
  $region7: #{_lambda_.7} parent=0 // loop_footer_branch
    %12 = sbr.rel target = $region3
  $region8: #{_lambda_.7} parent=0 // loop_exit
    _

// kernel: _lambda_.9
$region0: #{_lambda_.9}
  #allocation0 [shape = 'u32[]', space=smem, size = 0x4, offset = 0x4, fixed_abs, tag = 'smem constant byte address 0x4 - core index']
  #allocation1 [shape = 'u32[144,128]{1,0:T(1,128)}', space=vmem, size = 0x12000, scoped, tag = 'internal scratch']
  %s0 = inlined_call_operand.vmem [shape: bf16[2,10,10,64], index: 0, kind: input, shape index: {}]
  %s1 = inlined_call_operand.vmem [shape: bf16[576,64], index: 1, kind: input, shape index: {}]
  %s2 = inlined_call_operand.vmem [shape: f32[64,32], index: 2, kind: input, shape index: {}]
  %s3 = inlined_call_operand.vmem [shape: f32[32,64], index: 3, kind: input, shape index: {}]
  %s4 = inlined_call_operand.vmem [shape: f32[1,64], index: 4, kind: input, shape index: {}]
  %s5 = inlined_call_operand.vmem [shape: f32[1,64], index: 5, kind: input, shape index: {}]
  %s6 = inlined_call_operand.vmem [shape: bf16[2,64,64], index: 6, kind: input, shape index: {}]
  %s7 = inlined_call_operand.hbm [shape: f32[2,64,64], index: 7, kind: output, shape index: {}]
  %s8 = sld [smem:[#allocation0]]
  $region61: #{_lambda_.9} parent=0
    _
  %s10 = ssub.s32 1, %s8
  %s11 = scalar_select 0, %s10, %s8
  $region1: #{_lambda_.9} parent=0
    #allocation2 [shape = 'u8[65536]{0}', space=vmem, size = 0x10000, scoped, tag = 'output window, operand 0']
    #allocation3 [shape = 's32[2]{0}', space=sflag, size = 0x8, scoped, tag = 'scoped memory for _lambda_.9']
    %12 = vsyncpa [#allocation3], 0
    %s13 = scalar_lea.sflag [#allocation3], 1
    %14 = vsyncpa %s13, 0
    loop: start=0, step=1, limit=4
    $region2: #{_lambda_.9} parent=1 // loop_pre_header
      _
    $region3: #{_lambda_.9} parent=1 // loop_header
      %s16 = sphi 0, %s20
      %p17 = scmp.ge.s32.totalorder %s16, 4
      %s26 = sphi 0, %s28
      %s29 = sphi 0, %s26
      %s30 = sphi 0, %s29
      %s46 = sphi 0, %s30
      %s50 = sphi 0, %s50
      %s52 = sphi 0, %s50
      %s53 = sphi 0, %s52
      %s67 = sphi 0, %s53
      %s71 = sphi 0, %s71
      %s73 = sphi 0, %s71
      %s74 = sphi 0, %s73
      %s88 = sphi 0, %s74
      %s92 = sphi 0, %s92
      %s94 = sphi 0, %s92
      %s95 = sphi 0, %s94
      %s109 = sphi 0, %s95
      %s113 = sphi 0, %s113
      %s115 = sphi 0, %s113
      %s116 = sphi 0, %s115
      %s130 = sphi 0, %s116
      %s134 = sphi 0, %s134
      %s136 = sphi 0, %s134
      %s137 = sphi 0, %s136
      %s151 = sphi 0, %s137
      %s157 = sphi 0, %s159
      %s160 = sphi 0, %s157
      %s161 = sphi 0, %s160
      %s177 = sphi 0, %s161
      %s183 = sphi 0, %s185
      %s186 = sphi 0, %s183
      %s187 = sphi 0, %s186
      %s203 = sphi 0, %s187
    $region4: #{_lambda_.9} parent=1 // loop_header_branch
      %19 = sbr.rel (%p17) target = $region8
    $region5: #{_lambda_.9} parent=1 // loop_body
      %s21 = ssub.s32 %s16, 1
      %s22 = ssub.s32 %s16, 2
      %s23 = sadd.s32 %s16, 1
      %s24 = ssub.s32 %s16, %s23
      %p25 = scmp.eq.s32.totalorder %s24, 0
      %s27 = sadd.s32 %s26, 1
      %s28 = scalar_select %p25, %s26, %s27
      %p31 = pneg %p25
      %p32 = scmp.eq.s32.totalorder %s16, 1
      %p33 = por %p31, %p32
      %p34 = scmp.ne.s32.totalorder %s26, %s29
      %p35 = scmp.eq.s32.totalorder %s16, 0
      %p36 = por %p34, %p35
      %p37 = scmp.ne.s32.totalorder %s26, %s29
      %p38 = scmp.eq.s32.totalorder %s21, 1
      %p39 = por %p37, %p38
      %p40 = scmp.ne.s32.totalorder %s29, %s30
      %p41 = scmp.eq.s32.totalorder %s21, 0
      %p42 = por %p40, %p41
      %p43 = scmp.ne.s32.totalorder %s29, %s30
      %p44 = scmp.eq.s32.totalorder %s22, 1
      %p45 = por %p43, %p44
      %p47 = scmp.ne.s32.totalorder %s30, %s46
      %p48 = scmp.eq.s32.totalorder %s22, 0
      %p49 = por %p47, %p48
      %s51 = sadd.s32 %s50, 1
      %p54 = scmp.eq.s32.totalorder %s16, 1
      %p55 = scmp.ne.s32.totalorder %s50, %s52
      %p56 = scmp.eq.s32.totalorder %s16, 0
      %p57 = por %p55, %p56
      %p58 = scmp.ne.s32.totalorder %s50, %s52
      %p59 = scmp.eq.s32.totalorder %s21, 1
      %p60 = por %p58, %p59
      %p61 = scmp.ne.s32.totalorder %s52, %s53
      %p62 = scmp.eq.s32.totalorder %s21, 0
      %p63 = por %p61, %p62
      %p64 = scmp.ne.s32.totalorder %s52, %s53
      %p65 = scmp.eq.s32.totalorder %s22, 1
      %p66 = por %p64, %p65
      %p68 = scmp.ne.s32.totalorder %s53, %s67
      %p69 = scmp.eq.s32.totalorder %s22, 0
      %p70 = por %p68, %p69
      %s72 = sadd.s32 %s71, 1
      %p75 = scmp.eq.s32.totalorder %s16, 1
      %p76 = scmp.ne.s32.totalorder %s71, %s73
      %p77 = scmp.eq.s32.totalorder %s16, 0
      %p78 = por %p76, %p77
      %p79 = scmp.ne.s32.totalorder %s71, %s73
      %p80 = scmp.eq.s32.totalorder %s21, 1
      %p81 = por %p79, %p80
      %p82 = scmp.ne.s32.totalorder %s73, %s74
      %p83 = scmp.eq.s32.totalorder %s21, 0
      %p84 = por %p82, %p83
      %p85 = scmp.ne.s32.totalorder %s73, %s74
      %p86 = scmp.eq.s32.totalorder %s22, 1
      %p87 = por %p85, %p86
      %p89 = scmp.ne.s32.totalorder %s74, %s88
      %p90 = scmp.eq.s32.totalorder %s22, 0
      %p91 = por %p89, %p90
      %s93 = sadd.s32 %s92, 1
      %p96 = scmp.eq.s32.totalorder %s16, 1
      %p97 = scmp.ne.s32.totalorder %s92, %s94
      %p98 = scmp.eq.s32.totalorder %s16, 0
      %p99 = por %p97, %p98
      %p100 = scmp.ne.s32.totalorder %s92, %s94
      %p101 = scmp.eq.s32.totalorder %s21, 1
      %p102 = por %p100, %p101
      %p103 = scmp.ne.s32.totalorder %s94, %s95
      %p104 = scmp.eq.s32.totalorder %s21, 0
      %p105 = por %p103, %p104
      %p106 = scmp.ne.s32.totalorder %s94, %s95
      %p107 = scmp.eq.s32.totalorder %s22, 1
      %p108 = por %p106, %p107
      %p110 = scmp.ne.s32.totalorder %s95, %s109
      %p111 = scmp.eq.s32.totalorder %s22, 0
      %p112 = por %p110, %p111
      %s114 = sadd.s32 %s113, 1
      %p117 = scmp.eq.s32.totalorder %s16, 1
      %p118 = scmp.ne.s32.totalorder %s113, %s115
      %p119 = scmp.eq.s32.totalorder %s16, 0
      %p120 = por %p118, %p119
      %p121 = scmp.ne.s32.totalorder %s113, %s115
      %p122 = scmp.eq.s32.totalorder %s21, 1
      %p123 = por %p121, %p122
      %p124 = scmp.ne.s32.totalorder %s115, %s116
      %p125 = scmp.eq.s32.totalorder %s21, 0
      %p126 = por %p124, %p125
      %p127 = scmp.ne.s32.totalorder %s115, %s116
      %p128 = scmp.eq.s32.totalorder %s22, 1
      %p129 = por %p127, %p128
      %p131 = scmp.ne.s32.totalorder %s116, %s130
      %p132 = scmp.eq.s32.totalorder %s22, 0
      %p133 = por %p131, %p132
      %s135 = sadd.s32 %s134, 1
      %p138 = scmp.eq.s32.totalorder %s16, 1
      %p139 = scmp.ne.s32.totalorder %s134, %s136
      %p140 = scmp.eq.s32.totalorder %s16, 0
      %p141 = por %p139, %p140
      %p142 = scmp.ne.s32.totalorder %s134, %s136
      %p143 = scmp.eq.s32.totalorder %s21, 1
      %p144 = por %p142, %p143
      %p145 = scmp.ne.s32.totalorder %s136, %s137
      %p146 = scmp.eq.s32.totalorder %s21, 0
      %p147 = por %p145, %p146
      %p148 = scmp.ne.s32.totalorder %s136, %s137
      %p149 = scmp.eq.s32.totalorder %s22, 1
      %p150 = por %p148, %p149
      %p152 = scmp.ne.s32.totalorder %s137, %s151
      %p153 = scmp.eq.s32.totalorder %s22, 0
      %p154 = por %p152, %p153
      %s155 = ssub.s32 %s16, %s23
      %p156 = scmp.eq.s32.totalorder %s155, 0
      %s158 = sadd.s32 %s157, 1
      %s159 = scalar_select %p156, %s157, %s158
      %p162 = pneg %p156
      %p163 = scmp.eq.s32.totalorder %s16, 1
      %p164 = por %p162, %p163
      %p165 = scmp.ne.s32.totalorder %s157, %s160
      %p166 = scmp.eq.s32.totalorder %s16, 0
      %p167 = por %p165, %p166
      %p168 = scmp.ne.s32.totalorder %s157, %s160
      %p169 = scmp.eq.s32.totalorder %s21, 1
      %p170 = por %p168, %p169
      %p171 = scmp.ne.s32.totalorder %s160, %s161
      %p172 = scmp.eq.s32.totalorder %s21, 0
      %p173 = por %p171, %p172
      %p174 = scmp.ne.s32.totalorder %s160, %s161
      %p175 = scmp.eq.s32.totalorder %s22, 1
      %p176 = por %p174, %p175
      %p178 = scmp.ne.s32.totalorder %s161, %s177
      %p179 = scmp.eq.s32.totalorder %s22, 0
      %p180 = por %p178, %p179
      %s181 = ssub.s32 %s16, %s23
      %p182 = scmp.eq.s32.totalorder %s181, 0
      %s184 = sadd.s32 %s183, 1
      %s185 = scalar_select %p182, %s183, %s184
      %p188 = pneg %p182
      %p189 = scmp.eq.s32.totalorder %s16, 1
      %p190 = por %p188, %p189
      %p191 = scmp.ne.s32.totalorder %s183, %s186
      %p192 = scmp.eq.s32.totalorder %s16, 0
      %p193 = por %p191, %p192
      %p194 = scmp.ne.s32.totalorder %s183, %s186
      %p195 = scmp.eq.s32.totalorder %s21, 1
      %p196 = por %p194, %p195
      %p197 = scmp.ne.s32.totalorder %s186, %s187
      %p198 = scmp.eq.s32.totalorder %s21, 0
      %p199 = por %p197, %p198
      %p200 = scmp.ne.s32.totalorder %s186, %s187
      %p201 = scmp.eq.s32.totalorder %s22, 1
      %p202 = por %p200, %p201
      %p204 = scmp.ne.s32.totalorder %s187, %s203
      %p205 = scmp.eq.s32.totalorder %s22, 0
      %p206 = por %p204, %p205
      %p207 = scmp.le.s32.totalorder 1, %s16
      %p208 = scmp.lt.s32.totalorder %s16, 3
      %p209 = pnand %p207, %p208
      %p210 = pneg %p209
      // Predicated region
      $region9: #{_lambda_.9} parent=5 // pred_check
        _
      $region10: #{_lambda_.9} parent=5 // pred_check_branch
        %212 = sbr.rel (%p209) target = $region12
      $region11: #{_lambda_.9} parent=5 // pred_region
        %s213 = ssub.s32 %s16, 1
        // Predicated region
        $region13: #{_lambda_.9} parent=11 // pred_check
          %p214 = pneg %p63
        $region14: #{_lambda_.9} parent=11 // pred_check_branch
          %216 = sbr.rel (%p214) target = $region16
        $region15: #{_lambda_.9} parent=11 // pred_region
          _
        $region16: #{_lambda_.9} parent=11 // pred_fallthru
          _
        // Predicated region
        $region17: #{_lambda_.9} parent=11 // pred_check
          %p217 = pneg %p84
        $region18: #{_lambda_.9} parent=11 // pred_check_branch
          %219 = sbr.rel (%p217) target = $region20
        $region19: #{_lambda_.9} parent=11 // pred_region
          _
        $region20: #{_lambda_.9} parent=11 // pred_fallthru
          _
        // Predicated region
        $region21: #{_lambda_.9} parent=11 // pred_check
          %p220 = pneg %p105
        $region22: #{_lambda_.9} parent=11 // pred_check_branch
          %222 = sbr.rel (%p220) target = $region24
        $region23: #{_lambda_.9} parent=11 // pred_region
          _
        $region24: #{_lambda_.9} parent=11 // pred_fallthru
          _
        // Predicated region
        $region25: #{_lambda_.9} parent=11 // pred_check
          %p223 = pneg %p126
        $region26: #{_lambda_.9} parent=11 // pred_check_branch
          %225 = sbr.rel (%p223) target = $region28
        $region27: #{_lambda_.9} parent=11 // pred_region
          _
        $region28: #{_lambda_.9} parent=11 // pred_fallthru
          _
        // Predicated region
        $region29: #{_lambda_.9} parent=11 // pred_check
          %p226 = pneg %p147
        $region30: #{_lambda_.9} parent=11 // pred_check_branch
          %228 = sbr.rel (%p226) target = $region32
        $region31: #{_lambda_.9} parent=11 // pred_region
          _
        $region32: #{_lambda_.9} parent=11 // pred_fallthru
          _
      $region12: #{_lambda_.9} parent=5 // pred_fallthru
        _
      %p229 = scmp.lt.s32.totalorder %s16, 2
      // Predicated region
      $region33: #{_lambda_.9} parent=5 // pred_check
        %p230 = pneg %p229
      $region34: #{_lambda_.9} parent=5 // pred_check_branch
        %232 = sbr.rel (%p230) target = $region36
      $region35: #{_lambda_.9} parent=5 // pred_region
        // Predicated region
        $region37: #{_lambda_.9} parent=35 // pred_check
          %p233 = pneg %p36
        $region38: #{_lambda_.9} parent=35 // pred_check_branch
          %235 = sbr.rel (%p233) target = $region40
        $region39: #{_lambda_.9} parent=35 // pred_region
          %p236 = scmp.lt.s32.totalorder %s16, 1
          %s237 = scalar_select %p236, %s16, 1
          %s238 = smul.addr %s237, 20
          %s239 = smul.addr %s238, 4
          %s240 = scalar_lea.vmem %s0, %s239
        $region40: #{_lambda_.9} parent=35 // pred_fallthru
          _
        // Predicated region
        $region41: #{_lambda_.9} parent=35 // pred_check
          %p241 = pneg %p167
        $region42: #{_lambda_.9} parent=35 // pred_check_branch
          %243 = sbr.rel (%p241) target = $region44
        $region43: #{_lambda_.9} parent=35 // pred_region
          %p244 = scmp.lt.s32.totalorder %s16, 1
          %s245 = scalar_select %p244, %s16, 1
          %s246 = smul.addr %s245, 8
          %s247 = smul.addr %s246, 4
          %s248 = scalar_lea.vmem %s6, %s247
        $region44: #{_lambda_.9} parent=35 // pred_fallthru
          _
      $region36: #{_lambda_.9} parent=5 // pred_fallthru
        _
      %p249 = scmp.le.s32.totalorder 1, %s16
      %p250 = scmp.lt.s32.totalorder %s16, 3
      %p251 = pnand %p249, %p250
      %p252 = pneg %p251
      // Predicated region
      $region45: #{_lambda_.9} parent=5 // pred_check
        _
      $region46: #{_lambda_.9} parent=5 // pred_check_branch
        %254 = sbr.rel (%p251) target = $region48
      $region47: #{_lambda_.9} parent=5 // pred_region
        %s255 = ssub.s32 %s16, 1
        %p256 = scmp.lt.s32.totalorder %s21, 1
        %s257 = scalar_select %p256, %s21, 1
        %s258 = smul.addr %s257, 20
        %s259 = smul.addr %s258, 4
        %s260 = scalar_lea.vmem %s0, %s259
        %p261 = pneg %p42
        %p262 = pneg %p39
        %p263 = pneg %p63
        %p264 = pneg %p60
        %p265 = pneg %p84
        %p266 = pneg %p81
        %p267 = pneg %p105
        %p268 = pneg %p102
        %p269 = pneg %p126
        %p270 = pneg %p123
        %p271 = pneg %p147
        %p272 = pneg %p144
        %p273 = scmp.lt.s32.totalorder %s21, 1
        %s274 = scalar_select %p273, %s21, 1
        %s275 = smul.addr %s274, 8
        %s276 = smul.addr %s275, 4
        %s277 = scalar_lea.vmem %s6, %s276
        %p278 = pneg %p173
        %p279 = pneg %p170
        %p280 = pneg %p199
        %p281 = pneg %p196
        %s282 = sand.u32 %s186, 1
        %s283 = scalar_lea.sflag [#allocation3], %s282
        %s284 = sand.u32 %s186, 1
        %s285 = smul.addr %s284, 64
        %s286 = scalar_lea.vmem [#allocation2], %s285
        %p287 = scmp.lt.s32.totalorder %s21, 1
        %s288 = scalar_select %p287, %s21, 1
        %s289 = smul.addr %s288, 20
        %s290 = smul.addr %s289, 4
        %s291 = scalar_lea.vmem %s0, %s290
        %p292 = scmp.lt.s32.totalorder %s21, 1
        %s293 = scalar_select %p292, %s21, 1
        %s294 = smul.addr %s293, 8
        %s295 = smul.addr %s294, 4
        %s296 = scalar_lea.vmem %s6, %s295
        %v298 = vld [vmem:[%s291] sm:$0xf]
        %v299 = vld [vmem:[%s291 + $0x8] sm:$0xf]
        %v300 = vld [vmem:[%s291 + $0x10] sm:$0xf]
        %v301 = vld [vmem:[%s291 + $0x18] sm:$0xf]
        %v302 = vld [vmem:[%s291 + $0x20] sm:$0xf]
        %v303 = vld [vmem:[%s291 + $0x28] sm:$0xf]
        %v304 = vld [vmem:[%s291 + $0x30] sm:$0xf]
        %v305 = vld [vmem:[%s291 + $0x38] sm:$0xf]
        %v306 = vld [vmem:[%s1] sm:$0xf]
        %v307 = vld [vmem:[%s1 + $0x4] sm:$0xf]
        %v308 = vld [vmem:[%s1 + $0x8] sm:$0xf]
        %v309 = vld [vmem:[%s1 + $0xc] sm:$0xf]
        %v310 = vld [vmem:[%s1 + $0x10] sm:$0xf]
        %v311 = vld [vmem:[%s1 + $0x14] sm:$0xf]
        %v312 = vld [vmem:[%s1 + $0x18] sm:$0xf]
        %v313 = vld [vmem:[%s1 + $0x1c] sm:$0xf]
        %v314 = vld [vmem:[%s291 + $0x4] sm:$0x1]
        %v315 = vld [vmem:[%s291 + $0xc] sm:$0x1]
        %v316 = vld [vmem:[%s291 + $0x14] sm:$0x1]
        %v317 = vld [vmem:[%s291 + $0x1c] sm:$0x1]
        %v318 = vld [vmem:[%s291 + $0x24] sm:$0x1]
        %v319 = vld [vmem:[%s291 + $0x2c] sm:$0x1]
        %v320 = vld [vmem:[%s291 + $0x34] sm:$0x1]
        %v321 = vld [vmem:[%s291 + $0x3c] sm:$0x1]
        %vm322 = vsmask.f32 3328
        %vm323 = vsmask.f32 7440
        %vm324 = vmor %vm322, %vm323
        %v326 = vshrl.u32 %v298, 16
        %v328 = vrot.slane %v326, 4
        %v329 = vshll.u32 %v298, 16
        %v331 = vrot.slane %v329, 5
        %v332 = vor.u32 %v328, %v331
        %v333 = vrot.slane %v332, 4
        %v335 = vshll.u32 %v314, 16
        %v337 = vrot.slane %v335, 5
        %v338 = vsel %vm324, %v333, %v337
        %v340 = vshrl.u32 %v299, 16
        %v342 = vrot.slane %v340, 4
        %v343 = vshll.u32 %v299, 16
        %v345 = vrot.slane %v343, 5
        %v346 = vor.u32 %v342, %v345
        %v347 = vrot.slane %v346, 4
        %v349 = vshll.u32 %v315, 16
        %v351 = vrot.slane %v349, 5
        %v352 = vsel %vm324, %v347, %v351
        %v354 = vshrl.u32 %v300, 16
        %v356 = vrot.slane %v354, 4
        %v357 = vshll.u32 %v300, 16
        %v359 = vrot.slane %v357, 5
        %v360 = vor.u32 %v356, %v359
        %v361 = vrot.slane %v360, 4
        %v363 = vshll.u32 %v316, 16
        %v365 = vrot.slane %v363, 5
        %v366 = vsel %vm324, %v361, %v365
        %v368 = vshrl.u32 %v301, 16
        %v370 = vrot.slane %v368, 4
        %v371 = vshll.u32 %v301, 16
        %v373 = vrot.slane %v371, 5
        %v374 = vor.u32 %v370, %v373
        %v375 = vrot.slane %v374, 4
        %v377 = vshll.u32 %v317, 16
        %v379 = vrot.slane %v377, 5
        %v380 = vsel %vm324, %v375, %v379
        %v382 = vshrl.u32 %v302, 16
        %v384 = vrot.slane %v382, 4
        %v385 = vshll.u32 %v302, 16
        %v387 = vrot.slane %v385, 5
        %v388 = vor.u32 %v384, %v387
        %v389 = vrot.slane %v388, 4
        %v391 = vshll.u32 %v318, 16
        %v393 = vrot.slane %v391, 5
        %v394 = vsel %vm324, %v389, %v393
        %v396 = vshrl.u32 %v303, 16
        %v398 = vrot.slane %v396, 4
        %v399 = vshll.u32 %v303, 16
        %v401 = vrot.slane %v399, 5
        %v402 = vor.u32 %v398, %v401
        %v403 = vrot.slane %v402, 4
        %v405 = vshll.u32 %v319, 16
        %v407 = vrot.slane %v405, 5
        %v408 = vsel %vm324, %v403, %v407
        %v410 = vshrl.u32 %v304, 16
        %v412 = vrot.slane %v410, 4
        %v413 = vshll.u32 %v304, 16
        %v415 = vrot.slane %v413, 5
        %v416 = vor.u32 %v412, %v415
        %v417 = vrot.slane %v416, 4
        %v419 = vshll.u32 %v320, 16
        %v421 = vrot.slane %v419, 5
        %v422 = vsel %vm324, %v417, %v421
        %v424 = vshrl.u32 %v305, 16
        %v426 = vrot.slane %v424, 4
        %v427 = vshll.u32 %v305, 16
        %v429 = vrot.slane %v427, 5
        %v430 = vor.u32 %v426, %v429
        %v431 = vrot.slane %v430, 4
        %v433 = vshll.u32 %v321, 16
        %v435 = vrot.slane %v433, 5
        %v436 = vsel %vm324, %v431, %v435
        %v437 = vld [vmem:[%s1 + $0x20] sm:$0xf]
        %v438 = vld [vmem:[%s1 + $0x24] sm:$0xf]
        %v439 = vld [vmem:[%s1 + $0x28] sm:$0xf]
        %v440 = vld [vmem:[%s1 + $0x2c] sm:$0xf]
        %v441 = vld [vmem:[%s1 + $0x30] sm:$0xf]
        %v442 = vld [vmem:[%s1 + $0x34] sm:$0xf]
        %v443 = vld [vmem:[%s1 + $0x38] sm:$0xf]
        %v444 = vld [vmem:[%s1 + $0x3c] sm:$0xf]
        %v445 = vunpack.c.l.b16 %v338
        %v446 = vunpack.c.l.b16 %v352
        %v447 = vunpack.c.l.b16 %v366
        %v448 = vunpack.c.l.b16 %v380
        %v449 = vunpack.c.l.b16 %v394
        %v450 = vunpack.c.l.b16 %v408
        %v451 = vunpack.c.l.b16 %v422
        %v452 = vunpack.c.l.b16 %v436
        %v453 = vpack.c.b16 %v446, %v445
        %v454 = vpack.c.b16 %v448, %v447
        %v455 = vpack.c.b16 %v450, %v449
        %v456 = vpack.c.b16 %v452, %v451
        %v465 = vunpack.c.l.b16 %v437
        %v466 = vunpack.c.l.b16 %v438
        %v467 = vunpack.c.l.b16 %v439
        %v468 = vunpack.c.l.b16 %v440
        %v469 = vunpack.c.l.b16 %v441
        %v470 = vunpack.c.l.b16 %v442
        %v471 = vunpack.c.l.b16 %v443
        %v472 = vunpack.c.l.b16 %v444
        %v473 = vpack.c.b16 %v466, %v465
        %v474 = vpack.c.b16 %v468, %v467
        %v475 = vpack.c.b16 %v470, %v469
        %v476 = vpack.c.b16 %v472, %v471
        %vm481 = vcmask 523264
        %v483 = vsel %vm481, %v453, 0
        %v486 = vsel %vm481, %v454, 0
        %v489 = vsel %vm481, %v455, 0
        %v492 = vsel %vm481, %v456, 0
        %494 = vmatprep.subr.bf16.mxu0 0
        %495 = vmatpush1.bf16.msra.mxu0 %v473
        %496 = vmatprep.subr.bf16.mxu0 0
        %497 = vmatpush1.bf16.msra.mxu0 %v474
        %498 = vmatprep.subr.bf16.mxu0 0
        %499 = vmatpush1.bf16.msra.mxu0 %v475
        %500 = vmatprep.subr.bf16.mxu0 0
        %501 = vmatpush1.bf16.msra.mxu0 %v476
        %502 = vmatprep.subr.bf16.mxu0 0
        %503 = vmatpush1.bf16.msra.mxu0 0
        %504 = vmatprep.subr.bf16.mxu0 0
        %505 = vmatpush1.bf16.msra.mxu0 0
        %506 = vmatprep.subr.bf16.mxu0 0
        %507 = vmatpush1.bf16.msra.mxu0 0
        %508 = vmatprep.subr.bf16.mxu0 0
        %509 = vmatpush1.bf16.msra.mxu0 0
        %510 = vmatprep.subr.bf16.mxu0 0
        %511 = vmatpush1.bf16.msra.mxu0 0
        %512 = vmatprep.subr.bf16.mxu0 0
        %513 = vmatpush1.bf16.msra.mxu0 0
        %514 = vmatprep.subr.bf16.mxu0 0
        %515 = vmatpush1.bf16.msra.mxu0 0
        %516 = vmatprep.subr.bf16.mxu0 0
        %517 = vmatpush1.bf16.msra.mxu0 0
        %518 = vmatprep.subr.bf16.mxu0 0
        %519 = vmatpush1.bf16.msra.mxu0 0
        %520 = vmatprep.subr.bf16.mxu0 0
        %521 = vmatpush1.bf16.msra.mxu0 0
        %522 = vmatprep.subr.bf16.mxu0 0
        %523 = vmatpush1.bf16.msra.mxu0 0
        %524 = vmatprep.subr.bf16.mxu0 0
        %525 = vmatpush1.bf16.msra.mxu0 0
        %526 = vmatprep.mubr.bf16.mxu0 0
        %527 = vmatmul.mubr.bf16.gmra.mrb[0].mxu0 %v483
        %v528 = vpop.f32.mrb[0].mxu0
        %v529 = vadd.f32 0.0, %v528
        %v530 = vpop.f32.mrb[0].mxu0
        %v531 = vpop.f32.mrb[0].mxu0
        %v532 = vadd.f32 0.0, %v531
        %v533 = vpop.f32.mrb[0].mxu0
        %534 = vmatprep.mubr.bf16.mxu0 0
        %535 = vmatmul.mubr.bf16.gmra.mrb[0].mxu0 %v486
        %v536 = vpop.f32.mrb[0].mxu0
        %v537 = vadd.f32 0.0, %v536
        %v538 = vpop.f32.mrb[0].mxu0
        %v539 = vpop.f32.mrb[0].mxu0
        %v540 = vadd.f32 0.0, %v539
        %v541 = vpop.f32.mrb[0].mxu0
        %542 = vmatprep.mubr.bf16.mxu0 0
        %543 = vmatmul.mubr.bf16.gmra.mrb[0].mxu0 %v489
        %v544 = vpop.f32.mrb[0].mxu0
        %v545 = vadd.f32 0.0, %v544
        %v546 = vpop.f32.mrb[0].mxu0
        %v547 = vpop.f32.mrb[0].mxu0
        %v548 = vadd.f32 0.0, %v547
        %v549 = vpop.f32.mrb[0].mxu0
        %550 = vmatprep.mubr.bf16.mxu0 0
        %551 = vmatmul.mubr.bf16.gmra.mrb[0].mxu0 %v492
        %v552 = vpop.f32.mrb[0].mxu0
        %v553 = vadd.f32 0.0, %v552
        %v554 = vpop.f32.mrb[0].mxu0
        %v555 = vpop.f32.mrb[0].mxu0
        %v556 = vadd.f32 0.0, %v555
        %v557 = vpop.f32.mrb[0].mxu0
        %558 = vdwg.mxu0
        %v567 = vunpack.c.l.b16 %v298
        %v568 = vunpack.c.l.b16 %v299
        %v569 = vunpack.c.l.b16 %v300
        %v570 = vunpack.c.l.b16 %v301
        %v571 = vunpack.c.l.b16 %v302
        %v572 = vunpack.c.l.b16 %v303
        %v573 = vunpack.c.l.b16 %v304
        %v574 = vunpack.c.l.b16 %v305
        %v575 = vpack.c.b16 %v568, %v567
        %v576 = vpack.c.b16 %v570, %v569
        %v577 = vpack.c.b16 %v572, %v571
        %v578 = vpack.c.b16 %v574, %v573
        %v587 = vunpack.c.l.b16 %v306
        %v588 = vunpack.c.l.b16 %v307
        %v589 = vunpack.c.l.b16 %v308
        %v590 = vunpack.c.l.b16 %v309
        %v591 = vunpack.c.l.b16 %v310
        %v592 = vunpack.c.l.b16 %v311
        %v593 = vunpack.c.l.b16 %v312
        %v594 = vunpack.c.l.b16 %v313
        %v595 = vpack.c.b16 %v588, %v587
        %v596 = vpack.c.b16 %v590, %v589
        %v597 = vpack.c.b16 %v592, %v591
        %v598 = vpack.c.b16 %v594, %v593
        %v604 = vsel %vm481, %v575, 0
        %v607 = vsel %vm481, %v576, 0
        %v610 = vsel %vm481, %v577, 0
        %v613 = vsel %vm481, %v578, 0
        %615 = vmatprep.subr.bf16.mxu0 0
        %616 = vmatpush1.bf16.msra.mxu0 %v595
        %617 = vmatprep.subr.bf16.mxu0 0
        %618 = vmatpush1.bf16.msra.mxu0 %v596
        %619 = vmatprep.subr.bf16.mxu0 0
        %620 = vmatpush1.bf16.msra.mxu0 %v597
        %621 = vmatprep.subr.bf16.mxu0 0
        %622 = vmatpush1.bf16.msra.mxu0 %v598
        %623 = vmatprep.subr.bf16.mxu0 0
        %624 = vmatpush1.bf16.msra.mxu0 0
        %625 = vmatprep.subr.bf16.mxu0 0
        %626 = vmatpush1.bf16.msra.mxu0 0
        %627 = vmatprep.subr.bf16.mxu0 0
        %628 = vmatpush1.bf16.msra.mxu0 0
        %629 = vmatprep.subr.bf16.mxu0 0
        %630 = vmatpush1.bf16.msra.mxu0 0
        %631 = vmatprep.subr.bf16.mxu0 0
        %632 = vmatpush1.bf16.msra.mxu0 0
        %633 = vmatprep.subr.bf16.mxu0 0
        %634 = vmatpush1.bf16.msra.mxu0 0
        %635 = vmatprep.subr.bf16.mxu0 0
        %636 = vmatpush1.bf16.msra.mxu0 0
        %637 = vmatprep.subr.bf16.mxu0 0
        %638 = vmatpush1.bf16.msra.mxu0 0
        %639 = vmatprep.subr.bf16.mxu0 0
        %640 = vmatpush1.bf16.msra.mxu0 0
        %641 = vmatprep.subr.bf16.mxu0 0
        %642 = vmatpush1.bf16.msra.mxu0 0
        %643 = vmatprep.subr.bf16.mxu0 0
        %644 = vmatpush1.bf16.msra.mxu0 0
        %645 = vmatprep.subr.bf16.mxu0 0
        %646 = vmatpush1.bf16.msra.mxu0 0
        %647 = vmatprep.mubr.bf16.mxu0 0
        %648 = vmatmul.mubr.bf16.gmra.mrb[0].mxu0 %v604
        %v649 = vpop.f32.mrb[0].mxu0
        %v650 = vadd.f32 %v529, %v649
        %v651 = vpop.f32.mrb[0].mxu0
        %v652 = vpop.f32.mrb[0].mxu0
        %v653 = vadd.f32 %v532, %v652
        %v654 = vpop.f32.mrb[0].mxu0
        %655 = vmatprep.mubr.bf16.mxu0 0
        %656 = vmatmul.mubr.bf16.gmra.mrb[0].mxu0 %v607
        %v657 = vpop.f32.mrb[0].mxu0
        %v658 = vadd.f32 %v537, %v657
        %v659 = vpop.f32.mrb[0].mxu0
        %v660 = vpop.f32.mrb[0].mxu0
        %v661 = vadd.f32 %v540, %v660
        %v662 = vpop.f32.mrb[0].mxu0
        %663 = vmatprep.mubr.bf16.mxu0 0
        %664 = vmatmul.mubr.bf16.gmra.mrb[0].mxu0 %v610
        %v665 = vpop.f32.mrb[0].mxu0
        %v666 = vadd.f32 %v545, %v665
        %v667 = vpop.f32.mrb[0].mxu0
        %v668 = vpop.f32.mrb[0].mxu0
        %v669 = vadd.f32 %v548, %v668
        %v670 = vpop.f32.mrb[0].mxu0
        %671 = vmatprep.mubr.bf16.mxu0 0
        %672 = vmatmul.mubr.bf16.gmra.mrb[0].mxu0 %v613
        %v673 = vpop.f32.mrb[0].mxu0
        %v674 = vadd.f32 %v553, %v673
        %v675 = vpop.f32.mrb[0].mxu0
        %v676 = vpop.f32.mrb[0].mxu0
        %v677 = vadd.f32 %v556, %v676
        %v678 = vpop.f32.mrb[0].mxu0
        %679 = vdwg.mxu0
        %v680 = vld [vmem:[%s291] sm:$0xe]
        %v681 = vld [vmem:[%s291 + $0x8] sm:$0xe]
        %v682 = vld [vmem:[%s291 + $0x10] sm:$0xe]
        %v683 = vld [vmem:[%s291 + $0x18] sm:$0xe]
        %v684 = vld [vmem:[%s291 + $0x20] sm:$0xe]
        %v685 = vld [vmem:[%s291 + $0x28] sm:$0xe]
        %v686 = vld [vmem:[%s291 + $0x30] sm:$0xe]
        %v687 = vld [vmem:[%s291 + $0x38] sm:$0xe]
        %vm704 = vcmask 1042432
        %vm705 = vcmask 1046532
        %vm706 = vmor %vm704, %vm705
        %v707 = vrot.slane %v680, 5
        %v708 = vrot.slane %v707, 4
        %v709 = vrot.slane %v314, 5
        %v710 = vsel %vm706, %v708, %v709
        %v711 = vrot.slane %v681, 5
        %v712 = vrot.slane %v711, 4
        %v713 = vrot.slane %v315, 5
        %v714 = vsel %vm706, %v712, %v713
        %v715 = vrot.slane %v682, 5
        %v716 = vrot.slane %v715, 4
        %v717 = vrot.slane %v316, 5
        %v718 = vsel %vm706, %v716, %v717
        %v719 = vrot.slane %v683, 5
        %v720 = vrot.slane %v719, 4
        %v721 = vrot.slane %v317, 5
        %v722 = vsel %vm706, %v720, %v721
        %v723 = vrot.slane %v684, 5
        %v724 = vrot.slane %v723, 4
        %v725 = vrot.slane %v318, 5
        %v726 = vsel %vm706, %v724, %v725
        %v727 = vrot.slane %v685, 5
        %v728 = vrot.slane %v727, 4
        %v729 = vrot.slane %v319, 5
        %v730 = vsel %vm706, %v728, %v729
        %v731 = vrot.slane %v686, 5
        %v732 = vrot.slane %v731, 4
        %v733 = vrot.slane %v320, 5
        %v734 = vsel %vm706, %v732, %v733
        %v735 = vrot.slane %v687, 5
        %v736 = vrot.slane %v735, 4
        %v737 = vrot.slane %v321, 5
        %v738 = vsel %vm706, %v736, %v737
        %v739 = vld [vmem:[%s1 + $0x40] sm:$0xf]
        %v740 = vld [vmem:[%s1 + $0x44] sm:$0xf]
        %v741 = vld [vmem:[%s1 + $0x48] sm:$0xf]
        %v742 = vld [vmem:[%s1 + $0x4c] sm:$0xf]
        %v743 = vld [vmem:[%s1 + $0x50] sm:$0xf]
        %v744 = vld [vmem:[%s1 + $0x54] sm:$0xf]
        %v745 = vld [vmem:[%s1 + $0x58] sm:$0xf]
        %v746 = vld [vmem:[%s1 + $0x5c] sm:$0xf]
        %v747 = vunpack.c.l.b16 %v710
        %v748 = vunpack.c.l.b16 %v714
        %v749 = vunpack.c.l.b16 %v718
        %v750 = vunpack.c.l.b16 %v722
        %v751 = vunpack.c.l.b16 %v726
        %v752 = vunpack.c.l.b16 %v730
        %v753 = vunpack.c.l.b16 %v734
        %v754 = vunpack.c.l.b16 %v738
        %v755 = vpack.c.b16 %v748, %v747
        %v756 = vpack.c.b16 %v750, %v749
        %v757 = vpack.c.b16 %v752, %v751
        %v758 = vpack.c.b16 %v754, %v753
        %v767 = vunpack.c.l.b16 %v739
        %v768 = vunpack.c.l.b16 %v740
        %v769 = vunpack.c.l.b16 %v741
        %v770 = vunpack.c.l.b16 %v742
        %v771 = vunpack.c.l.b16 %v743
        %v772 = vunpack.c.l.b16 %v744
        %v773 = vunpack.c.l.b16 %v745
        %v774 = vunpack.c.l.b16 %v746
        %v775 = vpack.c.b16 %v768, %v767
        %v776 = vpack.c.b16 %v770, %v769
        %v777 = vpack.c.b16 %v772, %v771
        %v778 = vpack.c.b16 %v774, %v773
        %v784 = vsel %vm481, %v755, 0
        %v787 = vsel %vm481, %v756, 0
        %v790 = vsel %vm481, %v757, 0
        %v793 = vsel %vm481, %v758, 0
        %795 = vmatprep.subr.bf16.mxu0 0
        %796 = vmatpush1.bf16.msra.mxu0 %v775
        %797 = vmatprep.subr.bf16.mxu0 0
        %798 = vmatpush1.bf16.msra.mxu0 %v776
        %799 = vmatprep.subr.bf16.mxu0 0
        %800 = vmatpush1.bf16.msra.mxu0 %v777
        %801 = vmatprep.subr.bf16.mxu0 0
        %802 = vmatpush1.bf16.msra.mxu0 %v778
        %803 = vmatprep.subr.bf16.mxu0 0
        %804 = vmatpush1.bf16.msra.mxu0 0
        %805 = vmatprep.subr.bf16.mxu0 0
        %806 = vmatpush1.bf16.msra.mxu0 0
        %807 = vmatprep.subr.bf16.mxu0 0
        %808 = vmatpush1.bf16.msra.mxu0 0
        %809 = vmatprep.subr.bf16.mxu0 0
        %810 = vmatpush1.bf16.msra.mxu0 0
        %811 = vmatprep.subr.bf16.mxu0 0
        %812 = vmatpush1.bf16.msra.mxu0 0
        %813 = vmatprep.subr.bf16.mxu0 0
        %814 = vmatpush1.bf16.msra.mxu0 0
        %815 = vmatprep.subr.bf16.mxu0 0
        %816 = vmatpush1.bf16.msra.mxu0 0
        %817 = vmatprep.subr.bf16.mxu0 0
        %818 = vmatpush1.bf16.msra.mxu0 0
        %819 = vmatprep.subr.bf16.mxu0 0
        %820 = vmatpush1.bf16.msra.mxu0 0
        %821 = vmatprep.subr.bf16.mxu0 0
        %822 = vmatpush1.bf16.msra.mxu0 0
        %823 = vmatprep.subr.bf16.mxu0 0
        %824 = vmatpush1.bf16.msra.mxu0 0
        %825 = vmatprep.subr.bf16.mxu0 0
        %826 = vmatpush1.bf16.msra.mxu0 0
        %827 = vmatprep.mubr.bf16.mxu0 0
        %828 = vmatmul.mubr.bf16.gmra.mrb[0].mxu0 %v784
        %v829 = vpop.f32.mrb[0].mxu0
        %v830 = vadd.f32 0.0, %v829
        %v831 = vpop.f32.mrb[0].mxu0
        %v832 = vpop.f32.mrb[0].mxu0
        %v833 = vadd.f32 0.0, %v832
        %v834 = vpop.f32.mrb[0].mxu0
        %835 = vmatprep.mubr.bf16.mxu0 0
        %836 = vmatmul.mubr.bf16.gmra.mrb[0].mxu0 %v787
        %v837 = vpop.f32.mrb[0].mxu0
        %v838 = vadd.f32 0.0, %v837
        %v839 = vpop.f32.mrb[0].mxu0
        %v840 = vpop.f32.mrb[0].mxu0
        %v841 = vadd.f32 0.0, %v840
        %v842 = vpop.f32.mrb[0].mxu0
        %843 = vmatprep.mubr.bf16.mxu0 0
        %844 = vmatmul.mubr.bf16.gmra.mrb[0].mxu0 %v790
        %v845 = vpop.f32.mrb[0].mxu0
        %v846 = vadd.f32 0.0, %v845
        %v847 = vpop.f32.mrb[0].mxu0
        %v848 = vpop.f32.mrb[0].mxu0
        %v849 = vadd.f32 0.0, %v848
        %v850 = vpop.f32.mrb[0].mxu0
        %851 = vmatprep.mubr.bf16.mxu0 0
        %852 = vmatmul.mubr.bf16.gmra.mrb[0].mxu0 %v793
        %v853 = vpop.f32.mrb[0].mxu0
        %v854 = vadd.f32 0.0, %v853
        %v855 = vpop.f32.mrb[0].mxu0
        %v856 = vpop.f32.mrb[0].mxu0
        %v857 = vadd.f32 0.0, %v856
        %v858 = vpop.f32.mrb[0].mxu0
        %859 = vdwg.mxu0
        %v860 = vadd.f32 %v650, %v830
        %v861 = vadd.f32 %v653, %v833
        %v862 = vadd.f32 %v658, %v838
        %v863 = vadd.f32 %v661, %v841
        %v864 = vadd.f32 %v666, %v846
        %v865 = vadd.f32 %v669, %v849
        %v866 = vadd.f32 %v674, %v854
        %v867 = vadd.f32 %v677, %v857
        %s868 = scalar_lea.vmem %s291, 8
        %v869 = vld [vmem:[%s868] sm:$0xf]
        %v870 = vld [vmem:[%s868 + $0x8] sm:$0xf]
        %v871 = vld [vmem:[%s868 + $0x10] sm:$0xf]
        %v872 = vld [vmem:[%s868 + $0x18] sm:$0xf]
        %v873 = vld [vmem:[%s868 + $0x20] sm:$0xf]
        %v874 = vld [vmem:[%s868 + $0x28] sm:$0xf]
        %v875 = vld [vmem:[%s868 + $0x30] sm:$0xf]
        %v876 = vld [vmem:[%s868 + $0x38] sm:$0xf]
        %v877 = vld [vmem:[%s1 + $0x60] sm:$0xf]
        %v878 = vld [vmem:[%s1 + $0x64] sm:$0xf]
        %v879 = vld [vmem:[%s1 + $0x68] sm:$0xf]
        %v880 = vld [vmem:[%s1 + $0x6c] sm:$0xf]
        %v881 = vld [vmem:[%s1 + $0x70] sm:$0xf]
        %v882 = vld [vmem:[%s1 + $0x74] sm:$0xf]
        %v883 = vld [vmem:[%s1 + $0x78] sm:$0xf]
        %v884 = vld [vmem:[%s1 + $0x7c] sm:$0xf]
        %v893 = vunpack.c.l.b16 %v869
        %v894 = vunpack.c.l.b16 %v870
        %v895 = vunpack.c.l.b16 %v871
        %v896 = vunpack.c.l.b16 %v872
        %v897 = vunpack.c.l.b16 %v873
        %v898 = vunpack.c.l.b16 %v874
        %v899 = vunpack.c.l.b16 %v875
        %v900 = vunpack.c.l.b16 %v876
        %v901 = vpack.c.b16 %v894, %v893
        %v902 = vpack.c.b16 %v896, %v895
        %v903 = vpack.c.b16 %v898, %v897
        %v904 = vpack.c.b16 %v900, %v899
        %v913 = vunpack.c.l.b16 %v877
        %v914 = vunpack.c.l.b16 %v878
        %v915 = vunpack.c.l.b16 %v879
        %v916 = vunpack.c.l.b16 %v880
        %v917 = vunpack.c.l.b16 %v881
        %v918 = vunpack.c.l.b16 %v882
        %v919 = vunpack.c.l.b16 %v883
        %v920 = vunpack.c.l.b16 %v884
        %v921 = vpack.c.b16 %v914, %v913
        %v922 = vpack.c.b16 %v916, %v915
        %v923 = vpack.c.b16 %v918, %v917
        %v924 = vpack.c.b16 %v920, %v919
        %v930 = vsel %vm481, %v901, 0
        %v933 = vsel %vm481, %v902, 0
        %v936 = vsel %vm481, %v903, 0
        %v939 = vsel %vm481, %v904, 0
        %941 = vmatprep.subr.bf16.mxu0 0
        %942 = vmatpush1.bf16.msra.mxu0 %v921
        %943 = vmatprep.subr.bf16.mxu0 0
        %944 = vmatpush1.bf16.msra.mxu0 %v922
        %945 = vmatprep.subr.bf16.mxu0 0
        %946 = vmatpush1.bf16.msra.mxu0 %v923
        %947 = vmatprep.subr.bf16.mxu0 0
        %948 = vmatpush1.bf16.msra.mxu0 %v924
        %949 = vmatprep.subr.bf16.mxu0 0
        %950 = vmatpush1.bf16.msra.mxu0 0
        %951 = vmatprep.subr.bf16.mxu0 0
        %952 = vmatpush1.bf16.msra.mxu0 0
        %953 = vmatprep.subr.bf16.mxu0 0
        %954 = vmatpush1.bf16.msra.mxu0 0
        %955 = vmatprep.subr.bf16.mxu0 0
        %956 = vmatpush1.bf16.msra.mxu0 0
        %957 = vmatprep.subr.bf16.mxu0 0
        %958 = vmatpush1.bf16.msra.mxu0 0
        %959 = vmatprep.subr.bf16.mxu0 0
        %960 = vmatpush1.bf16.msra.mxu0 0
        %961 = vmatprep.subr.bf16.mxu0 0
        %962 = vmatpush1.bf16.msra.mxu0 0
        %963 = vmatprep.subr.bf16.mxu0 0
        %964 = vmatpush1.bf16.msra.mxu0 0
        %965 = vmatprep.subr.bf16.mxu0 0
        %966 = vmatpush1.bf16.msra.mxu0 0
        %967 = vmatprep.subr.bf16.mxu0 0
        %968 = vmatpush1.bf16.msra.mxu0 0
        %969 = vmatprep.subr.bf16.mxu0 0
        %970 = vmatpush1.bf16.msra.mxu0 0
        %971 = vmatprep.subr.bf16.mxu0 0
        %972 = vmatpush1.bf16.msra.mxu0 0
        %973 = vmatprep.mubr.bf16.mxu0 0
        %974 = vmatmul.mubr.bf16.gmra.mrb[0].mxu0 %v930
        %v975 = vpop.f32.mrb[0].mxu0
        %v976 = vadd.f32 0.0, %v975
        %v977 = vpop.f32.mrb[0].mxu0
        %v978 = vpop.f32.mrb[0].mxu0
        %v979 = vadd.f32 0.0, %v978
        %v980 = vpop.f32.mrb[0].mxu0
        %981 = vmatprep.mubr.bf16.mxu0 0
        %982 = vmatmul.mubr.bf16.gmra.mrb[0].mxu0 %v933
        %v983 = vpop.f32.mrb[0].mxu0
        %v984 = vadd.f32 0.0, %v983
        %v985 = vpop.f32.mrb[0].mxu0
        %v986 = vpop.f32.mrb[0].mxu0
        %v987 = vadd.f32 0.0, %v986
        %v988 = vpop.f32.mrb[0].mxu0
        %989 = vmatprep.mubr.bf16.mxu0 0
        %990 = vmatmul.mubr.bf16.gmra.mrb[0].mxu0 %v936
        %v991 = vpop.f32.mrb[0].mxu0
        %v992 = vadd.f32 0.0, %v991
        %v993 = vpop.f32.mrb[0].mxu0
        %v994 = vpop.f32.mrb[0].mxu0
        %v995 = vadd.f32 0.0, %v994
        %v996 = vpop.f32.mrb[0].mxu0
        %997 = vmatprep.mubr.bf16.mxu0 0
        %998 = vmatmul.mubr.bf16.gmra.mrb[0].mxu0 %v939
        %v999 = vpop.f32.mrb[0].mxu0
        %v1000 = vadd.f32 0.0, %v999
        %v1001 = vpop.f32.mrb[0].mxu0
        %v1002 = vpop.f32.mrb[0].mxu0
        %v1003 = vadd.f32 0.0, %v1002
        %v1004 = vpop.f32.mrb[0].mxu0
        %1005 = vdwg.mxu0
        %v1006 = vadd.f32 %v860, %v976
        %v1007 = vadd.f32 %v861, %v979
        %v1008 = vadd.f32 %v862, %v984
        %v1009 = vadd.f32 %v863, %v987
        %v1010 = vadd.f32 %v864, %v992
        %v1011 = vadd.f32 %v865, %v995
        %v1012 = vadd.f32 %v866, %v1000
        %v1013 = vadd.f32 %v867, %v1003
        %v1014 = vld [vmem:[%s868] sm:$0xf]
        %v1015 = vld [vmem:[%s868 + $0x4] sm:$0x1]
        %v1016 = vld [vmem:[%s868 + $0x8] sm:$0xf]
        %v1017 = vld [vmem:[%s868 + $0xc] sm:$0x1]
        %v1018 = vld [vmem:[%s868 + $0x10] sm:$0xf]
        %v1019 = vld [vmem:[%s868 + $0x14] sm:$0x1]
        %v1020 = vld [vmem:[%s868 + $0x18] sm:$0xf]
        %v1021 = vld [vmem:[%s868 + $0x1c] sm:$0x1]
        %v1022 = vld [vmem:[%s868 + $0x20] sm:$0xf]
        %v1023 = vld [vmem:[%s868 + $0x24] sm:$0x1]
        %v1024 = vld [vmem:[%s868 + $0x28] sm:$0xf]
        %v1025 = vld [vmem:[%s868 + $0x2c] sm:$0x1]
        %v1026 = vld [vmem:[%s868 + $0x30] sm:$0xf]
        %v1027 = vld [vmem:[%s868 + $0x34] sm:$0x1]
        %v1028 = vld [vmem:[%s868 + $0x38] sm:$0xf]
        %v1029 = vld [vmem:[%s868 + $0x3c] sm:$0x1]
        %v1031 = vshrl.u32 %v1014, 16
        %v1033 = vrot.slane %v1031, 4
        %v1034 = vshll.u32 %v1014, 16
        %v1036 = vrot.slane %v1034, 5
        %v1037 = vor.u32 %v1033, %v1036
        %v1038 = vrot.slane %v1037, 4
        %v1040 = vshll.u32 %v1015, 16
        %v1042 = vrot.slane %v1040, 5
        %v1043 = vsel %vm324, %v1038, %v1042
        %v1045 = vshrl.u32 %v1016, 16
        %v1047 = vrot.slane %v1045, 4
        %v1048 = vshll.u32 %v1016, 16
        %v1050 = vrot.slane %v1048, 5
        %v1051 = vor.u32 %v1047, %v1050
        %v1052 = vrot.slane %v1051, 4
        %v1054 = vshll.u32 %v1017, 16
        %v1056 = vrot.slane %v1054, 5
        %v1057 = vsel %vm324, %v1052, %v1056
        %v1059 = vshrl.u32 %v1018, 16
        %v1061 = vrot.slane %v1059, 4
        %v1062 = vshll.u32 %v1018, 16
        %v1064 = vrot.slane %v1062, 5
        %v1065 = vor.u32 %v1061, %v1064
        %v1066 = vrot.slane %v1065, 4
        %v1068 = vshll.u32 %v1019, 16
        %v1070 = vrot.slane %v1068, 5
        %v1071 = vsel %vm324, %v1066, %v1070
        %v1073 = vshrl.u32 %v1020, 16
        %v1075 = vrot.slane %v1073, 4
        %v1076 = vshll.u32 %v1020, 16
        %v1078 = vrot.slane %v1076, 5
        %v1079 = vor.u32 %v1075, %v1078
        %v1080 = vrot.slane %v1079, 4
        %v1082 = vshll.u32 %v1021, 16
        %v1084 = vrot.slane %v1082, 5
        %v1085 = vsel %vm324, %v1080, %v1084
        %v1087 = vshrl.u32 %v1022, 16
        %v1089 = vrot.slane %v1087, 4
        %v1090 = vshll.u32 %v1022, 16
        %v1092 = vrot.slane %v1090, 5
        %v1093 = vor.u32 %v1089, %v1092
        %v1094 = vrot.slane %v1093, 4
        %v1096 = vshll.u32 %v1023, 16
        %v1098 = vrot.slane %v1096, 5
        %v1099 = vsel %vm324, %v1094, %v1098
        %v1101 = vshrl.u32 %v1024, 16
        %v1103 = vrot.slane %v1101, 4
        %v1104 = vshll.u32 %v1024, 16
        %v1106 = vrot.slane %v1104, 5
        %v1107 = vor.u32 %v1103, %v1106
        %v1108 = vrot.slane %v1107, 4
        %v1110 = vshll.u32 %v1025, 16
        %v1112 = vrot.slane %v1110, 5
        %v1113 = vsel %vm324, %v1108, %v1112
        %v1115 = vshrl.u32 %v1026, 16
        %v1117 = vrot.slane %v1115, 4
        %v1118 = vshll.u32 %v1026, 16
        %v1120 = vrot.slane %v1118, 5
        %v1121 = vor.u32 %v1117, %v1120
        %v1122 = vrot.slane %v1121, 4
        %v1124 = vshll.u32 %v1027, 16
        %v1126 = vrot.slane %v1124, 5
        %v1127 = vsel %vm324, %v1122, %v1126
        %v1129 = vshrl.u32 %v1028, 16
        %v1131 = vrot.slane %v1129, 4
        %v1132 = vshll.u32 %v1028, 16
        %v1134 = vrot.slane %v1132, 5
        %v1135 = vor.u32 %v1131, %v1134
        %v1136 = vrot.slane %v1135, 4
        %v1138 = vshll.u32 %v1029, 16
        %v1140 = vrot.slane %v1138, 5
        %v1141 = vsel %vm324, %v1136, %v1140
        %v1142 = vld [vmem:[%s1 + $0x80] sm:$0xf]
        %v1143 = vld [vmem:[%s1 + $0x84] sm:$0xf]
        %v1144 = vld [vmem:[%s1 + $0x88] sm:$0xf]
        %v1145 = vld [vmem:[%s1 + $0x8c] sm:$0xf]
        %v1146 = vld [vmem:[%s1 + $0x90] sm:$0xf]
        %v1147 = vld [vmem:[%s1 + $0x94] sm:$0xf]
        %v1148 = vld [vmem:[%s1 + $0x98] sm:$0xf]
        %v1149 = vld [vmem:[%s1 + $0x9c] sm:$0xf]
        %v1150 = vunpack.c.l.b16 %v1043
        %v1151 = vunpack.c.l.b16 %v1057
        %v1152 = vunpack.c.l.b16 %v1071
        %v1153 = vunpack.c.l.b16 %v1085
        %v1154 = vunpack.c.l.b16 %v1099
        %v1155 = vunpack.c.l.b16 %v1113
        %v1156 = vunpack.c.l.b16 %v1127
        %v1157 = vunpack.c.l.b16 %v1141
        %v1158 = vpack.c.b16 %v1151, %v1150
        %v1159 = vpack.c.b16 %v1153, %v1152
        %v1160 = vpack.c.b16 %v1155, %v1154
        %v1161 = vpack.c.b16 %v1157, %v1156
        %v1170 = vunpack.c.l.b16 %v1142
        %v1171 = vunpack.c.l.b16 %v1143
        %v1172 = vunpack.c.l.b16 %v1144
        %v1173 = vunpack.c.l.b16 %v1145
        %v1174 = vunpack.c.l.b16 %v1146
        %v1175 = vunpack.c.l.b16 %v1147
        %v1176 = vunpack.c.l.b16 %v1148
        %v1177 = vunpack.c.l.b16 %v1149
        %v1178 = vpack.c.b16 %v1171, %v1170
        %v1179 = vpack.c.b16 %v1173, %v1172
        %v1180 = vpack.c.b16 %v1175, %v1174
        %v1181 = vpack.c.b16 %v1177, %v1176
        %v1187 = vsel %vm481, %v1158, 0
        %v1190 = vsel %vm481, %v1159, 0
        %v1193 = vsel %vm481, %v1160, 0
        %v1196 = vsel %vm481, %v1161, 0
        %1198 = vmatprep.subr.bf16.mxu0 0
        %1199 = vmatpush1.bf16.msra.mxu0 %v1178
        %1200 = vmatprep.subr.bf16.mxu0 0
        %1201 = vmatpush1.bf16.msra.mxu0 %v1179
        %1202 = vmatprep.subr.bf16.mxu0 0
        %1203 = vmatpush1.bf16.msra.mxu0 %v1180
        %1204 = vmatprep.subr.bf16.mxu0 0
        %1205 = vmatpush1.bf16.msra.mxu0 %v1181
        %1206 = vmatprep.subr.bf16.mxu0 0
        %1207 = vmatpush1.bf16.msra.mxu0 0
        %1208 = vmatprep.subr.bf16.mxu0 0
        %1209 = vmatpush1.bf16.msra.mxu0 0
        %1210 = vmatprep.subr.bf16.mxu0 0
        %1211 = vmatpush1.bf16.msra.mxu0 0
        %1212 = vmatprep.subr.bf16.mxu0 0
        %1213 = vmatpush1.bf16.msra.mxu0 0
        %1214 = vmatprep.subr.bf16.mxu0 0
        %1215 = vmatpush1.bf16.msra.mxu0 0
        %1216 = vmatprep.subr.bf16.mxu0 0
        %1217 = vmatpush1.bf16.msra.mxu0 0
        %1218 = vmatprep.subr.bf16.mxu0 0
        %1219 = vmatpush1.bf16.msra.mxu0 0
        %1220 = vmatprep.subr.bf16.mxu0 0
        %1221 = vmatpush1.bf16.msra.mxu0 0
        %1222 = vmatprep.subr.bf16.mxu0 0
        %1223 = vmatpush1.bf16.msra.mxu0 0
        %1224 = vmatprep.subr.bf16.mxu0 0
        %1225 = vmatpush1.bf16.msra.mxu0 0
        %1226 = vmatprep.subr.bf16.mxu0 0
        %1227 = vmatpush1.bf16.msra.mxu0 0
        %1228 = vmatprep.subr.bf16.mxu0 0
        %1229 = vmatpush1.bf16.msra.mxu0 0
        %1230 = vmatprep.mubr.bf16.mxu0 0
        %1231 = vmatmul.mubr.bf16.gmra.mrb[0].mxu0 %v1187
        %v1232 = vpop.f32.mrb[0].mxu0
        %v1233 = vadd.f32 0.0, %v1232
        %v1234 = vpop.f32.mrb[0].mxu0
        %v1235 = vpop.f32.mrb[0].mxu0
        %v1236 = vadd.f32 0.0, %v1235
        %v1237 = vpop.f32.mrb[0].mxu0
        %1238 = vmatprep.mubr.bf16.mxu0 0
        %1239 = vmatmul.mubr.bf16.gmra.mrb[0].mxu0 %v1190
        %v1240 = vpop.f32.mrb[0].mxu0
        %v1241 = vadd.f32 0.0, %v1240
        %v1242 = vpop.f32.mrb[0].mxu0
        %v1243 = vpop.f32.mrb[0].mxu0
        %v1244 = vadd.f32 0.0, %v1243
        %v1245 = vpop.f32.mrb[0].mxu0
        %1246 = vmatprep.mubr.bf16.mxu0 0
        %1247 = vmatmul.mubr.bf16.gmra.mrb[0].mxu0 %v1193
        %v1248 = vpop.f32.mrb[0].mxu0
        %v1249 = vadd.f32 0.0, %v1248
        %v1250 = vpop.f32.mrb[0].mxu0
        %v1251 = vpop.f32.mrb[0].mxu0
        %v1252 = vadd.f32 0.0, %v1251
        %v1253 = vpop.f32.mrb[0].mxu0
        %1254 = vmatprep.mubr.bf16.mxu0 0
        %1255 = vmatmul.mubr.bf16.gmra.mrb[0].mxu0 %v1196
        %v1256 = vpop.f32.mrb[0].mxu0
        %v1257 = vadd.f32 0.0, %v1256
        %v1258 = vpop.f32.mrb[0].mxu0
        %v1259 = vpop.f32.mrb[0].mxu0
        %v1260 = vadd.f32 0.0, %v1259
        %v1261 = vpop.f32.mrb[0].mxu0
        %1262 = vdwg.mxu0
        %v1263 = vadd.f32 %v1006, %v1233
        %v1264 = vadd.f32 %v1007, %v1236
        %v1265 = vadd.f32 %v1008, %v1241
        %v1266 = vadd.f32 %v1009, %v1244
        %v1267 = vadd.f32 %v1010, %v1249
        %v1268 = vadd.f32 %v1011, %v1252
        %v1269 = vadd.f32 %v1012, %v1257
        %v1270 = vadd.f32 %v1013, %v1260
        %v1271 = vld [vmem:[%s868] sm:$0xe]
        %v1272 = vld [vmem:[%s868 + $0x8] sm:$0xe]
        %v1273 = vld [vmem:[%s868 + $0x10] sm:$0xe]
        %v1274 = vld [vmem:[%s868 + $0x18] sm:$0xe]
        %v1275 = vld [vmem:[%s868 + $0x20] sm:$0xe]
        %v1276 = vld [vmem:[%s868 + $0x28] sm:$0xe]
        %v1277 = vld [vmem:[%s868 + $0x30] sm:$0xe]
        %v1278 = vld [vmem:[%s868 + $0x38] sm:$0xe]
        %v1295 = vrot.slane %v1271, 5
        %v1296 = vrot.slane %v1295, 4
        %v1297 = vrot.slane %v1015, 5
        %v1298 = vsel %vm706, %v1296, %v1297
        %v1299 = vrot.slane %v1272, 5
        %v1300 = vrot.slane %v1299, 4
        %v1301 = vrot.slane %v1017, 5
        %v1302 = vsel %vm706, %v1300, %v1301
        %v1303 = vrot.slane %v1273, 5
        %v1304 = vrot.slane %v1303, 4
        %v1305 = vrot.slane %v1019, 5
        %v1306 = vsel %vm706, %v1304, %v1305
        %v1307 = vrot.slane %v1274, 5
        %v1308 = vrot.slane %v1307, 4
        %v1309 = vrot.slane %v1021, 5
        %v1310 = vsel %vm706, %v1308, %v1309
        %v1311 = vrot.slane %v1275, 5
        %v1312 = vrot.slane %v1311, 4
        %v1313 = vrot.slane %v1023, 5
        %v1314 = vsel %vm706, %v1312, %v1313
        %v1315 = vrot.slane %v1276, 5
        %v1316 = vrot.slane %v1315, 4
        %v1317 = vrot.slane %v1025, 5
        %v1318 = vsel %vm706, %v1316, %v1317
        %v1319 = vrot.slane %v1277, 5
        %v1320 = vrot.slane %v1319, 4
        %v1321 = vrot.slane %v1027, 5
        %v1322 = vsel %vm706, %v1320, %v1321
        %v1323 = vrot.slane %v1278, 5
        %v1324 = vrot.slane %v1323, 4
        %v1325 = vrot.slane %v1029, 5
        %v1326 = vsel %vm706, %v1324, %v1325
        %v1327 = vld [vmem:[%s1 + $0xa0] sm:$0xf]
        %v1328 = vld [vmem:[%s1 + $0xa4] sm:$0xf]
        %v1329 = vld [vmem:[%s1 + $0xa8] sm:$0xf]
        %v1330 = vld [vmem:[%s1 + $0xac] sm:$0xf]
        %v1331 = vld [vmem:[%s1 + $0xb0] sm:$0xf]
        %v1332 = vld [vmem:[%s1 + $0xb4] sm:$0xf]
        %v1333 = vld [vmem:[%s1 + $0xb8] sm:$0xf]
        %v1334 = vld [vmem:[%s1 + $0xbc] sm:$0xf]
        %v1335 = vunpack.c.l.b16 %v1298
        %v1336 = vunpack.c.l.b16 %v1302
        %v1337 = vunpack.c.l.b16 %v1306
        %v1338 = vunpack.c.l.b16 %v1310
        %v1339 = vunpack.c.l.b16 %v1314
        %v1340 = vunpack.c.l.b16 %v1318
        %v1341 = vunpack.c.l.b16 %v1322
        %v1342 = vunpack.c.l.b16 %v1326
        %v1343 = vpack.c.b16 %v1336, %v1335
        %v1344 = vpack.c.b16 %v1338, %v1337
        %v1345 = vpack.c.b16 %v1340, %v1339
        %v1346 = vpack.c.b16 %v1342, %v1341
        %v1355 = vunpack.c.l.b16 %v1327
        %v1356 = vunpack.c.l.b16 %v1328
        %v1357 = vunpack.c.l.b16 %v1329
        %v1358 = vunpack.c.l.b16 %v1330
        %v1359 = vunpack.c.l.b16 %v1331
        %v1360 = vunpack.c.l.b16 %v1332
        %v1361 = vunpack.c.l.b16 %v1333
        %v1362 = vunpack.c.l.b16 %v1334
        %v1363 = vpack.c.b16 %v1356, %v1355
        %v1364 = vpack.c.b16 %v1358, %v1357
        %v1365 = vpack.c.b16 %v1360, %v1359
        %v1366 = vpack.c.b16 %v1362, %v1361
        %v1372 = vsel %vm481, %v1343, 0
        %v1375 = vsel %vm481, %v1344, 0
        %v1378 = vsel %vm481, %v1345, 0
        %v1381 = vsel %vm481, %v1346, 0
        %1383 = vmatprep.subr.bf16.mxu0 0
        %1384 = vmatpush1.bf16.msra.mxu0 %v1363
        %1385 = vmatprep.subr.bf16.mxu0 0
        %1386 = vmatpush1.bf16.msra.mxu0 %v1364
        %1387 = vmatprep.subr.bf16.mxu0 0
        %1388 = vmatpush1.bf16.msra.mxu0 %v1365
        %1389 = vmatprep.subr.bf16.mxu0 0
        %1390 = vmatpush1.bf16.msra.mxu0 %v1366
        %1391 = vmatprep.subr.bf16.mxu0 0
        %1392 = vmatpush1.bf16.msra.mxu0 0
        %1393 = vmatprep.subr.bf16.mxu0 0
        %1394 = vmatpush1.bf16.msra.mxu0 0
        %1395 = vmatprep.subr.bf16.mxu0 0
        %1396 = vmatpush1.bf16.msra.mxu0 0
        %1397 = vmatprep.subr.bf16.mxu0 0
        %1398 = vmatpush1.bf16.msra.mxu0 0
        %1399 = vmatprep.subr.bf16.mxu0 0
        %1400 = vmatpush1.bf16.msra.mxu0 0
        %1401 = vmatprep.subr.bf16.mxu0 0
        %1402 = vmatpush1.bf16.msra.mxu0 0
        %1403 = vmatprep.subr.bf16.mxu0 0
        %1404 = vmatpush1.bf16.msra.mxu0 0
        %1405 = vmatprep.subr.bf16.mxu0 0
        %1406 = vmatpush1.bf16.msra.mxu0 0
        %1407 = vmatprep.subr.bf16.mxu0 0
        %1408 = vmatpush1.bf16.msra.mxu0 0
        %1409 = vmatprep.subr.bf16.mxu0 0
        %1410 = vmatpush1.bf16.msra.mxu0 0
        %1411 = vmatprep.subr.bf16.mxu0 0
        %1412 = vmatpush1.bf16.msra.mxu0 0
        %1413 = vmatprep.subr.bf16.mxu0 0
        %1414 = vmatpush1.bf16.msra.mxu0 0
        %1415 = vmatprep.mubr.bf16.mxu0 0
        %1416 = vmatmul.mubr.bf16.gmra.mrb[0].mxu0 %v1372
        %v1417 = vpop.f32.mrb[0].mxu0
        %v1418 = vadd.f32 0.0, %v1417
        %v1419 = vpop.f32.mrb[0].mxu0
        %v1420 = vpop.f32.mrb[0].mxu0
        %v1421 = vadd.f32 0.0, %v1420
        %v1422 = vpop.f32.mrb[0].mxu0
        %1423 = vmatprep.mubr.bf16.mxu0 0
        %1424 = vmatmul.mubr.bf16.gmra.mrb[0].mxu0 %v1375
        %v1425 = vpop.f32.mrb[0].mxu0
        %v1426 = vadd.f32 0.0, %v1425
        %v1427 = vpop.f32.mrb[0].mxu0
        %v1428 = vpop.f32.mrb[0].mxu0
        %v1429 = vadd.f32 0.0, %v1428
        %v1430 = vpop.f32.mrb[0].mxu0
        %1431 = vmatprep.mubr.bf16.mxu0 0
        %1432 = vmatmul.mubr.bf16.gmra.mrb[0].mxu0 %v1378
        %v1433 = vpop.f32.mrb[0].mxu0
        %v1434 = vadd.f32 0.0, %v1433
        %v1435 = vpop.f32.mrb[0].mxu0
        %v1436 = vpop.f32.mrb[0].mxu0
        %v1437 = vadd.f32 0.0, %v1436
        %v1438 = vpop.f32.mrb[0].mxu0
        %1439 = vmatprep.mubr.bf16.mxu0 0
        %1440 = vmatmul.mubr.bf16.gmra.mrb[0].mxu0 %v1381
        %v1441 = vpop.f32.mrb[0].mxu0
        %v1442 = vadd.f32 0.0, %v1441
        %v1443 = vpop.f32.mrb[0].mxu0
        %v1444 = vpop.f32.mrb[0].mxu0
        %v1445 = vadd.f32 0.0, %v1444
        %v1446 = vpop.f32.mrb[0].mxu0
        %1447 = vdwg.mxu0
        %v1448 = vadd.f32 %v1263, %v1418
        %v1449 = vadd.f32 %v1264, %v1421
        %v1450 = vadd.f32 %v1265, %v1426
        %v1451 = vadd.f32 %v1266, %v1429
        %v1452 = vadd.f32 %v1267, %v1434
        %v1453 = vadd.f32 %v1268, %v1437
        %v1454 = vadd.f32 %v1269, %v1442
        %v1455 = vadd.f32 %v1270, %v1445
        %s1456 = scalar_lea.vmem %s291, 16
        %v1457 = vld [vmem:[%s1456] sm:$0xf]
        %v1458 = vld [vmem:[%s1456 + $0x8] sm:$0xf]
        %v1459 = vld [vmem:[%s1456 + $0x10] sm:$0xf]
        %v1460 = vld [vmem:[%s1456 + $0x18] sm:$0xf]
        %v1461 = vld [vmem:[%s1456 + $0x20] sm:$0xf]
        %v1462 = vld [vmem:[%s1456 + $0x28] sm:$0xf]
        %v1463 = vld [vmem:[%s1456 + $0x30] sm:$0xf]
        %v1464 = vld [vmem:[%s1456 + $0x38] sm:$0xf]
        %v1465 = vld [vmem:[%s1 + $0xc0] sm:$0xf]
        %v1466 = vld [vmem:[%s1 + $0xc4] sm:$0xf]
        %v1467 = vld [vmem:[%s1 + $0xc8] sm:$0xf]
        %v1468 = vld [vmem:[%s1 + $0xcc] sm:$0xf]
        %v1469 = vld [vmem:[%s1 + $0xd0] sm:$0xf]
        %v1470 = vld [vmem:[%s1 + $0xd4] sm:$0xf]
        %v1471 = vld [vmem:[%s1 + $0xd8] sm:$0xf]
        %v1472 = vld [vmem:[%s1 + $0xdc] sm:$0xf]
        %v1481 = vunpack.c.l.b16 %v1457
        %v1482 = vunpack.c.l.b16 %v1458
        %v1483 = vunpack.c.l.b16 %v1459
        %v1484 = vunpack.c.l.b16 %v1460
        %v1485 = vunpack.c.l.b16 %v1461
        %v1486 = vunpack.c.l.b16 %v1462
        %v1487 = vunpack.c.l.b16 %v1463
        %v1488 = vunpack.c.l.b16 %v1464
        %v1489 = vpack.c.b16 %v1482, %v1481
        %v1490 = vpack.c.b16 %v1484, %v1483
        %v1491 = vpack.c.b16 %v1486, %v1485
        %v1492 = vpack.c.b16 %v1488, %v1487
        %v1501 = vunpack.c.l.b16 %v1465
        %v1502 = vunpack.c.l.b16 %v1466
        %v1503 = vunpack.c.l.b16 %v1467
        %v1504 = vunpack.c.l.b16 %v1468
        %v1505 = vunpack.c.l.b16 %v1469
        %v1506 = vunpack.c.l.b16 %v1470
        %v1507 = vunpack.c.l.b16 %v1471
        %v1508 = vunpack.c.l.b16 %v1472
        %v1509 = vpack.c.b16 %v1502, %v1501
        %v1510 = vpack.c.b16 %v1504, %v1503
        %v1511 = vpack.c.b16 %v1506, %v1505
        %v1512 = vpack.c.b16 %v1508, %v1507
        %v1518 = vsel %vm481, %v1489, 0
        %v1521 = vsel %vm481, %v1490, 0
        %v1524 = vsel %vm481, %v1491, 0
        %v1527 = vsel %vm481, %v1492, 0
        %1529 = vmatprep.subr.bf16.mxu0 0
        %1530 = vmatpush1.bf16.msra.mxu0 %v1509
        %1531 = vmatprep.subr.bf16.mxu0 0
        %1532 = vmatpush1.bf16.msra.mxu0 %v1510
        %1533 = vmatprep.subr.bf16.mxu0 0
        %1534 = vmatpush1.bf16.msra.mxu0 %v1511
        %1535 = vmatprep.subr.bf16.mxu0 0
        %1536 = vmatpush1.bf16.msra.mxu0 %v1512
        %1537 = vmatprep.subr.bf16.mxu0 0
        %1538 = vmatpush1.bf16.msra.mxu0 0
        %1539 = vmatprep.subr.bf16.mxu0 0
        %1540 = vmatpush1.bf16.msra.mxu0 0
        %1541 = vmatprep.subr.bf16.mxu0 0
        %1542 = vmatpush1.bf16.msra.mxu0 0
        %1543 = vmatprep.subr.bf16.mxu0 0
        %1544 = vmatpush1.bf16.msra.mxu0 0
        %1545 = vmatprep.subr.bf16.mxu0 0
        %1546 = vmatpush1.bf16.msra.mxu0 0
        %1547 = vmatprep.subr.bf16.mxu0 0
        %1548 = vmatpush1.bf16.msra.mxu0 0
        %1549 = vmatprep.subr.bf16.mxu0 0
        %1550 = vmatpush1.bf16.msra.mxu0 0
        %1551 = vmatprep.subr.bf16.mxu0 0
        %1552 = vmatpush1.bf16.msra.mxu0 0
        %1553 = vmatprep.subr.bf16.mxu0 0
        %1554 = vmatpush1.bf16.msra.mxu0 0
        %1555 = vmatprep.subr.bf16.mxu0 0
        %1556 = vmatpush1.bf16.msra.mxu0 0
        %1557 = vmatprep.subr.bf16.mxu0 0
        %1558 = vmatpush1.bf16.msra.mxu0 0
        %1559 = vmatprep.subr.bf16.mxu0 0
        %1560 = vmatpush1.bf16.msra.mxu0 0
        %1561 = vmatprep.mubr.bf16.mxu0 0
        %1562 = vmatmul.mubr.bf16.gmra.mrb[0].mxu0 %v1518
        %v1563 = vpop.f32.mrb[0].mxu0
        %v1564 = vadd.f32 0.0, %v1563
        %v1565 = vpop.f32.mrb[0].mxu0
        %v1566 = vpop.f32.mrb[0].mxu0
        %v1567 = vadd.f32 0.0, %v1566
        %v1568 = vpop.f32.mrb[0].mxu0
        %1569 = vmatprep.mubr.bf16.mxu0 0
        %1570 = vmatmul.mubr.bf16.gmra.mrb[0].mxu0 %v1521
        %v1571 = vpop.f32.mrb[0].mxu0
        %v1572 = vadd.f32 0.0, %v1571
        %v1573 = vpop.f32.mrb[0].mxu0
        %v1574 = vpop.f32.mrb[0].mxu0
        %v1575 = vadd.f32 0.0, %v1574
        %v1576 = vpop.f32.mrb[0].mxu0
        %1577 = vmatprep.mubr.bf16.mxu0 0
        %1578 = vmatmul.mubr.bf16.gmra.mrb[0].mxu0 %v1524
        %v1579 = vpop.f32.mrb[0].mxu0
        %v1580 = vadd.f32 0.0, %v1579
        %v1581 = vpop.f32.mrb[0].mxu0
        %v1582 = vpop.f32.mrb[0].mxu0
        %v1583 = vadd.f32 0.0, %v1582
        %v1584 = vpop.f32.mrb[0].mxu0
        %1585 = vmatprep.mubr.bf16.mxu0 0
        %1586 = vmatmul.mubr.bf16.gmra.mrb[0].mxu0 %v1527
        %v1587 = vpop.f32.mrb[0].mxu0
        %v1588 = vadd.f32 0.0, %v1587
        %v1589 = vpop.f32.mrb[0].mxu0
        %v1590 = vpop.f32.mrb[0].mxu0
        %v1591 = vadd.f32 0.0, %v1590
        %v1592 = vpop.f32.mrb[0].mxu0
        %1593 = vdwg.mxu0
        %v1594 = vadd.f32 %v1448, %v1564
        %v1595 = vadd.f32 %v1449, %v1567
        %v1596 = vadd.f32 %v1450, %v1572
        %v1597 = vadd.f32 %v1451, %v1575
        %v1598 = vadd.f32 %v1452, %v1580
        %v1599 = vadd.f32 %v1453, %v1583
        %v1600 = vadd.f32 %v1454, %v1588
        %v1601 = vadd.f32 %v1455, %v1591
        %v1602 = vld [vmem:[%s1456] sm:$0xf]
        %v1603 = vld [vmem:[%s1456 + $0x4] sm:$0x1]
        %v1604 = vld [vmem:[%s1456 + $0x8] sm:$0xf]
        %v1605 = vld [vmem:[%s1456 + $0xc] sm:$0x1]
        %v1606 = vld [vmem:[%s1456 + $0x10] sm:$0xf]
        %v1607 = vld [vmem:[%s1456 + $0x14] sm:$0x1]
        %v1608 = vld [vmem:[%s1456 + $0x18] sm:$0xf]
        %v1609 = vld [vmem:[%s1456 + $0x1c] sm:$0x1]
        %v1610 = vld [vmem:[%s1456 + $0x20] sm:$0xf]
        %v1611 = vld [vmem:[%s1456 + $0x24] sm:$0x1]
        %v1612 = vld [vmem:[%s1456 + $0x28] sm:$0xf]
        %v1613 = vld [vmem:[%s1456 + $0x2c] sm:$0x1]
        %v1614 = vld [vmem:[%s1456 + $0x30] sm:$0xf]
        %v1615 = vld [vmem:[%s1456 + $0x34] sm:$0x1]
        %v1616 = vld [vmem:[%s1456 + $0x38] sm:$0xf]
        %v1617 = vld [vmem:[%s1456 + $0x3c] sm:$0x1]
        %v1619 = vshrl.u32 %v1602, 16
        %v1621 = vrot.slane %v1619, 4
        %v1622 = vshll.u32 %v1602, 16
        %v1624 = vrot.slane %v1622, 5
        %v1625 = vor.u32 %v1621, %v1624
        %v1626 = vrot.slane %v1625, 4
        %v1628 = vshll.u32 %v1603, 16
        %v1630 = vrot.slane %v1628, 5
        %v1631 = vsel %vm324, %v1626, %v1630
        %v1633 = vshrl.u32 %v1604, 16
        %v1635 = vrot.slane %v1633, 4
        %v1636 = vshll.u32 %v1604, 16
        %v1638 = vrot.slane %v1636, 5
        %v1639 = vor.u32 %v1635, %v1638
        %v1640 = vrot.slane %v1639, 4
        %v1642 = vshll.u32 %v1605, 16
        %v1644 = vrot.slane %v1642, 5
        %v1645 = vsel %vm324, %v1640, %v1644
        %v1647 = vshrl.u32 %v1606, 16
        %v1649 = vrot.slane %v1647, 4
        %v1650 = vshll.u32 %v1606, 16
        %v1652 = vrot.slane %v1650, 5
        %v1653 = vor.u32 %v1649, %v1652
        %v1654 = vrot.slane %v1653, 4
        %v1656 = vshll.u32 %v1607, 16
        %v1658 = vrot.slane %v1656, 5
        %v1659 = vsel %vm324, %v1654, %v1658
        %v1661 = vshrl.u32 %v1608, 16
        %v1663 = vrot.slane %v1661, 4
        %v1664 = vshll.u32 %v1608, 16
        %v1666 = vrot.slane %v1664, 5
        %v1667 = vor.u32 %v1663, %v1666
        %v1668 = vrot.slane %v1667, 4
        %v1670 = vshll.u32 %v1609, 16
        %v1672 = vrot.slane %v1670, 5
        %v1673 = vsel %vm324, %v1668, %v1672
        %v1675 = vshrl.u32 %v1610, 16
        %v1677 = vrot.slane %v1675, 4
        %v1678 = vshll.u32 %v1610, 16
        %v1680 = vrot.slane %v1678, 5
        %v1681 = vor.u32 %v1677, %v1680
        %v1682 = vrot.slane %v1681, 4
        %v1684 = vshll.u32 %v1611, 16
        %v1686 = vrot.slane %v1684, 5
        %v1687 = vsel %vm324, %v1682, %v1686
        %v1689 = vshrl.u32 %v1612, 16
        %v1691 = vrot.slane %v1689, 4
        %v1692 = vshll.u32 %v1612, 16
        %v1694 = vrot.slane %v1692, 5
        %v1695 = vor.u32 %v1691, %v1694
        %v1696 = vrot.slane %v1695, 4
        %v1698 = vshll.u32 %v1613, 16
        %v1700 = vrot.slane %v1698, 5
        %v1701 = vsel %vm324, %v1696, %v1700
        %v1703 = vshrl.u32 %v1614, 16
        %v1705 = vrot.slane %v1703, 4
        %v1706 = vshll.u32 %v1614, 16
        %v1708 = vrot.slane %v1706, 5
        %v1709 = vor.u32 %v1705, %v1708
        %v1710 = vrot.slane %v1709, 4
        %v1712 = vshll.u32 %v1615, 16
        %v1714 = vrot.slane %v1712, 5
        %v1715 = vsel %vm324, %v1710, %v1714
        %v1717 = vshrl.u32 %v1616, 16
        %v1719 = vrot.slane %v1717, 4
        %v1720 = vshll.u32 %v1616, 16
        %v1722 = vrot.slane %v1720, 5
        %v1723 = vor.u32 %v1719, %v1722
        %v1724 = vrot.slane %v1723, 4
        %v1726 = vshll.u32 %v1617, 16
        %v1728 = vrot.slane %v1726, 5
        %v1729 = vsel %vm324, %v1724, %v1728
        %v1730 = vld [vmem:[%s1 + $0xe0] sm:$0xf]
        %v1731 = vld [vmem:[%s1 + $0xe4] sm:$0xf]
        %v1732 = vld [vmem:[%s1 + $0xe8] sm:$0xf]
        %v1733 = vld [vmem:[%s1 + $0xec] sm:$0xf]
        %v1734 = vld [vmem:[%s1 + $0xf0] sm:$0xf]
        %v1735 = vld [vmem:[%s1 + $0xf4] sm:$0xf]
        %v1736 = vld [vmem:[%s1 + $0xf8] sm:$0xf]
        %v1737 = vld [vmem:[%s1 + $0xfc] sm:$0xf]
        %v1738 = vunpack.c.l.b16 %v1631
        %v1739 = vunpack.c.l.b16 %v1645
        %v1740 = vunpack.c.l.b16 %v1659
        %v1741 = vunpack.c.l.b16 %v1673
        %v1742 = vunpack.c.l.b16 %v1687
        %v1743 = vunpack.c.l.b16 %v1701
        %v1744 = vunpack.c.l.b16 %v1715
        %v1745 = vunpack.c.l.b16 %v1729
        %v1746 = vpack.c.b16 %v1739, %v1738
        %v1747 = vpack.c.b16 %v1741, %v1740
        %v1748 = vpack.c.b16 %v1743, %v1742
        %v1749 = vpack.c.b16 %v1745, %v1744
        %v1758 = vunpack.c.l.b16 %v1730
        %v1759 = vunpack.c.l.b16 %v1731
        %v1760 = vunpack.c.l.b16 %v1732
        %v1761 = vunpack.c.l.b16 %v1733
        %v1762 = vunpack.c.l.b16 %v1734
        %v1763 = vunpack.c.l.b16 %v1735
        %v1764 = vunpack.c.l.b16 %v1736
        %v1765 = vunpack.c.l.b16 %v1737
        %v1766 = vpack.c.b16 %v1759, %v1758
        %v1767 = vpack.c.b16 %v1761, %v1760
        %v1768 = vpack.c.b16 %v1763, %v1762
        %v1769 = vpack.c.b16 %v1765, %v1764
        %v1775 = vsel %vm481, %v1746, 0
        %v1778 = vsel %vm481, %v1747, 0
        %v1781 = vsel %vm481, %v1748, 0
        %v1784 = vsel %vm481, %v1749, 0
        %1786 = vmatprep.subr.bf16.mxu0 0
        %1787 = vmatpush1.bf16.msra.mxu0 %v1766
        %1788 = vmatprep.subr.bf16.mxu0 0
        %1789 = vmatpush1.bf16.msra.mxu0 %v1767
        %1790 = vmatprep.subr.bf16.mxu0 0
        %1791 = vmatpush1.bf16.msra.mxu0 %v1768
        %1792 = vmatprep.subr.bf16.mxu0 0
        %1793 = vmatpush1.bf16.msra.mxu0 %v1769
        %1794 = vmatprep.subr.bf16.mxu0 0
        %1795 = vmatpush1.bf16.msra.mxu0 0
        %1796 = vmatprep.subr.bf16.mxu0 0
        %1797 = vmatpush1.bf16.msra.mxu0 0
        %1798 = vmatprep.subr.bf16.mxu0 0
        %1799 = vmatpush1.bf16.msra.mxu0 0
        %1800 = vmatprep.subr.bf16.mxu0 0
        %1801 = vmatpush1.bf16.msra.mxu0 0
        %1802 = vmatprep.subr.bf16.mxu0 0
        %1803 = vmatpush1.bf16.msra.mxu0 0
        %1804 = vmatprep.subr.bf16.mxu0 0
        %1805 = vmatpush1.bf16.msra.mxu0 0
        %1806 = vmatprep.subr.bf16.mxu0 0
        %1807 = vmatpush1.bf16.msra.mxu0 0
        %1808 = vmatprep.subr.bf16.mxu0 0
        %1809 = vmatpush1.bf16.msra.mxu0 0
        %1810 = vmatprep.subr.bf16.mxu0 0
        %1811 = vmatpush1.bf16.msra.mxu0 0
        %1812 = vmatprep.subr.bf16.mxu0 0
        %1813 = vmatpush1.bf16.msra.mxu0 0
        %1814 = vmatprep.subr.bf16.mxu0 0
        %1815 = vmatpush1.bf16.msra.mxu0 0
        %1816 = vmatprep.subr.bf16.mxu0 0
        %1817 = vmatpush1.bf16.msra.mxu0 0
        %1818 = vmatprep.mubr.bf16.mxu0 0
        %1819 = vmatmul.mubr.bf16.gmra.mrb[0].mxu0 %v1775
        %v1820 = vpop.f32.mrb[0].mxu0
        %v1821 = vadd.f32 0.0, %v1820
        %v1822 = vpop.f32.mrb[0].mxu0
        %v1823 = vpop.f32.mrb[0].mxu0
        %v1824 = vadd.f32 0.0, %v1823
        %v1825 = vpop.f32.mrb[0].mxu0
        %1826 = vmatprep.mubr.bf16.mxu0 0
        %1827 = vmatmul.mubr.bf16.gmra.mrb[0].mxu0 %v1778
        %v1828 = vpop.f32.mrb[0].mxu0
        %v1829 = vadd.f32 0.0, %v1828
        %v1830 = vpop.f32.mrb[0].mxu0
        %v1831 = vpop.f32.mrb[0].mxu0
        %v1832 = vadd.f32 0.0, %v1831
        %v1833 = vpop.f32.mrb[0].mxu0
        %1834 = vmatprep.mubr.bf16.mxu0 0
        %1835 = vmatmul.mubr.bf16.gmra.mrb[0].mxu0 %v1781
        %v1836 = vpop.f32.mrb[0].mxu0
        %v1837 = vadd.f32 0.0, %v1836
        %v1838 = vpop.f32.mrb[0].mxu0
        %v1839 = vpop.f32.mrb[0].mxu0
        %v1840 = vadd.f32 0.0, %v1839
        %v1841 = vpop.f32.mrb[0].mxu0
        %1842 = vmatprep.mubr.bf16.mxu0 0
        %1843 = vmatmul.mubr.bf16.gmra.mrb[0].mxu0 %v1784
        %v1844 = vpop.f32.mrb[0].mxu0
        %v1845 = vadd.f32 0.0, %v1844
        %v1846 = vpop.f32.mrb[0].mxu0
        %v1847 = vpop.f32.mrb[0].mxu0
        %v1848 = vadd.f32 0.0, %v1847
        %v1849 = vpop.f32.mrb[0].mxu0
        %1850 = vdwg.mxu0
        %v1851 = vadd.f32 %v1594, %v1821
        %v1852 = vadd.f32 %v1595, %v1824
        %v1853 = vadd.f32 %v1596, %v1829
        %v1854 = vadd.f32 %v1597, %v1832
        %v1855 = vadd.f32 %v1598, %v1837
        %v1856 = vadd.f32 %v1599, %v1840
        %v1857 = vadd.f32 %v1600, %v1845
        %v1858 = vadd.f32 %v1601, %v1848
        %v1859 = vld [vmem:[%s1456] sm:$0xe]
        %v1860 = vld [vmem:[%s1456 + $0x8] sm:$0xe]
        %v1861 = vld [vmem:[%s1456 + $0x10] sm:$0xe]
        %v1862 = vld [vmem:[%s1456 + $0x18] sm:$0xe]
        %v1863 = vld [vmem:[%s1456 + $0x20] sm:$0xe]
        %v1864 = vld [vmem:[%s1456 + $0x28] sm:$0xe]
        %v1865 = vld [vmem:[%s1456 + $0x30] sm:$0xe]
        %v1866 = vld [vmem:[%s1456 + $0x38] sm:$0xe]
        %v1883 = vrot.slane %v1859, 5
        %v1884 = vrot.slane %v1883, 4
        %v1885 = vrot.slane %v1603, 5
        %v1886 = vsel %vm706, %v1884, %v1885
        %v1887 = vrot.slane %v1860, 5
        %v1888 = vrot.slane %v1887, 4
        %v1889 = vrot.slane %v1605, 5
        %v1890 = vsel %vm706, %v1888, %v1889
        %v1891 = vrot.slane %v1861, 5
        %v1892 = vrot.slane %v1891, 4
        %v1893 = vrot.slane %v1607, 5
        %v1894 = vsel %vm706, %v1892, %v1893
        %v1895 = vrot.slane %v1862, 5
        %v1896 = vrot.slane %v1895, 4
        %v1897 = vrot.slane %v1609, 5
        %v1898 = vsel %vm706, %v1896, %v1897
        %v1899 = vrot.slane %v1863, 5
        %v1900 = vrot.slane %v1899, 4
        %v1901 = vrot.slane %v1611, 5
        %v1902 = vsel %vm706, %v1900, %v1901
        %v1903 = vrot.slane %v1864, 5
        %v1904 = vrot.slane %v1903, 4
        %v1905 = vrot.slane %v1613, 5
        %v1906 = vsel %vm706, %v1904, %v1905
        %v1907 = vrot.slane %v1865, 5
        %v1908 = vrot.slane %v1907, 4
        %v1909 = vrot.slane %v1615, 5
        %v1910 = vsel %vm706, %v1908, %v1909
        %v1911 = vrot.slane %v1866, 5
        %v1912 = vrot.slane %v1911, 4
        %v1913 = vrot.slane %v1617, 5
        %v1914 = vsel %vm706, %v1912, %v1913
        %v1915 = vld [vmem:[%s1 + $0x100] sm:$0xf]
        %v1916 = vld [vmem:[%s1 + $0x104] sm:$0xf]
        %v1917 = vld [vmem:[%s1 + $0x108] sm:$0xf]
        %v1918 = vld [vmem:[%s1 + $0x10c] sm:$0xf]
        %v1919 = vld [vmem:[%s1 + $0x110] sm:$0xf]
        %v1920 = vld [vmem:[%s1 + $0x114] sm:$0xf]
        %v1921 = vld [vmem:[%s1 + $0x118] sm:$0xf]
        %v1922 = vld [vmem:[%s1 + $0x11c] sm:$0xf]
        %v1923 = vunpack.c.l.b16 %v1886
        %v1924 = vunpack.c.l.b16 %v1890
        %v1925 = vunpack.c.l.b16 %v1894
        %v1926 = vunpack.c.l.b16 %v1898
        %v1927 = vunpack.c.l.b16 %v1902
        %v1928 = vunpack.c.l.b16 %v1906
        %v1929 = vunpack.c.l.b16 %v1910
        %v1930 = vunpack.c.l.b16 %v1914
        %v1931 = vpack.c.b16 %v1924, %v1923
        %v1932 = vpack.c.b16 %v1926, %v1925
        %v1933 = vpack.c.b16 %v1928, %v1927
        %v1934 = vpack.c.b16 %v1930, %v1929
        %v1943 = vunpack.c.l.b16 %v1915
        %v1944 = vunpack.c.l.b16 %v1916
        %v1945 = vunpack.c.l.b16 %v1917
        %v1946 = vunpack.c.l.b16 %v1918
        %v1947 = vunpack.c.l.b16 %v1919
        %v1948 = vunpack.c.l.b16 %v1920
        %v1949 = vunpack.c.l.b16 %v1921
        %v1950 = vunpack.c.l.b16 %v1922
        %v1951 = vpack.c.b16 %v1944, %v1943
        %v1952 = vpack.c.b16 %v1946, %v1945
        %v1953 = vpack.c.b16 %v1948, %v1947
        %v1954 = vpack.c.b16 %v1950, %v1949
        %v1960 = vsel %vm481, %v1931, 0
        %v1963 = vsel %vm481, %v1932, 0
        %v1966 = vsel %vm481, %v1933, 0
        %v1969 = vsel %vm481, %v1934, 0
        %1971 = vmatprep.subr.bf16.mxu0 0
        %1972 = vmatpush1.bf16.msra.mxu0 %v1951
        %1973 = vmatprep.subr.bf16.mxu0 0
        %1974 = vmatpush1.bf16.msra.mxu0 %v1952
        %1975 = vmatprep.subr.bf16.mxu0 0
        %1976 = vmatpush1.bf16.msra.mxu0 %v1953
        %1977 = vmatprep.subr.bf16.mxu0 0
        %1978 = vmatpush1.bf16.msra.mxu0 %v1954
        %1979 = vmatprep.subr.bf16.mxu0 0
        %1980 = vmatpush1.bf16.msra.mxu0 0
        %1981 = vmatprep.subr.bf16.mxu0 0
        %1982 = vmatpush1.bf16.msra.mxu0 0
        %1983 = vmatprep.subr.bf16.mxu0 0
        %1984 = vmatpush1.bf16.msra.mxu0 0
        %1985 = vmatprep.subr.bf16.mxu0 0
        %1986 = vmatpush1.bf16.msra.mxu0 0
        %1987 = vmatprep.subr.bf16.mxu0 0
        %1988 = vmatpush1.bf16.msra.mxu0 0
        %1989 = vmatprep.subr.bf16.mxu0 0
        %1990 = vmatpush1.bf16.msra.mxu0 0
        %1991 = vmatprep.subr.bf16.mxu0 0
        %1992 = vmatpush1.bf16.msra.mxu0 0
        %1993 = vmatprep.subr.bf16.mxu0 0
        %1994 = vmatpush1.bf16.msra.mxu0 0
        %1995 = vmatprep.subr.bf16.mxu0 0
        %1996 = vmatpush1.bf16.msra.mxu0 0
        %1997 = vmatprep.subr.bf16.mxu0 0
        %1998 = vmatpush1.bf16.msra.mxu0 0
        %1999 = vmatprep.subr.bf16.mxu0 0
        %2000 = vmatpush1.bf16.msra.mxu0 0
        %2001 = vmatprep.subr.bf16.mxu0 0
        %2002 = vmatpush1.bf16.msra.mxu0 0
        %2003 = vmatprep.mubr.bf16.mxu0 0
        %2004 = vmatmul.mubr.bf16.gmra.mrb[0].mxu0 %v1960
        %v2005 = vpop.f32.mrb[0].mxu0
        %v2006 = vadd.f32 0.0, %v2005
        %v2007 = vpop.f32.mrb[0].mxu0
        %v2008 = vpop.f32.mrb[0].mxu0
        %v2009 = vadd.f32 0.0, %v2008
        %v2010 = vpop.f32.mrb[0].mxu0
        %2011 = vmatprep.mubr.bf16.mxu0 0
        %2012 = vmatmul.mubr.bf16.gmra.mrb[0].mxu0 %v1963
        %v2013 = vpop.f32.mrb[0].mxu0
        %v2014 = vadd.f32 0.0, %v2013
        %v2015 = vpop.f32.mrb[0].mxu0
        %v2016 = vpop.f32.mrb[0].mxu0
        %v2017 = vadd.f32 0.0, %v2016
        %v2018 = vpop.f32.mrb[0].mxu0
        %2019 = vmatprep.mubr.bf16.mxu0 0
        %2020 = vmatmul.mubr.bf16.gmra.mrb[0].mxu0 %v1966
        %v2021 = vpop.f32.mrb[0].mxu0
        %v2022 = vadd.f32 0.0, %v2021
        %v2023 = vpop.f32.mrb[0].mxu0
        %v2024 = vpop.f32.mrb[0].mxu0
        %v2025 = vadd.f32 0.0, %v2024
        %v2026 = vpop.f32.mrb[0].mxu0
        %2027 = vmatprep.mubr.bf16.mxu0 0
        %2028 = vmatmul.mubr.bf16.gmra.mrb[0].mxu0 %v1969
        %v2029 = vpop.f32.mrb[0].mxu0
        %v2030 = vadd.f32 0.0, %v2029
        %v2031 = vpop.f32.mrb[0].mxu0
        %v2032 = vpop.f32.mrb[0].mxu0
        %v2033 = vadd.f32 0.0, %v2032
        %v2034 = vpop.f32.mrb[0].mxu0
        %2035 = vdwg.mxu0
        %v2036 = vadd.f32 %v1851, %v2006
        %v2037 = vadd.f32 %v1852, %v2009
        %v2038 = vadd.f32 %v1853, %v2014
        %v2039 = vadd.f32 %v1854, %v2017
        %v2040 = vadd.f32 %v1855, %v2022
        %v2041 = vadd.f32 %v1856, %v2025
        %v2042 = vadd.f32 %v1857, %v2030
        %v2043 = vadd.f32 %v1858, %v2033
        %v2044 = vld [vmem:[%s2] sm:$0xff]
        %v2045 = vld [vmem:[%s2 + $0x8] sm:$0xff]
        %v2046 = vld [vmem:[%s2 + $0x10] sm:$0xff]
        %v2047 = vld [vmem:[%s2 + $0x18] sm:$0xff]
        %v2048 = vld [vmem:[%s2 + $0x20] sm:$0xff]
        %v2049 = vld [vmem:[%s2 + $0x28] sm:$0xff]
        %v2050 = vld [vmem:[%s2 + $0x30] sm:$0xff]
        %v2051 = vld [vmem:[%s2 + $0x38] sm:$0xff]
        %v2052 = vld [vmem:[%s3] sm:$0xff]
        %v2053 = vld [vmem:[%s3 + $0x8] sm:$0xff]
        %v2054 = vld [vmem:[%s3 + $0x10] sm:$0xff]
        %v2055 = vld [vmem:[%s3 + $0x18] sm:$0xff]
        %v2056 = vsel %vm481, %v2036, 0.0
        %v2057 = vsel %vm481, %v2037, 0.0
        %v2058 = vadd.f32 %v2056, %v2057
        %v2059 = vsel %vm481, %v2038, 0.0
        %v2060 = vadd.f32 %v2058, %v2059
        %v2061 = vsel %vm481, %v2039, 0.0
        %v2062 = vadd.f32 %v2060, %v2061
        %v2063 = vsel %vm481, %v2040, 0.0
        %v2064 = vadd.f32 %v2062, %v2063
        %v2065 = vsel %vm481, %v2041, 0.0
        %v2066 = vadd.f32 %v2064, %v2065
        %v2067 = vsel %vm481, %v2042, 0.0
        %v2068 = vadd.f32 %v2066, %v2067
        %v2069 = vsel %vm481, %v2043, 0.0
        %v2070 = vadd.f32 %v2068, %v2069
        %v2071 = vrot.slane %v2070, 4
        %v2072 = vadd.f32 %v2070, %v2071
        %v2073 = vrot.slane %v2072, 2
        %v2074 = vadd.f32 %v2072, %v2073
        %v2075 = vrot.slane %v2074, 1
        %v2076 = vadd.f32 %v2074, %v2075
        %v2078 = vsel %vm481, %v2076, 0
        %2080 = vmatprep.subr.mxu0 0.0
        %2081 = vmatpush1.msra.mxu0 %v2044
        %2082 = vmatprep.subr.mxu0 0.0
        %2083 = vmatpush1.msra.mxu0 %v2045
        %2084 = vmatprep.subr.mxu0 0.0
        %2085 = vmatpush1.msra.mxu0 %v2046
        %2086 = vmatprep.subr.mxu0 0.0
        %2087 = vmatpush1.msra.mxu0 %v2047
        %2088 = vmatprep.subr.mxu0 0.0
        %2089 = vmatpush1.msra.mxu0 %v2048
        %2090 = vmatprep.subr.mxu0 0.0
        %2091 = vmatpush1.msra.mxu0 %v2049
        %2092 = vmatprep.subr.mxu0 0.0
        %2093 = vmatpush1.msra.mxu0 %v2050
        %2094 = vmatprep.subr.mxu0 0.0
        %2095 = vmatpush1.msra.mxu0 %v2051
        %2096 = vmatprep.subr.mxu0 0.0
        %2097 = vmatpush1.msra.mxu0 0.0
        %2098 = vmatprep.subr.mxu0 0.0
        %2099 = vmatpush1.msra.mxu0 0.0
        %2100 = vmatprep.subr.mxu0 0.0
        %2101 = vmatpush1.msra.mxu0 0.0
        %2102 = vmatprep.subr.mxu0 0.0
        %2103 = vmatpush1.msra.mxu0 0.0
        %2104 = vmatprep.subr.mxu0 0.0
        %2105 = vmatpush1.msra.mxu0 0.0
        %2106 = vmatprep.subr.mxu0 0.0
        %2107 = vmatpush1.msra.mxu0 0.0
        %2108 = vmatprep.subr.mxu0 0.0
        %2109 = vmatpush1.msra.mxu0 0.0
        %2110 = vmatprep.subr.mxu0 0.0
        %2111 = vmatpush1.msra.mxu0 0.0
        %2112 = vmatprep.subr.mxu0 0.0
        %2113 = vmatpush1.msra.mxu0 0.0
        %2114 = vmatprep.subr.mxu0 0.0
        %2115 = vmatpush1.msra.mxu0 0.0
        %2116 = vmatprep.subr.mxu0 0.0
        %2117 = vmatpush1.msra.mxu0 0.0
        %2118 = vmatprep.subr.mxu0 0.0
        %2119 = vmatpush1.msra.mxu0 0.0
        %2120 = vmatprep.subr.mxu0 0.0
        %2121 = vmatpush1.msra.mxu0 0.0
        %2122 = vmatprep.subr.mxu0 0.0
        %2123 = vmatpush1.msra.mxu0 0.0
        %2124 = vmatprep.subr.mxu0 0.0
        %2125 = vmatpush1.msra.mxu0 0.0
        %2126 = vmatprep.subr.mxu0 0.0
        %2127 = vmatpush1.msra.mxu0 0.0
        %2128 = vmatprep.subr.mxu0 0.0
        %2129 = vmatpush1.msra.mxu0 0.0
        %2130 = vmatprep.subr.mxu0 0.0
        %2131 = vmatpush1.msra.mxu0 0.0
        %2132 = vmatprep.subr.mxu0 0.0
        %2133 = vmatpush1.msra.mxu0 0.0
        %2134 = vmatprep.subr.mxu0 0.0
        %2135 = vmatpush1.msra.mxu0 0.0
        %2136 = vmatprep.subr.mxu0 0.0
        %2137 = vmatpush1.msra.mxu0 0.0
        %2138 = vmatprep.subr.mxu0 0.0
        %2139 = vmatpush1.msra.mxu0 0.0
        %2140 = vmatprep.subr.mxu0 0.0
        %2141 = vmatpush1.msra.mxu0 0.0
        %2142 = vmatprep.subr.mxu0 0.0
        %2143 = vmatpush1.msra.mxu0 0.0
        %2144 = vmatprep.mubr.f32.mxu0 0.0
        %2145 = vmatmul.mubr.f32.gmra.mrb[0].mxu0 %v2078
        %v2146 = vpop.f32.mrb[0].mxu0
        %v2147 = vadd.f32 0.0, %v2146
        %v2148 = vpop.f32.mrb[0].mxu0
        %2149 = vdwg.mxu0
        %v2150 = vmul.f32 %v2147, 0.0078125
        %vm2151 = vcmask 261120
        %v2153 = vsel %vm2151, %v2150, 0
        %2155 = vmatprep.subr.mxu0 0.0
        %2156 = vmatpush1.msra.mxu0 %v2052
        %2157 = vmatprep.subr.mxu0 0.0
        %2158 = vmatpush1.msra.mxu0 %v2053
        %2159 = vmatprep.subr.mxu0 0.0
        %2160 = vmatpush1.msra.mxu0 %v2054
        %2161 = vmatprep.subr.mxu0 0.0
        %2162 = vmatpush1.msra.mxu0 %v2055
        %2163 = vmatprep.subr.mxu0 0.0
        %2164 = vmatpush1.msra.mxu0 0.0
        %2165 = vmatprep.subr.mxu0 0.0
        %2166 = vmatpush1.msra.mxu0 0.0
        %2167 = vmatprep.subr.mxu0 0.0
        %2168 = vmatpush1.msra.mxu0 0.0
        %2169 = vmatprep.subr.mxu0 0.0
        %2170 = vmatpush1.msra.mxu0 0.0
        %2171 = vmatprep.subr.mxu0 0.0
        %2172 = vmatpush1.msra.mxu0 0.0
        %2173 = vmatprep.subr.mxu0 0.0
        %2174 = vmatpush1.msra.mxu0 0.0
        %2175 = vmatprep.subr.mxu0 0.0
        %2176 = vmatpush1.msra.mxu0 0.0
        %2177 = vmatprep.subr.mxu0 0.0
        %2178 = vmatpush1.msra.mxu0 0.0
        %2179 = vmatprep.subr.mxu0 0.0
        %2180 = vmatpush1.msra.mxu0 0.0
        %2181 = vmatprep.subr.mxu0 0.0
        %2182 = vmatpush1.msra.mxu0 0.0
        %2183 = vmatprep.subr.mxu0 0.0
        %2184 = vmatpush1.msra.mxu0 0.0
        %2185 = vmatprep.subr.mxu0 0.0
        %2186 = vmatpush1.msra.mxu0 0.0
        %2187 = vmatprep.subr.mxu0 0.0
        %2188 = vmatpush1.msra.mxu0 0.0
        %2189 = vmatprep.subr.mxu0 0.0
        %2190 = vmatpush1.msra.mxu0 0.0
        %2191 = vmatprep.subr.mxu0 0.0
        %2192 = vmatpush1.msra.mxu0 0.0
        %2193 = vmatprep.subr.mxu0 0.0
        %2194 = vmatpush1.msra.mxu0 0.0
        %2195 = vmatprep.subr.mxu0 0.0
        %2196 = vmatpush1.msra.mxu0 0.0
        %2197 = vmatprep.subr.mxu0 0.0
        %2198 = vmatpush1.msra.mxu0 0.0
        %2199 = vmatprep.subr.mxu0 0.0
        %2200 = vmatpush1.msra.mxu0 0.0
        %2201 = vmatprep.subr.mxu0 0.0
        %2202 = vmatpush1.msra.mxu0 0.0
        %2203 = vmatprep.subr.mxu0 0.0
        %2204 = vmatpush1.msra.mxu0 0.0
        %2205 = vmatprep.subr.mxu0 0.0
        %2206 = vmatpush1.msra.mxu0 0.0
        %2207 = vmatprep.subr.mxu0 0.0
        %2208 = vmatpush1.msra.mxu0 0.0
        %2209 = vmatprep.subr.mxu0 0.0
        %2210 = vmatpush1.msra.mxu0 0.0
        %2211 = vmatprep.subr.mxu0 0.0
        %2212 = vmatpush1.msra.mxu0 0.0
        %2213 = vmatprep.subr.mxu0 0.0
        %2214 = vmatpush1.msra.mxu0 0.0
        %2215 = vmatprep.subr.mxu0 0.0
        %2216 = vmatpush1.msra.mxu0 0.0
        %2217 = vmatprep.subr.mxu0 0.0
        %2218 = vmatpush1.msra.mxu0 0.0
        %2219 = vmatprep.mubr.f32.mxu0 0.0
        %2220 = vmatmul.mubr.f32.gmra.mrb[0].mxu0 %v2153
        %v2221 = vpop.f32.mrb[0].mxu0
        %v2222 = vadd.f32 0.0, %v2221
        %v2223 = vpop.f32.mrb[0].mxu0
        %2224 = vdwg.mxu0
        %v2225 = vlaneseq
        %v2226 = vshrl.u32 %v2225, 7
        %v2227 = vsub.s32 0, %v2226
        %v2228 = vrot.slane %v2222, %v2227
        %v2229 = vsub.f32 %v2036, %v2228
        %v2230 = vsub.f32 %v2037, %v2228
        %v2231 = vsub.f32 %v2038, %v2228
        %v2232 = vsub.f32 %v2039, %v2228
        %v2233 = vsub.f32 %v2040, %v2228
        %v2234 = vsub.f32 %v2041, %v2228
        %v2235 = vsub.f32 %v2042, %v2228
        %v2236 = vsub.f32 %v2043, %v2228
        %v2237 = vmul.f32 %v2229, %v2229
        %v2238 = vmul.f32 %v2230, %v2230
        %v2239 = vmul.f32 %v2231, %v2231
        %v2240 = vmul.f32 %v2232, %v2232
        %v2241 = vmul.f32 %v2233, %v2233
        %v2242 = vmul.f32 %v2234, %v2234
        %v2243 = vmul.f32 %v2235, %v2235
        %v2244 = vmul.f32 %v2236, %v2236
        %v2245 = vsel %vm481, %v2237, 0.0
        %v2246 = vsel %vm481, %v2238, 0.0
        %v2247 = vadd.f32 %v2245, %v2246
        %v2248 = vsel %vm481, %v2239, 0.0
        %v2249 = vadd.f32 %v2247, %v2248
        %v2250 = vsel %vm481, %v2240, 0.0
        %v2251 = vadd.f32 %v2249, %v2250
        %v2252 = vsel %vm481, %v2241, 0.0
        %v2253 = vadd.f32 %v2251, %v2252
        %v2254 = vsel %vm481, %v2242, 0.0
        %v2255 = vadd.f32 %v2253, %v2254
        %v2256 = vsel %vm481, %v2243, 0.0
        %v2257 = vadd.f32 %v2255, %v2256
        %v2258 = vsel %vm481, %v2244, 0.0
        %v2259 = vadd.f32 %v2257, %v2258
        %v2260 = vrot.slane %v2259, 4
        %v2261 = vadd.f32 %v2259, %v2260
        %v2262 = vrot.slane %v2261, 2
        %v2263 = vadd.f32 %v2261, %v2262
        %v2264 = vrot.slane %v2263, 1
        %v2265 = vadd.f32 %v2263, %v2264
        %v2267 = vsel %vm481, %v2265, 0
        %2269 = vmatprep.subr.mxu0 0.0
        %2270 = vmatpush1.msra.mxu0 %v2044
        %2271 = vmatprep.subr.mxu0 0.0
        %2272 = vmatpush1.msra.mxu0 %v2045
        %2273 = vmatprep.subr.mxu0 0.0
        %2274 = vmatpush1.msra.mxu0 %v2046
        %2275 = vmatprep.subr.mxu0 0.0
        %2276 = vmatpush1.msra.mxu0 %v2047
        %2277 = vmatprep.subr.mxu0 0.0
        %2278 = vmatpush1.msra.mxu0 %v2048
        %2279 = vmatprep.subr.mxu0 0.0
        %2280 = vmatpush1.msra.mxu0 %v2049
        %2281 = vmatprep.subr.mxu0 0.0
        %2282 = vmatpush1.msra.mxu0 %v2050
        %2283 = vmatprep.subr.mxu0 0.0
        %2284 = vmatpush1.msra.mxu0 %v2051
        %2285 = vmatprep.subr.mxu0 0.0
        %2286 = vmatpush1.msra.mxu0 0.0
        %2287 = vmatprep.subr.mxu0 0.0
        %2288 = vmatpush1.msra.mxu0 0.0
        %2289 = vmatprep.subr.mxu0 0.0
        %2290 = vmatpush1.msra.mxu0 0.0
        %2291 = vmatprep.subr.mxu0 0.0
        %2292 = vmatpush1.msra.mxu0 0.0
        %2293 = vmatprep.subr.mxu0 0.0
        %2294 = vmatpush1.msra.mxu0 0.0
        %2295 = vmatprep.subr.mxu0 0.0
        %2296 = vmatpush1.msra.mxu0 0.0
        %2297 = vmatprep.subr.mxu0 0.0
        %2298 = vmatpush1.msra.mxu0 0.0
        %2299 = vmatprep.subr.mxu0 0.0
        %2300 = vmatpush1.msra.mxu0 0.0
        %2301 = vmatprep.subr.mxu0 0.0
        %2302 = vmatpush1.msra.mxu0 0.0
        %2303 = vmatprep.subr.mxu0 0.0
        %2304 = vmatpush1.msra.mxu0 0.0
        %2305 = vmatprep.subr.mxu0 0.0
        %2306 = vmatpush1.msra.mxu0 0.0
        %2307 = vmatprep.subr.mxu0 0.0
        %2308 = vmatpush1.msra.mxu0 0.0
        %2309 = vmatprep.subr.mxu0 0.0
        %2310 = vmatpush1.msra.mxu0 0.0
        %2311 = vmatprep.subr.mxu0 0.0
        %2312 = vmatpush1.msra.mxu0 0.0
        %2313 = vmatprep.subr.mxu0 0.0
        %2314 = vmatpush1.msra.mxu0 0.0
        %2315 = vmatprep.subr.mxu0 0.0
        %2316 = vmatpush1.msra.mxu0 0.0
        %2317 = vmatprep.subr.mxu0 0.0
        %2318 = vmatpush1.msra.mxu0 0.0
        %2319 = vmatprep.subr.mxu0 0.0
        %2320 = vmatpush1.msra.mxu0 0.0
        %2321 = vmatprep.subr.mxu0 0.0
        %2322 = vmatpush1.msra.mxu0 0.0
        %2323 = vmatprep.subr.mxu0 0.0
        %2324 = vmatpush1.msra.mxu0 0.0
        %2325 = vmatprep.subr.mxu0 0.0
        %2326 = vmatpush1.msra.mxu0 0.0
        %2327 = vmatprep.subr.mxu0 0.0
        %2328 = vmatpush1.msra.mxu0 0.0
        %2329 = vmatprep.subr.mxu0 0.0
        %2330 = vmatpush1.msra.mxu0 0.0
        %2331 = vmatprep.subr.mxu0 0.0
        %2332 = vmatpush1.msra.mxu0 0.0
        %2333 = vmatprep.mubr.f32.mxu0 0.0
        %2334 = vmatmul.mubr.f32.gmra.mrb[0].mxu0 %v2267
        %v2335 = vpop.f32.mrb[0].mxu0
        %v2336 = vadd.f32 0.0, %v2335
        %v2337 = vpop.f32.mrb[0].mxu0
        %2338 = vdwg.mxu0
        %v2339 = vmul.f32 %v2336, 0.0078125
        %v2340 = vadd.f32 %v2339, 1e-05
        %v2341 = vrsqrt.pop %v2340
        %v2343 = vsel %vm2151, %v2341, 0
        %2345 = vmatprep.subr.mxu0 0.0
        %2346 = vmatpush1.msra.mxu0 %v2052
        %2347 = vmatprep.subr.mxu0 0.0
        %2348 = vmatpush1.msra.mxu0 %v2053
        %2349 = vmatprep.subr.mxu0 0.0
        %2350 = vmatpush1.msra.mxu0 %v2054
        %2351 = vmatprep.subr.mxu0 0.0
        %2352 = vmatpush1.msra.mxu0 %v2055
        %2353 = vmatprep.subr.mxu0 0.0
        %2354 = vmatpush1.msra.mxu0 0.0
        %2355 = vmatprep.subr.mxu0 0.0
        %2356 = vmatpush1.msra.mxu0 0.0
        %2357 = vmatprep.subr.mxu0 0.0
        %2358 = vmatpush1.msra.mxu0 0.0
        %2359 = vmatprep.subr.mxu0 0.0
        %2360 = vmatpush1.msra.mxu0 0.0
        %2361 = vmatprep.subr.mxu0 0.0
        %2362 = vmatpush1.msra.mxu0 0.0
        %2363 = vmatprep.subr.mxu0 0.0
        %2364 = vmatpush1.msra.mxu0 0.0
        %2365 = vmatprep.subr.mxu0 0.0
        %2366 = vmatpush1.msra.mxu0 0.0
        %2367 = vmatprep.subr.mxu0 0.0
        %2368 = vmatpush1.msra.mxu0 0.0
        %2369 = vmatprep.subr.mxu0 0.0
        %2370 = vmatpush1.msra.mxu0 0.0
        %2371 = vmatprep.subr.mxu0 0.0
        %2372 = vmatpush1.msra.mxu0 0.0
        %2373 = vmatprep.subr.mxu0 0.0
        %2374 = vmatpush1.msra.mxu0 0.0
        %2375 = vmatprep.subr.mxu0 0.0
        %2376 = vmatpush1.msra.mxu0 0.0
        %2377 = vmatprep.subr.mxu0 0.0
        %2378 = vmatpush1.msra.mxu0 0.0
        %2379 = vmatprep.subr.mxu0 0.0
        %2380 = vmatpush1.msra.mxu0 0.0
        %2381 = vmatprep.subr.mxu0 0.0
        %2382 = vmatpush1.msra.mxu0 0.0
        %2383 = vmatprep.subr.mxu0 0.0
        %2384 = vmatpush1.msra.mxu0 0.0
        %2385 = vmatprep.subr.mxu0 0.0
        %2386 = vmatpush1.msra.mxu0 0.0
        %2387 = vmatprep.subr.mxu0 0.0
        %2388 = vmatpush1.msra.mxu0 0.0
        %2389 = vmatprep.subr.mxu0 0.0
        %2390 = vmatpush1.msra.mxu0 0.0
        %2391 = vmatprep.subr.mxu0 0.0
        %2392 = vmatpush1.msra.mxu0 0.0
        %2393 = vmatprep.subr.mxu0 0.0
        %2394 = vmatpush1.msra.mxu0 0.0
        %2395 = vmatprep.subr.mxu0 0.0
        %2396 = vmatpush1.msra.mxu0 0.0
        %2397 = vmatprep.subr.mxu0 0.0
        %2398 = vmatpush1.msra.mxu0 0.0
        %2399 = vmatprep.subr.mxu0 0.0
        %2400 = vmatpush1.msra.mxu0 0.0
        %2401 = vmatprep.subr.mxu0 0.0
        %2402 = vmatpush1.msra.mxu0 0.0
        %2403 = vmatprep.subr.mxu0 0.0
        %2404 = vmatpush1.msra.mxu0 0.0
        %2405 = vmatprep.subr.mxu0 0.0
        %2406 = vmatpush1.msra.mxu0 0.0
        %2407 = vmatprep.subr.mxu0 0.0
        %2408 = vmatpush1.msra.mxu0 0.0
        %2409 = vmatprep.mubr.f32.mxu0 0.0
        %2410 = vmatmul.mubr.f32.gmra.mrb[0].mxu0 %v2343
        %v2411 = vpop.f32.mrb[0].mxu0
        %v2412 = vadd.f32 0.0, %v2411
        %v2413 = vpop.f32.mrb[0].mxu0
        %2414 = vdwg.mxu0
        %v2415 = vlaneseq
        %v2416 = vshrl.u32 %v2415, 7
        %v2417 = vsub.s32 0, %v2416
        %v2418 = vrot.slane %v2412, %v2417
        %v2419 = vmul.f32 %v2229, %v2418
        %v2420 = vmul.f32 %v2230, %v2418
        %v2421 = vmul.f32 %v2231, %v2418
        %v2422 = vmul.f32 %v2232, %v2418
        %v2423 = vmul.f32 %v2233, %v2418
        %v2424 = vmul.f32 %v2234, %v2418
        %v2425 = vmul.f32 %v2235, %v2418
        %v2426 = vmul.f32 %v2236, %v2418
        %v2427 = vld [vmem:[%s4] sm:$0x1]
        %v2429 = vlaneseq
        %v2430 = vshrl.u32 %v2429, 7
        %v2431 = vsub.s32 0, %v2430
        %v2432 = vrot.slane %v2427, %v2431
        %v2434 = vmul.f32 %v2419, %v2432
        %v2435 = vmul.f32 %v2420, %v2432
        %v2436 = vmul.f32 %v2421, %v2432
        %v2437 = vmul.f32 %v2422, %v2432
        %v2438 = vmul.f32 %v2423, %v2432
        %v2439 = vmul.f32 %v2424, %v2432
        %v2440 = vmul.f32 %v2425, %v2432
        %v2441 = vmul.f32 %v2426, %v2432
        %v2442 = vld [vmem:[%s5] sm:$0x1]
        %v2444 = vlaneseq
        %v2445 = vshrl.u32 %v2444, 7
        %v2446 = vsub.s32 0, %v2445
        %v2447 = vrot.slane %v2442, %v2446
        %v2449 = vadd.f32 %v2434, %v2447
        %v2450 = vadd.f32 %v2435, %v2447
        %v2451 = vadd.f32 %v2436, %v2447
        %v2452 = vadd.f32 %v2437, %v2447
        %v2453 = vadd.f32 %v2438, %v2447
        %v2454 = vadd.f32 %v2439, %v2447
        %v2455 = vadd.f32 %v2440, %v2447
        %v2456 = vadd.f32 %v2441, %v2447
        %v2457 = vld [vmem:[%s296] sm:$0xf]
        %v2458 = vld [vmem:[%s296 + $0x4] sm:$0xf]
        %v2459 = vld [vmem:[%s296 + $0x8] sm:$0xf]
        %v2460 = vld [vmem:[%s296 + $0xc] sm:$0xf]
        %v2461 = vld [vmem:[%s296 + $0x10] sm:$0xf]
        %v2462 = vld [vmem:[%s296 + $0x14] sm:$0xf]
        %v2463 = vld [vmem:[%s296 + $0x18] sm:$0xf]
        %v2464 = vld [vmem:[%s296 + $0x1c] sm:$0xf]
        %v2465 = vunpack.c.l.bf16 %v2457
        %v2466 = vunpack.c.l.bf16 %v2458
        %v2467 = vunpack.c.l.bf16 %v2459
        %v2468 = vunpack.c.l.bf16 %v2460
        %v2469 = vunpack.c.l.bf16 %v2461
        %v2470 = vunpack.c.l.bf16 %v2462
        %v2471 = vunpack.c.l.bf16 %v2463
        %v2472 = vunpack.c.l.bf16 %v2464
        %v2473 = vadd.f32 %v2449, %v2465
        %v2474 = vadd.f32 %v2450, %v2466
        %v2475 = vadd.f32 %v2451, %v2467
        %v2476 = vadd.f32 %v2452, %v2468
        %v2477 = vadd.f32 %v2453, %v2469
        %v2478 = vadd.f32 %v2454, %v2470
        %v2479 = vadd.f32 %v2455, %v2471
        %v2480 = vadd.f32 %v2456, %v2472
        %v2481 = vmax.f32 %v2473, 0.0
        %v2482 = vmax.f32 %v2474, 0.0
        %v2483 = vmax.f32 %v2475, 0.0
        %v2484 = vmax.f32 %v2476, 0.0
        %v2485 = vmax.f32 %v2477, 0.0
        %v2486 = vmax.f32 %v2478, 0.0
        %v2487 = vmax.f32 %v2479, 0.0
        %v2488 = vmax.f32 %v2480, 0.0
        %2489 = vst.msk [vmem:[%s286] sm:$0xff] %vm481, %v2481
        %2490 = vst.msk [vmem:[%s286 + $0x8] sm:$0xff] %vm481, %v2482
        %2491 = vst.msk [vmem:[%s286 + $0x10] sm:$0xff] %vm481, %v2483
        %2492 = vst.msk [vmem:[%s286 + $0x18] sm:$0xff] %vm481, %v2484
        %2493 = vst.msk [vmem:[%s286 + $0x20] sm:$0xff] %vm481, %v2485
        %2494 = vst.msk [vmem:[%s286 + $0x28] sm:$0xff] %vm481, %v2486
        %2495 = vst.msk [vmem:[%s286 + $0x30] sm:$0xff] %vm481, %v2487
        %2496 = vst.msk [vmem:[%s286 + $0x38] sm:$0xff] %vm481, %v2488
        %s2497 = sand.u32 %s186, 1
        %s2498 = scalar_lea.sflag [#allocation3], %s2497
        %s2499 = sand.u32 %s186, 1
        %s2500 = smul.addr %s2499, 64
        %s2501 = scalar_lea.vmem [#allocation2], %s2500
        // Predicated region
        $region49: #{_lambda_.9} parent=47 // pred_check
          %p2502 = pneg %p196
        $region50: #{_lambda_.9} parent=47 // pred_check_branch
          %2504 = sbr.rel (%p2502) target = $region52
        $region51: #{_lambda_.9} parent=47 // pred_region
          %s2506 = ssub.s32 1024, 1024
          %2507 = vsyncadd %s2498, %s2506
          %s2508 = smul.addr %s21, 8
          %s2509 = smul.addr %s2508, 128
          %s2510 = scalar_lea.hbm %s7, %s2509
          %s2511 = sshll.u32 %s2501, 4
          %s2512 = int_to_ptr.vmem [resolvable:$true] %s2511
          %2517 = dma.vmem_to_hbm [thread:$0]  %s2512, 1024, %s2510, %s2498, 128, 128, 8
        $region52: #{_lambda_.9} parent=47 // pred_fallthru
          _
      $region48: #{_lambda_.9} parent=5 // pred_fallthru
        _
      %p2518 = scmp.le.s32.totalorder 2, %s16
      // Predicated region
      $region53: #{_lambda_.9} parent=5 // pred_check
        %p2519 = pneg %p2518
      $region54: #{_lambda_.9} parent=5 // pred_check_branch
        %2521 = sbr.rel (%p2519) target = $region56
      $region55: #{_lambda_.9} parent=5 // pred_region
        %s2522 = ssub.s32 %s16, 2
        // Predicated region
        $region57: #{_lambda_.9} parent=55 // pred_check
          %p2523 = pneg %p202
        $region58: #{_lambda_.9} parent=55 // pred_check_branch
          %2525 = sbr.rel (%p2523) target = $region60
        $region59: #{_lambda_.9} parent=55 // pred_region
          %s2526 = sand.u32 %s187, 1
          %s2527 = scalar_lea.sflag [#allocation3], %s2526
          %s2528 = sand.u32 %s187, 1
          %s2529 = smul.addr %s2528, 64
          %s2530 = scalar_lea.vmem [#allocation2], %s2529
          %2531 = dma.done %s2527, 1024
        $region60: #{_lambda_.9} parent=55 // pred_fallthru
          _
      $region56: #{_lambda_.9} parent=5 // pred_fallthru
        _
    $region6: #{_lambda_.9} parent=1 // loop_footer
      %s20 = sadd.s32 1, %s16
    $region7: #{_lambda_.9} parent=1 // loop_footer_branch
      %15 = sbr.rel target = $region3
    $region8: #{_lambda_.9} parent=1 // loop_exit
      _
    %2532 = vsyncpa [#allocation3], 1
    %s2533 = scalar_lea.sflag [#allocation3], 1
    %2534 = vsyncpa %s2533, 1

</llo_original>
